<compile_context>
chip_gen: v7x
topology: tpu7x:2x2x1
jax: 0.10.0
libtpu: 0.0.40
codegen_flags: <defaults>
</compile_context>

<pallas_src>
import numpy as np
import jax
import jax.numpy as jnp
from jax.experimental import pallas as pl
from jax.experimental.pallas import tpu as pltpu

_BN_EPS = 1e-5
_NUM_BLOCKS = 4


def _block_geometry(B, H0, W0, Cin, C):
    """Static per-block shape info for the padded-flat row layout."""
    geo = []
    H, W, ci = H0, W0, Cin
    for _ in range(_NUM_BLOCKS):
        PH, PW = H + 2, W + 2
        Mp = B * PH * PW                  # rows of the zero-padded activation
        Mr = Mp - 2 * PW - 2              # candidate conv-output rows (incl. invalid ones)
        geo.append(dict(H=H, W=W, PH=PH, PW=PW, Mp=Mp, Mr=Mr, Cin=ci))
        H, W, ci = H // 2, W // 2, C
    return geo


def _valid_mask_np(B, H, W):
    """1.0 for candidate rows that are real conv outputs (ph < H and pw < W), else 0."""
    PH, PW = H + 2, W + 2
    Mr = B * PH * PW - 2 * PW - 2
    r = np.arange(Mr)
    ph = (r % (PH * PW)) // PW
    pw = r % PW
    return ((ph < H) & (pw < W)).astype(np.float32)[:, None]      # (Mr, 1)


def _build_kernel(B, H0, W0, Cin, C):
    geo = _block_geometry(B, H0, W0, Cin, C)

    def kernel(xpad_ref, w1_ref, wr_ref, g_ref, bt_ref,
               m1_ref, m2_ref, m3_ref, m4_ref,
               wc_ref, bc_ref,
               o_ref,
               pad2_ref, pad3_ref, pad4_ref, acc_ref):
        mask_refs = [m1_ref, m2_ref, m3_ref, m4_ref]
        act_refs = [xpad_ref, pad2_ref, pad3_ref, pad4_ref]

        # Zero the intermediate padded activation buffers once; only their border ring
        # survives (the interior is fully overwritten by the pooling stores below).
        for r in (pad2_ref, pad3_ref, pad4_ref):
            r[...] = jnp.zeros_like(r)

        feat_sum = [jnp.zeros((1, C), jnp.float32) for _ in range(B)]

        for blk in range(_NUM_BLOCKS):
            gm = geo[blk]
            H, W, PH, PW, Mr, ci = gm["H"], gm["W"], gm["PH"], gm["PW"], gm["Mr"], gm["Cin"]
            Ho, Wo = H // 2, W // 2
            p_ref = act_refs[blk]

            # ---- Conv2d(3x3, pad=1): in-VMEM im2col (9 shifted contiguous row slices
            #      of the padded-flat activation) + ONE stacked bf16 MXU matmul.
            #      (Conv bias omitted: cancels exactly under BN batch statistics.)
            taps = [p_ref[pl.ds(dy * PW + dx, Mr), :]
                    for dy in range(3) for dx in range(3)]
            patches = jnp.concatenate(taps, axis=1).astype(jnp.bfloat16)   # (Mr, 9*ci)
            w2d = w1_ref[...] if blk == 0 else wr_ref[blk - 1]             # (9*ci, C) bf16
            acc = jnp.dot(patches, w2d,
                          preferred_element_type=jnp.float32)              # (Mr, C) f32

            # ---- BatchNorm2d (track_running_stats=False): batch statistics over the
            #      valid output rows only (biased variance), two reductions total.
            inv_n = 1.0 / float(B * H * W)
            mask = mask_refs[blk][...]                                     # (Mr, 1)
            mean = jnp.sum(acc * mask, axis=0, keepdims=True) * inv_n      # (1, C)
            d = acc - mean
            var = jnp.sum(d * d * mask, axis=0, keepdims=True) * inv_n     # (1, C)
            scale = g_ref[blk] * jax.lax.rsqrt(var + _BN_EPS)              # (1, C)
            shift = bt_ref[blk] - mean * scale                             # (1, C)

            # Hoisted per-block broadcasts for the pooling loop.
            scale_rows = jnp.broadcast_to(scale, (Wo, C))
            shift_rows = jnp.broadcast_to(shift, (Wo, C))
            pos_rows = scale_rows >= 0.0

            # Stash the raw conv accumulator so pooling can use strided row loads.
            acc_ref[pl.ds(0, Mr), :] = acc

            # ---- MaxPool2d(2) + BN affine + ReLU. The BN transform is per-channel
            #      affine, so pooling commutes with it via a sign-aware max/min select;
            #      ReLU commutes with max. Pooled rows go straight into the next
            #      block's padded activation buffer (or the classifier accumulator).
            for b in range(B):
                src = b * PH * PW
                for ho in range(Ho):
                    q = [acc_ref[pl.ds(src + (2 * ho + hp) * PW + wp, Wo, stride=2), :]
                         for hp in range(2) for wp in range(2)]            # 4 x (Wo, C)
                    hi = jnp.maximum(jnp.maximum(q[0], q[1]), jnp.maximum(q[2], q[3]))
                    lo = jnp.minimum(jnp.minimum(q[0], q[1]), jnp.minimum(q[2], q[3]))
                    pre = jnp.where(pos_rows, hi, lo)
                    y = jnp.maximum(pre * scale_rows + shift_rows, 0.0)    # (Wo, C) f32
                    if blk + 1 < _NUM_BLOCKS:
                        nxt = act_refs[blk + 1]
                        PWn = Wo + 2
                        dst = b * (Ho + 2) * PWn + (ho + 1) * PWn + 1
                        nxt[pl.ds(dst, Wo), :] = y.astype(nxt.dtype)
                    else:
                        feat_sum[b] = feat_sum[b] + jnp.sum(y, axis=0, keepdims=True)

        # ---- Classifier: global spatial mean + Linear, fused (never leaves VMEM).
        last = geo[-1]
        inv_s = 1.0 / float((last["H"] // 2) * (last["W"] // 2))
        feat = jnp.concatenate(feat_sum, axis=0) * inv_s                   # (B, C) f32
        logits = jnp.dot(feat, wc_ref[...],
                         preferred_element_type=jnp.float32) + bc_ref[...]
        o_ref[...] = logits.astype(o_ref.dtype)

    return kernel, geo


def _vmem_spec():
    return pl.BlockSpec(memory_space=pltpu.MemorySpace.VMEM)


@jax.jit
def cnn_forward(x_nchw, params):
    B, Cin, H, W = x_nchw.shape
    C = params["wc"].shape[0]             # hidden_size
    out_features = params["wc"].shape[1]

    kernel, geo = _build_kernel(B, H, W, Cin, C)

    # Thin XLA glue: NCHW -> NHWC, zero-pad the spatial ring once, flatten rows.
    x = jnp.transpose(x_nchw, (0, 2, 3, 1))
    xp = jnp.pad(x, ((0, 0), (1, 1), (1, 1), (0, 0)))
    xpad = xp.reshape(B * (H + 2) * (W + 2), Cin).astype(jnp.float32)

    # Weights: HWIO -> (9*Cin, Cout); bf16 operands for the MXU, f32 accumulation.
    w1 = params["blocks"][0][0].reshape(9 * Cin, C).astype(jnp.bfloat16)
    wr = jnp.stack([params["blocks"][i][0].reshape(9 * C, C)
                    for i in range(1, _NUM_BLOCKS)]).astype(jnp.bfloat16)   # (3, 9C, C)
    gam = jnp.stack([params["blocks"][i][1] for i in range(_NUM_BLOCKS)])   # (4, 1, C)
    bet = jnp.stack([params["blocks"][i][2] for i in range(_NUM_BLOCKS)])   # (4, 1, C)

    # Static 0/1 validity masks (row is a real conv output) per block.
    masks = [jnp.asarray(_valid_mask_np(B, gg["H"], gg["W"])) for gg in geo]

    scratch = [
        pltpu.VMEM((geo[1]["Mp"], C), jnp.float32),    # padded activation after block 1
        pltpu.VMEM((geo[2]["Mp"], C), jnp.float32),    # padded activation after block 2
        pltpu.VMEM((geo[3]["Mp"], C), jnp.float32),    # padded activation after block 3
        pltpu.VMEM((geo[0]["Mr"], C), jnp.float32),    # conv accumulator (reused per block)
    ]

    return pl.pallas_call(
        kernel,
        out_shape=jax.ShapeDtypeStruct((B, out_features), jnp.float32),
        in_specs=[_vmem_spec() for _ in range(11)],
        out_specs=_vmem_spec(),
        scratch_shapes=scratch,
    )(xpad, w1, wr, gam, bet, masks[0], masks[1], masks[2], masks[3],
      params["wc"], params["bc"])


def init_params(key, in_channels, out_features, hidden_size):
    """Deterministic synthetic parameters (shapes mirror the PyTorch module).

    Conv biases are not materialized: with BatchNorm using batch statistics right
    after each conv, a per-channel constant bias cancels exactly in the forward pass.
    """
    params = {"blocks": []}
    cin = in_channels
    for _ in range(_NUM_BLOCKS):
        key, k1, k2, k3 = jax.random.split(key, 4)
        w = 0.1 * jax.random.normal(k1, (3, 3, cin, hidden_size), jnp.float32)   # HWIO
        g = 1.0 + 0.1 * jax.random.normal(k2, (1, hidden_size), jnp.float32)     # BN gamma
        beta = 0.1 * jax.random.normal(k3, (1, hidden_size), jnp.float32)        # BN beta
        params["blocks"].append((w, g, beta))
        cin = hidden_size
    key, k1, k2 = jax.random.split(key, 3)
    params["wc"] = 0.1 * jax.random.normal(k1, (hidden_size, out_features), jnp.float32)
    params["bc"] = 0.1 * jax.random.normal(k2, (1, out_features), jnp.float32)
    return params


if __name__ == "__main__":
    B, Cin, Hin, Win = 2, 4, 16, 16
    hidden_size, out_features = 32, 8

    key = jax.random.PRNGKey(0)
    kx, kp = jax.random.split(key)
    x = jax.random.normal(kx, (B, Cin, Hin, Win), jnp.float32)
    params = init_params(kp, Cin, out_features, hidden_size)

    logits = cnn_forward(x, params)
    jax.block_until_ready(logits)
    assert logits.shape == (B, out_features)
    assert bool(jnp.all(jnp.isfinite(logits)))
    print("KERNEL_OK")
</pallas_src>

<mosaic_0001>
module attributes {stable_mosaic.version = 11 : i64} {
  func.func @kernel(%arg0: memref<648x4xf32, #tpu.memory_space<vmem>>, %arg1: memref<36x32xbf16, #tpu.memory_space<vmem>>, %arg2: memref<3x288x32xbf16, #tpu.memory_space<vmem>>, %arg3: memref<4x1x32xf32, #tpu.memory_space<vmem>>, %arg4: memref<4x1x32xf32, #tpu.memory_space<vmem>>, %arg5: memref<610x1xf32, #tpu.memory_space<vmem>>, %arg6: memref<178x1xf32, #tpu.memory_space<vmem>>, %arg7: memref<58x1xf32, #tpu.memory_space<vmem>>, %arg8: memref<22x1xf32, #tpu.memory_space<vmem>>, %arg9: memref<32x8xf32, #tpu.memory_space<vmem>>, %arg10: memref<1x8xf32, #tpu.memory_space<vmem>>, %arg11: memref<2x8xf32, #tpu.memory_space<vmem>>, %arg12: memref<200x32xf32, #tpu.memory_space<vmem>>, %arg13: memref<72x32xf32, #tpu.memory_space<vmem>>, %arg14: memref<32x32xf32, #tpu.memory_space<vmem>>, %arg15: memref<610x32xf32, #tpu.memory_space<vmem>>) attributes {dimension_semantics = [], scalar_prefetch = 0 : i64, scratch_operands = 4 : i64, tpu.core_type = #tpu.core_type<tc>} {
    %cst = arith.constant 0.000000e+00 : f32
    %0 = vector.broadcast %cst : f32 to vector<200x32xf32>
    %c0 = arith.constant 0 : index
    %c0_0 = arith.constant 0 : index
    %1 = vector.load %arg12[%c0, %c0_0] : memref<200x32xf32, #tpu.memory_space<vmem>>, vector<200x32xf32>
    tpu.vector_store %arg12[%c0, %c0_0], %0 {strides = array<i32>} : memref<200x32xf32, #tpu.memory_space<vmem>>, vector<200x32xf32>,
    %cst_1 = arith.constant 0.000000e+00 : f32
    %2 = vector.broadcast %cst_1 : f32 to vector<72x32xf32>
    %c0_2 = arith.constant 0 : index
    %c0_3 = arith.constant 0 : index
    %3 = vector.load %arg13[%c0_2, %c0_3] : memref<72x32xf32, #tpu.memory_space<vmem>>, vector<72x32xf32>
    tpu.vector_store %arg13[%c0_2, %c0_3], %2 {strides = array<i32>} : memref<72x32xf32, #tpu.memory_space<vmem>>, vector<72x32xf32>,
    %cst_4 = arith.constant 0.000000e+00 : f32
    %4 = vector.broadcast %cst_4 : f32 to vector<32x32xf32>
    %c0_5 = arith.constant 0 : index
    %c0_6 = arith.constant 0 : index
    %5 = vector.load %arg14[%c0_5, %c0_6] : memref<32x32xf32, #tpu.memory_space<vmem>>, vector<32x32xf32>
    tpu.vector_store %arg14[%c0_5, %c0_6], %4 {strides = array<i32>} : memref<32x32xf32, #tpu.memory_space<vmem>>, vector<32x32xf32>,
    %cst_7 = arith.constant 0.000000e+00 : f32
    %6 = vector.broadcast %cst_7 : f32 to vector<1x32xf32>
    %cst_8 = arith.constant 0.000000e+00 : f32
    %7 = vector.broadcast %cst_8 : f32 to vector<1x32xf32>
    %c0_9 = arith.constant 0 : index
    %c0_10 = arith.constant 0 : index
    %8 = vector.load %arg0[%c0_9, %c0_10] : memref<648x4xf32, #tpu.memory_space<vmem>>, vector<610x4xf32>
    %c1 = arith.constant 1 : index
    %c0_11 = arith.constant 0 : index
    %9 = vector.load %arg0[%c1, %c0_11] : memref<648x4xf32, #tpu.memory_space<vmem>>, vector<610x4xf32>
    %c2 = arith.constant 2 : index
    %c0_12 = arith.constant 0 : index
    %10 = vector.load %arg0[%c2, %c0_12] : memref<648x4xf32, #tpu.memory_space<vmem>>, vector<610x4xf32>
    %c18 = arith.constant 18 : index
    %c0_13 = arith.constant 0 : index
    %11 = vector.load %arg0[%c18, %c0_13] : memref<648x4xf32, #tpu.memory_space<vmem>>, vector<610x4xf32>
    %c19 = arith.constant 19 : index
    %c0_14 = arith.constant 0 : index
    %12 = vector.load %arg0[%c19, %c0_14] : memref<648x4xf32, #tpu.memory_space<vmem>>, vector<610x4xf32>
    %c20 = arith.constant 20 : index
    %c0_15 = arith.constant 0 : index
    %13 = vector.load %arg0[%c20, %c0_15] : memref<648x4xf32, #tpu.memory_space<vmem>>, vector<610x4xf32>
    %c36 = arith.constant 36 : index
    %c0_16 = arith.constant 0 : index
    %14 = vector.load %arg0[%c36, %c0_16] : memref<648x4xf32, #tpu.memory_space<vmem>>, vector<610x4xf32>
    %c37 = arith.constant 37 : index
    %c0_17 = arith.constant 0 : index
    %15 = vector.load %arg0[%c37, %c0_17] : memref<648x4xf32, #tpu.memory_space<vmem>>, vector<610x4xf32>
    %c38 = arith.constant 38 : index
    %c0_18 = arith.constant 0 : index
    %16 = vector.load %arg0[%c38, %c0_18] : memref<648x4xf32, #tpu.memory_space<vmem>>, vector<610x4xf32>
    %17 = tpu.concatenate %8, %9, %10, %11, %12, %13, %14, %15, %16 in 1 : vector<610x4xf32>, vector<610x4xf32>, vector<610x4xf32>, vector<610x4xf32>, vector<610x4xf32>, vector<610x4xf32>, vector<610x4xf32>, vector<610x4xf32>, vector<610x4xf32> -> vector<610x36xf32>
    %18 = arith.truncf %17 : vector<610x36xf32> to vector<610x36xbf16>
    %c0_19 = arith.constant 0 : index
    %c0_20 = arith.constant 0 : index
    %19 = vector.load %arg1[%c0_19, %c0_20] : memref<36x32xbf16, #tpu.memory_space<vmem>>, vector<36x32xbf16>
    %cst_21 = arith.constant dense<0.000000e+00> : vector<610x32xf32>
    %20 = tpu.matmul %18, %19, %cst_21 {dimension_numbers = #tpu.dot_dimension_numbers<[1], [0], [0], [1], [0, 0, 1, 1], [], []>} : vector<610x36xbf16>, vector<36x32xbf16>, vector<610x32xf32> -> vector<610x32xf32>
    %c0_22 = arith.constant 0 : index
    %c0_23 = arith.constant 0 : index
    %21 = vector.load %arg5[%c0_22, %c0_23] : memref<610x1xf32, #tpu.memory_space<vmem>>, vector<610x1xf32>
    %22 = vector.broadcast %21 : vector<610x1xf32> to vector<610x32xf32>
    %23 = arith.mulf %20, %22 : vector<610x32xf32>
    %cst_24 = arith.constant dense<0.000000e+00> : vector<32xf32>
    %24 = vector.multi_reduction <add>, %23, %cst_24 [0] : vector<610x32xf32> to vector<32xf32>
    %25 = vector.shape_cast %24 : vector<32xf32> to vector<1x32xf32>
    %cst_25 = arith.constant 0.001953125 : f32
    %26 = vector.broadcast %cst_25 : f32 to vector<1x32xf32>
    %27 = arith.mulf %25, %26 : vector<1x32xf32>
    %28 = vector.broadcast %27 : vector<1x32xf32> to vector<610x32xf32>
    %29 = arith.subf %20, %28 : vector<610x32xf32>
    %30 = arith.mulf %29, %29 : vector<610x32xf32>
    %31 = vector.broadcast %21 : vector<610x1xf32> to vector<610x32xf32>
    %32 = arith.mulf %30, %31 : vector<610x32xf32>
    %cst_26 = arith.constant dense<0.000000e+00> : vector<32xf32>
    %33 = vector.multi_reduction <add>, %32, %cst_26 [0] : vector<610x32xf32> to vector<32xf32>
    %34 = vector.shape_cast %33 : vector<32xf32> to vector<1x32xf32>
    %cst_27 = arith.constant 0.001953125 : f32
    %35 = vector.broadcast %cst_27 : f32 to vector<1x32xf32>
    %36 = arith.mulf %34, %35 : vector<1x32xf32>
    %c0_28 = arith.constant 0 : index
    %c0_29 = arith.constant 0 : index
    %c0_30 = arith.constant 0 : index
    %37 = vector.load %arg3[%c0_28, %c0_29, %c0_30] : memref<4x1x32xf32, #tpu.memory_space<vmem>>, vector<1x1x32xf32>
    %38 = vector.shape_cast %37 : vector<1x1x32xf32> to vector<1x32xf32>
    %cst_31 = arith.constant 9.99999974E-6 : f32
    %39 = vector.broadcast %cst_31 : f32 to vector<1x32xf32>
    %40 = arith.addf %36, %39 : vector<1x32xf32>
    %41 = math.rsqrt %40 : vector<1x32xf32>
    %42 = arith.mulf %38, %41 : vector<1x32xf32>
    %c0_32 = arith.constant 0 : index
    %c0_33 = arith.constant 0 : index
    %c0_34 = arith.constant 0 : index
    %43 = vector.load %arg4[%c0_32, %c0_33, %c0_34] : memref<4x1x32xf32, #tpu.memory_space<vmem>>, vector<1x1x32xf32>
    %44 = vector.shape_cast %43 : vector<1x1x32xf32> to vector<1x32xf32>
    %45 = arith.mulf %27, %42 : vector<1x32xf32>
    %46 = arith.subf %44, %45 : vector<1x32xf32>
    %47 = vector.shape_cast %42 : vector<1x32xf32> to vector<1x32xf32>
    %48 = vector.broadcast %47 : vector<1x32xf32> to vector<8x32xf32>
    %49 = vector.shape_cast %46 : vector<1x32xf32> to vector<1x32xf32>
    %50 = vector.broadcast %49 : vector<1x32xf32> to vector<8x32xf32>
    %cst_35 = arith.constant 0.000000e+00 : f32
    %51 = vector.broadcast %cst_35 : f32 to vector<8x32xf32>
    %52 = arith.cmpf oge, %48, %51 : vector<8x32xf32>
    %c0_36 = arith.constant 0 : index
    %c0_37 = arith.constant 0 : index
    %53 = vector.load %arg15[%c0_36, %c0_37] : memref<610x32xf32, #tpu.memory_space<vmem>>, vector<610x32xf32>
    tpu.vector_store %arg15[%c0_36, %c0_37], %20 {strides = array<i32>} : memref<610x32xf32, #tpu.memory_space<vmem>>, vector<610x32xf32>,
    %c0_38 = arith.constant 0 : index
    %c0_39 = arith.constant 0 : index
    %54 = tpu.strided_load %arg15[%c0_38, %c0_39] {strides = array<i32: 2, 1>} : memref<610x32xf32, #tpu.memory_space<vmem>>, vector<8x32xf32>
    %c1_40 = arith.constant 1 : index
    %c0_41 = arith.constant 0 : index
    %55 = tpu.strided_load %arg15[%c1_40, %c0_41] {strides = array<i32: 2, 1>} : memref<610x32xf32, #tpu.memory_space<vmem>>, vector<8x32xf32>
    %c18_42 = arith.constant 18 : index
    %c0_43 = arith.constant 0 : index
    %56 = tpu.strided_load %arg15[%c18_42, %c0_43] {strides = array<i32: 2, 1>} : memref<610x32xf32, #tpu.memory_space<vmem>>, vector<8x32xf32>
    %c19_44 = arith.constant 19 : index
    %c0_45 = arith.constant 0 : index
    %57 = tpu.strided_load %arg15[%c19_44, %c0_45] {strides = array<i32: 2, 1>} : memref<610x32xf32, #tpu.memory_space<vmem>>, vector<8x32xf32>
    %58 = arith.maximumf %54, %55 : vector<8x32xf32>
    %59 = arith.maximumf %56, %57 : vector<8x32xf32>
    %60 = arith.maximumf %58, %59 : vector<8x32xf32>
    %61 = arith.minimumf %54, %55 : vector<8x32xf32>
    %62 = arith.minimumf %56, %57 : vector<8x32xf32>
    %63 = arith.minimumf %61, %62 : vector<8x32xf32>
    %64 = arith.select %52, %60, %63 : vector<8x32xi1>, vector<8x32xf32>
    %65 = arith.mulf %64, %48 : vector<8x32xf32>
    %66 = arith.addf %65, %50 : vector<8x32xf32>
    %cst_46 = arith.constant 0.000000e+00 : f32
    %67 = vector.broadcast %cst_46 : f32 to vector<8x32xf32>
    %68 = arith.maximumf %66, %67 : vector<8x32xf32>
    %c11 = arith.constant 11 : index
    %c0_47 = arith.constant 0 : index
    %69 = vector.load %arg12[%c11, %c0_47] : memref<200x32xf32, #tpu.memory_space<vmem>>, vector<8x32xf32>
    tpu.vector_store %arg12[%c11, %c0_47], %68 {strides = array<i32>} : memref<200x32xf32, #tpu.memory_space<vmem>>, vector<8x32xf32>,
    %c36_48 = arith.constant 36 : index
    %c0_49 = arith.constant 0 : index
    %70 = tpu.strided_load %arg15[%c36_48, %c0_49] {strides = array<i32: 2, 1>} : memref<610x32xf32, #tpu.memory_space<vmem>>, vector<8x32xf32>
    %c37_50 = arith.constant 37 : index
    %c0_51 = arith.constant 0 : index
    %71 = tpu.strided_load %arg15[%c37_50, %c0_51] {strides = array<i32: 2, 1>} : memref<610x32xf32, #tpu.memory_space<vmem>>, vector<8x32xf32>
    %c54 = arith.constant 54 : index
    %c0_52 = arith.constant 0 : index
    %72 = tpu.strided_load %arg15[%c54, %c0_52] {strides = array<i32: 2, 1>} : memref<610x32xf32, #tpu.memory_space<vmem>>, vector<8x32xf32>
    %c55 = arith.constant 55 : index
    %c0_53 = arith.constant 0 : index
    %73 = tpu.strided_load %arg15[%c55, %c0_53] {strides = array<i32: 2, 1>} : memref<610x32xf32, #tpu.memory_space<vmem>>, vector<8x32xf32>
    %74 = arith.maximumf %70, %71 : vector<8x32xf32>
    %75 = arith.maximumf %72, %73 : vector<8x32xf32>
    %76 = arith.maximumf %74, %75 : vector<8x32xf32>
    %77 = arith.minimumf %70, %71 : vector<8x32xf32>
    %78 = arith.minimumf %72, %73 : vector<8x32xf32>
    %79 = arith.minimumf %77, %78 : vector<8x32xf32>
    %80 = arith.select %52, %76, %79 : vector<8x32xi1>, vector<8x32xf32>
    %81 = arith.mulf %80, %48 : vector<8x32xf32>
    %82 = arith.addf %81, %50 : vector<8x32xf32>
    %cst_54 = arith.constant 0.000000e+00 : f32
    %83 = vector.broadcast %cst_54 : f32 to vector<8x32xf32>
    %84 = arith.maximumf %82, %83 : vector<8x32xf32>
    %c21 = arith.constant 21 : index
    %c0_55 = arith.constant 0 : index
    %85 = vector.load %arg12[%c21, %c0_55] : memref<200x32xf32, #tpu.memory_space<vmem>>, vector<8x32xf32>
    tpu.vector_store %arg12[%c21, %c0_55], %84 {strides = array<i32>} : memref<200x32xf32, #tpu.memory_space<vmem>>, vector<8x32xf32>,
    %c72 = arith.constant 72 : index
    %c0_56 = arith.constant 0 : index
    %86 = tpu.strided_load %arg15[%c72, %c0_56] {strides = array<i32: 2, 1>} : memref<610x32xf32, #tpu.memory_space<vmem>>, vector<8x32xf32>
    %c73 = arith.constant 73 : index
    %c0_57 = arith.constant 0 : index
    %87 = tpu.strided_load %arg15[%c73, %c0_57] {strides = array<i32: 2, 1>} : memref<610x32xf32, #tpu.memory_space<vmem>>, vector<8x32xf32>
    %c90 = arith.constant 90 : index
    %c0_58 = arith.constant 0 : index
    %88 = tpu.strided_load %arg15[%c90, %c0_58] {strides = array<i32: 2, 1>} : memref<610x32xf32, #tpu.memory_space<vmem>>, vector<8x32xf32>
    %c91 = arith.constant 91 : index
    %c0_59 = arith.constant 0 : index
    %89 = tpu.strided_load %arg15[%c91, %c0_59] {strides = array<i32: 2, 1>} : memref<610x32xf32, #tpu.memory_space<vmem>>, vector<8x32xf32>
    %90 = arith.maximumf %86, %87 : vector<8x32xf32>
    %91 = arith.maximumf %88, %89 : vector<8x32xf32>
    %92 = arith.maximumf %90, %91 : vector<8x32xf32>
    %93 = arith.minimumf %86, %87 : vector<8x32xf32>
    %94 = arith.minimumf %88, %89 : vector<8x32xf32>
    %95 = arith.minimumf %93, %94 : vector<8x32xf32>
    %96 = arith.select %52, %92, %95 : vector<8x32xi1>, vector<8x32xf32>
    %97 = arith.mulf %96, %48 : vector<8x32xf32>
    %98 = arith.addf %97, %50 : vector<8x32xf32>
    %cst_60 = arith.constant 0.000000e+00 : f32
    %99 = vector.broadcast %cst_60 : f32 to vector<8x32xf32>
    %100 = arith.maximumf %98, %99 : vector<8x32xf32>
    %c31 = arith.constant 31 : index
    %c0_61 = arith.constant 0 : index
    %101 = vector.load %arg12[%c31, %c0_61] : memref<200x32xf32, #tpu.memory_space<vmem>>, vector<8x32xf32>
    tpu.vector_store %arg12[%c31, %c0_61], %100 {strides = array<i32>} : memref<200x32xf32, #tpu.memory_space<vmem>>, vector<8x32xf32>,
    %c108 = arith.constant 108 : index
    %c0_62 = arith.constant 0 : index
    %102 = tpu.strided_load %arg15[%c108, %c0_62] {strides = array<i32: 2, 1>} : memref<610x32xf32, #tpu.memory_space<vmem>>, vector<8x32xf32>
    %c109 = arith.constant 109 : index
    %c0_63 = arith.constant 0 : index
    %103 = tpu.strided_load %arg15[%c109, %c0_63] {strides = array<i32: 2, 1>} : memref<610x32xf32, #tpu.memory_space<vmem>>, vector<8x32xf32>
    %c126 = arith.constant 126 : index
    %c0_64 = arith.constant 0 : index
    %104 = tpu.strided_load %arg15[%c126, %c0_64] {strides = array<i32: 2, 1>} : memref<610x32xf32, #tpu.memory_space<vmem>>, vector<8x32xf32>
    %c127 = arith.constant 127 : index
    %c0_65 = arith.constant 0 : index
    %105 = tpu.strided_load %arg15[%c127, %c0_65] {strides = array<i32: 2, 1>} : memref<610x32xf32, #tpu.memory_space<vmem>>, vector<8x32xf32>
    %106 = arith.maximumf %102, %103 : vector<8x32xf32>
    %107 = arith.maximumf %104, %105 : vector<8x32xf32>
    %108 = arith.maximumf %106, %107 : vector<8x32xf32>
    %109 = arith.minimumf %102, %103 : vector<8x32xf32>
    %110 = arith.minimumf %104, %105 : vector<8x32xf32>
    %111 = arith.minimumf %109, %110 : vector<8x32xf32>
    %112 = arith.select %52, %108, %111 : vector<8x32xi1>, vector<8x32xf32>
    %113 = arith.mulf %112, %48 : vector<8x32xf32>
    %114 = arith.addf %113, %50 : vector<8x32xf32>
    %cst_66 = arith.constant 0.000000e+00 : f32
    %115 = vector.broadcast %cst_66 : f32 to vector<8x32xf32>
    %116 = arith.maximumf %114, %115 : vector<8x32xf32>
    %c41 = arith.constant 41 : index
    %c0_67 = arith.constant 0 : index
    %117 = vector.load %arg12[%c41, %c0_67] : memref<200x32xf32, #tpu.memory_space<vmem>>, vector<8x32xf32>
    tpu.vector_store %arg12[%c41, %c0_67], %116 {strides = array<i32>} : memref<200x32xf32, #tpu.memory_space<vmem>>, vector<8x32xf32>,
    %c144 = arith.constant 144 : index
    %c0_68 = arith.constant 0 : index
    %118 = tpu.strided_load %arg15[%c144, %c0_68] {strides = array<i32: 2, 1>} : memref<610x32xf32, #tpu.memory_space<vmem>>, vector<8x32xf32>
    %c145 = arith.constant 145 : index
    %c0_69 = arith.constant 0 : index
    %119 = tpu.strided_load %arg15[%c145, %c0_69] {strides = array<i32: 2, 1>} : memref<610x32xf32, #tpu.memory_space<vmem>>, vector<8x32xf32>
    %c162 = arith.constant 162 : index
    %c0_70 = arith.constant 0 : index
    %120 = tpu.strided_load %arg15[%c162, %c0_70] {strides = array<i32: 2, 1>} : memref<610x32xf32, #tpu.memory_space<vmem>>, vector<8x32xf32>
    %c163 = arith.constant 163 : index
    %c0_71 = arith.constant 0 : index
    %121 = tpu.strided_load %arg15[%c163, %c0_71] {strides = array<i32: 2, 1>} : memref<610x32xf32, #tpu.memory_space<vmem>>, vector<8x32xf32>
    %122 = arith.maximumf %118, %119 : vector<8x32xf32>
    %123 = arith.maximumf %120, %121 : vector<8x32xf32>
    %124 = arith.maximumf %122, %123 : vector<8x32xf32>
    %125 = arith.minimumf %118, %119 : vector<8x32xf32>
    %126 = arith.minimumf %120, %121 : vector<8x32xf32>
    %127 = arith.minimumf %125, %126 : vector<8x32xf32>
    %128 = arith.select %52, %124, %127 : vector<8x32xi1>, vector<8x32xf32>
    %129 = arith.mulf %128, %48 : vector<8x32xf32>
    %130 = arith.addf %129, %50 : vector<8x32xf32>
    %cst_72 = arith.constant 0.000000e+00 : f32
    %131 = vector.broadcast %cst_72 : f32 to vector<8x32xf32>
    %132 = arith.maximumf %130, %131 : vector<8x32xf32>
    %c51 = arith.constant 51 : index
    %c0_73 = arith.constant 0 : index
    %133 = vector.load %arg12[%c51, %c0_73] : memref<200x32xf32, #tpu.memory_space<vmem>>, vector<8x32xf32>
    tpu.vector_store %arg12[%c51, %c0_73], %132 {strides = array<i32>} : memref<200x32xf32, #tpu.memory_space<vmem>>, vector<8x32xf32>,
    %c180 = arith.constant 180 : index
    %c0_74 = arith.constant 0 : index
    %134 = tpu.strided_load %arg15[%c180, %c0_74] {strides = array<i32: 2, 1>} : memref<610x32xf32, #tpu.memory_space<vmem>>, vector<8x32xf32>
    %c181 = arith.constant 181 : index
    %c0_75 = arith.constant 0 : index
    %135 = tpu.strided_load %arg15[%c181, %c0_75] {strides = array<i32: 2, 1>} : memref<610x32xf32, #tpu.memory_space<vmem>>, vector<8x32xf32>
    %c198 = arith.constant 198 : index
    %c0_76 = arith.constant 0 : index
    %136 = tpu.strided_load %arg15[%c198, %c0_76] {strides = array<i32: 2, 1>} : memref<610x32xf32, #tpu.memory_space<vmem>>, vector<8x32xf32>
    %c199 = arith.constant 199 : index
    %c0_77 = arith.constant 0 : index
    %137 = tpu.strided_load %arg15[%c199, %c0_77] {strides = array<i32: 2, 1>} : memref<610x32xf32, #tpu.memory_space<vmem>>, vector<8x32xf32>
    %138 = arith.maximumf %134, %135 : vector<8x32xf32>
    %139 = arith.maximumf %136, %137 : vector<8x32xf32>
    %140 = arith.maximumf %138, %139 : vector<8x32xf32>
    %141 = arith.minimumf %134, %135 : vector<8x32xf32>
    %142 = arith.minimumf %136, %137 : vector<8x32xf32>
    %143 = arith.minimumf %141, %142 : vector<8x32xf32>
    %144 = arith.select %52, %140, %143 : vector<8x32xi1>, vector<8x32xf32>
    %145 = arith.mulf %144, %48 : vector<8x32xf32>
    %146 = arith.addf %145, %50 : vector<8x32xf32>
    %cst_78 = arith.constant 0.000000e+00 : f32
    %147 = vector.broadcast %cst_78 : f32 to vector<8x32xf32>
    %148 = arith.maximumf %146, %147 : vector<8x32xf32>
    %c61 = arith.constant 61 : index
    %c0_79 = arith.constant 0 : index
    %149 = vector.load %arg12[%c61, %c0_79] : memref<200x32xf32, #tpu.memory_space<vmem>>, vector<8x32xf32>
    tpu.vector_store %arg12[%c61, %c0_79], %148 {strides = array<i32>} : memref<200x32xf32, #tpu.memory_space<vmem>>, vector<8x32xf32>,
    %c216 = arith.constant 216 : index
    %c0_80 = arith.constant 0 : index
    %150 = tpu.strided_load %arg15[%c216, %c0_80] {strides = array<i32: 2, 1>} : memref<610x32xf32, #tpu.memory_space<vmem>>, vector<8x32xf32>
    %c217 = arith.constant 217 : index
    %c0_81 = arith.constant 0 : index
    %151 = tpu.strided_load %arg15[%c217, %c0_81] {strides = array<i32: 2, 1>} : memref<610x32xf32, #tpu.memory_space<vmem>>, vector<8x32xf32>
    %c234 = arith.constant 234 : index
    %c0_82 = arith.constant 0 : index
    %152 = tpu.strided_load %arg15[%c234, %c0_82] {strides = array<i32: 2, 1>} : memref<610x32xf32, #tpu.memory_space<vmem>>, vector<8x32xf32>
    %c235 = arith.constant 235 : index
    %c0_83 = arith.constant 0 : index
    %153 = tpu.strided_load %arg15[%c235, %c0_83] {strides = array<i32: 2, 1>} : memref<610x32xf32, #tpu.memory_space<vmem>>, vector<8x32xf32>
    %154 = arith.maximumf %150, %151 : vector<8x32xf32>
    %155 = arith.maximumf %152, %153 : vector<8x32xf32>
    %156 = arith.maximumf %154, %155 : vector<8x32xf32>
    %157 = arith.minimumf %150, %151 : vector<8x32xf32>
    %158 = arith.minimumf %152, %153 : vector<8x32xf32>
    %159 = arith.minimumf %157, %158 : vector<8x32xf32>
    %160 = arith.select %52, %156, %159 : vector<8x32xi1>, vector<8x32xf32>
    %161 = arith.mulf %160, %48 : vector<8x32xf32>
    %162 = arith.addf %161, %50 : vector<8x32xf32>
    %cst_84 = arith.constant 0.000000e+00 : f32
    %163 = vector.broadcast %cst_84 : f32 to vector<8x32xf32>
    %164 = arith.maximumf %162, %163 : vector<8x32xf32>
    %c71 = arith.constant 71 : index
    %c0_85 = arith.constant 0 : index
    %165 = vector.load %arg12[%c71, %c0_85] : memref<200x32xf32, #tpu.memory_space<vmem>>, vector<8x32xf32>
    tpu.vector_store %arg12[%c71, %c0_85], %164 {strides = array<i32>} : memref<200x32xf32, #tpu.memory_space<vmem>>, vector<8x32xf32>,
    %c252 = arith.constant 252 : index
    %c0_86 = arith.constant 0 : index
    %166 = tpu.strided_load %arg15[%c252, %c0_86] {strides = array<i32: 2, 1>} : memref<610x32xf32, #tpu.memory_space<vmem>>, vector<8x32xf32>
    %c253 = arith.constant 253 : index
    %c0_87 = arith.constant 0 : index
    %167 = tpu.strided_load %arg15[%c253, %c0_87] {strides = array<i32: 2, 1>} : memref<610x32xf32, #tpu.memory_space<vmem>>, vector<8x32xf32>
    %c270 = arith.constant 270 : index
    %c0_88 = arith.constant 0 : index
    %168 = tpu.strided_load %arg15[%c270, %c0_88] {strides = array<i32: 2, 1>} : memref<610x32xf32, #tpu.memory_space<vmem>>, vector<8x32xf32>
    %c271 = arith.constant 271 : index
    %c0_89 = arith.constant 0 : index
    %169 = tpu.strided_load %arg15[%c271, %c0_89] {strides = array<i32: 2, 1>} : memref<610x32xf32, #tpu.memory_space<vmem>>, vector<8x32xf32>
    %170 = arith.maximumf %166, %167 : vector<8x32xf32>
    %171 = arith.maximumf %168, %169 : vector<8x32xf32>
    %172 = arith.maximumf %170, %171 : vector<8x32xf32>
    %173 = arith.minimumf %166, %167 : vector<8x32xf32>
    %174 = arith.minimumf %168, %169 : vector<8x32xf32>
    %175 = arith.minimumf %173, %174 : vector<8x32xf32>
    %176 = arith.select %52, %172, %175 : vector<8x32xi1>, vector<8x32xf32>
    %177 = arith.mulf %176, %48 : vector<8x32xf32>
    %178 = arith.addf %177, %50 : vector<8x32xf32>
    %cst_90 = arith.constant 0.000000e+00 : f32
    %179 = vector.broadcast %cst_90 : f32 to vector<8x32xf32>
    %180 = arith.maximumf %178, %179 : vector<8x32xf32>
    %c81 = arith.constant 81 : index
    %c0_91 = arith.constant 0 : index
    %181 = vector.load %arg12[%c81, %c0_91] : memref<200x32xf32, #tpu.memory_space<vmem>>, vector<8x32xf32>
    tpu.vector_store %arg12[%c81, %c0_91], %180 {strides = array<i32>} : memref<200x32xf32, #tpu.memory_space<vmem>>, vector<8x32xf32>,
    %c324 = arith.constant 324 : index
    %c0_92 = arith.constant 0 : index
    %182 = tpu.strided_load %arg15[%c324, %c0_92] {strides = array<i32: 2, 1>} : memref<610x32xf32, #tpu.memory_space<vmem>>, vector<8x32xf32>
    %c325 = arith.constant 325 : index
    %c0_93 = arith.constant 0 : index
    %183 = tpu.strided_load %arg15[%c325, %c0_93] {strides = array<i32: 2, 1>} : memref<610x32xf32, #tpu.memory_space<vmem>>, vector<8x32xf32>
    %c342 = arith.constant 342 : index
    %c0_94 = arith.constant 0 : index
    %184 = tpu.strided_load %arg15[%c342, %c0_94] {strides = array<i32: 2, 1>} : memref<610x32xf32, #tpu.memory_space<vmem>>, vector<8x32xf32>
    %c343 = arith.constant 343 : index
    %c0_95 = arith.constant 0 : index
    %185 = tpu.strided_load %arg15[%c343, %c0_95] {strides = array<i32: 2, 1>} : memref<610x32xf32, #tpu.memory_space<vmem>>, vector<8x32xf32>
    %186 = arith.maximumf %182, %183 : vector<8x32xf32>
    %187 = arith.maximumf %184, %185 : vector<8x32xf32>
    %188 = arith.maximumf %186, %187 : vector<8x32xf32>
    %189 = arith.minimumf %182, %183 : vector<8x32xf32>
    %190 = arith.minimumf %184, %185 : vector<8x32xf32>
    %191 = arith.minimumf %189, %190 : vector<8x32xf32>
    %192 = arith.select %52, %188, %191 : vector<8x32xi1>, vector<8x32xf32>
    %193 = arith.mulf %192, %48 : vector<8x32xf32>
    %194 = arith.addf %193, %50 : vector<8x32xf32>
    %cst_96 = arith.constant 0.000000e+00 : f32
    %195 = vector.broadcast %cst_96 : f32 to vector<8x32xf32>
    %196 = arith.maximumf %194, %195 : vector<8x32xf32>
    %c111 = arith.constant 111 : index
    %c0_97 = arith.constant 0 : index
    %197 = vector.load %arg12[%c111, %c0_97] : memref<200x32xf32, #tpu.memory_space<vmem>>, vector<8x32xf32>
    tpu.vector_store %arg12[%c111, %c0_97], %196 {strides = array<i32>} : memref<200x32xf32, #tpu.memory_space<vmem>>, vector<8x32xf32>,
    %c360 = arith.constant 360 : index
    %c0_98 = arith.constant 0 : index
    %198 = tpu.strided_load %arg15[%c360, %c0_98] {strides = array<i32: 2, 1>} : memref<610x32xf32, #tpu.memory_space<vmem>>, vector<8x32xf32>
    %c361 = arith.constant 361 : index
    %c0_99 = arith.constant 0 : index
    %199 = tpu.strided_load %arg15[%c361, %c0_99] {strides = array<i32: 2, 1>} : memref<610x32xf32, #tpu.memory_space<vmem>>, vector<8x32xf32>
    %c378 = arith.constant 378 : index
    %c0_100 = arith.constant 0 : index
    %200 = tpu.strided_load %arg15[%c378, %c0_100] {strides = array<i32: 2, 1>} : memref<610x32xf32, #tpu.memory_space<vmem>>, vector<8x32xf32>
    %c379 = arith.constant 379 : index
    %c0_101 = arith.constant 0 : index
    %201 = tpu.strided_load %arg15[%c379, %c0_101] {strides = array<i32: 2, 1>} : memref<610x32xf32, #tpu.memory_space<vmem>>, vector<8x32xf32>
    %202 = arith.maximumf %198, %199 : vector<8x32xf32>
    %203 = arith.maximumf %200, %201 : vector<8x32xf32>
    %204 = arith.maximumf %202, %203 : vector<8x32xf32>
    %205 = arith.minimumf %198, %199 : vector<8x32xf32>
    %206 = arith.minimumf %200, %201 : vector<8x32xf32>
    %207 = arith.minimumf %205, %206 : vector<8x32xf32>
    %208 = arith.select %52, %204, %207 : vector<8x32xi1>, vector<8x32xf32>
    %209 = arith.mulf %208, %48 : vector<8x32xf32>
    %210 = arith.addf %209, %50 : vector<8x32xf32>
    %cst_102 = arith.constant 0.000000e+00 : f32
    %211 = vector.broadcast %cst_102 : f32 to vector<8x32xf32>
    %212 = arith.maximumf %210, %211 : vector<8x32xf32>
    %c121 = arith.constant 121 : index
    %c0_103 = arith.constant 0 : index
    %213 = vector.load %arg12[%c121, %c0_103] : memref<200x32xf32, #tpu.memory_space<vmem>>, vector<8x32xf32>
    tpu.vector_store %arg12[%c121, %c0_103], %212 {strides = array<i32>} : memref<200x32xf32, #tpu.memory_space<vmem>>, vector<8x32xf32>,
    %c396 = arith.constant 396 : index
    %c0_104 = arith.constant 0 : index
    %214 = tpu.strided_load %arg15[%c396, %c0_104] {strides = array<i32: 2, 1>} : memref<610x32xf32, #tpu.memory_space<vmem>>, vector<8x32xf32>
    %c397 = arith.constant 397 : index
    %c0_105 = arith.constant 0 : index
    %215 = tpu.strided_load %arg15[%c397, %c0_105] {strides = array<i32: 2, 1>} : memref<610x32xf32, #tpu.memory_space<vmem>>, vector<8x32xf32>
    %c414 = arith.constant 414 : index
    %c0_106 = arith.constant 0 : index
    %216 = tpu.strided_load %arg15[%c414, %c0_106] {strides = array<i32: 2, 1>} : memref<610x32xf32, #tpu.memory_space<vmem>>, vector<8x32xf32>
    %c415 = arith.constant 415 : index
    %c0_107 = arith.constant 0 : index
    %217 = tpu.strided_load %arg15[%c415, %c0_107] {strides = array<i32: 2, 1>} : memref<610x32xf32, #tpu.memory_space<vmem>>, vector<8x32xf32>
    %218 = arith.maximumf %214, %215 : vector<8x32xf32>
    %219 = arith.maximumf %216, %217 : vector<8x32xf32>
    %220 = arith.maximumf %218, %219 : vector<8x32xf32>
    %221 = arith.minimumf %214, %215 : vector<8x32xf32>
    %222 = arith.minimumf %216, %217 : vector<8x32xf32>
    %223 = arith.minimumf %221, %222 : vector<8x32xf32>
    %224 = arith.select %52, %220, %223 : vector<8x32xi1>, vector<8x32xf32>
    %225 = arith.mulf %224, %48 : vector<8x32xf32>
    %226 = arith.addf %225, %50 : vector<8x32xf32>
    %cst_108 = arith.constant 0.000000e+00 : f32
    %227 = vector.broadcast %cst_108 : f32 to vector<8x32xf32>
    %228 = arith.maximumf %226, %227 : vector<8x32xf32>
    %c131 = arith.constant 131 : index
    %c0_109 = arith.constant 0 : index
    %229 = vector.load %arg12[%c131, %c0_109] : memref<200x32xf32, #tpu.memory_space<vmem>>, vector<8x32xf32>
    tpu.vector_store %arg12[%c131, %c0_109], %228 {strides = array<i32>} : memref<200x32xf32, #tpu.memory_space<vmem>>, vector<8x32xf32>,
    %c432 = arith.constant 432 : index
    %c0_110 = arith.constant 0 : index
    %230 = tpu.strided_load %arg15[%c432, %c0_110] {strides = array<i32: 2, 1>} : memref<610x32xf32, #tpu.memory_space<vmem>>, vector<8x32xf32>
    %c433 = arith.constant 433 : index
    %c0_111 = arith.constant 0 : index
    %231 = tpu.strided_load %arg15[%c433, %c0_111] {strides = array<i32: 2, 1>} : memref<610x32xf32, #tpu.memory_space<vmem>>, vector<8x32xf32>
    %c450 = arith.constant 450 : index
    %c0_112 = arith.constant 0 : index
    %232 = tpu.strided_load %arg15[%c450, %c0_112] {strides = array<i32: 2, 1>} : memref<610x32xf32, #tpu.memory_space<vmem>>, vector<8x32xf32>
    %c451 = arith.constant 451 : index
    %c0_113 = arith.constant 0 : index
    %233 = tpu.strided_load %arg15[%c451, %c0_113] {strides = array<i32: 2, 1>} : memref<610x32xf32, #tpu.memory_space<vmem>>, vector<8x32xf32>
    %234 = arith.maximumf %230, %231 : vector<8x32xf32>
    %235 = arith.maximumf %232, %233 : vector<8x32xf32>
    %236 = arith.maximumf %234, %235 : vector<8x32xf32>
    %237 = arith.minimumf %230, %231 : vector<8x32xf32>
    %238 = arith.minimumf %232, %233 : vector<8x32xf32>
    %239 = arith.minimumf %237, %238 : vector<8x32xf32>
    %240 = arith.select %52, %236, %239 : vector<8x32xi1>, vector<8x32xf32>
    %241 = arith.mulf %240, %48 : vector<8x32xf32>
    %242 = arith.addf %241, %50 : vector<8x32xf32>
    %cst_114 = arith.constant 0.000000e+00 : f32
    %243 = vector.broadcast %cst_114 : f32 to vector<8x32xf32>
    %244 = arith.maximumf %242, %243 : vector<8x32xf32>
    %c141 = arith.constant 141 : index
    %c0_115 = arith.constant 0 : index
    %245 = vector.load %arg12[%c141, %c0_115] : memref<200x32xf32, #tpu.memory_space<vmem>>, vector<8x32xf32>
    tpu.vector_store %arg12[%c141, %c0_115], %244 {strides = array<i32>} : memref<200x32xf32, #tpu.memory_space<vmem>>, vector<8x32xf32>,
    %c468 = arith.constant 468 : index
    %c0_116 = arith.constant 0 : index
    %246 = tpu.strided_load %arg15[%c468, %c0_116] {strides = array<i32: 2, 1>} : memref<610x32xf32, #tpu.memory_space<vmem>>, vector<8x32xf32>
    %c469 = arith.constant 469 : index
    %c0_117 = arith.constant 0 : index
    %247 = tpu.strided_load %arg15[%c469, %c0_117] {strides = array<i32: 2, 1>} : memref<610x32xf32, #tpu.memory_space<vmem>>, vector<8x32xf32>
    %c486 = arith.constant 486 : index
    %c0_118 = arith.constant 0 : index
    %248 = tpu.strided_load %arg15[%c486, %c0_118] {strides = array<i32: 2, 1>} : memref<610x32xf32, #tpu.memory_space<vmem>>, vector<8x32xf32>
    %c487 = arith.constant 487 : index
    %c0_119 = arith.constant 0 : index
    %249 = tpu.strided_load %arg15[%c487, %c0_119] {strides = array<i32: 2, 1>} : memref<610x32xf32, #tpu.memory_space<vmem>>, vector<8x32xf32>
    %250 = arith.maximumf %246, %247 : vector<8x32xf32>
    %251 = arith.maximumf %248, %249 : vector<8x32xf32>
    %252 = arith.maximumf %250, %251 : vector<8x32xf32>
    %253 = arith.minimumf %246, %247 : vector<8x32xf32>
    %254 = arith.minimumf %248, %249 : vector<8x32xf32>
    %255 = arith.minimumf %253, %254 : vector<8x32xf32>
    %256 = arith.select %52, %252, %255 : vector<8x32xi1>, vector<8x32xf32>
    %257 = arith.mulf %256, %48 : vector<8x32xf32>
    %258 = arith.addf %257, %50 : vector<8x32xf32>
    %cst_120 = arith.constant 0.000000e+00 : f32
    %259 = vector.broadcast %cst_120 : f32 to vector<8x32xf32>
    %260 = arith.maximumf %258, %259 : vector<8x32xf32>
    %c151 = arith.constant 151 : index
    %c0_121 = arith.constant 0 : index
    %261 = vector.load %arg12[%c151, %c0_121] : memref<200x32xf32, #tpu.memory_space<vmem>>, vector<8x32xf32>
    tpu.vector_store %arg12[%c151, %c0_121], %260 {strides = array<i32>} : memref<200x32xf32, #tpu.memory_space<vmem>>, vector<8x32xf32>,
    %c504 = arith.constant 504 : index
    %c0_122 = arith.constant 0 : index
    %262 = tpu.strided_load %arg15[%c504, %c0_122] {strides = array<i32: 2, 1>} : memref<610x32xf32, #tpu.memory_space<vmem>>, vector<8x32xf32>
    %c505 = arith.constant 505 : index
    %c0_123 = arith.constant 0 : index
    %263 = tpu.strided_load %arg15[%c505, %c0_123] {strides = array<i32: 2, 1>} : memref<610x32xf32, #tpu.memory_space<vmem>>, vector<8x32xf32>
    %c522 = arith.constant 522 : index
    %c0_124 = arith.constant 0 : index
    %264 = tpu.strided_load %arg15[%c522, %c0_124] {strides = array<i32: 2, 1>} : memref<610x32xf32, #tpu.memory_space<vmem>>, vector<8x32xf32>
    %c523 = arith.constant 523 : index
    %c0_125 = arith.constant 0 : index
    %265 = tpu.strided_load %arg15[%c523, %c0_125] {strides = array<i32: 2, 1>} : memref<610x32xf32, #tpu.memory_space<vmem>>, vector<8x32xf32>
    %266 = arith.maximumf %262, %263 : vector<8x32xf32>
    %267 = arith.maximumf %264, %265 : vector<8x32xf32>
    %268 = arith.maximumf %266, %267 : vector<8x32xf32>
    %269 = arith.minimumf %262, %263 : vector<8x32xf32>
    %270 = arith.minimumf %264, %265 : vector<8x32xf32>
    %271 = arith.minimumf %269, %270 : vector<8x32xf32>
    %272 = arith.select %52, %268, %271 : vector<8x32xi1>, vector<8x32xf32>
    %273 = arith.mulf %272, %48 : vector<8x32xf32>
    %274 = arith.addf %273, %50 : vector<8x32xf32>
    %cst_126 = arith.constant 0.000000e+00 : f32
    %275 = vector.broadcast %cst_126 : f32 to vector<8x32xf32>
    %276 = arith.maximumf %274, %275 : vector<8x32xf32>
    %c161 = arith.constant 161 : index
    %c0_127 = arith.constant 0 : index
    %277 = vector.load %arg12[%c161, %c0_127] : memref<200x32xf32, #tpu.memory_space<vmem>>, vector<8x32xf32>
    tpu.vector_store %arg12[%c161, %c0_127], %276 {strides = array<i32>} : memref<200x32xf32, #tpu.memory_space<vmem>>, vector<8x32xf32>,
    %c540 = arith.constant 540 : index
    %c0_128 = arith.constant 0 : index
    %278 = tpu.strided_load %arg15[%c540, %c0_128] {strides = array<i32: 2, 1>} : memref<610x32xf32, #tpu.memory_space<vmem>>, vector<8x32xf32>
    %c541 = arith.constant 541 : index
    %c0_129 = arith.constant 0 : index
    %279 = tpu.strided_load %arg15[%c541, %c0_129] {strides = array<i32: 2, 1>} : memref<610x32xf32, #tpu.memory_space<vmem>>, vector<8x32xf32>
    %c558 = arith.constant 558 : index
    %c0_130 = arith.constant 0 : index
    %280 = tpu.strided_load %arg15[%c558, %c0_130] {strides = array<i32: 2, 1>} : memref<610x32xf32, #tpu.memory_space<vmem>>, vector<8x32xf32>
    %c559 = arith.constant 559 : index
    %c0_131 = arith.constant 0 : index
    %281 = tpu.strided_load %arg15[%c559, %c0_131] {strides = array<i32: 2, 1>} : memref<610x32xf32, #tpu.memory_space<vmem>>, vector<8x32xf32>
    %282 = arith.maximumf %278, %279 : vector<8x32xf32>
    %283 = arith.maximumf %280, %281 : vector<8x32xf32>
    %284 = arith.maximumf %282, %283 : vector<8x32xf32>
    %285 = arith.minimumf %278, %279 : vector<8x32xf32>
    %286 = arith.minimumf %280, %281 : vector<8x32xf32>
    %287 = arith.minimumf %285, %286 : vector<8x32xf32>
    %288 = arith.select %52, %284, %287 : vector<8x32xi1>, vector<8x32xf32>
    %289 = arith.mulf %288, %48 : vector<8x32xf32>
    %290 = arith.addf %289, %50 : vector<8x32xf32>
    %cst_132 = arith.constant 0.000000e+00 : f32
    %291 = vector.broadcast %cst_132 : f32 to vector<8x32xf32>
    %292 = arith.maximumf %290, %291 : vector<8x32xf32>
    %c171 = arith.constant 171 : index
    %c0_133 = arith.constant 0 : index
    %293 = vector.load %arg12[%c171, %c0_133] : memref<200x32xf32, #tpu.memory_space<vmem>>, vector<8x32xf32>
    tpu.vector_store %arg12[%c171, %c0_133], %292 {strides = array<i32>} : memref<200x32xf32, #tpu.memory_space<vmem>>, vector<8x32xf32>,
    %c576 = arith.constant 576 : index
    %c0_134 = arith.constant 0 : index
    %294 = tpu.strided_load %arg15[%c576, %c0_134] {strides = array<i32: 2, 1>} : memref<610x32xf32, #tpu.memory_space<vmem>>, vector<8x32xf32>
    %c577 = arith.constant 577 : index
    %c0_135 = arith.constant 0 : index
    %295 = tpu.strided_load %arg15[%c577, %c0_135] {strides = array<i32: 2, 1>} : memref<610x32xf32, #tpu.memory_space<vmem>>, vector<8x32xf32>
    %c594 = arith.constant 594 : index
    %c0_136 = arith.constant 0 : index
    %296 = tpu.strided_load %arg15[%c594, %c0_136] {strides = array<i32: 2, 1>} : memref<610x32xf32, #tpu.memory_space<vmem>>, vector<8x32xf32>
    %c595 = arith.constant 595 : index
    %c0_137 = arith.constant 0 : index
    %297 = tpu.strided_load %arg15[%c595, %c0_137] {strides = array<i32: 2, 1>} : memref<610x32xf32, #tpu.memory_space<vmem>>, vector<8x32xf32>
    %298 = arith.maximumf %294, %295 : vector<8x32xf32>
    %299 = arith.maximumf %296, %297 : vector<8x32xf32>
    %300 = arith.maximumf %298, %299 : vector<8x32xf32>
    %301 = arith.minimumf %294, %295 : vector<8x32xf32>
    %302 = arith.minimumf %296, %297 : vector<8x32xf32>
    %303 = arith.minimumf %301, %302 : vector<8x32xf32>
    %304 = arith.select %52, %300, %303 : vector<8x32xi1>, vector<8x32xf32>
    %305 = arith.mulf %304, %48 : vector<8x32xf32>
    %306 = arith.addf %305, %50 : vector<8x32xf32>
    %cst_138 = arith.constant 0.000000e+00 : f32
    %307 = vector.broadcast %cst_138 : f32 to vector<8x32xf32>
    %308 = arith.maximumf %306, %307 : vector<8x32xf32>
    %c181_139 = arith.constant 181 : index
    %c0_140 = arith.constant 0 : index
    %309 = vector.load %arg12[%c181_139, %c0_140] : memref<200x32xf32, #tpu.memory_space<vmem>>, vector<8x32xf32>
    tpu.vector_store %arg12[%c181_139, %c0_140], %308 {strides = array<i32>} : memref<200x32xf32, #tpu.memory_space<vmem>>, vector<8x32xf32>,
    %c0_141 = arith.constant 0 : index
    %c0_142 = arith.constant 0 : index
    %310 = vector.load %arg12[%c0_141, %c0_142] : memref<200x32xf32, #tpu.memory_space<vmem>>, vector<178x32xf32>
    %c1_143 = arith.constant 1 : index
    %c0_144 = arith.constant 0 : index
    %311 = vector.load %arg12[%c1_143, %c0_144] : memref<200x32xf32, #tpu.memory_space<vmem>>, vector<178x32xf32>
    %c2_145 = arith.constant 2 : index
    %c0_146 = arith.constant 0 : index
    %312 = vector.load %arg12[%c2_145, %c0_146] : memref<200x32xf32, #tpu.memory_space<vmem>>, vector<178x32xf32>
    %c10 = arith.constant 10 : index
    %c0_147 = arith.constant 0 : index
    %313 = vector.load %arg12[%c10, %c0_147] : memref<200x32xf32, #tpu.memory_space<vmem>>, vector<178x32xf32>
    %c11_148 = arith.constant 11 : index
    %c0_149 = arith.constant 0 : index
    %314 = vector.load %arg12[%c11_148, %c0_149] : memref<200x32xf32, #tpu.memory_space<vmem>>, vector<178x32xf32>
    %c12 = arith.constant 12 : index
    %c0_150 = arith.constant 0 : index
    %315 = vector.load %arg12[%c12, %c0_150] : memref<200x32xf32, #tpu.memory_space<vmem>>, vector<178x32xf32>
    %c20_151 = arith.constant 20 : index
    %c0_152 = arith.constant 0 : index
    %316 = vector.load %arg12[%c20_151, %c0_152] : memref<200x32xf32, #tpu.memory_space<vmem>>, vector<178x32xf32>
    %c21_153 = arith.constant 21 : index
    %c0_154 = arith.constant 0 : index
    %317 = vector.load %arg12[%c21_153, %c0_154] : memref<200x32xf32, #tpu.memory_space<vmem>>, vector<178x32xf32>
    %c22 = arith.constant 22 : index
    %c0_155 = arith.constant 0 : index
    %318 = vector.load %arg12[%c22, %c0_155] : memref<200x32xf32, #tpu.memory_space<vmem>>, vector<178x32xf32>
    %319 = tpu.concatenate %310, %311, %312, %313, %314, %315, %316, %317, %318 in 1 : vector<178x32xf32>, vector<178x32xf32>, vector<178x32xf32>, vector<178x32xf32>, vector<178x32xf32>, vector<178x32xf32>, vector<178x32xf32>, vector<178x32xf32>, vector<178x32xf32> -> vector<178x288xf32>
    %320 = arith.truncf %319 : vector<178x288xf32> to vector<178x288xbf16>
    %c0_156 = arith.constant 0 : index
    %c0_157 = arith.constant 0 : index
    %c0_158 = arith.constant 0 : index
    %321 = vector.load %arg2[%c0_156, %c0_157, %c0_158] : memref<3x288x32xbf16, #tpu.memory_space<vmem>>, vector<1x288x32xbf16>
    %322 = vector.shape_cast %321 : vector<1x288x32xbf16> to vector<288x32xbf16>
    %cst_159 = arith.constant dense<0.000000e+00> : vector<178x32xf32>
    %323 = tpu.matmul %320, %322, %cst_159 {dimension_numbers = #tpu.dot_dimension_numbers<[1], [0], [0], [1], [0, 0, 1, 1], [], []>} : vector<178x288xbf16>, vector<288x32xbf16>, vector<178x32xf32> -> vector<178x32xf32>
    %c0_160 = arith.constant 0 : index
    %c0_161 = arith.constant 0 : index
    %324 = vector.load %arg6[%c0_160, %c0_161] : memref<178x1xf32, #tpu.memory_space<vmem>>, vector<178x1xf32>
    %325 = vector.broadcast %324 : vector<178x1xf32> to vector<178x32xf32>
    %326 = arith.mulf %323, %325 : vector<178x32xf32>
    %cst_162 = arith.constant dense<0.000000e+00> : vector<32xf32>
    %327 = vector.multi_reduction <add>, %326, %cst_162 [0] : vector<178x32xf32> to vector<32xf32>
    %328 = vector.shape_cast %327 : vector<32xf32> to vector<1x32xf32>
    %cst_163 = arith.constant 7.812500e-03 : f32
    %329 = vector.broadcast %cst_163 : f32 to vector<1x32xf32>
    %330 = arith.mulf %328, %329 : vector<1x32xf32>
    %331 = vector.broadcast %330 : vector<1x32xf32> to vector<178x32xf32>
    %332 = arith.subf %323, %331 : vector<178x32xf32>
    %333 = arith.mulf %332, %332 : vector<178x32xf32>
    %334 = vector.broadcast %324 : vector<178x1xf32> to vector<178x32xf32>
    %335 = arith.mulf %333, %334 : vector<178x32xf32>
    %cst_164 = arith.constant dense<0.000000e+00> : vector<32xf32>
    %336 = vector.multi_reduction <add>, %335, %cst_164 [0] : vector<178x32xf32> to vector<32xf32>
    %337 = vector.shape_cast %336 : vector<32xf32> to vector<1x32xf32>
    %cst_165 = arith.constant 7.812500e-03 : f32
    %338 = vector.broadcast %cst_165 : f32 to vector<1x32xf32>
    %339 = arith.mulf %337, %338 : vector<1x32xf32>
    %c1_166 = arith.constant 1 : index
    %c0_167 = arith.constant 0 : index
    %c0_168 = arith.constant 0 : index
    %340 = vector.load %arg3[%c1_166, %c0_167, %c0_168] : memref<4x1x32xf32, #tpu.memory_space<vmem>>, vector<1x1x32xf32>
    %341 = vector.shape_cast %340 : vector<1x1x32xf32> to vector<1x32xf32>
    %cst_169 = arith.constant 9.99999974E-6 : f32
    %342 = vector.broadcast %cst_169 : f32 to vector<1x32xf32>
    %343 = arith.addf %339, %342 : vector<1x32xf32>
    %344 = math.rsqrt %343 : vector<1x32xf32>
    %345 = arith.mulf %341, %344 : vector<1x32xf32>
    %c1_170 = arith.constant 1 : index
    %c0_171 = arith.constant 0 : index
    %c0_172 = arith.constant 0 : index
    %346 = vector.load %arg4[%c1_170, %c0_171, %c0_172] : memref<4x1x32xf32, #tpu.memory_space<vmem>>, vector<1x1x32xf32>
    %347 = vector.shape_cast %346 : vector<1x1x32xf32> to vector<1x32xf32>
    %348 = arith.mulf %330, %345 : vector<1x32xf32>
    %349 = arith.subf %347, %348 : vector<1x32xf32>
    %350 = vector.shape_cast %345 : vector<1x32xf32> to vector<1x32xf32>
    %351 = vector.broadcast %350 : vector<1x32xf32> to vector<4x32xf32>
    %352 = vector.shape_cast %349 : vector<1x32xf32> to vector<1x32xf32>
    %353 = vector.broadcast %352 : vector<1x32xf32> to vector<4x32xf32>
    %cst_173 = arith.constant 0.000000e+00 : f32
    %354 = vector.broadcast %cst_173 : f32 to vector<4x32xf32>
    %355 = arith.cmpf oge, %351, %354 : vector<4x32xf32>
    %c0_174 = arith.constant 0 : index
    %c0_175 = arith.constant 0 : index
    %356 = vector.load %arg15[%c0_174, %c0_175] : memref<610x32xf32, #tpu.memory_space<vmem>>, vector<178x32xf32>
    tpu.vector_store %arg15[%c0_174, %c0_175], %323 {strides = array<i32>} : memref<610x32xf32, #tpu.memory_space<vmem>>, vector<178x32xf32>,
    %c0_176 = arith.constant 0 : index
    %c0_177 = arith.constant 0 : index
    %357 = tpu.strided_load %arg15[%c0_176, %c0_177] {strides = array<i32: 2, 1>} : memref<610x32xf32, #tpu.memory_space<vmem>>, vector<4x32xf32>
    %c1_178 = arith.constant 1 : index
    %c0_179 = arith.constant 0 : index
    %358 = tpu.strided_load %arg15[%c1_178, %c0_179] {strides = array<i32: 2, 1>} : memref<610x32xf32, #tpu.memory_space<vmem>>, vector<4x32xf32>
    %c10_180 = arith.constant 10 : index
    %c0_181 = arith.constant 0 : index
    %359 = tpu.strided_load %arg15[%c10_180, %c0_181] {strides = array<i32: 2, 1>} : memref<610x32xf32, #tpu.memory_space<vmem>>, vector<4x32xf32>
    %c11_182 = arith.constant 11 : index
    %c0_183 = arith.constant 0 : index
    %360 = tpu.strided_load %arg15[%c11_182, %c0_183] {strides = array<i32: 2, 1>} : memref<610x32xf32, #tpu.memory_space<vmem>>, vector<4x32xf32>
    %361 = arith.maximumf %357, %358 : vector<4x32xf32>
    %362 = arith.maximumf %359, %360 : vector<4x32xf32>
    %363 = arith.maximumf %361, %362 : vector<4x32xf32>
    %364 = arith.minimumf %357, %358 : vector<4x32xf32>
    %365 = arith.minimumf %359, %360 : vector<4x32xf32>
    %366 = arith.minimumf %364, %365 : vector<4x32xf32>
    %367 = arith.select %355, %363, %366 : vector<4x32xi1>, vector<4x32xf32>
    %368 = arith.mulf %367, %351 : vector<4x32xf32>
    %369 = arith.addf %368, %353 : vector<4x32xf32>
    %cst_184 = arith.constant 0.000000e+00 : f32
    %370 = vector.broadcast %cst_184 : f32 to vector<4x32xf32>
    %371 = arith.maximumf %369, %370 : vector<4x32xf32>
    %c7 = arith.constant 7 : index
    %c0_185 = arith.constant 0 : index
    %372 = vector.load %arg13[%c7, %c0_185] : memref<72x32xf32, #tpu.memory_space<vmem>>, vector<4x32xf32>
    tpu.vector_store %arg13[%c7, %c0_185], %371 {strides = array<i32>} : memref<72x32xf32, #tpu.memory_space<vmem>>, vector<4x32xf32>,
    %c20_186 = arith.constant 20 : index
    %c0_187 = arith.constant 0 : index
    %373 = tpu.strided_load %arg15[%c20_186, %c0_187] {strides = array<i32: 2, 1>} : memref<610x32xf32, #tpu.memory_space<vmem>>, vector<4x32xf32>
    %c21_188 = arith.constant 21 : index
    %c0_189 = arith.constant 0 : index
    %374 = tpu.strided_load %arg15[%c21_188, %c0_189] {strides = array<i32: 2, 1>} : memref<610x32xf32, #tpu.memory_space<vmem>>, vector<4x32xf32>
    %c30 = arith.constant 30 : index
    %c0_190 = arith.constant 0 : index
    %375 = tpu.strided_load %arg15[%c30, %c0_190] {strides = array<i32: 2, 1>} : memref<610x32xf32, #tpu.memory_space<vmem>>, vector<4x32xf32>
    %c31_191 = arith.constant 31 : index
    %c0_192 = arith.constant 0 : index
    %376 = tpu.strided_load %arg15[%c31_191, %c0_192] {strides = array<i32: 2, 1>} : memref<610x32xf32, #tpu.memory_space<vmem>>, vector<4x32xf32>
    %377 = arith.maximumf %373, %374 : vector<4x32xf32>
    %378 = arith.maximumf %375, %376 : vector<4x32xf32>
    %379 = arith.maximumf %377, %378 : vector<4x32xf32>
    %380 = arith.minimumf %373, %374 : vector<4x32xf32>
    %381 = arith.minimumf %375, %376 : vector<4x32xf32>
    %382 = arith.minimumf %380, %381 : vector<4x32xf32>
    %383 = arith.select %355, %379, %382 : vector<4x32xi1>, vector<4x32xf32>
    %384 = arith.mulf %383, %351 : vector<4x32xf32>
    %385 = arith.addf %384, %353 : vector<4x32xf32>
    %cst_193 = arith.constant 0.000000e+00 : f32
    %386 = vector.broadcast %cst_193 : f32 to vector<4x32xf32>
    %387 = arith.maximumf %385, %386 : vector<4x32xf32>
    %c13 = arith.constant 13 : index
    %c0_194 = arith.constant 0 : index
    %388 = vector.load %arg13[%c13, %c0_194] : memref<72x32xf32, #tpu.memory_space<vmem>>, vector<4x32xf32>
    tpu.vector_store %arg13[%c13, %c0_194], %387 {strides = array<i32>} : memref<72x32xf32, #tpu.memory_space<vmem>>, vector<4x32xf32>,
    %c40 = arith.constant 40 : index
    %c0_195 = arith.constant 0 : index
    %389 = tpu.strided_load %arg15[%c40, %c0_195] {strides = array<i32: 2, 1>} : memref<610x32xf32, #tpu.memory_space<vmem>>, vector<4x32xf32>
    %c41_196 = arith.constant 41 : index
    %c0_197 = arith.constant 0 : index
    %390 = tpu.strided_load %arg15[%c41_196, %c0_197] {strides = array<i32: 2, 1>} : memref<610x32xf32, #tpu.memory_space<vmem>>, vector<4x32xf32>
    %c50 = arith.constant 50 : index
    %c0_198 = arith.constant 0 : index
    %391 = tpu.strided_load %arg15[%c50, %c0_198] {strides = array<i32: 2, 1>} : memref<610x32xf32, #tpu.memory_space<vmem>>, vector<4x32xf32>
    %c51_199 = arith.constant 51 : index
    %c0_200 = arith.constant 0 : index
    %392 = tpu.strided_load %arg15[%c51_199, %c0_200] {strides = array<i32: 2, 1>} : memref<610x32xf32, #tpu.memory_space<vmem>>, vector<4x32xf32>
    %393 = arith.maximumf %389, %390 : vector<4x32xf32>
    %394 = arith.maximumf %391, %392 : vector<4x32xf32>
    %395 = arith.maximumf %393, %394 : vector<4x32xf32>
    %396 = arith.minimumf %389, %390 : vector<4x32xf32>
    %397 = arith.minimumf %391, %392 : vector<4x32xf32>
    %398 = arith.minimumf %396, %397 : vector<4x32xf32>
    %399 = arith.select %355, %395, %398 : vector<4x32xi1>, vector<4x32xf32>
    %400 = arith.mulf %399, %351 : vector<4x32xf32>
    %401 = arith.addf %400, %353 : vector<4x32xf32>
    %cst_201 = arith.constant 0.000000e+00 : f32
    %402 = vector.broadcast %cst_201 : f32 to vector<4x32xf32>
    %403 = arith.maximumf %401, %402 : vector<4x32xf32>
    %c19_202 = arith.constant 19 : index
    %c0_203 = arith.constant 0 : index
    %404 = vector.load %arg13[%c19_202, %c0_203] : memref<72x32xf32, #tpu.memory_space<vmem>>, vector<4x32xf32>
    tpu.vector_store %arg13[%c19_202, %c0_203], %403 {strides = array<i32>} : memref<72x32xf32, #tpu.memory_space<vmem>>, vector<4x32xf32>,
    %c60 = arith.constant 60 : index
    %c0_204 = arith.constant 0 : index
    %405 = tpu.strided_load %arg15[%c60, %c0_204] {strides = array<i32: 2, 1>} : memref<610x32xf32, #tpu.memory_space<vmem>>, vector<4x32xf32>
    %c61_205 = arith.constant 61 : index
    %c0_206 = arith.constant 0 : index
    %406 = tpu.strided_load %arg15[%c61_205, %c0_206] {strides = array<i32: 2, 1>} : memref<610x32xf32, #tpu.memory_space<vmem>>, vector<4x32xf32>
    %c70 = arith.constant 70 : index
    %c0_207 = arith.constant 0 : index
    %407 = tpu.strided_load %arg15[%c70, %c0_207] {strides = array<i32: 2, 1>} : memref<610x32xf32, #tpu.memory_space<vmem>>, vector<4x32xf32>
    %c71_208 = arith.constant 71 : index
    %c0_209 = arith.constant 0 : index
    %408 = tpu.strided_load %arg15[%c71_208, %c0_209] {strides = array<i32: 2, 1>} : memref<610x32xf32, #tpu.memory_space<vmem>>, vector<4x32xf32>
    %409 = arith.maximumf %405, %406 : vector<4x32xf32>
    %410 = arith.maximumf %407, %408 : vector<4x32xf32>
    %411 = arith.maximumf %409, %410 : vector<4x32xf32>
    %412 = arith.minimumf %405, %406 : vector<4x32xf32>
    %413 = arith.minimumf %407, %408 : vector<4x32xf32>
    %414 = arith.minimumf %412, %413 : vector<4x32xf32>
    %415 = arith.select %355, %411, %414 : vector<4x32xi1>, vector<4x32xf32>
    %416 = arith.mulf %415, %351 : vector<4x32xf32>
    %417 = arith.addf %416, %353 : vector<4x32xf32>
    %cst_210 = arith.constant 0.000000e+00 : f32
    %418 = vector.broadcast %cst_210 : f32 to vector<4x32xf32>
    %419 = arith.maximumf %417, %418 : vector<4x32xf32>
    %c25 = arith.constant 25 : index
    %c0_211 = arith.constant 0 : index
    %420 = vector.load %arg13[%c25, %c0_211] : memref<72x32xf32, #tpu.memory_space<vmem>>, vector<4x32xf32>
    tpu.vector_store %arg13[%c25, %c0_211], %419 {strides = array<i32>} : memref<72x32xf32, #tpu.memory_space<vmem>>, vector<4x32xf32>,
    %c100 = arith.constant 100 : index
    %c0_212 = arith.constant 0 : index
    %421 = tpu.strided_load %arg15[%c100, %c0_212] {strides = array<i32: 2, 1>} : memref<610x32xf32, #tpu.memory_space<vmem>>, vector<4x32xf32>
    %c101 = arith.constant 101 : index
    %c0_213 = arith.constant 0 : index
    %422 = tpu.strided_load %arg15[%c101, %c0_213] {strides = array<i32: 2, 1>} : memref<610x32xf32, #tpu.memory_space<vmem>>, vector<4x32xf32>
    %c110 = arith.constant 110 : index
    %c0_214 = arith.constant 0 : index
    %423 = tpu.strided_load %arg15[%c110, %c0_214] {strides = array<i32: 2, 1>} : memref<610x32xf32, #tpu.memory_space<vmem>>, vector<4x32xf32>
    %c111_215 = arith.constant 111 : index
    %c0_216 = arith.constant 0 : index
    %424 = tpu.strided_load %arg15[%c111_215, %c0_216] {strides = array<i32: 2, 1>} : memref<610x32xf32, #tpu.memory_space<vmem>>, vector<4x32xf32>
    %425 = arith.maximumf %421, %422 : vector<4x32xf32>
    %426 = arith.maximumf %423, %424 : vector<4x32xf32>
    %427 = arith.maximumf %425, %426 : vector<4x32xf32>
    %428 = arith.minimumf %421, %422 : vector<4x32xf32>
    %429 = arith.minimumf %423, %424 : vector<4x32xf32>
    %430 = arith.minimumf %428, %429 : vector<4x32xf32>
    %431 = arith.select %355, %427, %430 : vector<4x32xi1>, vector<4x32xf32>
    %432 = arith.mulf %431, %351 : vector<4x32xf32>
    %433 = arith.addf %432, %353 : vector<4x32xf32>
    %cst_217 = arith.constant 0.000000e+00 : f32
    %434 = vector.broadcast %cst_217 : f32 to vector<4x32xf32>
    %435 = arith.maximumf %433, %434 : vector<4x32xf32>
    %c43 = arith.constant 43 : index
    %c0_218 = arith.constant 0 : index
    %436 = vector.load %arg13[%c43, %c0_218] : memref<72x32xf32, #tpu.memory_space<vmem>>, vector<4x32xf32>
    tpu.vector_store %arg13[%c43, %c0_218], %435 {strides = array<i32>} : memref<72x32xf32, #tpu.memory_space<vmem>>, vector<4x32xf32>,
    %c120 = arith.constant 120 : index
    %c0_219 = arith.constant 0 : index
    %437 = tpu.strided_load %arg15[%c120, %c0_219] {strides = array<i32: 2, 1>} : memref<610x32xf32, #tpu.memory_space<vmem>>, vector<4x32xf32>
    %c121_220 = arith.constant 121 : index
    %c0_221 = arith.constant 0 : index
    %438 = tpu.strided_load %arg15[%c121_220, %c0_221] {strides = array<i32: 2, 1>} : memref<610x32xf32, #tpu.memory_space<vmem>>, vector<4x32xf32>
    %c130 = arith.constant 130 : index
    %c0_222 = arith.constant 0 : index
    %439 = tpu.strided_load %arg15[%c130, %c0_222] {strides = array<i32: 2, 1>} : memref<610x32xf32, #tpu.memory_space<vmem>>, vector<4x32xf32>
    %c131_223 = arith.constant 131 : index
    %c0_224 = arith.constant 0 : index
    %440 = tpu.strided_load %arg15[%c131_223, %c0_224] {strides = array<i32: 2, 1>} : memref<610x32xf32, #tpu.memory_space<vmem>>, vector<4x32xf32>
    %441 = arith.maximumf %437, %438 : vector<4x32xf32>
    %442 = arith.maximumf %439, %440 : vector<4x32xf32>
    %443 = arith.maximumf %441, %442 : vector<4x32xf32>
    %444 = arith.minimumf %437, %438 : vector<4x32xf32>
    %445 = arith.minimumf %439, %440 : vector<4x32xf32>
    %446 = arith.minimumf %444, %445 : vector<4x32xf32>
    %447 = arith.select %355, %443, %446 : vector<4x32xi1>, vector<4x32xf32>
    %448 = arith.mulf %447, %351 : vector<4x32xf32>
    %449 = arith.addf %448, %353 : vector<4x32xf32>
    %cst_225 = arith.constant 0.000000e+00 : f32
    %450 = vector.broadcast %cst_225 : f32 to vector<4x32xf32>
    %451 = arith.maximumf %449, %450 : vector<4x32xf32>
    %c49 = arith.constant 49 : index
    %c0_226 = arith.constant 0 : index
    %452 = vector.load %arg13[%c49, %c0_226] : memref<72x32xf32, #tpu.memory_space<vmem>>, vector<4x32xf32>
    tpu.vector_store %arg13[%c49, %c0_226], %451 {strides = array<i32>} : memref<72x32xf32, #tpu.memory_space<vmem>>, vector<4x32xf32>,
    %c140 = arith.constant 140 : index
    %c0_227 = arith.constant 0 : index
    %453 = tpu.strided_load %arg15[%c140, %c0_227] {strides = array<i32: 2, 1>} : memref<610x32xf32, #tpu.memory_space<vmem>>, vector<4x32xf32>
    %c141_228 = arith.constant 141 : index
    %c0_229 = arith.constant 0 : index
    %454 = tpu.strided_load %arg15[%c141_228, %c0_229] {strides = array<i32: 2, 1>} : memref<610x32xf32, #tpu.memory_space<vmem>>, vector<4x32xf32>
    %c150 = arith.constant 150 : index
    %c0_230 = arith.constant 0 : index
    %455 = tpu.strided_load %arg15[%c150, %c0_230] {strides = array<i32: 2, 1>} : memref<610x32xf32, #tpu.memory_space<vmem>>, vector<4x32xf32>
    %c151_231 = arith.constant 151 : index
    %c0_232 = arith.constant 0 : index
    %456 = tpu.strided_load %arg15[%c151_231, %c0_232] {strides = array<i32: 2, 1>} : memref<610x32xf32, #tpu.memory_space<vmem>>, vector<4x32xf32>
    %457 = arith.maximumf %453, %454 : vector<4x32xf32>
    %458 = arith.maximumf %455, %456 : vector<4x32xf32>
    %459 = arith.maximumf %457, %458 : vector<4x32xf32>
    %460 = arith.minimumf %453, %454 : vector<4x32xf32>
    %461 = arith.minimumf %455, %456 : vector<4x32xf32>
    %462 = arith.minimumf %460, %461 : vector<4x32xf32>
    %463 = arith.select %355, %459, %462 : vector<4x32xi1>, vector<4x32xf32>
    %464 = arith.mulf %463, %351 : vector<4x32xf32>
    %465 = arith.addf %464, %353 : vector<4x32xf32>
    %cst_233 = arith.constant 0.000000e+00 : f32
    %466 = vector.broadcast %cst_233 : f32 to vector<4x32xf32>
    %467 = arith.maximumf %465, %466 : vector<4x32xf32>
    %c55_234 = arith.constant 55 : index
    %c0_235 = arith.constant 0 : index
    %468 = vector.load %arg13[%c55_234, %c0_235] : memref<72x32xf32, #tpu.memory_space<vmem>>, vector<4x32xf32>
    tpu.vector_store %arg13[%c55_234, %c0_235], %467 {strides = array<i32>} : memref<72x32xf32, #tpu.memory_space<vmem>>, vector<4x32xf32>,
    %c160 = arith.constant 160 : index
    %c0_236 = arith.constant 0 : index
    %469 = tpu.strided_load %arg15[%c160, %c0_236] {strides = array<i32: 2, 1>} : memref<610x32xf32, #tpu.memory_space<vmem>>, vector<4x32xf32>
    %c161_237 = arith.constant 161 : index
    %c0_238 = arith.constant 0 : index
    %470 = tpu.strided_load %arg15[%c161_237, %c0_238] {strides = array<i32: 2, 1>} : memref<610x32xf32, #tpu.memory_space<vmem>>, vector<4x32xf32>
    %c170 = arith.constant 170 : index
    %c0_239 = arith.constant 0 : index
    %471 = tpu.strided_load %arg15[%c170, %c0_239] {strides = array<i32: 2, 1>} : memref<610x32xf32, #tpu.memory_space<vmem>>, vector<4x32xf32>
    %c171_240 = arith.constant 171 : index
    %c0_241 = arith.constant 0 : index
    %472 = tpu.strided_load %arg15[%c171_240, %c0_241] {strides = array<i32: 2, 1>} : memref<610x32xf32, #tpu.memory_space<vmem>>, vector<4x32xf32>
    %473 = arith.maximumf %469, %470 : vector<4x32xf32>
    %474 = arith.maximumf %471, %472 : vector<4x32xf32>
    %475 = arith.maximumf %473, %474 : vector<4x32xf32>
    %476 = arith.minimumf %469, %470 : vector<4x32xf32>
    %477 = arith.minimumf %471, %472 : vector<4x32xf32>
    %478 = arith.minimumf %476, %477 : vector<4x32xf32>
    %479 = arith.select %355, %475, %478 : vector<4x32xi1>, vector<4x32xf32>
    %480 = arith.mulf %479, %351 : vector<4x32xf32>
    %481 = arith.addf %480, %353 : vector<4x32xf32>
    %cst_242 = arith.constant 0.000000e+00 : f32
    %482 = vector.broadcast %cst_242 : f32 to vector<4x32xf32>
    %483 = arith.maximumf %481, %482 : vector<4x32xf32>
    %c61_243 = arith.constant 61 : index
    %c0_244 = arith.constant 0 : index
    %484 = vector.load %arg13[%c61_243, %c0_244] : memref<72x32xf32, #tpu.memory_space<vmem>>, vector<4x32xf32>
    tpu.vector_store %arg13[%c61_243, %c0_244], %483 {strides = array<i32>} : memref<72x32xf32, #tpu.memory_space<vmem>>, vector<4x32xf32>,
    %c0_245 = arith.constant 0 : index
    %c0_246 = arith.constant 0 : index
    %485 = vector.load %arg13[%c0_245, %c0_246] : memref<72x32xf32, #tpu.memory_space<vmem>>, vector<58x32xf32>
    %c1_247 = arith.constant 1 : index
    %c0_248 = arith.constant 0 : index
    %486 = vector.load %arg13[%c1_247, %c0_248] : memref<72x32xf32, #tpu.memory_space<vmem>>, vector<58x32xf32>
    %c2_249 = arith.constant 2 : index
    %c0_250 = arith.constant 0 : index
    %487 = vector.load %arg13[%c2_249, %c0_250] : memref<72x32xf32, #tpu.memory_space<vmem>>, vector<58x32xf32>
    %c6 = arith.constant 6 : index
    %c0_251 = arith.constant 0 : index
    %488 = vector.load %arg13[%c6, %c0_251] : memref<72x32xf32, #tpu.memory_space<vmem>>, vector<58x32xf32>
    %c7_252 = arith.constant 7 : index
    %c0_253 = arith.constant 0 : index
    %489 = vector.load %arg13[%c7_252, %c0_253] : memref<72x32xf32, #tpu.memory_space<vmem>>, vector<58x32xf32>
    %c8 = arith.constant 8 : index
    %c0_254 = arith.constant 0 : index
    %490 = vector.load %arg13[%c8, %c0_254] : memref<72x32xf32, #tpu.memory_space<vmem>>, vector<58x32xf32>
    %c12_255 = arith.constant 12 : index
    %c0_256 = arith.constant 0 : index
    %491 = vector.load %arg13[%c12_255, %c0_256] : memref<72x32xf32, #tpu.memory_space<vmem>>, vector<58x32xf32>
    %c13_257 = arith.constant 13 : index
    %c0_258 = arith.constant 0 : index
    %492 = vector.load %arg13[%c13_257, %c0_258] : memref<72x32xf32, #tpu.memory_space<vmem>>, vector<58x32xf32>
    %c14 = arith.constant 14 : index
    %c0_259 = arith.constant 0 : index
    %493 = vector.load %arg13[%c14, %c0_259] : memref<72x32xf32, #tpu.memory_space<vmem>>, vector<58x32xf32>
    %494 = tpu.concatenate %485, %486, %487, %488, %489, %490, %491, %492, %493 in 1 : vector<58x32xf32>, vector<58x32xf32>, vector<58x32xf32>, vector<58x32xf32>, vector<58x32xf32>, vector<58x32xf32>, vector<58x32xf32>, vector<58x32xf32>, vector<58x32xf32> -> vector<58x288xf32>
    %495 = arith.truncf %494 : vector<58x288xf32> to vector<58x288xbf16>
    %c1_260 = arith.constant 1 : index
    %c0_261 = arith.constant 0 : index
    %c0_262 = arith.constant 0 : index
    %496 = vector.load %arg2[%c1_260, %c0_261, %c0_262] : memref<3x288x32xbf16, #tpu.memory_space<vmem>>, vector<1x288x32xbf16>
    %497 = vector.shape_cast %496 : vector<1x288x32xbf16> to vector<288x32xbf16>
    %cst_263 = arith.constant dense<0.000000e+00> : vector<58x32xf32>
    %498 = tpu.matmul %495, %497, %cst_263 {dimension_numbers = #tpu.dot_dimension_numbers<[1], [0], [0], [1], [0, 0, 1, 1], [], []>} : vector<58x288xbf16>, vector<288x32xbf16>, vector<58x32xf32> -> vector<58x32xf32>
    %c0_264 = arith.constant 0 : index
    %c0_265 = arith.constant 0 : index
    %499 = vector.load %arg7[%c0_264, %c0_265] : memref<58x1xf32, #tpu.memory_space<vmem>>, vector<58x1xf32>
    %500 = vector.broadcast %499 : vector<58x1xf32> to vector<58x32xf32>
    %501 = arith.mulf %498, %500 : vector<58x32xf32>
    %cst_266 = arith.constant dense<0.000000e+00> : vector<32xf32>
    %502 = vector.multi_reduction <add>, %501, %cst_266 [0] : vector<58x32xf32> to vector<32xf32>
    %503 = vector.shape_cast %502 : vector<32xf32> to vector<1x32xf32>
    %cst_267 = arith.constant 3.125000e-02 : f32
    %504 = vector.broadcast %cst_267 : f32 to vector<1x32xf32>
    %505 = arith.mulf %503, %504 : vector<1x32xf32>
    %506 = vector.broadcast %505 : vector<1x32xf32> to vector<58x32xf32>
    %507 = arith.subf %498, %506 : vector<58x32xf32>
    %508 = arith.mulf %507, %507 : vector<58x32xf32>
    %509 = vector.broadcast %499 : vector<58x1xf32> to vector<58x32xf32>
    %510 = arith.mulf %508, %509 : vector<58x32xf32>
    %cst_268 = arith.constant dense<0.000000e+00> : vector<32xf32>
    %511 = vector.multi_reduction <add>, %510, %cst_268 [0] : vector<58x32xf32> to vector<32xf32>
    %512 = vector.shape_cast %511 : vector<32xf32> to vector<1x32xf32>
    %cst_269 = arith.constant 3.125000e-02 : f32
    %513 = vector.broadcast %cst_269 : f32 to vector<1x32xf32>
    %514 = arith.mulf %512, %513 : vector<1x32xf32>
    %c2_270 = arith.constant 2 : index
    %c0_271 = arith.constant 0 : index
    %c0_272 = arith.constant 0 : index
    %515 = vector.load %arg3[%c2_270, %c0_271, %c0_272] : memref<4x1x32xf32, #tpu.memory_space<vmem>>, vector<1x1x32xf32>
    %516 = vector.shape_cast %515 : vector<1x1x32xf32> to vector<1x32xf32>
    %cst_273 = arith.constant 9.99999974E-6 : f32
    %517 = vector.broadcast %cst_273 : f32 to vector<1x32xf32>
    %518 = arith.addf %514, %517 : vector<1x32xf32>
    %519 = math.rsqrt %518 : vector<1x32xf32>
    %520 = arith.mulf %516, %519 : vector<1x32xf32>
    %c2_274 = arith.constant 2 : index
    %c0_275 = arith.constant 0 : index
    %c0_276 = arith.constant 0 : index
    %521 = vector.load %arg4[%c2_274, %c0_275, %c0_276] : memref<4x1x32xf32, #tpu.memory_space<vmem>>, vector<1x1x32xf32>
    %522 = vector.shape_cast %521 : vector<1x1x32xf32> to vector<1x32xf32>
    %523 = arith.mulf %505, %520 : vector<1x32xf32>
    %524 = arith.subf %522, %523 : vector<1x32xf32>
    %525 = vector.shape_cast %520 : vector<1x32xf32> to vector<1x32xf32>
    %526 = vector.broadcast %525 : vector<1x32xf32> to vector<2x32xf32>
    %527 = vector.shape_cast %524 : vector<1x32xf32> to vector<1x32xf32>
    %528 = vector.broadcast %527 : vector<1x32xf32> to vector<2x32xf32>
    %cst_277 = arith.constant 0.000000e+00 : f32
    %529 = vector.broadcast %cst_277 : f32 to vector<2x32xf32>
    %530 = arith.cmpf oge, %526, %529 : vector<2x32xf32>
    %c0_278 = arith.constant 0 : index
    %c0_279 = arith.constant 0 : index
    %531 = vector.load %arg15[%c0_278, %c0_279] : memref<610x32xf32, #tpu.memory_space<vmem>>, vector<58x32xf32>
    tpu.vector_store %arg15[%c0_278, %c0_279], %498 {strides = array<i32>} : memref<610x32xf32, #tpu.memory_space<vmem>>, vector<58x32xf32>,
    %c0_280 = arith.constant 0 : index
    %c0_281 = arith.constant 0 : index
    %532 = tpu.strided_load %arg15[%c0_280, %c0_281] {strides = array<i32: 2, 1>} : memref<610x32xf32, #tpu.memory_space<vmem>>, vector<2x32xf32>
    %c1_282 = arith.constant 1 : index
    %c0_283 = arith.constant 0 : index
    %533 = tpu.strided_load %arg15[%c1_282, %c0_283] {strides = array<i32: 2, 1>} : memref<610x32xf32, #tpu.memory_space<vmem>>, vector<2x32xf32>
    %c6_284 = arith.constant 6 : index
    %c0_285 = arith.constant 0 : index
    %534 = tpu.strided_load %arg15[%c6_284, %c0_285] {strides = array<i32: 2, 1>} : memref<610x32xf32, #tpu.memory_space<vmem>>, vector<2x32xf32>
    %c7_286 = arith.constant 7 : index
    %c0_287 = arith.constant 0 : index
    %535 = tpu.strided_load %arg15[%c7_286, %c0_287] {strides = array<i32: 2, 1>} : memref<610x32xf32, #tpu.memory_space<vmem>>, vector<2x32xf32>
    %536 = arith.maximumf %532, %533 : vector<2x32xf32>
    %537 = arith.maximumf %534, %535 : vector<2x32xf32>
    %538 = arith.maximumf %536, %537 : vector<2x32xf32>
    %539 = arith.minimumf %532, %533 : vector<2x32xf32>
    %540 = arith.minimumf %534, %535 : vector<2x32xf32>
    %541 = arith.minimumf %539, %540 : vector<2x32xf32>
    %542 = arith.select %530, %538, %541 : vector<2x32xi1>, vector<2x32xf32>
    %543 = arith.mulf %542, %526 : vector<2x32xf32>
    %544 = arith.addf %543, %528 : vector<2x32xf32>
    %cst_288 = arith.constant 0.000000e+00 : f32
    %545 = vector.broadcast %cst_288 : f32 to vector<2x32xf32>
    %546 = arith.maximumf %544, %545 : vector<2x32xf32>
    %c5 = arith.constant 5 : index
    %c0_289 = arith.constant 0 : index
    %547 = vector.load %arg14[%c5, %c0_289] : memref<32x32xf32, #tpu.memory_space<vmem>>, vector<2x32xf32>
    tpu.vector_store %arg14[%c5, %c0_289], %546 {strides = array<i32>} : memref<32x32xf32, #tpu.memory_space<vmem>>, vector<2x32xf32>,
    %c12_290 = arith.constant 12 : index
    %c0_291 = arith.constant 0 : index
    %548 = tpu.strided_load %arg15[%c12_290, %c0_291] {strides = array<i32: 2, 1>} : memref<610x32xf32, #tpu.memory_space<vmem>>, vector<2x32xf32>
    %c13_292 = arith.constant 13 : index
    %c0_293 = arith.constant 0 : index
    %549 = tpu.strided_load %arg15[%c13_292, %c0_293] {strides = array<i32: 2, 1>} : memref<610x32xf32, #tpu.memory_space<vmem>>, vector<2x32xf32>
    %c18_294 = arith.constant 18 : index
    %c0_295 = arith.constant 0 : index
    %550 = tpu.strided_load %arg15[%c18_294, %c0_295] {strides = array<i32: 2, 1>} : memref<610x32xf32, #tpu.memory_space<vmem>>, vector<2x32xf32>
    %c19_296 = arith.constant 19 : index
    %c0_297 = arith.constant 0 : index
    %551 = tpu.strided_load %arg15[%c19_296, %c0_297] {strides = array<i32: 2, 1>} : memref<610x32xf32, #tpu.memory_space<vmem>>, vector<2x32xf32>
    %552 = arith.maximumf %548, %549 : vector<2x32xf32>
    %553 = arith.maximumf %550, %551 : vector<2x32xf32>
    %554 = arith.maximumf %552, %553 : vector<2x32xf32>
    %555 = arith.minimumf %548, %549 : vector<2x32xf32>
    %556 = arith.minimumf %550, %551 : vector<2x32xf32>
    %557 = arith.minimumf %555, %556 : vector<2x32xf32>
    %558 = arith.select %530, %554, %557 : vector<2x32xi1>, vector<2x32xf32>
    %559 = arith.mulf %558, %526 : vector<2x32xf32>
    %560 = arith.addf %559, %528 : vector<2x32xf32>
    %cst_298 = arith.constant 0.000000e+00 : f32
    %561 = vector.broadcast %cst_298 : f32 to vector<2x32xf32>
    %562 = arith.maximumf %560, %561 : vector<2x32xf32>
    %c9 = arith.constant 9 : index
    %c0_299 = arith.constant 0 : index
    %563 = vector.load %arg14[%c9, %c0_299] : memref<32x32xf32, #tpu.memory_space<vmem>>, vector<2x32xf32>
    tpu.vector_store %arg14[%c9, %c0_299], %562 {strides = array<i32>} : memref<32x32xf32, #tpu.memory_space<vmem>>, vector<2x32xf32>,
    %c36_300 = arith.constant 36 : index
    %c0_301 = arith.constant 0 : index
    %564 = tpu.strided_load %arg15[%c36_300, %c0_301] {strides = array<i32: 2, 1>} : memref<610x32xf32, #tpu.memory_space<vmem>>, vector<2x32xf32>
    %c37_302 = arith.constant 37 : index
    %c0_303 = arith.constant 0 : index
    %565 = tpu.strided_load %arg15[%c37_302, %c0_303] {strides = array<i32: 2, 1>} : memref<610x32xf32, #tpu.memory_space<vmem>>, vector<2x32xf32>
    %c42 = arith.constant 42 : index
    %c0_304 = arith.constant 0 : index
    %566 = tpu.strided_load %arg15[%c42, %c0_304] {strides = array<i32: 2, 1>} : memref<610x32xf32, #tpu.memory_space<vmem>>, vector<2x32xf32>
    %c43_305 = arith.constant 43 : index
    %c0_306 = arith.constant 0 : index
    %567 = tpu.strided_load %arg15[%c43_305, %c0_306] {strides = array<i32: 2, 1>} : memref<610x32xf32, #tpu.memory_space<vmem>>, vector<2x32xf32>
    %568 = arith.maximumf %564, %565 : vector<2x32xf32>
    %569 = arith.maximumf %566, %567 : vector<2x32xf32>
    %570 = arith.maximumf %568, %569 : vector<2x32xf32>
    %571 = arith.minimumf %564, %565 : vector<2x32xf32>
    %572 = arith.minimumf %566, %567 : vector<2x32xf32>
    %573 = arith.minimumf %571, %572 : vector<2x32xf32>
    %574 = arith.select %530, %570, %573 : vector<2x32xi1>, vector<2x32xf32>
    %575 = arith.mulf %574, %526 : vector<2x32xf32>
    %576 = arith.addf %575, %528 : vector<2x32xf32>
    %cst_307 = arith.constant 0.000000e+00 : f32
    %577 = vector.broadcast %cst_307 : f32 to vector<2x32xf32>
    %578 = arith.maximumf %576, %577 : vector<2x32xf32>
    %c21_308 = arith.constant 21 : index
    %c0_309 = arith.constant 0 : index
    %579 = vector.load %arg14[%c21_308, %c0_309] : memref<32x32xf32, #tpu.memory_space<vmem>>, vector<2x32xf32>
    tpu.vector_store %arg14[%c21_308, %c0_309], %578 {strides = array<i32>} : memref<32x32xf32, #tpu.memory_space<vmem>>, vector<2x32xf32>,
    %c48 = arith.constant 48 : index
    %c0_310 = arith.constant 0 : index
    %580 = tpu.strided_load %arg15[%c48, %c0_310] {strides = array<i32: 2, 1>} : memref<610x32xf32, #tpu.memory_space<vmem>>, vector<2x32xf32>
    %c49_311 = arith.constant 49 : index
    %c0_312 = arith.constant 0 : index
    %581 = tpu.strided_load %arg15[%c49_311, %c0_312] {strides = array<i32: 2, 1>} : memref<610x32xf32, #tpu.memory_space<vmem>>, vector<2x32xf32>
    %c54_313 = arith.constant 54 : index
    %c0_314 = arith.constant 0 : index
    %582 = tpu.strided_load %arg15[%c54_313, %c0_314] {strides = array<i32: 2, 1>} : memref<610x32xf32, #tpu.memory_space<vmem>>, vector<2x32xf32>
    %c55_315 = arith.constant 55 : index
    %c0_316 = arith.constant 0 : index
    %583 = tpu.strided_load %arg15[%c55_315, %c0_316] {strides = array<i32: 2, 1>} : memref<610x32xf32, #tpu.memory_space<vmem>>, vector<2x32xf32>
    %584 = arith.maximumf %580, %581 : vector<2x32xf32>
    %585 = arith.maximumf %582, %583 : vector<2x32xf32>
    %586 = arith.maximumf %584, %585 : vector<2x32xf32>
    %587 = arith.minimumf %580, %581 : vector<2x32xf32>
    %588 = arith.minimumf %582, %583 : vector<2x32xf32>
    %589 = arith.minimumf %587, %588 : vector<2x32xf32>
    %590 = arith.select %530, %586, %589 : vector<2x32xi1>, vector<2x32xf32>
    %591 = arith.mulf %590, %526 : vector<2x32xf32>
    %592 = arith.addf %591, %528 : vector<2x32xf32>
    %cst_317 = arith.constant 0.000000e+00 : f32
    %593 = vector.broadcast %cst_317 : f32 to vector<2x32xf32>
    %594 = arith.maximumf %592, %593 : vector<2x32xf32>
    %c25_318 = arith.constant 25 : index
    %c0_319 = arith.constant 0 : index
    %595 = vector.load %arg14[%c25_318, %c0_319] : memref<32x32xf32, #tpu.memory_space<vmem>>, vector<2x32xf32>
    tpu.vector_store %arg14[%c25_318, %c0_319], %594 {strides = array<i32>} : memref<32x32xf32, #tpu.memory_space<vmem>>, vector<2x32xf32>,
    %c0_320 = arith.constant 0 : index
    %c0_321 = arith.constant 0 : index
    %596 = vector.load %arg14[%c0_320, %c0_321] : memref<32x32xf32, #tpu.memory_space<vmem>>, vector<22x32xf32>
    %c1_322 = arith.constant 1 : index
    %c0_323 = arith.constant 0 : index
    %597 = vector.load %arg14[%c1_322, %c0_323] : memref<32x32xf32, #tpu.memory_space<vmem>>, vector<22x32xf32>
    %c2_324 = arith.constant 2 : index
    %c0_325 = arith.constant 0 : index
    %598 = vector.load %arg14[%c2_324, %c0_325] : memref<32x32xf32, #tpu.memory_space<vmem>>, vector<22x32xf32>
    %c4 = arith.constant 4 : index
    %c0_326 = arith.constant 0 : index
    %599 = vector.load %arg14[%c4, %c0_326] : memref<32x32xf32, #tpu.memory_space<vmem>>, vector<22x32xf32>
    %c5_327 = arith.constant 5 : index
    %c0_328 = arith.constant 0 : index
    %600 = vector.load %arg14[%c5_327, %c0_328] : memref<32x32xf32, #tpu.memory_space<vmem>>, vector<22x32xf32>
    %c6_329 = arith.constant 6 : index
    %c0_330 = arith.constant 0 : index
    %601 = vector.load %arg14[%c6_329, %c0_330] : memref<32x32xf32, #tpu.memory_space<vmem>>, vector<22x32xf32>
    %c8_331 = arith.constant 8 : index
    %c0_332 = arith.constant 0 : index
    %602 = vector.load %arg14[%c8_331, %c0_332] : memref<32x32xf32, #tpu.memory_space<vmem>>, vector<22x32xf32>
    %c9_333 = arith.constant 9 : index
    %c0_334 = arith.constant 0 : index
    %603 = vector.load %arg14[%c9_333, %c0_334] : memref<32x32xf32, #tpu.memory_space<vmem>>, vector<22x32xf32>
    %c10_335 = arith.constant 10 : index
    %c0_336 = arith.constant 0 : index
    %604 = vector.load %arg14[%c10_335, %c0_336] : memref<32x32xf32, #tpu.memory_space<vmem>>, vector<22x32xf32>
    %605 = tpu.concatenate %596, %597, %598, %599, %600, %601, %602, %603, %604 in 1 : vector<22x32xf32>, vector<22x32xf32>, vector<22x32xf32>, vector<22x32xf32>, vector<22x32xf32>, vector<22x32xf32>, vector<22x32xf32>, vector<22x32xf32>, vector<22x32xf32> -> vector<22x288xf32>
    %606 = arith.truncf %605 : vector<22x288xf32> to vector<22x288xbf16>
    %c2_337 = arith.constant 2 : index
    %c0_338 = arith.constant 0 : index
    %c0_339 = arith.constant 0 : index
    %607 = vector.load %arg2[%c2_337, %c0_338, %c0_339] : memref<3x288x32xbf16, #tpu.memory_space<vmem>>, vector<1x288x32xbf16>
    %608 = vector.shape_cast %607 : vector<1x288x32xbf16> to vector<288x32xbf16>
    %cst_340 = arith.constant dense<0.000000e+00> : vector<22x32xf32>
    %609 = tpu.matmul %606, %608, %cst_340 {dimension_numbers = #tpu.dot_dimension_numbers<[1], [0], [0], [1], [0, 0, 1, 1], [], []>} : vector<22x288xbf16>, vector<288x32xbf16>, vector<22x32xf32> -> vector<22x32xf32>
    %c0_341 = arith.constant 0 : index
    %c0_342 = arith.constant 0 : index
    %610 = vector.load %arg8[%c0_341, %c0_342] : memref<22x1xf32, #tpu.memory_space<vmem>>, vector<22x1xf32>
    %611 = vector.broadcast %610 : vector<22x1xf32> to vector<22x32xf32>
    %612 = arith.mulf %609, %611 : vector<22x32xf32>
    %cst_343 = arith.constant dense<0.000000e+00> : vector<32xf32>
    %613 = vector.multi_reduction <add>, %612, %cst_343 [0] : vector<22x32xf32> to vector<32xf32>
    %614 = vector.shape_cast %613 : vector<32xf32> to vector<1x32xf32>
    %cst_344 = arith.constant 1.250000e-01 : f32
    %615 = vector.broadcast %cst_344 : f32 to vector<1x32xf32>
    %616 = arith.mulf %614, %615 : vector<1x32xf32>
    %617 = vector.broadcast %616 : vector<1x32xf32> to vector<22x32xf32>
    %618 = arith.subf %609, %617 : vector<22x32xf32>
    %619 = arith.mulf %618, %618 : vector<22x32xf32>
    %620 = vector.broadcast %610 : vector<22x1xf32> to vector<22x32xf32>
    %621 = arith.mulf %619, %620 : vector<22x32xf32>
    %cst_345 = arith.constant dense<0.000000e+00> : vector<32xf32>
    %622 = vector.multi_reduction <add>, %621, %cst_345 [0] : vector<22x32xf32> to vector<32xf32>
    %623 = vector.shape_cast %622 : vector<32xf32> to vector<1x32xf32>
    %cst_346 = arith.constant 1.250000e-01 : f32
    %624 = vector.broadcast %cst_346 : f32 to vector<1x32xf32>
    %625 = arith.mulf %623, %624 : vector<1x32xf32>
    %c3 = arith.constant 3 : index
    %c0_347 = arith.constant 0 : index
    %c0_348 = arith.constant 0 : index
    %626 = vector.load %arg3[%c3, %c0_347, %c0_348] : memref<4x1x32xf32, #tpu.memory_space<vmem>>, vector<1x1x32xf32>
    %627 = vector.shape_cast %626 : vector<1x1x32xf32> to vector<1x32xf32>
    %cst_349 = arith.constant 9.99999974E-6 : f32
    %628 = vector.broadcast %cst_349 : f32 to vector<1x32xf32>
    %629 = arith.addf %625, %628 : vector<1x32xf32>
    %630 = math.rsqrt %629 : vector<1x32xf32>
    %631 = arith.mulf %627, %630 : vector<1x32xf32>
    %c3_350 = arith.constant 3 : index
    %c0_351 = arith.constant 0 : index
    %c0_352 = arith.constant 0 : index
    %632 = vector.load %arg4[%c3_350, %c0_351, %c0_352] : memref<4x1x32xf32, #tpu.memory_space<vmem>>, vector<1x1x32xf32>
    %633 = vector.shape_cast %632 : vector<1x1x32xf32> to vector<1x32xf32>
    %634 = arith.mulf %616, %631 : vector<1x32xf32>
    %635 = arith.subf %633, %634 : vector<1x32xf32>
    %cst_353 = arith.constant 0.000000e+00 : f32
    %636 = vector.broadcast %cst_353 : f32 to vector<1x32xf32>
    %637 = arith.cmpf oge, %631, %636 : vector<1x32xf32>
    %c0_354 = arith.constant 0 : index
    %c0_355 = arith.constant 0 : index
    %638 = vector.load %arg15[%c0_354, %c0_355] : memref<610x32xf32, #tpu.memory_space<vmem>>, vector<22x32xf32>
    tpu.vector_store %arg15[%c0_354, %c0_355], %609 {strides = array<i32>} : memref<610x32xf32, #tpu.memory_space<vmem>>, vector<22x32xf32>,
    %c0_356 = arith.constant 0 : index
    %c0_357 = arith.constant 0 : index
    %639 = tpu.strided_load %arg15[%c0_356, %c0_357] {strides = array<i32: 2, 1>} : memref<610x32xf32, #tpu.memory_space<vmem>>, vector<1x32xf32>
    %c1_358 = arith.constant 1 : index
    %c0_359 = arith.constant 0 : index
    %640 = tpu.strided_load %arg15[%c1_358, %c0_359] {strides = array<i32: 2, 1>} : memref<610x32xf32, #tpu.memory_space<vmem>>, vector<1x32xf32>
    %c4_360 = arith.constant 4 : index
    %c0_361 = arith.constant 0 : index
    %641 = tpu.strided_load %arg15[%c4_360, %c0_361] {strides = array<i32: 2, 1>} : memref<610x32xf32, #tpu.memory_space<vmem>>, vector<1x32xf32>
    %c5_362 = arith.constant 5 : index
    %c0_363 = arith.constant 0 : index
    %642 = tpu.strided_load %arg15[%c5_362, %c0_363] {strides = array<i32: 2, 1>} : memref<610x32xf32, #tpu.memory_space<vmem>>, vector<1x32xf32>
    %643 = arith.maximumf %639, %640 : vector<1x32xf32>
    %644 = arith.maximumf %641, %642 : vector<1x32xf32>
    %645 = arith.maximumf %643, %644 : vector<1x32xf32>
    %646 = arith.minimumf %639, %640 : vector<1x32xf32>
    %647 = arith.minimumf %641, %642 : vector<1x32xf32>
    %648 = arith.minimumf %646, %647 : vector<1x32xf32>
    %649 = arith.select %637, %645, %648 : vector<1x32xi1>, vector<1x32xf32>
    %650 = arith.mulf %649, %631 : vector<1x32xf32>
    %651 = arith.addf %650, %635 : vector<1x32xf32>
    %cst_364 = arith.constant 0.000000e+00 : f32
    %652 = vector.broadcast %cst_364 : f32 to vector<1x32xf32>
    %653 = arith.maximumf %651, %652 : vector<1x32xf32>
    %cst_365 = arith.constant dense<0.000000e+00> : vector<32xf32>
    %654 = vector.multi_reduction <add>, %653, %cst_365 [0] : vector<1x32xf32> to vector<32xf32>
    %655 = vector.shape_cast %654 : vector<32xf32> to vector<1x32xf32>
    %656 = arith.addf %6, %655 : vector<1x32xf32>
    %c16 = arith.constant 16 : index
    %c0_366 = arith.constant 0 : index
    %657 = tpu.strided_load %arg15[%c16, %c0_366] {strides = array<i32: 2, 1>} : memref<610x32xf32, #tpu.memory_space<vmem>>, vector<1x32xf32>
    %c17 = arith.constant 17 : index
    %c0_367 = arith.constant 0 : index
    %658 = tpu.strided_load %arg15[%c17, %c0_367] {strides = array<i32: 2, 1>} : memref<610x32xf32, #tpu.memory_space<vmem>>, vector<1x32xf32>
    %c20_368 = arith.constant 20 : index
    %c0_369 = arith.constant 0 : index
    %659 = tpu.strided_load %arg15[%c20_368, %c0_369] {strides = array<i32: 2, 1>} : memref<610x32xf32, #tpu.memory_space<vmem>>, vector<1x32xf32>
    %c21_370 = arith.constant 21 : index
    %c0_371 = arith.constant 0 : index
    %660 = tpu.strided_load %arg15[%c21_370, %c0_371] {strides = array<i32: 2, 1>} : memref<610x32xf32, #tpu.memory_space<vmem>>, vector<1x32xf32>
    %661 = arith.maximumf %657, %658 : vector<1x32xf32>
    %662 = arith.maximumf %659, %660 : vector<1x32xf32>
    %663 = arith.maximumf %661, %662 : vector<1x32xf32>
    %664 = arith.minimumf %657, %658 : vector<1x32xf32>
    %665 = arith.minimumf %659, %660 : vector<1x32xf32>
    %666 = arith.minimumf %664, %665 : vector<1x32xf32>
    %667 = arith.select %637, %663, %666 : vector<1x32xi1>, vector<1x32xf32>
    %668 = arith.mulf %667, %631 : vector<1x32xf32>
    %669 = arith.addf %668, %635 : vector<1x32xf32>
    %cst_372 = arith.constant 0.000000e+00 : f32
    %670 = vector.broadcast %cst_372 : f32 to vector<1x32xf32>
    %671 = arith.maximumf %669, %670 : vector<1x32xf32>
    %cst_373 = arith.constant dense<0.000000e+00> : vector<32xf32>
    %672 = vector.multi_reduction <add>, %671, %cst_373 [0] : vector<1x32xf32> to vector<32xf32>
    %673 = vector.shape_cast %672 : vector<32xf32> to vector<1x32xf32>
    %674 = arith.addf %7, %673 : vector<1x32xf32>
    %675 = tpu.concatenate %656, %674 in 0 : vector<1x32xf32>, vector<1x32xf32> -> vector<2x32xf32>
    %cst_374 = arith.constant 1.000000e+00 : f32
    %676 = vector.broadcast %cst_374 : f32 to vector<2x32xf32>
    %677 = arith.mulf %675, %676 : vector<2x32xf32>
    %c0_375 = arith.constant 0 : index
    %c0_376 = arith.constant 0 : index
    %678 = vector.load %arg9[%c0_375, %c0_376] : memref<32x8xf32, #tpu.memory_space<vmem>>, vector<32x8xf32>
    %cst_377 = arith.constant dense<0.000000e+00> : vector<2x8xf32>
    %679 = tpu.matmul %677, %678, %cst_377 {dimension_numbers = #tpu.dot_dimension_numbers<[1], [0], [0], [1], [0, 0, 1, 1], [], []>} : vector<2x32xf32>, vector<32x8xf32>, vector<2x8xf32> -> vector<2x8xf32>
    %c0_378 = arith.constant 0 : index
    %c0_379 = arith.constant 0 : index
    %680 = vector.load %arg10[%c0_378, %c0_379] : memref<1x8xf32, #tpu.memory_space<vmem>>, vector<1x8xf32>
    %681 = vector.broadcast %680 : vector<1x8xf32> to vector<2x8xf32>
    %682 = arith.addf %679, %681 : vector<2x8xf32>
    %c0_380 = arith.constant 0 : index
    %c0_381 = arith.constant 0 : index
    %683 = vector.load %arg11[%c0_380, %c0_381] : memref<2x8xf32, #tpu.memory_space<vmem>>, vector<2x8xf32>
    tpu.vector_store %arg11[%c0_380, %c0_381], %682 {strides = array<i32>} : memref<2x8xf32, #tpu.memory_space<vmem>>, vector<2x8xf32>,
    return
  }
}

</mosaic_0001>

<llo_original>
// kernel: cnn_forward.1
$region0: #{cnn_forward.1}
  #allocation0 [shape = 'u32[]', space=smem, size = 0x4, offset = 0x4, fixed_abs, tag = 'smem constant byte address 0x4 - core index']
  #allocation1 [shape = 'u32[144,128]{1,0:T(1,128)}', space=vmem, size = 0x12000, scoped, tag = 'internal scratch']
  #allocation2 [shape = 'f32[200,32]{1,0:T(8,128)}', space=vmem, size = 0x19000, scoped, tag = 'scratch operand']
  #allocation3 [shape = 'f32[72,32]{1,0:T(8,128)}', space=vmem, size = 0x9000, scoped, tag = 'scratch operand']
  #allocation4 [shape = 'f32[32,32]{1,0:T(8,128)}', space=vmem, size = 0x4000, scoped, tag = 'scratch operand']
  #allocation5 [shape = 'f32[610,32]{1,0:T(8,128)}', space=vmem, size = 0x4d000, scoped, tag = 'scratch operand']
  %s0 = inlined_call_operand.vmem [shape: f32[648,4], index: 0, kind: input, shape index: {}]
  %s1 = inlined_call_operand.vmem [shape: bf16[36,32], index: 1, kind: input, shape index: {}]
  %s2 = inlined_call_operand.vmem [shape: bf16[3,288,32], index: 2, kind: input, shape index: {}]
  %s3 = inlined_call_operand.vmem [shape: f32[4,1,32], index: 3, kind: input, shape index: {}]
  %s4 = inlined_call_operand.vmem [shape: f32[4,1,32], index: 4, kind: input, shape index: {}]
  %s5 = inlined_call_operand.vmem [shape: f32[610,1], index: 5, kind: input, shape index: {}]
  %s6 = inlined_call_operand.vmem [shape: f32[178,1], index: 6, kind: input, shape index: {}]
  %s7 = inlined_call_operand.vmem [shape: f32[58,1], index: 7, kind: input, shape index: {}]
  %s8 = inlined_call_operand.vmem [shape: f32[22,1], index: 8, kind: input, shape index: {}]
  %s9 = inlined_call_operand.vmem [shape: f32[32,8], index: 9, kind: input, shape index: {}]
  %s10 = inlined_call_operand.vmem [shape: f32[1,8], index: 10, kind: input, shape index: {}]
  %s11 = inlined_call_operand.hbm [shape: f32[2,8], index: 11, kind: output, shape index: {}]
  %s12 = sld [smem:[#allocation0]]
  $region54: #{cnn_forward.1} parent=0
    _
  %s14 = ssub.s32 1, %s12
  %s15 = scalar_select 0, %s14, %s12
  $region1: #{cnn_forward.1} parent=0
    #allocation6 [shape = 'u8[1024]{0}', space=vmem, size = 0x400, scoped, tag = 'output window, operand 0, single buffered']
    #allocation7 [shape = 's32[1]{0}', space=sflag, size = 0x4, scoped, tag = 'scoped memory for cnn_forward.1']
    %16 = vsyncpa [#allocation7], 0
    // Predicated region
    $region2: #{cnn_forward.1} parent=1 // pred_check
      _
    $region3: #{cnn_forward.1} parent=1 // pred_check_branch
      %18 = sbr.rel (0) target = $region5
    $region4: #{cnn_forward.1} parent=1 // pred_region
      _
    $region5: #{cnn_forward.1} parent=1 // pred_fallthru
      _
    // Predicated region
    $region6: #{cnn_forward.1} parent=1 // pred_check
      _
    $region7: #{cnn_forward.1} parent=1 // pred_check_branch
      %20 = sbr.rel (0) target = $region9
    $region8: #{cnn_forward.1} parent=1 // pred_region
      _
    $region9: #{cnn_forward.1} parent=1 // pred_fallthru
      _
    // Predicated region
    $region10: #{cnn_forward.1} parent=1 // pred_check
      _
    $region11: #{cnn_forward.1} parent=1 // pred_check_branch
      %22 = sbr.rel (0) target = $region13
    $region12: #{cnn_forward.1} parent=1 // pred_region
      _
    $region13: #{cnn_forward.1} parent=1 // pred_fallthru
      _
    // Predicated region
    $region14: #{cnn_forward.1} parent=1 // pred_check
      _
    $region15: #{cnn_forward.1} parent=1 // pred_check_branch
      %24 = sbr.rel (0) target = $region17
    $region16: #{cnn_forward.1} parent=1 // pred_region
      _
    $region17: #{cnn_forward.1} parent=1 // pred_fallthru
      _
    // Predicated region
    $region18: #{cnn_forward.1} parent=1 // pred_check
      _
    $region19: #{cnn_forward.1} parent=1 // pred_check_branch
      %26 = sbr.rel (0) target = $region21
    $region20: #{cnn_forward.1} parent=1 // pred_region
      _
    $region21: #{cnn_forward.1} parent=1 // pred_fallthru
      _
    // Predicated region
    $region22: #{cnn_forward.1} parent=1 // pred_check
      _
    $region23: #{cnn_forward.1} parent=1 // pred_check_branch
      %28 = sbr.rel (0) target = $region25
    $region24: #{cnn_forward.1} parent=1 // pred_region
      _
    $region25: #{cnn_forward.1} parent=1 // pred_fallthru
      _
    // Predicated region
    $region26: #{cnn_forward.1} parent=1 // pred_check
      _
    $region27: #{cnn_forward.1} parent=1 // pred_check_branch
      %30 = sbr.rel (0) target = $region29
    $region28: #{cnn_forward.1} parent=1 // pred_region
      _
    $region29: #{cnn_forward.1} parent=1 // pred_fallthru
      _
    // Predicated region
    $region30: #{cnn_forward.1} parent=1 // pred_check
      _
    $region31: #{cnn_forward.1} parent=1 // pred_check_branch
      %32 = sbr.rel (0) target = $region33
    $region32: #{cnn_forward.1} parent=1 // pred_region
      _
    $region33: #{cnn_forward.1} parent=1 // pred_fallthru
      _
    // Predicated region
    $region34: #{cnn_forward.1} parent=1 // pred_check
      _
    $region35: #{cnn_forward.1} parent=1 // pred_check_branch
      %34 = sbr.rel (0) target = $region37
    $region36: #{cnn_forward.1} parent=1 // pred_region
      _
    $region37: #{cnn_forward.1} parent=1 // pred_fallthru
      _
    // Predicated region
    $region38: #{cnn_forward.1} parent=1 // pred_check
      _
    $region39: #{cnn_forward.1} parent=1 // pred_check_branch
      %36 = sbr.rel (0) target = $region41
    $region40: #{cnn_forward.1} parent=1 // pred_region
      _
    $region41: #{cnn_forward.1} parent=1 // pred_fallthru
      _
    // Predicated region
    $region42: #{cnn_forward.1} parent=1 // pred_check
      _
    $region43: #{cnn_forward.1} parent=1 // pred_check_branch
      %38 = sbr.rel (0) target = $region45
    $region44: #{cnn_forward.1} parent=1 // pred_region
      _
    $region45: #{cnn_forward.1} parent=1 // pred_fallthru
      _
    %vm40 = vcmask 261120
    %41 = vst.msk [vmem:[#allocation2] sm:$0xff] %vm40, 0.0
    %42 = vst.msk [vmem:[#allocation2 + $0x8] sm:$0xff] %vm40, 0.0
    %43 = vst.msk [vmem:[#allocation2 + $0x10] sm:$0xff] %vm40, 0.0
    %44 = vst.msk [vmem:[#allocation2 + $0x18] sm:$0xff] %vm40, 0.0
    %45 = vst.msk [vmem:[#allocation2 + $0x20] sm:$0xff] %vm40, 0.0
    %46 = vst.msk [vmem:[#allocation2 + $0x28] sm:$0xff] %vm40, 0.0
    %47 = vst.msk [vmem:[#allocation2 + $0x30] sm:$0xff] %vm40, 0.0
    %48 = vst.msk [vmem:[#allocation2 + $0x38] sm:$0xff] %vm40, 0.0
    %49 = vst.msk [vmem:[#allocation2 + $0x40] sm:$0xff] %vm40, 0.0
    %50 = vst.msk [vmem:[#allocation2 + $0x48] sm:$0xff] %vm40, 0.0
    %51 = vst.msk [vmem:[#allocation2 + $0x50] sm:$0xff] %vm40, 0.0
    %52 = vst.msk [vmem:[#allocation2 + $0x58] sm:$0xff] %vm40, 0.0
    %53 = vst.msk [vmem:[#allocation2 + $0x60] sm:$0xff] %vm40, 0.0
    %54 = vst.msk [vmem:[#allocation2 + $0x68] sm:$0xff] %vm40, 0.0
    %55 = vst.msk [vmem:[#allocation2 + $0x70] sm:$0xff] %vm40, 0.0
    %56 = vst.msk [vmem:[#allocation2 + $0x78] sm:$0xff] %vm40, 0.0
    %57 = vst.msk [vmem:[#allocation2 + $0x80] sm:$0xff] %vm40, 0.0
    %58 = vst.msk [vmem:[#allocation2 + $0x88] sm:$0xff] %vm40, 0.0
    %59 = vst.msk [vmem:[#allocation2 + $0x90] sm:$0xff] %vm40, 0.0
    %60 = vst.msk [vmem:[#allocation2 + $0x98] sm:$0xff] %vm40, 0.0
    %61 = vst.msk [vmem:[#allocation2 + $0xa0] sm:$0xff] %vm40, 0.0
    %62 = vst.msk [vmem:[#allocation2 + $0xa8] sm:$0xff] %vm40, 0.0
    %63 = vst.msk [vmem:[#allocation2 + $0xb0] sm:$0xff] %vm40, 0.0
    %64 = vst.msk [vmem:[#allocation2 + $0xb8] sm:$0xff] %vm40, 0.0
    %65 = vst.msk [vmem:[#allocation2 + $0xc0] sm:$0xff] %vm40, 0.0
    %66 = vst.msk [vmem:[#allocation3] sm:$0xff] %vm40, 0.0
    %67 = vst.msk [vmem:[#allocation3 + $0x8] sm:$0xff] %vm40, 0.0
    %68 = vst.msk [vmem:[#allocation3 + $0x10] sm:$0xff] %vm40, 0.0
    %69 = vst.msk [vmem:[#allocation3 + $0x18] sm:$0xff] %vm40, 0.0
    %70 = vst.msk [vmem:[#allocation3 + $0x20] sm:$0xff] %vm40, 0.0
    %71 = vst.msk [vmem:[#allocation3 + $0x28] sm:$0xff] %vm40, 0.0
    %72 = vst.msk [vmem:[#allocation3 + $0x30] sm:$0xff] %vm40, 0.0
    %73 = vst.msk [vmem:[#allocation3 + $0x38] sm:$0xff] %vm40, 0.0
    %74 = vst.msk [vmem:[#allocation3 + $0x40] sm:$0xff] %vm40, 0.0
    %75 = vst.msk [vmem:[#allocation4] sm:$0xff] %vm40, 0.0
    %76 = vst.msk [vmem:[#allocation4 + $0x8] sm:$0xff] %vm40, 0.0
    %77 = vst.msk [vmem:[#allocation4 + $0x10] sm:$0xff] %vm40, 0.0
    %78 = vst.msk [vmem:[#allocation4 + $0x18] sm:$0xff] %vm40, 0.0
    %v79 = vld [vmem:[%s0] sm:$0xff]
    %v80 = vld [vmem:[%s0 + $0x8] sm:$0xff]
    %v81 = vld [vmem:[%s0 + $0x10] sm:$0xff]
    %v82 = vld [vmem:[%s0 + $0x18] sm:$0xff]
    %v83 = vld [vmem:[%s0 + $0x20] sm:$0xff]
    %v84 = vld [vmem:[%s0 + $0x28] sm:$0xff]
    %v85 = vld [vmem:[%s0 + $0x30] sm:$0xff]
    %v86 = vld [vmem:[%s0 + $0x38] sm:$0xff]
    %v87 = vld [vmem:[%s0 + $0x40] sm:$0xff]
    %v88 = vld [vmem:[%s0 + $0x48] sm:$0xff]
    %v89 = vld [vmem:[%s0 + $0x50] sm:$0xff]
    %v90 = vld [vmem:[%s0 + $0x58] sm:$0xff]
    %v91 = vld [vmem:[%s0 + $0x60] sm:$0xff]
    %v92 = vld [vmem:[%s0 + $0x68] sm:$0xff]
    %v93 = vld [vmem:[%s0 + $0x70] sm:$0xff]
    %v94 = vld [vmem:[%s0 + $0x78] sm:$0xff]
    %v95 = vld [vmem:[%s0 + $0x80] sm:$0xff]
    %v96 = vld [vmem:[%s0 + $0x88] sm:$0xff]
    %v97 = vld [vmem:[%s0 + $0x90] sm:$0xff]
    %v98 = vld [vmem:[%s0 + $0x98] sm:$0xff]
    %v99 = vld [vmem:[%s0 + $0xa0] sm:$0xff]
    %v100 = vld [vmem:[%s0 + $0xa8] sm:$0xff]
    %v101 = vld [vmem:[%s0 + $0xb0] sm:$0xff]
    %v102 = vld [vmem:[%s0 + $0xb8] sm:$0xff]
    %v103 = vld [vmem:[%s0 + $0xc0] sm:$0xff]
    %v104 = vld [vmem:[%s0 + $0xc8] sm:$0xff]
    %v105 = vld [vmem:[%s0 + $0xd0] sm:$0xff]
    %v106 = vld [vmem:[%s0 + $0xd8] sm:$0xff]
    %v107 = vld [vmem:[%s0 + $0xe0] sm:$0xff]
    %v108 = vld [vmem:[%s0 + $0xe8] sm:$0xff]
    %v109 = vld [vmem:[%s0 + $0xf0] sm:$0xff]
    %v110 = vld [vmem:[%s0 + $0xf8] sm:$0xff]
    %v111 = vld [vmem:[%s0 + $0x100] sm:$0xff]
    %v112 = vld [vmem:[%s0 + $0x108] sm:$0xff]
    %v113 = vld [vmem:[%s0 + $0x110] sm:$0xff]
    %v114 = vld [vmem:[%s0 + $0x118] sm:$0xff]
    %v115 = vld [vmem:[%s0 + $0x120] sm:$0xff]
    %v116 = vld [vmem:[%s0 + $0x128] sm:$0xff]
    %v117 = vld [vmem:[%s0 + $0x130] sm:$0xff]
    %v118 = vld [vmem:[%s0 + $0x138] sm:$0xff]
    %v119 = vld [vmem:[%s0 + $0x140] sm:$0xff]
    %v120 = vld [vmem:[%s0 + $0x148] sm:$0xff]
    %v121 = vld [vmem:[%s0 + $0x150] sm:$0xff]
    %v122 = vld [vmem:[%s0 + $0x158] sm:$0xff]
    %v123 = vld [vmem:[%s0 + $0x160] sm:$0xff]
    %v124 = vld [vmem:[%s0 + $0x168] sm:$0xff]
    %v125 = vld [vmem:[%s0 + $0x170] sm:$0xff]
    %v126 = vld [vmem:[%s0 + $0x178] sm:$0xff]
    %v127 = vld [vmem:[%s0 + $0x180] sm:$0xff]
    %v128 = vld [vmem:[%s0 + $0x188] sm:$0xff]
    %v129 = vld [vmem:[%s0 + $0x190] sm:$0xff]
    %v130 = vld [vmem:[%s0 + $0x198] sm:$0xff]
    %v131 = vld [vmem:[%s0 + $0x1a0] sm:$0xff]
    %v132 = vld [vmem:[%s0 + $0x1a8] sm:$0xff]
    %v133 = vld [vmem:[%s0 + $0x1b0] sm:$0xff]
    %v134 = vld [vmem:[%s0 + $0x1b8] sm:$0xff]
    %v135 = vld [vmem:[%s0 + $0x1c0] sm:$0xff]
    %v136 = vld [vmem:[%s0 + $0x1c8] sm:$0xff]
    %v137 = vld [vmem:[%s0 + $0x1d0] sm:$0xff]
    %v138 = vld [vmem:[%s0 + $0x1d8] sm:$0xff]
    %v139 = vld [vmem:[%s0 + $0x1e0] sm:$0xff]
    %v140 = vld [vmem:[%s0 + $0x1e8] sm:$0xff]
    %v141 = vld [vmem:[%s0 + $0x1f0] sm:$0xff]
    %v142 = vld [vmem:[%s0 + $0x1f8] sm:$0xff]
    %v143 = vld [vmem:[%s0 + $0x200] sm:$0xff]
    %v144 = vld [vmem:[%s0 + $0x208] sm:$0xff]
    %v145 = vld [vmem:[%s0 + $0x210] sm:$0xff]
    %v146 = vld [vmem:[%s0 + $0x218] sm:$0xff]
    %v147 = vld [vmem:[%s0 + $0x220] sm:$0xff]
    %v148 = vld [vmem:[%s0 + $0x228] sm:$0xff]
    %v149 = vld [vmem:[%s0 + $0x230] sm:$0xff]
    %v150 = vld [vmem:[%s0 + $0x238] sm:$0xff]
    %v151 = vld [vmem:[%s0 + $0x240] sm:$0xff]
    %v152 = vld [vmem:[%s0 + $0x248] sm:$0xff]
    %v153 = vld [vmem:[%s0 + $0x250] sm:$0xff]
    %v154 = vld [vmem:[%s0 + $0x258] sm:$0xff]
    %v155 = vld [vmem:[%s0 + $0x260] sm:$0x3]
    %v156 = vld [vmem:[%s0 + $0x1] sm:$0xff]
    %v157 = vld [vmem:[%s0 + $0x9] sm:$0xff]
    %v158 = vld [vmem:[%s0 + $0x11] sm:$0xff]
    %v159 = vld [vmem:[%s0 + $0x19] sm:$0xff]
    %v160 = vld [vmem:[%s0 + $0x21] sm:$0xff]
    %v161 = vld [vmem:[%s0 + $0x29] sm:$0xff]
    %v162 = vld [vmem:[%s0 + $0x31] sm:$0xff]
    %v163 = vld [vmem:[%s0 + $0x39] sm:$0xff]
    %v164 = vld [vmem:[%s0 + $0x41] sm:$0xff]
    %v165 = vld [vmem:[%s0 + $0x49] sm:$0xff]
    %v166 = vld [vmem:[%s0 + $0x51] sm:$0xff]
    %v167 = vld [vmem:[%s0 + $0x59] sm:$0xff]
    %v168 = vld [vmem:[%s0 + $0x61] sm:$0xff]
    %v169 = vld [vmem:[%s0 + $0x69] sm:$0xff]
    %v170 = vld [vmem:[%s0 + $0x71] sm:$0xff]
    %v171 = vld [vmem:[%s0 + $0x79] sm:$0xff]
    %v172 = vld [vmem:[%s0 + $0x81] sm:$0xff]
    %v173 = vld [vmem:[%s0 + $0x89] sm:$0xff]
    %v174 = vld [vmem:[%s0 + $0x91] sm:$0xff]
    %v175 = vld [vmem:[%s0 + $0x99] sm:$0xff]
    %v176 = vld [vmem:[%s0 + $0xa1] sm:$0xff]
    %v177 = vld [vmem:[%s0 + $0xa9] sm:$0xff]
    %v178 = vld [vmem:[%s0 + $0xb1] sm:$0xff]
    %v179 = vld [vmem:[%s0 + $0xb9] sm:$0xff]
    %v180 = vld [vmem:[%s0 + $0xc1] sm:$0xff]
    %v181 = vld [vmem:[%s0 + $0xc9] sm:$0xff]
    %v182 = vld [vmem:[%s0 + $0xd1] sm:$0xff]
    %v183 = vld [vmem:[%s0 + $0xd9] sm:$0xff]
    %v184 = vld [vmem:[%s0 + $0xe1] sm:$0xff]
    %v185 = vld [vmem:[%s0 + $0xe9] sm:$0xff]
    %v186 = vld [vmem:[%s0 + $0xf1] sm:$0xff]
    %v187 = vld [vmem:[%s0 + $0xf9] sm:$0xff]
    %v188 = vld [vmem:[%s0 + $0x101] sm:$0xff]
    %v189 = vld [vmem:[%s0 + $0x109] sm:$0xff]
    %v190 = vld [vmem:[%s0 + $0x111] sm:$0xff]
    %v191 = vld [vmem:[%s0 + $0x119] sm:$0xff]
    %v192 = vld [vmem:[%s0 + $0x121] sm:$0xff]
    %v193 = vld [vmem:[%s0 + $0x129] sm:$0xff]
    %v194 = vld [vmem:[%s0 + $0x131] sm:$0xff]
    %v195 = vld [vmem:[%s0 + $0x139] sm:$0xff]
    %v196 = vld [vmem:[%s0 + $0x141] sm:$0xff]
    %v197 = vld [vmem:[%s0 + $0x149] sm:$0xff]
    %v198 = vld [vmem:[%s0 + $0x151] sm:$0xff]
    %v199 = vld [vmem:[%s0 + $0x159] sm:$0xff]
    %v200 = vld [vmem:[%s0 + $0x161] sm:$0xff]
    %v201 = vld [vmem:[%s0 + $0x169] sm:$0xff]
    %v202 = vld [vmem:[%s0 + $0x171] sm:$0xff]
    %v203 = vld [vmem:[%s0 + $0x179] sm:$0xff]
    %v204 = vld [vmem:[%s0 + $0x181] sm:$0xff]
    %v205 = vld [vmem:[%s0 + $0x189] sm:$0xff]
    %v206 = vld [vmem:[%s0 + $0x191] sm:$0xff]
    %v207 = vld [vmem:[%s0 + $0x199] sm:$0xff]
    %v208 = vld [vmem:[%s0 + $0x1a1] sm:$0xff]
    %v209 = vld [vmem:[%s0 + $0x1a9] sm:$0xff]
    %v210 = vld [vmem:[%s0 + $0x1b1] sm:$0xff]
    %v211 = vld [vmem:[%s0 + $0x1b9] sm:$0xff]
    %v212 = vld [vmem:[%s0 + $0x1c1] sm:$0xff]
    %v213 = vld [vmem:[%s0 + $0x1c9] sm:$0xff]
    %v214 = vld [vmem:[%s0 + $0x1d1] sm:$0xff]
    %v215 = vld [vmem:[%s0 + $0x1d9] sm:$0xff]
    %v216 = vld [vmem:[%s0 + $0x1e1] sm:$0xff]
    %v217 = vld [vmem:[%s0 + $0x1e9] sm:$0xff]
    %v218 = vld [vmem:[%s0 + $0x1f1] sm:$0xff]
    %v219 = vld [vmem:[%s0 + $0x1f9] sm:$0xff]
    %v220 = vld [vmem:[%s0 + $0x201] sm:$0xff]
    %v221 = vld [vmem:[%s0 + $0x209] sm:$0xff]
    %v222 = vld [vmem:[%s0 + $0x211] sm:$0xff]
    %v223 = vld [vmem:[%s0 + $0x219] sm:$0xff]
    %v224 = vld [vmem:[%s0 + $0x221] sm:$0xff]
    %v225 = vld [vmem:[%s0 + $0x229] sm:$0xff]
    %v226 = vld [vmem:[%s0 + $0x231] sm:$0xff]
    %v227 = vld [vmem:[%s0 + $0x239] sm:$0xff]
    %v228 = vld [vmem:[%s0 + $0x241] sm:$0xff]
    %v229 = vld [vmem:[%s0 + $0x249] sm:$0xff]
    %v230 = vld [vmem:[%s0 + $0x251] sm:$0xff]
    %v231 = vld [vmem:[%s0 + $0x259] sm:$0xff]
    %v232 = vld [vmem:[%s0 + $0x261] sm:$0x3]
    %v233 = vld [vmem:[%s0 + $0x2] sm:$0xff]
    %v234 = vld [vmem:[%s0 + $0xa] sm:$0xff]
    %v235 = vld [vmem:[%s0 + $0x12] sm:$0xff]
    %v236 = vld [vmem:[%s0 + $0x1a] sm:$0xff]
    %v237 = vld [vmem:[%s0 + $0x22] sm:$0xff]
    %v238 = vld [vmem:[%s0 + $0x2a] sm:$0xff]
    %v239 = vld [vmem:[%s0 + $0x32] sm:$0xff]
    %v240 = vld [vmem:[%s0 + $0x3a] sm:$0xff]
    %v241 = vld [vmem:[%s0 + $0x42] sm:$0xff]
    %v242 = vld [vmem:[%s0 + $0x4a] sm:$0xff]
    %v243 = vld [vmem:[%s0 + $0x52] sm:$0xff]
    %v244 = vld [vmem:[%s0 + $0x5a] sm:$0xff]
    %v245 = vld [vmem:[%s0 + $0x62] sm:$0xff]
    %v246 = vld [vmem:[%s0 + $0x6a] sm:$0xff]
    %v247 = vld [vmem:[%s0 + $0x72] sm:$0xff]
    %v248 = vld [vmem:[%s0 + $0x7a] sm:$0xff]
    %v249 = vld [vmem:[%s0 + $0x82] sm:$0xff]
    %v250 = vld [vmem:[%s0 + $0x8a] sm:$0xff]
    %v251 = vld [vmem:[%s0 + $0x92] sm:$0xff]
    %v252 = vld [vmem:[%s0 + $0x9a] sm:$0xff]
    %v253 = vld [vmem:[%s0 + $0xa2] sm:$0xff]
    %v254 = vld [vmem:[%s0 + $0xaa] sm:$0xff]
    %v255 = vld [vmem:[%s0 + $0xb2] sm:$0xff]
    %v256 = vld [vmem:[%s0 + $0xba] sm:$0xff]
    %v257 = vld [vmem:[%s0 + $0xc2] sm:$0xff]
    %v258 = vld [vmem:[%s0 + $0xca] sm:$0xff]
    %v259 = vld [vmem:[%s0 + $0xd2] sm:$0xff]
    %v260 = vld [vmem:[%s0 + $0xda] sm:$0xff]
    %v261 = vld [vmem:[%s0 + $0xe2] sm:$0xff]
    %v262 = vld [vmem:[%s0 + $0xea] sm:$0xff]
    %v263 = vld [vmem:[%s0 + $0xf2] sm:$0xff]
    %v264 = vld [vmem:[%s0 + $0xfa] sm:$0xff]
    %v265 = vld [vmem:[%s0 + $0x102] sm:$0xff]
    %v266 = vld [vmem:[%s0 + $0x10a] sm:$0xff]
    %v267 = vld [vmem:[%s0 + $0x112] sm:$0xff]
    %v268 = vld [vmem:[%s0 + $0x11a] sm:$0xff]
    %v269 = vld [vmem:[%s0 + $0x122] sm:$0xff]
    %v270 = vld [vmem:[%s0 + $0x12a] sm:$0xff]
    %v271 = vld [vmem:[%s0 + $0x132] sm:$0xff]
    %v272 = vld [vmem:[%s0 + $0x13a] sm:$0xff]
    %v273 = vld [vmem:[%s0 + $0x142] sm:$0xff]
    %v274 = vld [vmem:[%s0 + $0x14a] sm:$0xff]
    %v275 = vld [vmem:[%s0 + $0x152] sm:$0xff]
    %v276 = vld [vmem:[%s0 + $0x15a] sm:$0xff]
    %v277 = vld [vmem:[%s0 + $0x162] sm:$0xff]
    %v278 = vld [vmem:[%s0 + $0x16a] sm:$0xff]
    %v279 = vld [vmem:[%s0 + $0x172] sm:$0xff]
    %v280 = vld [vmem:[%s0 + $0x17a] sm:$0xff]
    %v281 = vld [vmem:[%s0 + $0x182] sm:$0xff]
    %v282 = vld [vmem:[%s0 + $0x18a] sm:$0xff]
    %v283 = vld [vmem:[%s0 + $0x192] sm:$0xff]
    %v284 = vld [vmem:[%s0 + $0x19a] sm:$0xff]
    %v285 = vld [vmem:[%s0 + $0x1a2] sm:$0xff]
    %v286 = vld [vmem:[%s0 + $0x1aa] sm:$0xff]
    %v287 = vld [vmem:[%s0 + $0x1b2] sm:$0xff]
    %v288 = vld [vmem:[%s0 + $0x1ba] sm:$0xff]
    %v289 = vld [vmem:[%s0 + $0x1c2] sm:$0xff]
    %v290 = vld [vmem:[%s0 + $0x1ca] sm:$0xff]
    %v291 = vld [vmem:[%s0 + $0x1d2] sm:$0xff]
    %v292 = vld [vmem:[%s0 + $0x1da] sm:$0xff]
    %v293 = vld [vmem:[%s0 + $0x1e2] sm:$0xff]
    %v294 = vld [vmem:[%s0 + $0x1ea] sm:$0xff]
    %v295 = vld [vmem:[%s0 + $0x1f2] sm:$0xff]
    %v296 = vld [vmem:[%s0 + $0x1fa] sm:$0xff]
    %v297 = vld [vmem:[%s0 + $0x202] sm:$0xff]
    %v298 = vld [vmem:[%s0 + $0x20a] sm:$0xff]
    %v299 = vld [vmem:[%s0 + $0x212] sm:$0xff]
    %v300 = vld [vmem:[%s0 + $0x21a] sm:$0xff]
    %v301 = vld [vmem:[%s0 + $0x222] sm:$0xff]
    %v302 = vld [vmem:[%s0 + $0x22a] sm:$0xff]
    %v303 = vld [vmem:[%s0 + $0x232] sm:$0xff]
    %v304 = vld [vmem:[%s0 + $0x23a] sm:$0xff]
    %v305 = vld [vmem:[%s0 + $0x242] sm:$0xff]
    %v306 = vld [vmem:[%s0 + $0x24a] sm:$0xff]
    %v307 = vld [vmem:[%s0 + $0x252] sm:$0xff]
    %v308 = vld [vmem:[%s0 + $0x25a] sm:$0xff]
    %v309 = vld [vmem:[%s0 + $0x262] sm:$0x3]
    %v310 = vld [vmem:[%s0 + $0x262] sm:$0xff]
    %v311 = vld [vmem:[%s0 + $0x26a] sm:$0xff]
    %v312 = vld [vmem:[%s0 + $0x272] sm:$0x3]
    %v313 = vld [vmem:[%s0 + $0x13] sm:$0xff]
    %v314 = vld [vmem:[%s0 + $0x1b] sm:$0xff]
    %v315 = vld [vmem:[%s0 + $0x23] sm:$0xff]
    %v316 = vld [vmem:[%s0 + $0x2b] sm:$0xff]
    %v317 = vld [vmem:[%s0 + $0x33] sm:$0xff]
    %v318 = vld [vmem:[%s0 + $0x3b] sm:$0xff]
    %v319 = vld [vmem:[%s0 + $0x43] sm:$0xff]
    %v320 = vld [vmem:[%s0 + $0x4b] sm:$0xff]
    %v321 = vld [vmem:[%s0 + $0x53] sm:$0xff]
    %v322 = vld [vmem:[%s0 + $0x5b] sm:$0xff]
    %v323 = vld [vmem:[%s0 + $0x63] sm:$0xff]
    %v324 = vld [vmem:[%s0 + $0x6b] sm:$0xff]
    %v325 = vld [vmem:[%s0 + $0x73] sm:$0xff]
    %v326 = vld [vmem:[%s0 + $0x7b] sm:$0xff]
    %v327 = vld [vmem:[%s0 + $0x83] sm:$0xff]
    %v328 = vld [vmem:[%s0 + $0x8b] sm:$0xff]
    %v329 = vld [vmem:[%s0 + $0x93] sm:$0xff]
    %v330 = vld [vmem:[%s0 + $0x9b] sm:$0xff]
    %v331 = vld [vmem:[%s0 + $0xa3] sm:$0xff]
    %v332 = vld [vmem:[%s0 + $0xab] sm:$0xff]
    %v333 = vld [vmem:[%s0 + $0xb3] sm:$0xff]
    %v334 = vld [vmem:[%s0 + $0xbb] sm:$0xff]
    %v335 = vld [vmem:[%s0 + $0xc3] sm:$0xff]
    %v336 = vld [vmem:[%s0 + $0xcb] sm:$0xff]
    %v337 = vld [vmem:[%s0 + $0xd3] sm:$0xff]
    %v338 = vld [vmem:[%s0 + $0xdb] sm:$0xff]
    %v339 = vld [vmem:[%s0 + $0xe3] sm:$0xff]
    %v340 = vld [vmem:[%s0 + $0xeb] sm:$0xff]
    %v341 = vld [vmem:[%s0 + $0xf3] sm:$0xff]
    %v342 = vld [vmem:[%s0 + $0xfb] sm:$0xff]
    %v343 = vld [vmem:[%s0 + $0x103] sm:$0xff]
    %v344 = vld [vmem:[%s0 + $0x10b] sm:$0xff]
    %v345 = vld [vmem:[%s0 + $0x113] sm:$0xff]
    %v346 = vld [vmem:[%s0 + $0x11b] sm:$0xff]
    %v347 = vld [vmem:[%s0 + $0x123] sm:$0xff]
    %v348 = vld [vmem:[%s0 + $0x12b] sm:$0xff]
    %v349 = vld [vmem:[%s0 + $0x133] sm:$0xff]
    %v350 = vld [vmem:[%s0 + $0x13b] sm:$0xff]
    %v351 = vld [vmem:[%s0 + $0x143] sm:$0xff]
    %v352 = vld [vmem:[%s0 + $0x14b] sm:$0xff]
    %v353 = vld [vmem:[%s0 + $0x153] sm:$0xff]
    %v354 = vld [vmem:[%s0 + $0x15b] sm:$0xff]
    %v355 = vld [vmem:[%s0 + $0x163] sm:$0xff]
    %v356 = vld [vmem:[%s0 + $0x16b] sm:$0xff]
    %v357 = vld [vmem:[%s0 + $0x173] sm:$0xff]
    %v358 = vld [vmem:[%s0 + $0x17b] sm:$0xff]
    %v359 = vld [vmem:[%s0 + $0x183] sm:$0xff]
    %v360 = vld [vmem:[%s0 + $0x18b] sm:$0xff]
    %v361 = vld [vmem:[%s0 + $0x193] sm:$0xff]
    %v362 = vld [vmem:[%s0 + $0x19b] sm:$0xff]
    %v363 = vld [vmem:[%s0 + $0x1a3] sm:$0xff]
    %v364 = vld [vmem:[%s0 + $0x1ab] sm:$0xff]
    %v365 = vld [vmem:[%s0 + $0x1b3] sm:$0xff]
    %v366 = vld [vmem:[%s0 + $0x1bb] sm:$0xff]
    %v367 = vld [vmem:[%s0 + $0x1c3] sm:$0xff]
    %v368 = vld [vmem:[%s0 + $0x1cb] sm:$0xff]
    %v369 = vld [vmem:[%s0 + $0x1d3] sm:$0xff]
    %v370 = vld [vmem:[%s0 + $0x1db] sm:$0xff]
    %v371 = vld [vmem:[%s0 + $0x1e3] sm:$0xff]
    %v372 = vld [vmem:[%s0 + $0x1eb] sm:$0xff]
    %v373 = vld [vmem:[%s0 + $0x1f3] sm:$0xff]
    %v374 = vld [vmem:[%s0 + $0x1fb] sm:$0xff]
    %v375 = vld [vmem:[%s0 + $0x203] sm:$0xff]
    %v376 = vld [vmem:[%s0 + $0x20b] sm:$0xff]
    %v377 = vld [vmem:[%s0 + $0x213] sm:$0xff]
    %v378 = vld [vmem:[%s0 + $0x21b] sm:$0xff]
    %v379 = vld [vmem:[%s0 + $0x223] sm:$0xff]
    %v380 = vld [vmem:[%s0 + $0x22b] sm:$0xff]
    %v381 = vld [vmem:[%s0 + $0x233] sm:$0xff]
    %v382 = vld [vmem:[%s0 + $0x23b] sm:$0xff]
    %v383 = vld [vmem:[%s0 + $0x243] sm:$0xff]
    %v384 = vld [vmem:[%s0 + $0x24b] sm:$0xff]
    %v385 = vld [vmem:[%s0 + $0x253] sm:$0xff]
    %v386 = vld [vmem:[%s0 + $0x25b] sm:$0xff]
    %v387 = vld [vmem:[%s0 + $0x263] sm:$0xff]
    %v388 = vld [vmem:[%s0 + $0x26b] sm:$0xff]
    %v389 = vld [vmem:[%s0 + $0x273] sm:$0x3]
    %v390 = vld [vmem:[%s0 + $0x14] sm:$0xff]
    %v391 = vld [vmem:[%s0 + $0x1c] sm:$0xff]
    %v392 = vld [vmem:[%s0 + $0x24] sm:$0xff]
    %v393 = vld [vmem:[%s0 + $0x2c] sm:$0xff]
    %v394 = vld [vmem:[%s0 + $0x34] sm:$0xff]
    %v395 = vld [vmem:[%s0 + $0x3c] sm:$0xff]
    %v396 = vld [vmem:[%s0 + $0x44] sm:$0xff]
    %v397 = vld [vmem:[%s0 + $0x4c] sm:$0xff]
    %v398 = vld [vmem:[%s0 + $0x54] sm:$0xff]
    %v399 = vld [vmem:[%s0 + $0x5c] sm:$0xff]
    %v400 = vld [vmem:[%s0 + $0x64] sm:$0xff]
    %v401 = vld [vmem:[%s0 + $0x6c] sm:$0xff]
    %v402 = vld [vmem:[%s0 + $0x74] sm:$0xff]
    %v403 = vld [vmem:[%s0 + $0x7c] sm:$0xff]
    %v404 = vld [vmem:[%s0 + $0x84] sm:$0xff]
    %v405 = vld [vmem:[%s0 + $0x8c] sm:$0xff]
    %v406 = vld [vmem:[%s0 + $0x94] sm:$0xff]
    %v407 = vld [vmem:[%s0 + $0x9c] sm:$0xff]
    %v408 = vld [vmem:[%s0 + $0xa4] sm:$0xff]
    %v409 = vld [vmem:[%s0 + $0xac] sm:$0xff]
    %v410 = vld [vmem:[%s0 + $0xb4] sm:$0xff]
    %v411 = vld [vmem:[%s0 + $0xbc] sm:$0xff]
    %v412 = vld [vmem:[%s0 + $0xc4] sm:$0xff]
    %v413 = vld [vmem:[%s0 + $0xcc] sm:$0xff]
    %v414 = vld [vmem:[%s0 + $0xd4] sm:$0xff]
    %v415 = vld [vmem:[%s0 + $0xdc] sm:$0xff]
    %v416 = vld [vmem:[%s0 + $0xe4] sm:$0xff]
    %v417 = vld [vmem:[%s0 + $0xec] sm:$0xff]
    %v418 = vld [vmem:[%s0 + $0xf4] sm:$0xff]
    %v419 = vld [vmem:[%s0 + $0xfc] sm:$0xff]
    %v420 = vld [vmem:[%s0 + $0x104] sm:$0xff]
    %v421 = vld [vmem:[%s0 + $0x10c] sm:$0xff]
    %v422 = vld [vmem:[%s0 + $0x114] sm:$0xff]
    %v423 = vld [vmem:[%s0 + $0x11c] sm:$0xff]
    %v424 = vld [vmem:[%s0 + $0x124] sm:$0xff]
    %v425 = vld [vmem:[%s0 + $0x12c] sm:$0xff]
    %v426 = vld [vmem:[%s0 + $0x134] sm:$0xff]
    %v427 = vld [vmem:[%s0 + $0x13c] sm:$0xff]
    %v428 = vld [vmem:[%s0 + $0x144] sm:$0xff]
    %v429 = vld [vmem:[%s0 + $0x14c] sm:$0xff]
    %v430 = vld [vmem:[%s0 + $0x154] sm:$0xff]
    %v431 = vld [vmem:[%s0 + $0x15c] sm:$0xff]
    %v432 = vld [vmem:[%s0 + $0x164] sm:$0xff]
    %v433 = vld [vmem:[%s0 + $0x16c] sm:$0xff]
    %v434 = vld [vmem:[%s0 + $0x174] sm:$0xff]
    %v435 = vld [vmem:[%s0 + $0x17c] sm:$0xff]
    %v436 = vld [vmem:[%s0 + $0x184] sm:$0xff]
    %v437 = vld [vmem:[%s0 + $0x18c] sm:$0xff]
    %v438 = vld [vmem:[%s0 + $0x194] sm:$0xff]
    %v439 = vld [vmem:[%s0 + $0x19c] sm:$0xff]
    %v440 = vld [vmem:[%s0 + $0x1a4] sm:$0xff]
    %v441 = vld [vmem:[%s0 + $0x1ac] sm:$0xff]
    %v442 = vld [vmem:[%s0 + $0x1b4] sm:$0xff]
    %v443 = vld [vmem:[%s0 + $0x1bc] sm:$0xff]
    %v444 = vld [vmem:[%s0 + $0x1c4] sm:$0xff]
    %v445 = vld [vmem:[%s0 + $0x1cc] sm:$0xff]
    %v446 = vld [vmem:[%s0 + $0x1d4] sm:$0xff]
    %v447 = vld [vmem:[%s0 + $0x1dc] sm:$0xff]
    %v448 = vld [vmem:[%s0 + $0x1e4] sm:$0xff]
    %v449 = vld [vmem:[%s0 + $0x1ec] sm:$0xff]
    %v450 = vld [vmem:[%s0 + $0x1f4] sm:$0xff]
    %v451 = vld [vmem:[%s0 + $0x1fc] sm:$0xff]
    %v452 = vld [vmem:[%s0 + $0x204] sm:$0xff]
    %v453 = vld [vmem:[%s0 + $0x20c] sm:$0xff]
    %v454 = vld [vmem:[%s0 + $0x214] sm:$0xff]
    %v455 = vld [vmem:[%s0 + $0x21c] sm:$0xff]
    %v456 = vld [vmem:[%s0 + $0x224] sm:$0xff]
    %v457 = vld [vmem:[%s0 + $0x22c] sm:$0xff]
    %v458 = vld [vmem:[%s0 + $0x234] sm:$0xff]
    %v459 = vld [vmem:[%s0 + $0x23c] sm:$0xff]
    %v460 = vld [vmem:[%s0 + $0x244] sm:$0xff]
    %v461 = vld [vmem:[%s0 + $0x24c] sm:$0xff]
    %v462 = vld [vmem:[%s0 + $0x254] sm:$0xff]
    %v463 = vld [vmem:[%s0 + $0x25c] sm:$0xff]
    %v464 = vld [vmem:[%s0 + $0x264] sm:$0xff]
    %v465 = vld [vmem:[%s0 + $0x26c] sm:$0xff]
    %v466 = vld [vmem:[%s0 + $0x274] sm:$0x3]
    %v467 = vld [vmem:[%s0 + $0x274] sm:$0xff]
    %v468 = vld [vmem:[%s0 + $0x27c] sm:$0xff]
    %v469 = vld [vmem:[%s0 + $0x284] sm:$0x3]
    %v470 = vld [vmem:[%s0 + $0x25] sm:$0xff]
    %v471 = vld [vmem:[%s0 + $0x2d] sm:$0xff]
    %v472 = vld [vmem:[%s0 + $0x35] sm:$0xff]
    %v473 = vld [vmem:[%s0 + $0x3d] sm:$0xff]
    %v474 = vld [vmem:[%s0 + $0x45] sm:$0xff]
    %v475 = vld [vmem:[%s0 + $0x4d] sm:$0xff]
    %v476 = vld [vmem:[%s0 + $0x55] sm:$0xff]
    %v477 = vld [vmem:[%s0 + $0x5d] sm:$0xff]
    %v478 = vld [vmem:[%s0 + $0x65] sm:$0xff]
    %v479 = vld [vmem:[%s0 + $0x6d] sm:$0xff]
    %v480 = vld [vmem:[%s0 + $0x75] sm:$0xff]
    %v481 = vld [vmem:[%s0 + $0x7d] sm:$0xff]
    %v482 = vld [vmem:[%s0 + $0x85] sm:$0xff]
    %v483 = vld [vmem:[%s0 + $0x8d] sm:$0xff]
    %v484 = vld [vmem:[%s0 + $0x95] sm:$0xff]
    %v485 = vld [vmem:[%s0 + $0x9d] sm:$0xff]
    %v486 = vld [vmem:[%s0 + $0xa5] sm:$0xff]
    %v487 = vld [vmem:[%s0 + $0xad] sm:$0xff]
    %v488 = vld [vmem:[%s0 + $0xb5] sm:$0xff]
    %v489 = vld [vmem:[%s0 + $0xbd] sm:$0xff]
    %v490 = vld [vmem:[%s0 + $0xc5] sm:$0xff]
    %v491 = vld [vmem:[%s0 + $0xcd] sm:$0xff]
    %v492 = vld [vmem:[%s0 + $0xd5] sm:$0xff]
    %v493 = vld [vmem:[%s0 + $0xdd] sm:$0xff]
    %v494 = vld [vmem:[%s0 + $0xe5] sm:$0xff]
    %v495 = vld [vmem:[%s0 + $0xed] sm:$0xff]
    %v496 = vld [vmem:[%s0 + $0xf5] sm:$0xff]
    %v497 = vld [vmem:[%s0 + $0xfd] sm:$0xff]
    %v498 = vld [vmem:[%s0 + $0x105] sm:$0xff]
    %v499 = vld [vmem:[%s0 + $0x10d] sm:$0xff]
    %v500 = vld [vmem:[%s0 + $0x115] sm:$0xff]
    %v501 = vld [vmem:[%s0 + $0x11d] sm:$0xff]
    %v502 = vld [vmem:[%s0 + $0x125] sm:$0xff]
    %v503 = vld [vmem:[%s0 + $0x12d] sm:$0xff]
    %v504 = vld [vmem:[%s0 + $0x135] sm:$0xff]
    %v505 = vld [vmem:[%s0 + $0x13d] sm:$0xff]
    %v506 = vld [vmem:[%s0 + $0x145] sm:$0xff]
    %v507 = vld [vmem:[%s0 + $0x14d] sm:$0xff]
    %v508 = vld [vmem:[%s0 + $0x155] sm:$0xff]
    %v509 = vld [vmem:[%s0 + $0x15d] sm:$0xff]
    %v510 = vld [vmem:[%s0 + $0x165] sm:$0xff]
    %v511 = vld [vmem:[%s0 + $0x16d] sm:$0xff]
    %v512 = vld [vmem:[%s0 + $0x175] sm:$0xff]
    %v513 = vld [vmem:[%s0 + $0x17d] sm:$0xff]
    %v514 = vld [vmem:[%s0 + $0x185] sm:$0xff]
    %v515 = vld [vmem:[%s0 + $0x18d] sm:$0xff]
    %v516 = vld [vmem:[%s0 + $0x195] sm:$0xff]
    %v517 = vld [vmem:[%s0 + $0x19d] sm:$0xff]
    %v518 = vld [vmem:[%s0 + $0x1a5] sm:$0xff]
    %v519 = vld [vmem:[%s0 + $0x1ad] sm:$0xff]
    %v520 = vld [vmem:[%s0 + $0x1b5] sm:$0xff]
    %v521 = vld [vmem:[%s0 + $0x1bd] sm:$0xff]
    %v522 = vld [vmem:[%s0 + $0x1c5] sm:$0xff]
    %v523 = vld [vmem:[%s0 + $0x1cd] sm:$0xff]
    %v524 = vld [vmem:[%s0 + $0x1d5] sm:$0xff]
    %v525 = vld [vmem:[%s0 + $0x1dd] sm:$0xff]
    %v526 = vld [vmem:[%s0 + $0x1e5] sm:$0xff]
    %v527 = vld [vmem:[%s0 + $0x1ed] sm:$0xff]
    %v528 = vld [vmem:[%s0 + $0x1f5] sm:$0xff]
    %v529 = vld [vmem:[%s0 + $0x1fd] sm:$0xff]
    %v530 = vld [vmem:[%s0 + $0x205] sm:$0xff]
    %v531 = vld [vmem:[%s0 + $0x20d] sm:$0xff]
    %v532 = vld [vmem:[%s0 + $0x215] sm:$0xff]
    %v533 = vld [vmem:[%s0 + $0x21d] sm:$0xff]
    %v534 = vld [vmem:[%s0 + $0x225] sm:$0xff]
    %v535 = vld [vmem:[%s0 + $0x22d] sm:$0xff]
    %v536 = vld [vmem:[%s0 + $0x235] sm:$0xff]
    %v537 = vld [vmem:[%s0 + $0x23d] sm:$0xff]
    %v538 = vld [vmem:[%s0 + $0x245] sm:$0xff]
    %v539 = vld [vmem:[%s0 + $0x24d] sm:$0xff]
    %v540 = vld [vmem:[%s0 + $0x255] sm:$0xff]
    %v541 = vld [vmem:[%s0 + $0x25d] sm:$0xff]
    %v542 = vld [vmem:[%s0 + $0x265] sm:$0xff]
    %v543 = vld [vmem:[%s0 + $0x26d] sm:$0xff]
    %v544 = vld [vmem:[%s0 + $0x275] sm:$0xff]
    %v545 = vld [vmem:[%s0 + $0x27d] sm:$0xff]
    %v546 = vld [vmem:[%s0 + $0x285] sm:$0x3]
    %v547 = vld [vmem:[%s0 + $0x26] sm:$0xff]
    %v548 = vld [vmem:[%s0 + $0x2e] sm:$0xff]
    %v549 = vld [vmem:[%s0 + $0x36] sm:$0xff]
    %v550 = vld [vmem:[%s0 + $0x3e] sm:$0xff]
    %v551 = vld [vmem:[%s0 + $0x46] sm:$0xff]
    %v552 = vld [vmem:[%s0 + $0x4e] sm:$0xff]
    %v553 = vld [vmem:[%s0 + $0x56] sm:$0xff]
    %v554 = vld [vmem:[%s0 + $0x5e] sm:$0xff]
    %v555 = vld [vmem:[%s0 + $0x66] sm:$0xff]
    %v556 = vld [vmem:[%s0 + $0x6e] sm:$0xff]
    %v557 = vld [vmem:[%s0 + $0x76] sm:$0xff]
    %v558 = vld [vmem:[%s0 + $0x7e] sm:$0xff]
    %v559 = vld [vmem:[%s0 + $0x86] sm:$0xff]
    %v560 = vld [vmem:[%s0 + $0x8e] sm:$0xff]
    %v561 = vld [vmem:[%s0 + $0x96] sm:$0xff]
    %v562 = vld [vmem:[%s0 + $0x9e] sm:$0xff]
    %v563 = vld [vmem:[%s0 + $0xa6] sm:$0xff]
    %v564 = vld [vmem:[%s0 + $0xae] sm:$0xff]
    %v565 = vld [vmem:[%s0 + $0xb6] sm:$0xff]
    %v566 = vld [vmem:[%s0 + $0xbe] sm:$0xff]
    %v567 = vld [vmem:[%s0 + $0xc6] sm:$0xff]
    %v568 = vld [vmem:[%s0 + $0xce] sm:$0xff]
    %v569 = vld [vmem:[%s0 + $0xd6] sm:$0xff]
    %v570 = vld [vmem:[%s0 + $0xde] sm:$0xff]
    %v571 = vld [vmem:[%s0 + $0xe6] sm:$0xff]
    %v572 = vld [vmem:[%s0 + $0xee] sm:$0xff]
    %v573 = vld [vmem:[%s0 + $0xf6] sm:$0xff]
    %v574 = vld [vmem:[%s0 + $0xfe] sm:$0xff]
    %v575 = vld [vmem:[%s0 + $0x106] sm:$0xff]
    %v576 = vld [vmem:[%s0 + $0x10e] sm:$0xff]
    %v577 = vld [vmem:[%s0 + $0x116] sm:$0xff]
    %v578 = vld [vmem:[%s0 + $0x11e] sm:$0xff]
    %v579 = vld [vmem:[%s0 + $0x126] sm:$0xff]
    %v580 = vld [vmem:[%s0 + $0x12e] sm:$0xff]
    %v581 = vld [vmem:[%s0 + $0x136] sm:$0xff]
    %v582 = vld [vmem:[%s0 + $0x13e] sm:$0xff]
    %v583 = vld [vmem:[%s0 + $0x146] sm:$0xff]
    %v584 = vld [vmem:[%s0 + $0x14e] sm:$0xff]
    %v585 = vld [vmem:[%s0 + $0x156] sm:$0xff]
    %v586 = vld [vmem:[%s0 + $0x15e] sm:$0xff]
    %v587 = vld [vmem:[%s0 + $0x166] sm:$0xff]
    %v588 = vld [vmem:[%s0 + $0x16e] sm:$0xff]
    %v589 = vld [vmem:[%s0 + $0x176] sm:$0xff]
    %v590 = vld [vmem:[%s0 + $0x17e] sm:$0xff]
    %v591 = vld [vmem:[%s0 + $0x186] sm:$0xff]
    %v592 = vld [vmem:[%s0 + $0x18e] sm:$0xff]
    %v593 = vld [vmem:[%s0 + $0x196] sm:$0xff]
    %v594 = vld [vmem:[%s0 + $0x19e] sm:$0xff]
    %v595 = vld [vmem:[%s0 + $0x1a6] sm:$0xff]
    %v596 = vld [vmem:[%s0 + $0x1ae] sm:$0xff]
    %v597 = vld [vmem:[%s0 + $0x1b6] sm:$0xff]
    %v598 = vld [vmem:[%s0 + $0x1be] sm:$0xff]
    %v599 = vld [vmem:[%s0 + $0x1c6] sm:$0xff]
    %v600 = vld [vmem:[%s0 + $0x1ce] sm:$0xff]
    %v601 = vld [vmem:[%s0 + $0x1d6] sm:$0xff]
    %v602 = vld [vmem:[%s0 + $0x1de] sm:$0xff]
    %v603 = vld [vmem:[%s0 + $0x1e6] sm:$0xff]
    %v604 = vld [vmem:[%s0 + $0x1ee] sm:$0xff]
    %v605 = vld [vmem:[%s0 + $0x1f6] sm:$0xff]
    %v606 = vld [vmem:[%s0 + $0x1fe] sm:$0xff]
    %v607 = vld [vmem:[%s0 + $0x206] sm:$0xff]
    %v608 = vld [vmem:[%s0 + $0x20e] sm:$0xff]
    %v609 = vld [vmem:[%s0 + $0x216] sm:$0xff]
    %v610 = vld [vmem:[%s0 + $0x21e] sm:$0xff]
    %v611 = vld [vmem:[%s0 + $0x226] sm:$0xff]
    %v612 = vld [vmem:[%s0 + $0x22e] sm:$0xff]
    %v613 = vld [vmem:[%s0 + $0x236] sm:$0xff]
    %v614 = vld [vmem:[%s0 + $0x23e] sm:$0xff]
    %v615 = vld [vmem:[%s0 + $0x246] sm:$0xff]
    %v616 = vld [vmem:[%s0 + $0x24e] sm:$0xff]
    %v617 = vld [vmem:[%s0 + $0x256] sm:$0xff]
    %v618 = vld [vmem:[%s0 + $0x25e] sm:$0xff]
    %v619 = vld [vmem:[%s0 + $0x266] sm:$0xff]
    %v620 = vld [vmem:[%s0 + $0x26e] sm:$0xff]
    %v621 = vld [vmem:[%s0 + $0x276] sm:$0xff]
    %v622 = vld [vmem:[%s0 + $0x27e] sm:$0xff]
    %v623 = vld [vmem:[%s0 + $0x286] sm:$0x3]
    %701 = vrot.lane.b32.xlu0 %v156, 4
    %v702 = vpop.permute.xlu0 %701
    %703 = vrot.lane.b32.xlu0 %v157, 4
    %v704 = vpop.permute.xlu0 %703
    %705 = vrot.lane.b32.xlu0 %v158, 4
    %v706 = vpop.permute.xlu0 %705
    %707 = vrot.lane.b32.xlu0 %v159, 4
    %v708 = vpop.permute.xlu0 %707
    %709 = vrot.lane.b32.xlu0 %v160, 4
    %v710 = vpop.permute.xlu0 %709
    %711 = vrot.lane.b32.xlu0 %v161, 4
    %v712 = vpop.permute.xlu0 %711
    %713 = vrot.lane.b32.xlu0 %v162, 4
    %v714 = vpop.permute.xlu0 %713
    %715 = vrot.lane.b32.xlu0 %v163, 4
    %v716 = vpop.permute.xlu0 %715
    %717 = vrot.lane.b32.xlu0 %v164, 4
    %v718 = vpop.permute.xlu0 %717
    %719 = vrot.lane.b32.xlu0 %v165, 4
    %v720 = vpop.permute.xlu0 %719
    %721 = vrot.lane.b32.xlu0 %v166, 4
    %v722 = vpop.permute.xlu0 %721
    %723 = vrot.lane.b32.xlu0 %v167, 4
    %v724 = vpop.permute.xlu0 %723
    %725 = vrot.lane.b32.xlu0 %v168, 4
    %v726 = vpop.permute.xlu0 %725
    %727 = vrot.lane.b32.xlu0 %v169, 4
    %v728 = vpop.permute.xlu0 %727
    %729 = vrot.lane.b32.xlu0 %v170, 4
    %v730 = vpop.permute.xlu0 %729
    %731 = vrot.lane.b32.xlu0 %v171, 4
    %v732 = vpop.permute.xlu0 %731
    %733 = vrot.lane.b32.xlu0 %v172, 4
    %v734 = vpop.permute.xlu0 %733
    %735 = vrot.lane.b32.xlu0 %v173, 4
    %v736 = vpop.permute.xlu0 %735
    %737 = vrot.lane.b32.xlu0 %v174, 4
    %v738 = vpop.permute.xlu0 %737
    %739 = vrot.lane.b32.xlu0 %v175, 4
    %v740 = vpop.permute.xlu0 %739
    %741 = vrot.lane.b32.xlu0 %v176, 4
    %v742 = vpop.permute.xlu0 %741
    %743 = vrot.lane.b32.xlu0 %v177, 4
    %v744 = vpop.permute.xlu0 %743
    %745 = vrot.lane.b32.xlu0 %v178, 4
    %v746 = vpop.permute.xlu0 %745
    %747 = vrot.lane.b32.xlu0 %v179, 4
    %v748 = vpop.permute.xlu0 %747
    %749 = vrot.lane.b32.xlu0 %v180, 4
    %v750 = vpop.permute.xlu0 %749
    %751 = vrot.lane.b32.xlu0 %v181, 4
    %v752 = vpop.permute.xlu0 %751
    %753 = vrot.lane.b32.xlu0 %v182, 4
    %v754 = vpop.permute.xlu0 %753
    %755 = vrot.lane.b32.xlu0 %v183, 4
    %v756 = vpop.permute.xlu0 %755
    %757 = vrot.lane.b32.xlu0 %v184, 4
    %v758 = vpop.permute.xlu0 %757
    %759 = vrot.lane.b32.xlu0 %v185, 4
    %v760 = vpop.permute.xlu0 %759
    %761 = vrot.lane.b32.xlu0 %v186, 4
    %v762 = vpop.permute.xlu0 %761
    %763 = vrot.lane.b32.xlu0 %v187, 4
    %v764 = vpop.permute.xlu0 %763
    %765 = vrot.lane.b32.xlu0 %v188, 4
    %v766 = vpop.permute.xlu0 %765
    %767 = vrot.lane.b32.xlu0 %v189, 4
    %v768 = vpop.permute.xlu0 %767
    %769 = vrot.lane.b32.xlu0 %v190, 4
    %v770 = vpop.permute.xlu0 %769
    %771 = vrot.lane.b32.xlu0 %v191, 4
    %v772 = vpop.permute.xlu0 %771
    %773 = vrot.lane.b32.xlu0 %v192, 4
    %v774 = vpop.permute.xlu0 %773
    %775 = vrot.lane.b32.xlu0 %v193, 4
    %v776 = vpop.permute.xlu0 %775
    %777 = vrot.lane.b32.xlu0 %v194, 4
    %v778 = vpop.permute.xlu0 %777
    %779 = vrot.lane.b32.xlu0 %v195, 4
    %v780 = vpop.permute.xlu0 %779
    %781 = vrot.lane.b32.xlu0 %v196, 4
    %v782 = vpop.permute.xlu0 %781
    %783 = vrot.lane.b32.xlu0 %v197, 4
    %v784 = vpop.permute.xlu0 %783
    %785 = vrot.lane.b32.xlu0 %v198, 4
    %v786 = vpop.permute.xlu0 %785
    %787 = vrot.lane.b32.xlu0 %v199, 4
    %v788 = vpop.permute.xlu0 %787
    %789 = vrot.lane.b32.xlu0 %v200, 4
    %v790 = vpop.permute.xlu0 %789
    %791 = vrot.lane.b32.xlu0 %v201, 4
    %v792 = vpop.permute.xlu0 %791
    %793 = vrot.lane.b32.xlu0 %v202, 4
    %v794 = vpop.permute.xlu0 %793
    %795 = vrot.lane.b32.xlu0 %v203, 4
    %v796 = vpop.permute.xlu0 %795
    %797 = vrot.lane.b32.xlu0 %v204, 4
    %v798 = vpop.permute.xlu0 %797
    %799 = vrot.lane.b32.xlu0 %v205, 4
    %v800 = vpop.permute.xlu0 %799
    %801 = vrot.lane.b32.xlu0 %v206, 4
    %v802 = vpop.permute.xlu0 %801
    %803 = vrot.lane.b32.xlu0 %v207, 4
    %v804 = vpop.permute.xlu0 %803
    %805 = vrot.lane.b32.xlu0 %v208, 4
    %v806 = vpop.permute.xlu0 %805
    %807 = vrot.lane.b32.xlu0 %v209, 4
    %v808 = vpop.permute.xlu0 %807
    %809 = vrot.lane.b32.xlu0 %v210, 4
    %v810 = vpop.permute.xlu0 %809
    %811 = vrot.lane.b32.xlu0 %v211, 4
    %v812 = vpop.permute.xlu0 %811
    %813 = vrot.lane.b32.xlu0 %v212, 4
    %v814 = vpop.permute.xlu0 %813
    %815 = vrot.lane.b32.xlu0 %v213, 4
    %v816 = vpop.permute.xlu0 %815
    %817 = vrot.lane.b32.xlu0 %v214, 4
    %v818 = vpop.permute.xlu0 %817
    %819 = vrot.lane.b32.xlu0 %v215, 4
    %v820 = vpop.permute.xlu0 %819
    %821 = vrot.lane.b32.xlu0 %v216, 4
    %v822 = vpop.permute.xlu0 %821
    %823 = vrot.lane.b32.xlu0 %v217, 4
    %v824 = vpop.permute.xlu0 %823
    %825 = vrot.lane.b32.xlu0 %v218, 4
    %v826 = vpop.permute.xlu0 %825
    %827 = vrot.lane.b32.xlu0 %v219, 4
    %v828 = vpop.permute.xlu0 %827
    %829 = vrot.lane.b32.xlu0 %v220, 4
    %v830 = vpop.permute.xlu0 %829
    %831 = vrot.lane.b32.xlu0 %v221, 4
    %v832 = vpop.permute.xlu0 %831
    %833 = vrot.lane.b32.xlu0 %v222, 4
    %v834 = vpop.permute.xlu0 %833
    %835 = vrot.lane.b32.xlu0 %v223, 4
    %v836 = vpop.permute.xlu0 %835
    %837 = vrot.lane.b32.xlu0 %v224, 4
    %v838 = vpop.permute.xlu0 %837
    %839 = vrot.lane.b32.xlu0 %v225, 4
    %v840 = vpop.permute.xlu0 %839
    %841 = vrot.lane.b32.xlu0 %v226, 4
    %v842 = vpop.permute.xlu0 %841
    %843 = vrot.lane.b32.xlu0 %v227, 4
    %v844 = vpop.permute.xlu0 %843
    %845 = vrot.lane.b32.xlu0 %v228, 4
    %v846 = vpop.permute.xlu0 %845
    %847 = vrot.lane.b32.xlu0 %v229, 4
    %v848 = vpop.permute.xlu0 %847
    %849 = vrot.lane.b32.xlu0 %v230, 4
    %v850 = vpop.permute.xlu0 %849
    %851 = vrot.lane.b32.xlu0 %v231, 4
    %v852 = vpop.permute.xlu0 %851
    %853 = vrot.lane.b32.xlu0 %v232, 4
    %v854 = vpop.permute.xlu0 %853
    %1009 = vrot.lane.b32.xlu0 %v233, 8
    %v1010 = vpop.permute.xlu0 %1009
    %1011 = vrot.lane.b32.xlu0 %v234, 8
    %v1012 = vpop.permute.xlu0 %1011
    %1013 = vrot.lane.b32.xlu0 %v235, 8
    %v1014 = vpop.permute.xlu0 %1013
    %1015 = vrot.lane.b32.xlu0 %v236, 8
    %v1016 = vpop.permute.xlu0 %1015
    %1017 = vrot.lane.b32.xlu0 %v237, 8
    %v1018 = vpop.permute.xlu0 %1017
    %1019 = vrot.lane.b32.xlu0 %v238, 8
    %v1020 = vpop.permute.xlu0 %1019
    %1021 = vrot.lane.b32.xlu0 %v239, 8
    %v1022 = vpop.permute.xlu0 %1021
    %1023 = vrot.lane.b32.xlu0 %v240, 8
    %v1024 = vpop.permute.xlu0 %1023
    %1025 = vrot.lane.b32.xlu0 %v241, 8
    %v1026 = vpop.permute.xlu0 %1025
    %1027 = vrot.lane.b32.xlu0 %v242, 8
    %v1028 = vpop.permute.xlu0 %1027
    %1029 = vrot.lane.b32.xlu0 %v243, 8
    %v1030 = vpop.permute.xlu0 %1029
    %1031 = vrot.lane.b32.xlu0 %v244, 8
    %v1032 = vpop.permute.xlu0 %1031
    %1033 = vrot.lane.b32.xlu0 %v245, 8
    %v1034 = vpop.permute.xlu0 %1033
    %1035 = vrot.lane.b32.xlu0 %v246, 8
    %v1036 = vpop.permute.xlu0 %1035
    %1037 = vrot.lane.b32.xlu0 %v247, 8
    %v1038 = vpop.permute.xlu0 %1037
    %1039 = vrot.lane.b32.xlu0 %v248, 8
    %v1040 = vpop.permute.xlu0 %1039
    %1041 = vrot.lane.b32.xlu0 %v249, 8
    %v1042 = vpop.permute.xlu0 %1041
    %1043 = vrot.lane.b32.xlu0 %v250, 8
    %v1044 = vpop.permute.xlu0 %1043
    %1045 = vrot.lane.b32.xlu0 %v251, 8
    %v1046 = vpop.permute.xlu0 %1045
    %1047 = vrot.lane.b32.xlu0 %v252, 8
    %v1048 = vpop.permute.xlu0 %1047
    %1049 = vrot.lane.b32.xlu0 %v253, 8
    %v1050 = vpop.permute.xlu0 %1049
    %1051 = vrot.lane.b32.xlu0 %v254, 8
    %v1052 = vpop.permute.xlu0 %1051
    %1053 = vrot.lane.b32.xlu0 %v255, 8
    %v1054 = vpop.permute.xlu0 %1053
    %1055 = vrot.lane.b32.xlu0 %v256, 8
    %v1056 = vpop.permute.xlu0 %1055
    %1057 = vrot.lane.b32.xlu0 %v257, 8
    %v1058 = vpop.permute.xlu0 %1057
    %1059 = vrot.lane.b32.xlu0 %v258, 8
    %v1060 = vpop.permute.xlu0 %1059
    %1061 = vrot.lane.b32.xlu0 %v259, 8
    %v1062 = vpop.permute.xlu0 %1061
    %1063 = vrot.lane.b32.xlu0 %v260, 8
    %v1064 = vpop.permute.xlu0 %1063
    %1065 = vrot.lane.b32.xlu0 %v261, 8
    %v1066 = vpop.permute.xlu0 %1065
    %1067 = vrot.lane.b32.xlu0 %v262, 8
    %v1068 = vpop.permute.xlu0 %1067
    %1069 = vrot.lane.b32.xlu0 %v263, 8
    %v1070 = vpop.permute.xlu0 %1069
    %1071 = vrot.lane.b32.xlu0 %v264, 8
    %v1072 = vpop.permute.xlu0 %1071
    %1073 = vrot.lane.b32.xlu0 %v265, 8
    %v1074 = vpop.permute.xlu0 %1073
    %1075 = vrot.lane.b32.xlu0 %v266, 8
    %v1076 = vpop.permute.xlu0 %1075
    %1077 = vrot.lane.b32.xlu0 %v267, 8
    %v1078 = vpop.permute.xlu0 %1077
    %1079 = vrot.lane.b32.xlu0 %v268, 8
    %v1080 = vpop.permute.xlu0 %1079
    %1081 = vrot.lane.b32.xlu0 %v269, 8
    %v1082 = vpop.permute.xlu0 %1081
    %1083 = vrot.lane.b32.xlu0 %v270, 8
    %v1084 = vpop.permute.xlu0 %1083
    %1085 = vrot.lane.b32.xlu0 %v271, 8
    %v1086 = vpop.permute.xlu0 %1085
    %1087 = vrot.lane.b32.xlu0 %v272, 8
    %v1088 = vpop.permute.xlu0 %1087
    %1089 = vrot.lane.b32.xlu0 %v273, 8
    %v1090 = vpop.permute.xlu0 %1089
    %1091 = vrot.lane.b32.xlu0 %v274, 8
    %v1092 = vpop.permute.xlu0 %1091
    %1093 = vrot.lane.b32.xlu0 %v275, 8
    %v1094 = vpop.permute.xlu0 %1093
    %1095 = vrot.lane.b32.xlu0 %v276, 8
    %v1096 = vpop.permute.xlu0 %1095
    %1097 = vrot.lane.b32.xlu0 %v277, 8
    %v1098 = vpop.permute.xlu0 %1097
    %1099 = vrot.lane.b32.xlu0 %v278, 8
    %v1100 = vpop.permute.xlu0 %1099
    %1101 = vrot.lane.b32.xlu0 %v279, 8
    %v1102 = vpop.permute.xlu0 %1101
    %1103 = vrot.lane.b32.xlu0 %v280, 8
    %v1104 = vpop.permute.xlu0 %1103
    %1105 = vrot.lane.b32.xlu0 %v281, 8
    %v1106 = vpop.permute.xlu0 %1105
    %1107 = vrot.lane.b32.xlu0 %v282, 8
    %v1108 = vpop.permute.xlu0 %1107
    %1109 = vrot.lane.b32.xlu0 %v283, 8
    %v1110 = vpop.permute.xlu0 %1109
    %1111 = vrot.lane.b32.xlu0 %v284, 8
    %v1112 = vpop.permute.xlu0 %1111
    %1113 = vrot.lane.b32.xlu0 %v285, 8
    %v1114 = vpop.permute.xlu0 %1113
    %1115 = vrot.lane.b32.xlu0 %v286, 8
    %v1116 = vpop.permute.xlu0 %1115
    %1117 = vrot.lane.b32.xlu0 %v287, 8
    %v1118 = vpop.permute.xlu0 %1117
    %1119 = vrot.lane.b32.xlu0 %v288, 8
    %v1120 = vpop.permute.xlu0 %1119
    %1121 = vrot.lane.b32.xlu0 %v289, 8
    %v1122 = vpop.permute.xlu0 %1121
    %1123 = vrot.lane.b32.xlu0 %v290, 8
    %v1124 = vpop.permute.xlu0 %1123
    %1125 = vrot.lane.b32.xlu0 %v291, 8
    %v1126 = vpop.permute.xlu0 %1125
    %1127 = vrot.lane.b32.xlu0 %v292, 8
    %v1128 = vpop.permute.xlu0 %1127
    %1129 = vrot.lane.b32.xlu0 %v293, 8
    %v1130 = vpop.permute.xlu0 %1129
    %1131 = vrot.lane.b32.xlu0 %v294, 8
    %v1132 = vpop.permute.xlu0 %1131
    %1133 = vrot.lane.b32.xlu0 %v295, 8
    %v1134 = vpop.permute.xlu0 %1133
    %1135 = vrot.lane.b32.xlu0 %v296, 8
    %v1136 = vpop.permute.xlu0 %1135
    %1137 = vrot.lane.b32.xlu0 %v297, 8
    %v1138 = vpop.permute.xlu0 %1137
    %1139 = vrot.lane.b32.xlu0 %v298, 8
    %v1140 = vpop.permute.xlu0 %1139
    %1141 = vrot.lane.b32.xlu0 %v299, 8
    %v1142 = vpop.permute.xlu0 %1141
    %1143 = vrot.lane.b32.xlu0 %v300, 8
    %v1144 = vpop.permute.xlu0 %1143
    %1145 = vrot.lane.b32.xlu0 %v301, 8
    %v1146 = vpop.permute.xlu0 %1145
    %1147 = vrot.lane.b32.xlu0 %v302, 8
    %v1148 = vpop.permute.xlu0 %1147
    %1149 = vrot.lane.b32.xlu0 %v303, 8
    %v1150 = vpop.permute.xlu0 %1149
    %1151 = vrot.lane.b32.xlu0 %v304, 8
    %v1152 = vpop.permute.xlu0 %1151
    %1153 = vrot.lane.b32.xlu0 %v305, 8
    %v1154 = vpop.permute.xlu0 %1153
    %1155 = vrot.lane.b32.xlu0 %v306, 8
    %v1156 = vpop.permute.xlu0 %1155
    %1157 = vrot.lane.b32.xlu0 %v307, 8
    %v1158 = vpop.permute.xlu0 %1157
    %1159 = vrot.lane.b32.xlu0 %v308, 8
    %v1160 = vpop.permute.xlu0 %1159
    %1161 = vrot.lane.b32.xlu0 %v309, 8
    %v1162 = vpop.permute.xlu0 %1161
    %1243 = vrot.lane.b32.xlu0 %v235, 12
    %v1244 = vpop.permute.xlu0 %1243
    %1245 = vrot.lane.b32.xlu0 %v236, 12
    %v1246 = vpop.permute.xlu0 %1245
    %1247 = vrot.lane.b32.xlu0 %v237, 12
    %v1248 = vpop.permute.xlu0 %1247
    %1249 = vrot.lane.b32.xlu0 %v238, 12
    %v1250 = vpop.permute.xlu0 %1249
    %1251 = vrot.lane.b32.xlu0 %v239, 12
    %v1252 = vpop.permute.xlu0 %1251
    %1253 = vrot.lane.b32.xlu0 %v240, 12
    %v1254 = vpop.permute.xlu0 %1253
    %1255 = vrot.lane.b32.xlu0 %v241, 12
    %v1256 = vpop.permute.xlu0 %1255
    %1257 = vrot.lane.b32.xlu0 %v242, 12
    %v1258 = vpop.permute.xlu0 %1257
    %1259 = vrot.lane.b32.xlu0 %v243, 12
    %v1260 = vpop.permute.xlu0 %1259
    %1261 = vrot.lane.b32.xlu0 %v244, 12
    %v1262 = vpop.permute.xlu0 %1261
    %1263 = vrot.lane.b32.xlu0 %v245, 12
    %v1264 = vpop.permute.xlu0 %1263
    %1265 = vrot.lane.b32.xlu0 %v246, 12
    %v1266 = vpop.permute.xlu0 %1265
    %1267 = vrot.lane.b32.xlu0 %v247, 12
    %v1268 = vpop.permute.xlu0 %1267
    %1269 = vrot.lane.b32.xlu0 %v248, 12
    %v1270 = vpop.permute.xlu0 %1269
    %1271 = vrot.lane.b32.xlu0 %v249, 12
    %v1272 = vpop.permute.xlu0 %1271
    %1273 = vrot.lane.b32.xlu0 %v250, 12
    %v1274 = vpop.permute.xlu0 %1273
    %1275 = vrot.lane.b32.xlu0 %v251, 12
    %v1276 = vpop.permute.xlu0 %1275
    %1277 = vrot.lane.b32.xlu0 %v252, 12
    %v1278 = vpop.permute.xlu0 %1277
    %1279 = vrot.lane.b32.xlu0 %v253, 12
    %v1280 = vpop.permute.xlu0 %1279
    %1281 = vrot.lane.b32.xlu0 %v254, 12
    %v1282 = vpop.permute.xlu0 %1281
    %1283 = vrot.lane.b32.xlu0 %v255, 12
    %v1284 = vpop.permute.xlu0 %1283
    %1285 = vrot.lane.b32.xlu0 %v256, 12
    %v1286 = vpop.permute.xlu0 %1285
    %1287 = vrot.lane.b32.xlu0 %v257, 12
    %v1288 = vpop.permute.xlu0 %1287
    %1289 = vrot.lane.b32.xlu0 %v258, 12
    %v1290 = vpop.permute.xlu0 %1289
    %1291 = vrot.lane.b32.xlu0 %v259, 12
    %v1292 = vpop.permute.xlu0 %1291
    %1293 = vrot.lane.b32.xlu0 %v260, 12
    %v1294 = vpop.permute.xlu0 %1293
    %1295 = vrot.lane.b32.xlu0 %v261, 12
    %v1296 = vpop.permute.xlu0 %1295
    %1297 = vrot.lane.b32.xlu0 %v262, 12
    %v1298 = vpop.permute.xlu0 %1297
    %1299 = vrot.lane.b32.xlu0 %v263, 12
    %v1300 = vpop.permute.xlu0 %1299
    %1301 = vrot.lane.b32.xlu0 %v264, 12
    %v1302 = vpop.permute.xlu0 %1301
    %1303 = vrot.lane.b32.xlu0 %v265, 12
    %v1304 = vpop.permute.xlu0 %1303
    %1305 = vrot.lane.b32.xlu0 %v266, 12
    %v1306 = vpop.permute.xlu0 %1305
    %1307 = vrot.lane.b32.xlu0 %v267, 12
    %v1308 = vpop.permute.xlu0 %1307
    %1309 = vrot.lane.b32.xlu0 %v268, 12
    %v1310 = vpop.permute.xlu0 %1309
    %1311 = vrot.lane.b32.xlu0 %v269, 12
    %v1312 = vpop.permute.xlu0 %1311
    %1313 = vrot.lane.b32.xlu0 %v270, 12
    %v1314 = vpop.permute.xlu0 %1313
    %1315 = vrot.lane.b32.xlu0 %v271, 12
    %v1316 = vpop.permute.xlu0 %1315
    %1317 = vrot.lane.b32.xlu0 %v272, 12
    %v1318 = vpop.permute.xlu0 %1317
    %1319 = vrot.lane.b32.xlu0 %v273, 12
    %v1320 = vpop.permute.xlu0 %1319
    %1321 = vrot.lane.b32.xlu0 %v274, 12
    %v1322 = vpop.permute.xlu0 %1321
    %1323 = vrot.lane.b32.xlu0 %v275, 12
    %v1324 = vpop.permute.xlu0 %1323
    %1325 = vrot.lane.b32.xlu0 %v276, 12
    %v1326 = vpop.permute.xlu0 %1325
    %1327 = vrot.lane.b32.xlu0 %v277, 12
    %v1328 = vpop.permute.xlu0 %1327
    %1329 = vrot.lane.b32.xlu0 %v278, 12
    %v1330 = vpop.permute.xlu0 %1329
    %1331 = vrot.lane.b32.xlu0 %v279, 12
    %v1332 = vpop.permute.xlu0 %1331
    %1333 = vrot.lane.b32.xlu0 %v280, 12
    %v1334 = vpop.permute.xlu0 %1333
    %1335 = vrot.lane.b32.xlu0 %v281, 12
    %v1336 = vpop.permute.xlu0 %1335
    %1337 = vrot.lane.b32.xlu0 %v282, 12
    %v1338 = vpop.permute.xlu0 %1337
    %1339 = vrot.lane.b32.xlu0 %v283, 12
    %v1340 = vpop.permute.xlu0 %1339
    %1341 = vrot.lane.b32.xlu0 %v284, 12
    %v1342 = vpop.permute.xlu0 %1341
    %1343 = vrot.lane.b32.xlu0 %v285, 12
    %v1344 = vpop.permute.xlu0 %1343
    %1345 = vrot.lane.b32.xlu0 %v286, 12
    %v1346 = vpop.permute.xlu0 %1345
    %1347 = vrot.lane.b32.xlu0 %v287, 12
    %v1348 = vpop.permute.xlu0 %1347
    %1349 = vrot.lane.b32.xlu0 %v288, 12
    %v1350 = vpop.permute.xlu0 %1349
    %1351 = vrot.lane.b32.xlu0 %v289, 12
    %v1352 = vpop.permute.xlu0 %1351
    %1353 = vrot.lane.b32.xlu0 %v290, 12
    %v1354 = vpop.permute.xlu0 %1353
    %1355 = vrot.lane.b32.xlu0 %v291, 12
    %v1356 = vpop.permute.xlu0 %1355
    %1357 = vrot.lane.b32.xlu0 %v292, 12
    %v1358 = vpop.permute.xlu0 %1357
    %1359 = vrot.lane.b32.xlu0 %v293, 12
    %v1360 = vpop.permute.xlu0 %1359
    %1361 = vrot.lane.b32.xlu0 %v294, 12
    %v1362 = vpop.permute.xlu0 %1361
    %1363 = vrot.lane.b32.xlu0 %v295, 12
    %v1364 = vpop.permute.xlu0 %1363
    %1365 = vrot.lane.b32.xlu0 %v296, 12
    %v1366 = vpop.permute.xlu0 %1365
    %1367 = vrot.lane.b32.xlu0 %v297, 12
    %v1368 = vpop.permute.xlu0 %1367
    %1369 = vrot.lane.b32.xlu0 %v298, 12
    %v1370 = vpop.permute.xlu0 %1369
    %1371 = vrot.lane.b32.xlu0 %v299, 12
    %v1372 = vpop.permute.xlu0 %1371
    %1373 = vrot.lane.b32.xlu0 %v300, 12
    %v1374 = vpop.permute.xlu0 %1373
    %1375 = vrot.lane.b32.xlu0 %v301, 12
    %v1376 = vpop.permute.xlu0 %1375
    %1377 = vrot.lane.b32.xlu0 %v302, 12
    %v1378 = vpop.permute.xlu0 %1377
    %1379 = vrot.lane.b32.xlu0 %v303, 12
    %v1380 = vpop.permute.xlu0 %1379
    %1381 = vrot.lane.b32.xlu0 %v304, 12
    %v1382 = vpop.permute.xlu0 %1381
    %1383 = vrot.lane.b32.xlu0 %v305, 12
    %v1384 = vpop.permute.xlu0 %1383
    %1385 = vrot.lane.b32.xlu0 %v306, 12
    %v1386 = vpop.permute.xlu0 %1385
    %1387 = vrot.lane.b32.xlu0 %v307, 12
    %v1388 = vpop.permute.xlu0 %1387
    %1389 = vrot.lane.b32.xlu0 %v308, 12
    %v1390 = vpop.permute.xlu0 %1389
    %1391 = vrot.lane.b32.xlu0 %v310, 12
    %v1392 = vpop.permute.xlu0 %1391
    %1393 = vrot.lane.b32.xlu0 %v311, 12
    %v1394 = vpop.permute.xlu0 %1393
    %1395 = vrot.lane.b32.xlu0 %v312, 12
    %v1396 = vpop.permute.xlu0 %1395
    %1551 = vrot.lane.b32.xlu0 %v313, 16
    %v1552 = vpop.permute.xlu0 %1551
    %1553 = vrot.lane.b32.xlu0 %v314, 16
    %v1554 = vpop.permute.xlu0 %1553
    %1555 = vrot.lane.b32.xlu0 %v315, 16
    %v1556 = vpop.permute.xlu0 %1555
    %1557 = vrot.lane.b32.xlu0 %v316, 16
    %v1558 = vpop.permute.xlu0 %1557
    %1559 = vrot.lane.b32.xlu0 %v317, 16
    %v1560 = vpop.permute.xlu0 %1559
    %1561 = vrot.lane.b32.xlu0 %v318, 16
    %v1562 = vpop.permute.xlu0 %1561
    %1563 = vrot.lane.b32.xlu0 %v319, 16
    %v1564 = vpop.permute.xlu0 %1563
    %1565 = vrot.lane.b32.xlu0 %v320, 16
    %v1566 = vpop.permute.xlu0 %1565
    %1567 = vrot.lane.b32.xlu0 %v321, 16
    %v1568 = vpop.permute.xlu0 %1567
    %1569 = vrot.lane.b32.xlu0 %v322, 16
    %v1570 = vpop.permute.xlu0 %1569
    %1571 = vrot.lane.b32.xlu0 %v323, 16
    %v1572 = vpop.permute.xlu0 %1571
    %1573 = vrot.lane.b32.xlu0 %v324, 16
    %v1574 = vpop.permute.xlu0 %1573
    %1575 = vrot.lane.b32.xlu0 %v325, 16
    %v1576 = vpop.permute.xlu0 %1575
    %1577 = vrot.lane.b32.xlu0 %v326, 16
    %v1578 = vpop.permute.xlu0 %1577
    %1579 = vrot.lane.b32.xlu0 %v327, 16
    %v1580 = vpop.permute.xlu0 %1579
    %1581 = vrot.lane.b32.xlu0 %v328, 16
    %v1582 = vpop.permute.xlu0 %1581
    %1583 = vrot.lane.b32.xlu0 %v329, 16
    %v1584 = vpop.permute.xlu0 %1583
    %1585 = vrot.lane.b32.xlu0 %v330, 16
    %v1586 = vpop.permute.xlu0 %1585
    %1587 = vrot.lane.b32.xlu0 %v331, 16
    %v1588 = vpop.permute.xlu0 %1587
    %1589 = vrot.lane.b32.xlu0 %v332, 16
    %v1590 = vpop.permute.xlu0 %1589
    %1591 = vrot.lane.b32.xlu0 %v333, 16
    %v1592 = vpop.permute.xlu0 %1591
    %1593 = vrot.lane.b32.xlu0 %v334, 16
    %v1594 = vpop.permute.xlu0 %1593
    %1595 = vrot.lane.b32.xlu0 %v335, 16
    %v1596 = vpop.permute.xlu0 %1595
    %1597 = vrot.lane.b32.xlu0 %v336, 16
    %v1598 = vpop.permute.xlu0 %1597
    %1599 = vrot.lane.b32.xlu0 %v337, 16
    %v1600 = vpop.permute.xlu0 %1599
    %1601 = vrot.lane.b32.xlu0 %v338, 16
    %v1602 = vpop.permute.xlu0 %1601
    %1603 = vrot.lane.b32.xlu0 %v339, 16
    %v1604 = vpop.permute.xlu0 %1603
    %1605 = vrot.lane.b32.xlu0 %v340, 16
    %v1606 = vpop.permute.xlu0 %1605
    %1607 = vrot.lane.b32.xlu0 %v341, 16
    %v1608 = vpop.permute.xlu0 %1607
    %1609 = vrot.lane.b32.xlu0 %v342, 16
    %v1610 = vpop.permute.xlu0 %1609
    %1611 = vrot.lane.b32.xlu0 %v343, 16
    %v1612 = vpop.permute.xlu0 %1611
    %1613 = vrot.lane.b32.xlu0 %v344, 16
    %v1614 = vpop.permute.xlu0 %1613
    %1615 = vrot.lane.b32.xlu0 %v345, 16
    %v1616 = vpop.permute.xlu0 %1615
    %1617 = vrot.lane.b32.xlu0 %v346, 16
    %v1618 = vpop.permute.xlu0 %1617
    %1619 = vrot.lane.b32.xlu0 %v347, 16
    %v1620 = vpop.permute.xlu0 %1619
    %1621 = vrot.lane.b32.xlu0 %v348, 16
    %v1622 = vpop.permute.xlu0 %1621
    %1623 = vrot.lane.b32.xlu0 %v349, 16
    %v1624 = vpop.permute.xlu0 %1623
    %1625 = vrot.lane.b32.xlu0 %v350, 16
    %v1626 = vpop.permute.xlu0 %1625
    %1627 = vrot.lane.b32.xlu0 %v351, 16
    %v1628 = vpop.permute.xlu0 %1627
    %1629 = vrot.lane.b32.xlu0 %v352, 16
    %v1630 = vpop.permute.xlu0 %1629
    %1631 = vrot.lane.b32.xlu0 %v353, 16
    %v1632 = vpop.permute.xlu0 %1631
    %1633 = vrot.lane.b32.xlu0 %v354, 16
    %v1634 = vpop.permute.xlu0 %1633
    %1635 = vrot.lane.b32.xlu0 %v355, 16
    %v1636 = vpop.permute.xlu0 %1635
    %1637 = vrot.lane.b32.xlu0 %v356, 16
    %v1638 = vpop.permute.xlu0 %1637
    %1639 = vrot.lane.b32.xlu0 %v357, 16
    %v1640 = vpop.permute.xlu0 %1639
    %1641 = vrot.lane.b32.xlu0 %v358, 16
    %v1642 = vpop.permute.xlu0 %1641
    %1643 = vrot.lane.b32.xlu0 %v359, 16
    %v1644 = vpop.permute.xlu0 %1643
    %1645 = vrot.lane.b32.xlu0 %v360, 16
    %v1646 = vpop.permute.xlu0 %1645
    %1647 = vrot.lane.b32.xlu0 %v361, 16
    %v1648 = vpop.permute.xlu0 %1647
    %1649 = vrot.lane.b32.xlu0 %v362, 16
    %v1650 = vpop.permute.xlu0 %1649
    %1651 = vrot.lane.b32.xlu0 %v363, 16
    %v1652 = vpop.permute.xlu0 %1651
    %1653 = vrot.lane.b32.xlu0 %v364, 16
    %v1654 = vpop.permute.xlu0 %1653
    %1655 = vrot.lane.b32.xlu0 %v365, 16
    %v1656 = vpop.permute.xlu0 %1655
    %1657 = vrot.lane.b32.xlu0 %v366, 16
    %v1658 = vpop.permute.xlu0 %1657
    %1659 = vrot.lane.b32.xlu0 %v367, 16
    %v1660 = vpop.permute.xlu0 %1659
    %1661 = vrot.lane.b32.xlu0 %v368, 16
    %v1662 = vpop.permute.xlu0 %1661
    %1663 = vrot.lane.b32.xlu0 %v369, 16
    %v1664 = vpop.permute.xlu0 %1663
    %1665 = vrot.lane.b32.xlu0 %v370, 16
    %v1666 = vpop.permute.xlu0 %1665
    %1667 = vrot.lane.b32.xlu0 %v371, 16
    %v1668 = vpop.permute.xlu0 %1667
    %1669 = vrot.lane.b32.xlu0 %v372, 16
    %v1670 = vpop.permute.xlu0 %1669
    %1671 = vrot.lane.b32.xlu0 %v373, 16
    %v1672 = vpop.permute.xlu0 %1671
    %1673 = vrot.lane.b32.xlu0 %v374, 16
    %v1674 = vpop.permute.xlu0 %1673
    %1675 = vrot.lane.b32.xlu0 %v375, 16
    %v1676 = vpop.permute.xlu0 %1675
    %1677 = vrot.lane.b32.xlu0 %v376, 16
    %v1678 = vpop.permute.xlu0 %1677
    %1679 = vrot.lane.b32.xlu0 %v377, 16
    %v1680 = vpop.permute.xlu0 %1679
    %1681 = vrot.lane.b32.xlu0 %v378, 16
    %v1682 = vpop.permute.xlu0 %1681
    %1683 = vrot.lane.b32.xlu0 %v379, 16
    %v1684 = vpop.permute.xlu0 %1683
    %1685 = vrot.lane.b32.xlu0 %v380, 16
    %v1686 = vpop.permute.xlu0 %1685
    %1687 = vrot.lane.b32.xlu0 %v381, 16
    %v1688 = vpop.permute.xlu0 %1687
    %1689 = vrot.lane.b32.xlu0 %v382, 16
    %v1690 = vpop.permute.xlu0 %1689
    %1691 = vrot.lane.b32.xlu0 %v383, 16
    %v1692 = vpop.permute.xlu0 %1691
    %1693 = vrot.lane.b32.xlu0 %v384, 16
    %v1694 = vpop.permute.xlu0 %1693
    %1695 = vrot.lane.b32.xlu0 %v385, 16
    %v1696 = vpop.permute.xlu0 %1695
    %1697 = vrot.lane.b32.xlu0 %v386, 16
    %v1698 = vpop.permute.xlu0 %1697
    %1699 = vrot.lane.b32.xlu0 %v387, 16
    %v1700 = vpop.permute.xlu0 %1699
    %1701 = vrot.lane.b32.xlu0 %v388, 16
    %v1702 = vpop.permute.xlu0 %1701
    %1703 = vrot.lane.b32.xlu0 %v389, 16
    %v1704 = vpop.permute.xlu0 %1703
    %1859 = vrot.lane.b32.xlu0 %v390, 20
    %v1860 = vpop.permute.xlu0 %1859
    %1861 = vrot.lane.b32.xlu0 %v391, 20
    %v1862 = vpop.permute.xlu0 %1861
    %1863 = vrot.lane.b32.xlu0 %v392, 20
    %v1864 = vpop.permute.xlu0 %1863
    %1865 = vrot.lane.b32.xlu0 %v393, 20
    %v1866 = vpop.permute.xlu0 %1865
    %1867 = vrot.lane.b32.xlu0 %v394, 20
    %v1868 = vpop.permute.xlu0 %1867
    %1869 = vrot.lane.b32.xlu0 %v395, 20
    %v1870 = vpop.permute.xlu0 %1869
    %1871 = vrot.lane.b32.xlu0 %v396, 20
    %v1872 = vpop.permute.xlu0 %1871
    %1873 = vrot.lane.b32.xlu0 %v397, 20
    %v1874 = vpop.permute.xlu0 %1873
    %1875 = vrot.lane.b32.xlu0 %v398, 20
    %v1876 = vpop.permute.xlu0 %1875
    %1877 = vrot.lane.b32.xlu0 %v399, 20
    %v1878 = vpop.permute.xlu0 %1877
    %1879 = vrot.lane.b32.xlu0 %v400, 20
    %v1880 = vpop.permute.xlu0 %1879
    %1881 = vrot.lane.b32.xlu0 %v401, 20
    %v1882 = vpop.permute.xlu0 %1881
    %1883 = vrot.lane.b32.xlu0 %v402, 20
    %v1884 = vpop.permute.xlu0 %1883
    %1885 = vrot.lane.b32.xlu0 %v403, 20
    %v1886 = vpop.permute.xlu0 %1885
    %1887 = vrot.lane.b32.xlu0 %v404, 20
    %v1888 = vpop.permute.xlu0 %1887
    %1889 = vrot.lane.b32.xlu0 %v405, 20
    %v1890 = vpop.permute.xlu0 %1889
    %1891 = vrot.lane.b32.xlu0 %v406, 20
    %v1892 = vpop.permute.xlu0 %1891
    %1893 = vrot.lane.b32.xlu0 %v407, 20
    %v1894 = vpop.permute.xlu0 %1893
    %1895 = vrot.lane.b32.xlu0 %v408, 20
    %v1896 = vpop.permute.xlu0 %1895
    %1897 = vrot.lane.b32.xlu0 %v409, 20
    %v1898 = vpop.permute.xlu0 %1897
    %1899 = vrot.lane.b32.xlu0 %v410, 20
    %v1900 = vpop.permute.xlu0 %1899
    %1901 = vrot.lane.b32.xlu0 %v411, 20
    %v1902 = vpop.permute.xlu0 %1901
    %1903 = vrot.lane.b32.xlu0 %v412, 20
    %v1904 = vpop.permute.xlu0 %1903
    %1905 = vrot.lane.b32.xlu0 %v413, 20
    %v1906 = vpop.permute.xlu0 %1905
    %1907 = vrot.lane.b32.xlu0 %v414, 20
    %v1908 = vpop.permute.xlu0 %1907
    %1909 = vrot.lane.b32.xlu0 %v415, 20
    %v1910 = vpop.permute.xlu0 %1909
    %1911 = vrot.lane.b32.xlu0 %v416, 20
    %v1912 = vpop.permute.xlu0 %1911
    %1913 = vrot.lane.b32.xlu0 %v417, 20
    %v1914 = vpop.permute.xlu0 %1913
    %1915 = vrot.lane.b32.xlu0 %v418, 20
    %v1916 = vpop.permute.xlu0 %1915
    %1917 = vrot.lane.b32.xlu0 %v419, 20
    %v1918 = vpop.permute.xlu0 %1917
    %1919 = vrot.lane.b32.xlu0 %v420, 20
    %v1920 = vpop.permute.xlu0 %1919
    %1921 = vrot.lane.b32.xlu0 %v421, 20
    %v1922 = vpop.permute.xlu0 %1921
    %1923 = vrot.lane.b32.xlu0 %v422, 20
    %v1924 = vpop.permute.xlu0 %1923
    %1925 = vrot.lane.b32.xlu0 %v423, 20
    %v1926 = vpop.permute.xlu0 %1925
    %1927 = vrot.lane.b32.xlu0 %v424, 20
    %v1928 = vpop.permute.xlu0 %1927
    %1929 = vrot.lane.b32.xlu0 %v425, 20
    %v1930 = vpop.permute.xlu0 %1929
    %1931 = vrot.lane.b32.xlu0 %v426, 20
    %v1932 = vpop.permute.xlu0 %1931
    %1933 = vrot.lane.b32.xlu0 %v427, 20
    %v1934 = vpop.permute.xlu0 %1933
    %1935 = vrot.lane.b32.xlu0 %v428, 20
    %v1936 = vpop.permute.xlu0 %1935
    %1937 = vrot.lane.b32.xlu0 %v429, 20
    %v1938 = vpop.permute.xlu0 %1937
    %1939 = vrot.lane.b32.xlu0 %v430, 20
    %v1940 = vpop.permute.xlu0 %1939
    %1941 = vrot.lane.b32.xlu0 %v431, 20
    %v1942 = vpop.permute.xlu0 %1941
    %1943 = vrot.lane.b32.xlu0 %v432, 20
    %v1944 = vpop.permute.xlu0 %1943
    %1945 = vrot.lane.b32.xlu0 %v433, 20
    %v1946 = vpop.permute.xlu0 %1945
    %1947 = vrot.lane.b32.xlu0 %v434, 20
    %v1948 = vpop.permute.xlu0 %1947
    %1949 = vrot.lane.b32.xlu0 %v435, 20
    %v1950 = vpop.permute.xlu0 %1949
    %1951 = vrot.lane.b32.xlu0 %v436, 20
    %v1952 = vpop.permute.xlu0 %1951
    %1953 = vrot.lane.b32.xlu0 %v437, 20
    %v1954 = vpop.permute.xlu0 %1953
    %1955 = vrot.lane.b32.xlu0 %v438, 20
    %v1956 = vpop.permute.xlu0 %1955
    %1957 = vrot.lane.b32.xlu0 %v439, 20
    %v1958 = vpop.permute.xlu0 %1957
    %1959 = vrot.lane.b32.xlu0 %v440, 20
    %v1960 = vpop.permute.xlu0 %1959
    %1961 = vrot.lane.b32.xlu0 %v441, 20
    %v1962 = vpop.permute.xlu0 %1961
    %1963 = vrot.lane.b32.xlu0 %v442, 20
    %v1964 = vpop.permute.xlu0 %1963
    %1965 = vrot.lane.b32.xlu0 %v443, 20
    %v1966 = vpop.permute.xlu0 %1965
    %1967 = vrot.lane.b32.xlu0 %v444, 20
    %v1968 = vpop.permute.xlu0 %1967
    %1969 = vrot.lane.b32.xlu0 %v445, 20
    %v1970 = vpop.permute.xlu0 %1969
    %1971 = vrot.lane.b32.xlu0 %v446, 20
    %v1972 = vpop.permute.xlu0 %1971
    %1973 = vrot.lane.b32.xlu0 %v447, 20
    %v1974 = vpop.permute.xlu0 %1973
    %1975 = vrot.lane.b32.xlu0 %v448, 20
    %v1976 = vpop.permute.xlu0 %1975
    %1977 = vrot.lane.b32.xlu0 %v449, 20
    %v1978 = vpop.permute.xlu0 %1977
    %1979 = vrot.lane.b32.xlu0 %v450, 20
    %v1980 = vpop.permute.xlu0 %1979
    %1981 = vrot.lane.b32.xlu0 %v451, 20
    %v1982 = vpop.permute.xlu0 %1981
    %1983 = vrot.lane.b32.xlu0 %v452, 20
    %v1984 = vpop.permute.xlu0 %1983
    %1985 = vrot.lane.b32.xlu0 %v453, 20
    %v1986 = vpop.permute.xlu0 %1985
    %1987 = vrot.lane.b32.xlu0 %v454, 20
    %v1988 = vpop.permute.xlu0 %1987
    %1989 = vrot.lane.b32.xlu0 %v455, 20
    %v1990 = vpop.permute.xlu0 %1989
    %1991 = vrot.lane.b32.xlu0 %v456, 20
    %v1992 = vpop.permute.xlu0 %1991
    %1993 = vrot.lane.b32.xlu0 %v457, 20
    %v1994 = vpop.permute.xlu0 %1993
    %1995 = vrot.lane.b32.xlu0 %v458, 20
    %v1996 = vpop.permute.xlu0 %1995
    %1997 = vrot.lane.b32.xlu0 %v459, 20
    %v1998 = vpop.permute.xlu0 %1997
    %1999 = vrot.lane.b32.xlu0 %v460, 20
    %v2000 = vpop.permute.xlu0 %1999
    %2001 = vrot.lane.b32.xlu0 %v461, 20
    %v2002 = vpop.permute.xlu0 %2001
    %2003 = vrot.lane.b32.xlu0 %v462, 20
    %v2004 = vpop.permute.xlu0 %2003
    %2005 = vrot.lane.b32.xlu0 %v463, 20
    %v2006 = vpop.permute.xlu0 %2005
    %2007 = vrot.lane.b32.xlu0 %v464, 20
    %v2008 = vpop.permute.xlu0 %2007
    %2009 = vrot.lane.b32.xlu0 %v465, 20
    %v2010 = vpop.permute.xlu0 %2009
    %2011 = vrot.lane.b32.xlu0 %v466, 20
    %v2012 = vpop.permute.xlu0 %2011
    %2093 = vrot.lane.b32.xlu0 %v392, 24
    %v2094 = vpop.permute.xlu0 %2093
    %2095 = vrot.lane.b32.xlu0 %v393, 24
    %v2096 = vpop.permute.xlu0 %2095
    %2097 = vrot.lane.b32.xlu0 %v394, 24
    %v2098 = vpop.permute.xlu0 %2097
    %2099 = vrot.lane.b32.xlu0 %v395, 24
    %v2100 = vpop.permute.xlu0 %2099
    %2101 = vrot.lane.b32.xlu0 %v396, 24
    %v2102 = vpop.permute.xlu0 %2101
    %2103 = vrot.lane.b32.xlu0 %v397, 24
    %v2104 = vpop.permute.xlu0 %2103
    %2105 = vrot.lane.b32.xlu0 %v398, 24
    %v2106 = vpop.permute.xlu0 %2105
    %2107 = vrot.lane.b32.xlu0 %v399, 24
    %v2108 = vpop.permute.xlu0 %2107
    %2109 = vrot.lane.b32.xlu0 %v400, 24
    %v2110 = vpop.permute.xlu0 %2109
    %2111 = vrot.lane.b32.xlu0 %v401, 24
    %v2112 = vpop.permute.xlu0 %2111
    %2113 = vrot.lane.b32.xlu0 %v402, 24
    %v2114 = vpop.permute.xlu0 %2113
    %2115 = vrot.lane.b32.xlu0 %v403, 24
    %v2116 = vpop.permute.xlu0 %2115
    %2117 = vrot.lane.b32.xlu0 %v404, 24
    %v2118 = vpop.permute.xlu0 %2117
    %2119 = vrot.lane.b32.xlu0 %v405, 24
    %v2120 = vpop.permute.xlu0 %2119
    %2121 = vrot.lane.b32.xlu0 %v406, 24
    %v2122 = vpop.permute.xlu0 %2121
    %2123 = vrot.lane.b32.xlu0 %v407, 24
    %v2124 = vpop.permute.xlu0 %2123
    %2125 = vrot.lane.b32.xlu0 %v408, 24
    %v2126 = vpop.permute.xlu0 %2125
    %2127 = vrot.lane.b32.xlu0 %v409, 24
    %v2128 = vpop.permute.xlu0 %2127
    %2129 = vrot.lane.b32.xlu0 %v410, 24
    %v2130 = vpop.permute.xlu0 %2129
    %2131 = vrot.lane.b32.xlu0 %v411, 24
    %v2132 = vpop.permute.xlu0 %2131
    %2133 = vrot.lane.b32.xlu0 %v412, 24
    %v2134 = vpop.permute.xlu0 %2133
    %2135 = vrot.lane.b32.xlu0 %v413, 24
    %v2136 = vpop.permute.xlu0 %2135
    %2137 = vrot.lane.b32.xlu0 %v414, 24
    %v2138 = vpop.permute.xlu0 %2137
    %2139 = vrot.lane.b32.xlu0 %v415, 24
    %v2140 = vpop.permute.xlu0 %2139
    %2141 = vrot.lane.b32.xlu0 %v416, 24
    %v2142 = vpop.permute.xlu0 %2141
    %2143 = vrot.lane.b32.xlu0 %v417, 24
    %v2144 = vpop.permute.xlu0 %2143
    %2145 = vrot.lane.b32.xlu0 %v418, 24
    %v2146 = vpop.permute.xlu0 %2145
    %2147 = vrot.lane.b32.xlu0 %v419, 24
    %v2148 = vpop.permute.xlu0 %2147
    %2149 = vrot.lane.b32.xlu0 %v420, 24
    %v2150 = vpop.permute.xlu0 %2149
    %2151 = vrot.lane.b32.xlu0 %v421, 24
    %v2152 = vpop.permute.xlu0 %2151
    %2153 = vrot.lane.b32.xlu0 %v422, 24
    %v2154 = vpop.permute.xlu0 %2153
    %2155 = vrot.lane.b32.xlu0 %v423, 24
    %v2156 = vpop.permute.xlu0 %2155
    %2157 = vrot.lane.b32.xlu0 %v424, 24
    %v2158 = vpop.permute.xlu0 %2157
    %2159 = vrot.lane.b32.xlu0 %v425, 24
    %v2160 = vpop.permute.xlu0 %2159
    %2161 = vrot.lane.b32.xlu0 %v426, 24
    %v2162 = vpop.permute.xlu0 %2161
    %2163 = vrot.lane.b32.xlu0 %v427, 24
    %v2164 = vpop.permute.xlu0 %2163
    %2165 = vrot.lane.b32.xlu0 %v428, 24
    %v2166 = vpop.permute.xlu0 %2165
    %2167 = vrot.lane.b32.xlu0 %v429, 24
    %v2168 = vpop.permute.xlu0 %2167
    %2169 = vrot.lane.b32.xlu0 %v430, 24
    %v2170 = vpop.permute.xlu0 %2169
    %2171 = vrot.lane.b32.xlu0 %v431, 24
    %v2172 = vpop.permute.xlu0 %2171
    %2173 = vrot.lane.b32.xlu0 %v432, 24
    %v2174 = vpop.permute.xlu0 %2173
    %2175 = vrot.lane.b32.xlu0 %v433, 24
    %v2176 = vpop.permute.xlu0 %2175
    %2177 = vrot.lane.b32.xlu0 %v434, 24
    %v2178 = vpop.permute.xlu0 %2177
    %2179 = vrot.lane.b32.xlu0 %v435, 24
    %v2180 = vpop.permute.xlu0 %2179
    %2181 = vrot.lane.b32.xlu0 %v436, 24
    %v2182 = vpop.permute.xlu0 %2181
    %2183 = vrot.lane.b32.xlu0 %v437, 24
    %v2184 = vpop.permute.xlu0 %2183
    %2185 = vrot.lane.b32.xlu0 %v438, 24
    %v2186 = vpop.permute.xlu0 %2185
    %2187 = vrot.lane.b32.xlu0 %v439, 24
    %v2188 = vpop.permute.xlu0 %2187
    %2189 = vrot.lane.b32.xlu0 %v440, 24
    %v2190 = vpop.permute.xlu0 %2189
    %2191 = vrot.lane.b32.xlu0 %v441, 24
    %v2192 = vpop.permute.xlu0 %2191
    %2193 = vrot.lane.b32.xlu0 %v442, 24
    %v2194 = vpop.permute.xlu0 %2193
    %2195 = vrot.lane.b32.xlu0 %v443, 24
    %v2196 = vpop.permute.xlu0 %2195
    %2197 = vrot.lane.b32.xlu0 %v444, 24
    %v2198 = vpop.permute.xlu0 %2197
    %2199 = vrot.lane.b32.xlu0 %v445, 24
    %v2200 = vpop.permute.xlu0 %2199
    %2201 = vrot.lane.b32.xlu0 %v446, 24
    %v2202 = vpop.permute.xlu0 %2201
    %2203 = vrot.lane.b32.xlu0 %v447, 24
    %v2204 = vpop.permute.xlu0 %2203
    %2205 = vrot.lane.b32.xlu0 %v448, 24
    %v2206 = vpop.permute.xlu0 %2205
    %2207 = vrot.lane.b32.xlu0 %v449, 24
    %v2208 = vpop.permute.xlu0 %2207
    %2209 = vrot.lane.b32.xlu0 %v450, 24
    %v2210 = vpop.permute.xlu0 %2209
    %2211 = vrot.lane.b32.xlu0 %v451, 24
    %v2212 = vpop.permute.xlu0 %2211
    %2213 = vrot.lane.b32.xlu0 %v452, 24
    %v2214 = vpop.permute.xlu0 %2213
    %2215 = vrot.lane.b32.xlu0 %v453, 24
    %v2216 = vpop.permute.xlu0 %2215
    %2217 = vrot.lane.b32.xlu0 %v454, 24
    %v2218 = vpop.permute.xlu0 %2217
    %2219 = vrot.lane.b32.xlu0 %v455, 24
    %v2220 = vpop.permute.xlu0 %2219
    %2221 = vrot.lane.b32.xlu0 %v456, 24
    %v2222 = vpop.permute.xlu0 %2221
    %2223 = vrot.lane.b32.xlu0 %v457, 24
    %v2224 = vpop.permute.xlu0 %2223
    %2225 = vrot.lane.b32.xlu0 %v458, 24
    %v2226 = vpop.permute.xlu0 %2225
    %2227 = vrot.lane.b32.xlu0 %v459, 24
    %v2228 = vpop.permute.xlu0 %2227
    %2229 = vrot.lane.b32.xlu0 %v460, 24
    %v2230 = vpop.permute.xlu0 %2229
    %2231 = vrot.lane.b32.xlu0 %v461, 24
    %v2232 = vpop.permute.xlu0 %2231
    %2233 = vrot.lane.b32.xlu0 %v462, 24
    %v2234 = vpop.permute.xlu0 %2233
    %2235 = vrot.lane.b32.xlu0 %v463, 24
    %v2236 = vpop.permute.xlu0 %2235
    %2237 = vrot.lane.b32.xlu0 %v464, 24
    %v2238 = vpop.permute.xlu0 %2237
    %2239 = vrot.lane.b32.xlu0 %v465, 24
    %v2240 = vpop.permute.xlu0 %2239
    %2241 = vrot.lane.b32.xlu0 %v467, 24
    %v2242 = vpop.permute.xlu0 %2241
    %2243 = vrot.lane.b32.xlu0 %v468, 24
    %v2244 = vpop.permute.xlu0 %2243
    %2245 = vrot.lane.b32.xlu0 %v469, 24
    %v2246 = vpop.permute.xlu0 %2245
    %2401 = vrot.lane.b32.xlu0 %v470, 28
    %v2402 = vpop.permute.xlu0 %2401
    %2403 = vrot.lane.b32.xlu0 %v471, 28
    %v2404 = vpop.permute.xlu0 %2403
    %2405 = vrot.lane.b32.xlu0 %v472, 28
    %v2406 = vpop.permute.xlu0 %2405
    %2407 = vrot.lane.b32.xlu0 %v473, 28
    %v2408 = vpop.permute.xlu0 %2407
    %2409 = vrot.lane.b32.xlu0 %v474, 28
    %v2410 = vpop.permute.xlu0 %2409
    %2411 = vrot.lane.b32.xlu0 %v475, 28
    %v2412 = vpop.permute.xlu0 %2411
    %2413 = vrot.lane.b32.xlu0 %v476, 28
    %v2414 = vpop.permute.xlu0 %2413
    %2415 = vrot.lane.b32.xlu0 %v477, 28
    %v2416 = vpop.permute.xlu0 %2415
    %2417 = vrot.lane.b32.xlu0 %v478, 28
    %v2418 = vpop.permute.xlu0 %2417
    %2419 = vrot.lane.b32.xlu0 %v479, 28
    %v2420 = vpop.permute.xlu0 %2419
    %2421 = vrot.lane.b32.xlu0 %v480, 28
    %v2422 = vpop.permute.xlu0 %2421
    %2423 = vrot.lane.b32.xlu0 %v481, 28
    %v2424 = vpop.permute.xlu0 %2423
    %2425 = vrot.lane.b32.xlu0 %v482, 28
    %v2426 = vpop.permute.xlu0 %2425
    %2427 = vrot.lane.b32.xlu0 %v483, 28
    %v2428 = vpop.permute.xlu0 %2427
    %2429 = vrot.lane.b32.xlu0 %v484, 28
    %v2430 = vpop.permute.xlu0 %2429
    %2431 = vrot.lane.b32.xlu0 %v485, 28
    %v2432 = vpop.permute.xlu0 %2431
    %2433 = vrot.lane.b32.xlu0 %v486, 28
    %v2434 = vpop.permute.xlu0 %2433
    %2435 = vrot.lane.b32.xlu0 %v487, 28
    %v2436 = vpop.permute.xlu0 %2435
    %2437 = vrot.lane.b32.xlu0 %v488, 28
    %v2438 = vpop.permute.xlu0 %2437
    %2439 = vrot.lane.b32.xlu0 %v489, 28
    %v2440 = vpop.permute.xlu0 %2439
    %2441 = vrot.lane.b32.xlu0 %v490, 28
    %v2442 = vpop.permute.xlu0 %2441
    %2443 = vrot.lane.b32.xlu0 %v491, 28
    %v2444 = vpop.permute.xlu0 %2443
    %2445 = vrot.lane.b32.xlu0 %v492, 28
    %v2446 = vpop.permute.xlu0 %2445
    %2447 = vrot.lane.b32.xlu0 %v493, 28
    %v2448 = vpop.permute.xlu0 %2447
    %2449 = vrot.lane.b32.xlu0 %v494, 28
    %v2450 = vpop.permute.xlu0 %2449
    %2451 = vrot.lane.b32.xlu0 %v495, 28
    %v2452 = vpop.permute.xlu0 %2451
    %2453 = vrot.lane.b32.xlu0 %v496, 28
    %v2454 = vpop.permute.xlu0 %2453
    %2455 = vrot.lane.b32.xlu0 %v497, 28
    %v2456 = vpop.permute.xlu0 %2455
    %2457 = vrot.lane.b32.xlu0 %v498, 28
    %v2458 = vpop.permute.xlu0 %2457
    %2459 = vrot.lane.b32.xlu0 %v499, 28
    %v2460 = vpop.permute.xlu0 %2459
    %2461 = vrot.lane.b32.xlu0 %v500, 28
    %v2462 = vpop.permute.xlu0 %2461
    %2463 = vrot.lane.b32.xlu0 %v501, 28
    %v2464 = vpop.permute.xlu0 %2463
    %2465 = vrot.lane.b32.xlu0 %v502, 28
    %v2466 = vpop.permute.xlu0 %2465
    %2467 = vrot.lane.b32.xlu0 %v503, 28
    %v2468 = vpop.permute.xlu0 %2467
    %2469 = vrot.lane.b32.xlu0 %v504, 28
    %v2470 = vpop.permute.xlu0 %2469
    %2471 = vrot.lane.b32.xlu0 %v505, 28
    %v2472 = vpop.permute.xlu0 %2471
    %2473 = vrot.lane.b32.xlu0 %v506, 28
    %v2474 = vpop.permute.xlu0 %2473
    %2475 = vrot.lane.b32.xlu0 %v507, 28
    %v2476 = vpop.permute.xlu0 %2475
    %2477 = vrot.lane.b32.xlu0 %v508, 28
    %v2478 = vpop.permute.xlu0 %2477
    %2479 = vrot.lane.b32.xlu0 %v509, 28
    %v2480 = vpop.permute.xlu0 %2479
    %2481 = vrot.lane.b32.xlu0 %v510, 28
    %v2482 = vpop.permute.xlu0 %2481
    %2483 = vrot.lane.b32.xlu0 %v511, 28
    %v2484 = vpop.permute.xlu0 %2483
    %2485 = vrot.lane.b32.xlu0 %v512, 28
    %v2486 = vpop.permute.xlu0 %2485
    %2487 = vrot.lane.b32.xlu0 %v513, 28
    %v2488 = vpop.permute.xlu0 %2487
    %2489 = vrot.lane.b32.xlu0 %v514, 28
    %v2490 = vpop.permute.xlu0 %2489
    %2491 = vrot.lane.b32.xlu0 %v515, 28
    %v2492 = vpop.permute.xlu0 %2491
    %2493 = vrot.lane.b32.xlu0 %v516, 28
    %v2494 = vpop.permute.xlu0 %2493
    %2495 = vrot.lane.b32.xlu0 %v517, 28
    %v2496 = vpop.permute.xlu0 %2495
    %2497 = vrot.lane.b32.xlu0 %v518, 28
    %v2498 = vpop.permute.xlu0 %2497
    %2499 = vrot.lane.b32.xlu0 %v519, 28
    %v2500 = vpop.permute.xlu0 %2499
    %2501 = vrot.lane.b32.xlu0 %v520, 28
    %v2502 = vpop.permute.xlu0 %2501
    %2503 = vrot.lane.b32.xlu0 %v521, 28
    %v2504 = vpop.permute.xlu0 %2503
    %2505 = vrot.lane.b32.xlu0 %v522, 28
    %v2506 = vpop.permute.xlu0 %2505
    %2507 = vrot.lane.b32.xlu0 %v523, 28
    %v2508 = vpop.permute.xlu0 %2507
    %2509 = vrot.lane.b32.xlu0 %v524, 28
    %v2510 = vpop.permute.xlu0 %2509
    %2511 = vrot.lane.b32.xlu0 %v525, 28
    %v2512 = vpop.permute.xlu0 %2511
    %2513 = vrot.lane.b32.xlu0 %v526, 28
    %v2514 = vpop.permute.xlu0 %2513
    %2515 = vrot.lane.b32.xlu0 %v527, 28
    %v2516 = vpop.permute.xlu0 %2515
    %2517 = vrot.lane.b32.xlu0 %v528, 28
    %v2518 = vpop.permute.xlu0 %2517
    %2519 = vrot.lane.b32.xlu0 %v529, 28
    %v2520 = vpop.permute.xlu0 %2519
    %2521 = vrot.lane.b32.xlu0 %v530, 28
    %v2522 = vpop.permute.xlu0 %2521
    %2523 = vrot.lane.b32.xlu0 %v531, 28
    %v2524 = vpop.permute.xlu0 %2523
    %2525 = vrot.lane.b32.xlu0 %v532, 28
    %v2526 = vpop.permute.xlu0 %2525
    %2527 = vrot.lane.b32.xlu0 %v533, 28
    %v2528 = vpop.permute.xlu0 %2527
    %2529 = vrot.lane.b32.xlu0 %v534, 28
    %v2530 = vpop.permute.xlu0 %2529
    %2531 = vrot.lane.b32.xlu0 %v535, 28
    %v2532 = vpop.permute.xlu0 %2531
    %2533 = vrot.lane.b32.xlu0 %v536, 28
    %v2534 = vpop.permute.xlu0 %2533
    %2535 = vrot.lane.b32.xlu0 %v537, 28
    %v2536 = vpop.permute.xlu0 %2535
    %2537 = vrot.lane.b32.xlu0 %v538, 28
    %v2538 = vpop.permute.xlu0 %2537
    %2539 = vrot.lane.b32.xlu0 %v539, 28
    %v2540 = vpop.permute.xlu0 %2539
    %2541 = vrot.lane.b32.xlu0 %v540, 28
    %v2542 = vpop.permute.xlu0 %2541
    %2543 = vrot.lane.b32.xlu0 %v541, 28
    %v2544 = vpop.permute.xlu0 %2543
    %2545 = vrot.lane.b32.xlu0 %v542, 28
    %v2546 = vpop.permute.xlu0 %2545
    %2547 = vrot.lane.b32.xlu0 %v543, 28
    %v2548 = vpop.permute.xlu0 %2547
    %2549 = vrot.lane.b32.xlu0 %v544, 28
    %v2550 = vpop.permute.xlu0 %2549
    %2551 = vrot.lane.b32.xlu0 %v545, 28
    %v2552 = vpop.permute.xlu0 %2551
    %2553 = vrot.lane.b32.xlu0 %v546, 28
    %v2554 = vpop.permute.xlu0 %2553
    %2709 = vrot.lane.b32.xlu0 %v547, 32
    %v2710 = vpop.permute.xlu0 %2709
    %2711 = vrot.lane.b32.xlu0 %v548, 32
    %v2712 = vpop.permute.xlu0 %2711
    %2713 = vrot.lane.b32.xlu0 %v549, 32
    %v2714 = vpop.permute.xlu0 %2713
    %2715 = vrot.lane.b32.xlu0 %v550, 32
    %v2716 = vpop.permute.xlu0 %2715
    %2717 = vrot.lane.b32.xlu0 %v551, 32
    %v2718 = vpop.permute.xlu0 %2717
    %2719 = vrot.lane.b32.xlu0 %v552, 32
    %v2720 = vpop.permute.xlu0 %2719
    %2721 = vrot.lane.b32.xlu0 %v553, 32
    %v2722 = vpop.permute.xlu0 %2721
    %2723 = vrot.lane.b32.xlu0 %v554, 32
    %v2724 = vpop.permute.xlu0 %2723
    %2725 = vrot.lane.b32.xlu0 %v555, 32
    %v2726 = vpop.permute.xlu0 %2725
    %2727 = vrot.lane.b32.xlu0 %v556, 32
    %v2728 = vpop.permute.xlu0 %2727
    %2729 = vrot.lane.b32.xlu0 %v557, 32
    %v2730 = vpop.permute.xlu0 %2729
    %2731 = vrot.lane.b32.xlu0 %v558, 32
    %v2732 = vpop.permute.xlu0 %2731
    %2733 = vrot.lane.b32.xlu0 %v559, 32
    %v2734 = vpop.permute.xlu0 %2733
    %2735 = vrot.lane.b32.xlu0 %v560, 32
    %v2736 = vpop.permute.xlu0 %2735
    %2737 = vrot.lane.b32.xlu0 %v561, 32
    %v2738 = vpop.permute.xlu0 %2737
    %2739 = vrot.lane.b32.xlu0 %v562, 32
    %v2740 = vpop.permute.xlu0 %2739
    %2741 = vrot.lane.b32.xlu0 %v563, 32
    %v2742 = vpop.permute.xlu0 %2741
    %2743 = vrot.lane.b32.xlu0 %v564, 32
    %v2744 = vpop.permute.xlu0 %2743
    %2745 = vrot.lane.b32.xlu0 %v565, 32
    %v2746 = vpop.permute.xlu0 %2745
    %2747 = vrot.lane.b32.xlu0 %v566, 32
    %v2748 = vpop.permute.xlu0 %2747
    %2749 = vrot.lane.b32.xlu0 %v567, 32
    %v2750 = vpop.permute.xlu0 %2749
    %2751 = vrot.lane.b32.xlu0 %v568, 32
    %v2752 = vpop.permute.xlu0 %2751
    %2753 = vrot.lane.b32.xlu0 %v569, 32
    %v2754 = vpop.permute.xlu0 %2753
    %2755 = vrot.lane.b32.xlu0 %v570, 32
    %v2756 = vpop.permute.xlu0 %2755
    %2757 = vrot.lane.b32.xlu0 %v571, 32
    %v2758 = vpop.permute.xlu0 %2757
    %2759 = vrot.lane.b32.xlu0 %v572, 32
    %v2760 = vpop.permute.xlu0 %2759
    %2761 = vrot.lane.b32.xlu0 %v573, 32
    %v2762 = vpop.permute.xlu0 %2761
    %2763 = vrot.lane.b32.xlu0 %v574, 32
    %v2764 = vpop.permute.xlu0 %2763
    %2765 = vrot.lane.b32.xlu0 %v575, 32
    %v2766 = vpop.permute.xlu0 %2765
    %2767 = vrot.lane.b32.xlu0 %v576, 32
    %v2768 = vpop.permute.xlu0 %2767
    %2769 = vrot.lane.b32.xlu0 %v577, 32
    %v2770 = vpop.permute.xlu0 %2769
    %2771 = vrot.lane.b32.xlu0 %v578, 32
    %v2772 = vpop.permute.xlu0 %2771
    %2773 = vrot.lane.b32.xlu0 %v579, 32
    %v2774 = vpop.permute.xlu0 %2773
    %2775 = vrot.lane.b32.xlu0 %v580, 32
    %v2776 = vpop.permute.xlu0 %2775
    %2777 = vrot.lane.b32.xlu0 %v581, 32
    %v2778 = vpop.permute.xlu0 %2777
    %2779 = vrot.lane.b32.xlu0 %v582, 32
    %v2780 = vpop.permute.xlu0 %2779
    %2781 = vrot.lane.b32.xlu0 %v583, 32
    %v2782 = vpop.permute.xlu0 %2781
    %2783 = vrot.lane.b32.xlu0 %v584, 32
    %v2784 = vpop.permute.xlu0 %2783
    %2785 = vrot.lane.b32.xlu0 %v585, 32
    %v2786 = vpop.permute.xlu0 %2785
    %2787 = vrot.lane.b32.xlu0 %v586, 32
    %v2788 = vpop.permute.xlu0 %2787
    %2789 = vrot.lane.b32.xlu0 %v587, 32
    %v2790 = vpop.permute.xlu0 %2789
    %2791 = vrot.lane.b32.xlu0 %v588, 32
    %v2792 = vpop.permute.xlu0 %2791
    %2793 = vrot.lane.b32.xlu0 %v589, 32
    %v2794 = vpop.permute.xlu0 %2793
    %2795 = vrot.lane.b32.xlu0 %v590, 32
    %v2796 = vpop.permute.xlu0 %2795
    %2797 = vrot.lane.b32.xlu0 %v591, 32
    %v2798 = vpop.permute.xlu0 %2797
    %2799 = vrot.lane.b32.xlu0 %v592, 32
    %v2800 = vpop.permute.xlu0 %2799
    %2801 = vrot.lane.b32.xlu0 %v593, 32
    %v2802 = vpop.permute.xlu0 %2801
    %2803 = vrot.lane.b32.xlu0 %v594, 32
    %v2804 = vpop.permute.xlu0 %2803
    %2805 = vrot.lane.b32.xlu0 %v595, 32
    %v2806 = vpop.permute.xlu0 %2805
    %2807 = vrot.lane.b32.xlu0 %v596, 32
    %v2808 = vpop.permute.xlu0 %2807
    %2809 = vrot.lane.b32.xlu0 %v597, 32
    %v2810 = vpop.permute.xlu0 %2809
    %2811 = vrot.lane.b32.xlu0 %v598, 32
    %v2812 = vpop.permute.xlu0 %2811
    %2813 = vrot.lane.b32.xlu0 %v599, 32
    %v2814 = vpop.permute.xlu0 %2813
    %2815 = vrot.lane.b32.xlu0 %v600, 32
    %v2816 = vpop.permute.xlu0 %2815
    %2817 = vrot.lane.b32.xlu0 %v601, 32
    %v2818 = vpop.permute.xlu0 %2817
    %2819 = vrot.lane.b32.xlu0 %v602, 32
    %v2820 = vpop.permute.xlu0 %2819
    %2821 = vrot.lane.b32.xlu0 %v603, 32
    %v2822 = vpop.permute.xlu0 %2821
    %2823 = vrot.lane.b32.xlu0 %v604, 32
    %v2824 = vpop.permute.xlu0 %2823
    %2825 = vrot.lane.b32.xlu0 %v605, 32
    %v2826 = vpop.permute.xlu0 %2825
    %2827 = vrot.lane.b32.xlu0 %v606, 32
    %v2828 = vpop.permute.xlu0 %2827
    %2829 = vrot.lane.b32.xlu0 %v607, 32
    %v2830 = vpop.permute.xlu0 %2829
    %2831 = vrot.lane.b32.xlu0 %v608, 32
    %v2832 = vpop.permute.xlu0 %2831
    %2833 = vrot.lane.b32.xlu0 %v609, 32
    %v2834 = vpop.permute.xlu0 %2833
    %2835 = vrot.lane.b32.xlu0 %v610, 32
    %v2836 = vpop.permute.xlu0 %2835
    %2837 = vrot.lane.b32.xlu0 %v611, 32
    %v2838 = vpop.permute.xlu0 %2837
    %2839 = vrot.lane.b32.xlu0 %v612, 32
    %v2840 = vpop.permute.xlu0 %2839
    %2841 = vrot.lane.b32.xlu0 %v613, 32
    %v2842 = vpop.permute.xlu0 %2841
    %2843 = vrot.lane.b32.xlu0 %v614, 32
    %v2844 = vpop.permute.xlu0 %2843
    %2845 = vrot.lane.b32.xlu0 %v615, 32
    %v2846 = vpop.permute.xlu0 %2845
    %2847 = vrot.lane.b32.xlu0 %v616, 32
    %v2848 = vpop.permute.xlu0 %2847
    %2849 = vrot.lane.b32.xlu0 %v617, 32
    %v2850 = vpop.permute.xlu0 %2849
    %2851 = vrot.lane.b32.xlu0 %v618, 32
    %v2852 = vpop.permute.xlu0 %2851
    %2853 = vrot.lane.b32.xlu0 %v619, 32
    %v2854 = vpop.permute.xlu0 %2853
    %2855 = vrot.lane.b32.xlu0 %v620, 32
    %v2856 = vpop.permute.xlu0 %2855
    %2857 = vrot.lane.b32.xlu0 %v621, 32
    %v2858 = vpop.permute.xlu0 %2857
    %2859 = vrot.lane.b32.xlu0 %v622, 32
    %v2860 = vpop.permute.xlu0 %2859
    %2861 = vrot.lane.b32.xlu0 %v623, 32
    %v2862 = vpop.permute.xlu0 %2861
    %vm2940 = vcmask 31744
    %v2941 = vsel %vm2940, %v79, %v702
    %v2942 = vsel %vm2940, %v80, %v704
    %v2943 = vsel %vm2940, %v81, %v706
    %v2944 = vsel %vm2940, %v82, %v708
    %v2945 = vsel %vm2940, %v83, %v710
    %v2946 = vsel %vm2940, %v84, %v712
    %v2947 = vsel %vm2940, %v85, %v714
    %v2948 = vsel %vm2940, %v86, %v716
    %v2949 = vsel %vm2940, %v87, %v718
    %v2950 = vsel %vm2940, %v88, %v720
    %v2951 = vsel %vm2940, %v89, %v722
    %v2952 = vsel %vm2940, %v90, %v724
    %v2953 = vsel %vm2940, %v91, %v726
    %v2954 = vsel %vm2940, %v92, %v728
    %v2955 = vsel %vm2940, %v93, %v730
    %v2956 = vsel %vm2940, %v94, %v732
    %v2957 = vsel %vm2940, %v95, %v734
    %v2958 = vsel %vm2940, %v96, %v736
    %v2959 = vsel %vm2940, %v97, %v738
    %v2960 = vsel %vm2940, %v98, %v740
    %v2961 = vsel %vm2940, %v99, %v742
    %v2962 = vsel %vm2940, %v100, %v744
    %v2963 = vsel %vm2940, %v101, %v746
    %v2964 = vsel %vm2940, %v102, %v748
    %v2965 = vsel %vm2940, %v103, %v750
    %v2966 = vsel %vm2940, %v104, %v752
    %v2967 = vsel %vm2940, %v105, %v754
    %v2968 = vsel %vm2940, %v106, %v756
    %v2969 = vsel %vm2940, %v107, %v758
    %v2970 = vsel %vm2940, %v108, %v760
    %v2971 = vsel %vm2940, %v109, %v762
    %v2972 = vsel %vm2940, %v110, %v764
    %v2973 = vsel %vm2940, %v111, %v766
    %v2974 = vsel %vm2940, %v112, %v768
    %v2975 = vsel %vm2940, %v113, %v770
    %v2976 = vsel %vm2940, %v114, %v772
    %v2977 = vsel %vm2940, %v115, %v774
    %v2978 = vsel %vm2940, %v116, %v776
    %v2979 = vsel %vm2940, %v117, %v778
    %v2980 = vsel %vm2940, %v118, %v780
    %v2981 = vsel %vm2940, %v119, %v782
    %v2982 = vsel %vm2940, %v120, %v784
    %v2983 = vsel %vm2940, %v121, %v786
    %v2984 = vsel %vm2940, %v122, %v788
    %v2985 = vsel %vm2940, %v123, %v790
    %v2986 = vsel %vm2940, %v124, %v792
    %v2987 = vsel %vm2940, %v125, %v794
    %v2988 = vsel %vm2940, %v126, %v796
    %v2989 = vsel %vm2940, %v127, %v798
    %v2990 = vsel %vm2940, %v128, %v800
    %v2991 = vsel %vm2940, %v129, %v802
    %v2992 = vsel %vm2940, %v130, %v804
    %v2993 = vsel %vm2940, %v131, %v806
    %v2994 = vsel %vm2940, %v132, %v808
    %v2995 = vsel %vm2940, %v133, %v810
    %v2996 = vsel %vm2940, %v134, %v812
    %v2997 = vsel %vm2940, %v135, %v814
    %v2998 = vsel %vm2940, %v136, %v816
    %v2999 = vsel %vm2940, %v137, %v818
    %v3000 = vsel %vm2940, %v138, %v820
    %v3001 = vsel %vm2940, %v139, %v822
    %v3002 = vsel %vm2940, %v140, %v824
    %v3003 = vsel %vm2940, %v141, %v826
    %v3004 = vsel %vm2940, %v142, %v828
    %v3005 = vsel %vm2940, %v143, %v830
    %v3006 = vsel %vm2940, %v144, %v832
    %v3007 = vsel %vm2940, %v145, %v834
    %v3008 = vsel %vm2940, %v146, %v836
    %v3009 = vsel %vm2940, %v147, %v838
    %v3010 = vsel %vm2940, %v148, %v840
    %v3011 = vsel %vm2940, %v149, %v842
    %v3012 = vsel %vm2940, %v150, %v844
    %v3013 = vsel %vm2940, %v151, %v846
    %v3014 = vsel %vm2940, %v152, %v848
    %v3015 = vsel %vm2940, %v153, %v850
    %v3016 = vsel %vm2940, %v154, %v852
    %v3017 = vsel %vm2940, %v155, %v854
    %vm3018 = vcmask 64512
    %v3019 = vsel %vm3018, %v2941, %v1010
    %v3020 = vsel %vm3018, %v2942, %v1012
    %v3021 = vsel %vm3018, %v2943, %v1014
    %v3022 = vsel %vm3018, %v2944, %v1016
    %v3023 = vsel %vm3018, %v2945, %v1018
    %v3024 = vsel %vm3018, %v2946, %v1020
    %v3025 = vsel %vm3018, %v2947, %v1022
    %v3026 = vsel %vm3018, %v2948, %v1024
    %v3027 = vsel %vm3018, %v2949, %v1026
    %v3028 = vsel %vm3018, %v2950, %v1028
    %v3029 = vsel %vm3018, %v2951, %v1030
    %v3030 = vsel %vm3018, %v2952, %v1032
    %v3031 = vsel %vm3018, %v2953, %v1034
    %v3032 = vsel %vm3018, %v2954, %v1036
    %v3033 = vsel %vm3018, %v2955, %v1038
    %v3034 = vsel %vm3018, %v2956, %v1040
    %v3035 = vsel %vm3018, %v2957, %v1042
    %v3036 = vsel %vm3018, %v2958, %v1044
    %v3037 = vsel %vm3018, %v2959, %v1046
    %v3038 = vsel %vm3018, %v2960, %v1048
    %v3039 = vsel %vm3018, %v2961, %v1050
    %v3040 = vsel %vm3018, %v2962, %v1052
    %v3041 = vsel %vm3018, %v2963, %v1054
    %v3042 = vsel %vm3018, %v2964, %v1056
    %v3043 = vsel %vm3018, %v2965, %v1058
    %v3044 = vsel %vm3018, %v2966, %v1060
    %v3045 = vsel %vm3018, %v2967, %v1062
    %v3046 = vsel %vm3018, %v2968, %v1064
    %v3047 = vsel %vm3018, %v2969, %v1066
    %v3048 = vsel %vm3018, %v2970, %v1068
    %v3049 = vsel %vm3018, %v2971, %v1070
    %v3050 = vsel %vm3018, %v2972, %v1072
    %v3051 = vsel %vm3018, %v2973, %v1074
    %v3052 = vsel %vm3018, %v2974, %v1076
    %v3053 = vsel %vm3018, %v2975, %v1078
    %v3054 = vsel %vm3018, %v2976, %v1080
    %v3055 = vsel %vm3018, %v2977, %v1082
    %v3056 = vsel %vm3018, %v2978, %v1084
    %v3057 = vsel %vm3018, %v2979, %v1086
    %v3058 = vsel %vm3018, %v2980, %v1088
    %v3059 = vsel %vm3018, %v2981, %v1090
    %v3060 = vsel %vm3018, %v2982, %v1092
    %v3061 = vsel %vm3018, %v2983, %v1094
    %v3062 = vsel %vm3018, %v2984, %v1096
    %v3063 = vsel %vm3018, %v2985, %v1098
    %v3064 = vsel %vm3018, %v2986, %v1100
    %v3065 = vsel %vm3018, %v2987, %v1102
    %v3066 = vsel %vm3018, %v2988, %v1104
    %v3067 = vsel %vm3018, %v2989, %v1106
    %v3068 = vsel %vm3018, %v2990, %v1108
    %v3069 = vsel %vm3018, %v2991, %v1110
    %v3070 = vsel %vm3018, %v2992, %v1112
    %v3071 = vsel %vm3018, %v2993, %v1114
    %v3072 = vsel %vm3018, %v2994, %v1116
    %v3073 = vsel %vm3018, %v2995, %v1118
    %v3074 = vsel %vm3018, %v2996, %v1120
    %v3075 = vsel %vm3018, %v2997, %v1122
    %v3076 = vsel %vm3018, %v2998, %v1124
    %v3077 = vsel %vm3018, %v2999, %v1126
    %v3078 = vsel %vm3018, %v3000, %v1128
    %v3079 = vsel %vm3018, %v3001, %v1130
    %v3080 = vsel %vm3018, %v3002, %v1132
    %v3081 = vsel %vm3018, %v3003, %v1134
    %v3082 = vsel %vm3018, %v3004, %v1136
    %v3083 = vsel %vm3018, %v3005, %v1138
    %v3084 = vsel %vm3018, %v3006, %v1140
    %v3085 = vsel %vm3018, %v3007, %v1142
    %v3086 = vsel %vm3018, %v3008, %v1144
    %v3087 = vsel %vm3018, %v3009, %v1146
    %v3088 = vsel %vm3018, %v3010, %v1148
    %v3089 = vsel %vm3018, %v3011, %v1150
    %v3090 = vsel %vm3018, %v3012, %v1152
    %v3091 = vsel %vm3018, %v3013, %v1154
    %v3092 = vsel %vm3018, %v3014, %v1156
    %v3093 = vsel %vm3018, %v3015, %v1158
    %v3094 = vsel %vm3018, %v3016, %v1160
    %v3095 = vsel %vm3018, %v3017, %v1162
    %vm3096 = vcmask 97280
    %v3097 = vsel %vm3096, %v3019, %v1244
    %v3098 = vsel %vm3096, %v3020, %v1246
    %v3099 = vsel %vm3096, %v3021, %v1248
    %v3100 = vsel %vm3096, %v3022, %v1250
    %v3101 = vsel %vm3096, %v3023, %v1252
    %v3102 = vsel %vm3096, %v3024, %v1254
    %v3103 = vsel %vm3096, %v3025, %v1256
    %v3104 = vsel %vm3096, %v3026, %v1258
    %v3105 = vsel %vm3096, %v3027, %v1260
    %v3106 = vsel %vm3096, %v3028, %v1262
    %v3107 = vsel %vm3096, %v3029, %v1264
    %v3108 = vsel %vm3096, %v3030, %v1266
    %v3109 = vsel %vm3096, %v3031, %v1268
    %v3110 = vsel %vm3096, %v3032, %v1270
    %v3111 = vsel %vm3096, %v3033, %v1272
    %v3112 = vsel %vm3096, %v3034, %v1274
    %v3113 = vsel %vm3096, %v3035, %v1276
    %v3114 = vsel %vm3096, %v3036, %v1278
    %v3115 = vsel %vm3096, %v3037, %v1280
    %v3116 = vsel %vm3096, %v3038, %v1282
    %v3117 = vsel %vm3096, %v3039, %v1284
    %v3118 = vsel %vm3096, %v3040, %v1286
    %v3119 = vsel %vm3096, %v3041, %v1288
    %v3120 = vsel %vm3096, %v3042, %v1290
    %v3121 = vsel %vm3096, %v3043, %v1292
    %v3122 = vsel %vm3096, %v3044, %v1294
    %v3123 = vsel %vm3096, %v3045, %v1296
    %v3124 = vsel %vm3096, %v3046, %v1298
    %v3125 = vsel %vm3096, %v3047, %v1300
    %v3126 = vsel %vm3096, %v3048, %v1302
    %v3127 = vsel %vm3096, %v3049, %v1304
    %v3128 = vsel %vm3096, %v3050, %v1306
    %v3129 = vsel %vm3096, %v3051, %v1308
    %v3130 = vsel %vm3096, %v3052, %v1310
    %v3131 = vsel %vm3096, %v3053, %v1312
    %v3132 = vsel %vm3096, %v3054, %v1314
    %v3133 = vsel %vm3096, %v3055, %v1316
    %v3134 = vsel %vm3096, %v3056, %v1318
    %v3135 = vsel %vm3096, %v3057, %v1320
    %v3136 = vsel %vm3096, %v3058, %v1322
    %v3137 = vsel %vm3096, %v3059, %v1324
    %v3138 = vsel %vm3096, %v3060, %v1326
    %v3139 = vsel %vm3096, %v3061, %v1328
    %v3140 = vsel %vm3096, %v3062, %v1330
    %v3141 = vsel %vm3096, %v3063, %v1332
    %v3142 = vsel %vm3096, %v3064, %v1334
    %v3143 = vsel %vm3096, %v3065, %v1336
    %v3144 = vsel %vm3096, %v3066, %v1338
    %v3145 = vsel %vm3096, %v3067, %v1340
    %v3146 = vsel %vm3096, %v3068, %v1342
    %v3147 = vsel %vm3096, %v3069, %v1344
    %v3148 = vsel %vm3096, %v3070, %v1346
    %v3149 = vsel %vm3096, %v3071, %v1348
    %v3150 = vsel %vm3096, %v3072, %v1350
    %v3151 = vsel %vm3096, %v3073, %v1352
    %v3152 = vsel %vm3096, %v3074, %v1354
    %v3153 = vsel %vm3096, %v3075, %v1356
    %v3154 = vsel %vm3096, %v3076, %v1358
    %v3155 = vsel %vm3096, %v3077, %v1360
    %v3156 = vsel %vm3096, %v3078, %v1362
    %v3157 = vsel %vm3096, %v3079, %v1364
    %v3158 = vsel %vm3096, %v3080, %v1366
    %v3159 = vsel %vm3096, %v3081, %v1368
    %v3160 = vsel %vm3096, %v3082, %v1370
    %v3161 = vsel %vm3096, %v3083, %v1372
    %v3162 = vsel %vm3096, %v3084, %v1374
    %v3163 = vsel %vm3096, %v3085, %v1376
    %v3164 = vsel %vm3096, %v3086, %v1378
    %v3165 = vsel %vm3096, %v3087, %v1380
    %v3166 = vsel %vm3096, %v3088, %v1382
    %v3167 = vsel %vm3096, %v3089, %v1384
    %v3168 = vsel %vm3096, %v3090, %v1386
    %v3169 = vsel %vm3096, %v3091, %v1388
    %v3170 = vsel %vm3096, %v3092, %v1390
    %v3171 = vsel %vm3096, %v3093, %v1392
    %v3172 = vsel %vm3096, %v3094, %v1394
    %v3173 = vsel %vm3096, %v3095, %v1396
    %vm3174 = vcmask 130048
    %v3175 = vsel %vm3174, %v3097, %v1552
    %v3176 = vsel %vm3174, %v3098, %v1554
    %v3177 = vsel %vm3174, %v3099, %v1556
    %v3178 = vsel %vm3174, %v3100, %v1558
    %v3179 = vsel %vm3174, %v3101, %v1560
    %v3180 = vsel %vm3174, %v3102, %v1562
    %v3181 = vsel %vm3174, %v3103, %v1564
    %v3182 = vsel %vm3174, %v3104, %v1566
    %v3183 = vsel %vm3174, %v3105, %v1568
    %v3184 = vsel %vm3174, %v3106, %v1570
    %v3185 = vsel %vm3174, %v3107, %v1572
    %v3186 = vsel %vm3174, %v3108, %v1574
    %v3187 = vsel %vm3174, %v3109, %v1576
    %v3188 = vsel %vm3174, %v3110, %v1578
    %v3189 = vsel %vm3174, %v3111, %v1580
    %v3190 = vsel %vm3174, %v3112, %v1582
    %v3191 = vsel %vm3174, %v3113, %v1584
    %v3192 = vsel %vm3174, %v3114, %v1586
    %v3193 = vsel %vm3174, %v3115, %v1588
    %v3194 = vsel %vm3174, %v3116, %v1590
    %v3195 = vsel %vm3174, %v3117, %v1592
    %v3196 = vsel %vm3174, %v3118, %v1594
    %v3197 = vsel %vm3174, %v3119, %v1596
    %v3198 = vsel %vm3174, %v3120, %v1598
    %v3199 = vsel %vm3174, %v3121, %v1600
    %v3200 = vsel %vm3174, %v3122, %v1602
    %v3201 = vsel %vm3174, %v3123, %v1604
    %v3202 = vsel %vm3174, %v3124, %v1606
    %v3203 = vsel %vm3174, %v3125, %v1608
    %v3204 = vsel %vm3174, %v3126, %v1610
    %v3205 = vsel %vm3174, %v3127, %v1612
    %v3206 = vsel %vm3174, %v3128, %v1614
    %v3207 = vsel %vm3174, %v3129, %v1616
    %v3208 = vsel %vm3174, %v3130, %v1618
    %v3209 = vsel %vm3174, %v3131, %v1620
    %v3210 = vsel %vm3174, %v3132, %v1622
    %v3211 = vsel %vm3174, %v3133, %v1624
    %v3212 = vsel %vm3174, %v3134, %v1626
    %v3213 = vsel %vm3174, %v3135, %v1628
    %v3214 = vsel %vm3174, %v3136, %v1630
    %v3215 = vsel %vm3174, %v3137, %v1632
    %v3216 = vsel %vm3174, %v3138, %v1634
    %v3217 = vsel %vm3174, %v3139, %v1636
    %v3218 = vsel %vm3174, %v3140, %v1638
    %v3219 = vsel %vm3174, %v3141, %v1640
    %v3220 = vsel %vm3174, %v3142, %v1642
    %v3221 = vsel %vm3174, %v3143, %v1644
    %v3222 = vsel %vm3174, %v3144, %v1646
    %v3223 = vsel %vm3174, %v3145, %v1648
    %v3224 = vsel %vm3174, %v3146, %v1650
    %v3225 = vsel %vm3174, %v3147, %v1652
    %v3226 = vsel %vm3174, %v3148, %v1654
    %v3227 = vsel %vm3174, %v3149, %v1656
    %v3228 = vsel %vm3174, %v3150, %v1658
    %v3229 = vsel %vm3174, %v3151, %v1660
    %v3230 = vsel %vm3174, %v3152, %v1662
    %v3231 = vsel %vm3174, %v3153, %v1664
    %v3232 = vsel %vm3174, %v3154, %v1666
    %v3233 = vsel %vm3174, %v3155, %v1668
    %v3234 = vsel %vm3174, %v3156, %v1670
    %v3235 = vsel %vm3174, %v3157, %v1672
    %v3236 = vsel %vm3174, %v3158, %v1674
    %v3237 = vsel %vm3174, %v3159, %v1676
    %v3238 = vsel %vm3174, %v3160, %v1678
    %v3239 = vsel %vm3174, %v3161, %v1680
    %v3240 = vsel %vm3174, %v3162, %v1682
    %v3241 = vsel %vm3174, %v3163, %v1684
    %v3242 = vsel %vm3174, %v3164, %v1686
    %v3243 = vsel %vm3174, %v3165, %v1688
    %v3244 = vsel %vm3174, %v3166, %v1690
    %v3245 = vsel %vm3174, %v3167, %v1692
    %v3246 = vsel %vm3174, %v3168, %v1694
    %v3247 = vsel %vm3174, %v3169, %v1696
    %v3248 = vsel %vm3174, %v3170, %v1698
    %v3249 = vsel %vm3174, %v3171, %v1700
    %v3250 = vsel %vm3174, %v3172, %v1702
    %v3251 = vsel %vm3174, %v3173, %v1704
    %vm3252 = vcmask 162816
    %v3253 = vsel %vm3252, %v3175, %v1860
    %v3254 = vsel %vm3252, %v3176, %v1862
    %v3255 = vsel %vm3252, %v3177, %v1864
    %v3256 = vsel %vm3252, %v3178, %v1866
    %v3257 = vsel %vm3252, %v3179, %v1868
    %v3258 = vsel %vm3252, %v3180, %v1870
    %v3259 = vsel %vm3252, %v3181, %v1872
    %v3260 = vsel %vm3252, %v3182, %v1874
    %v3261 = vsel %vm3252, %v3183, %v1876
    %v3262 = vsel %vm3252, %v3184, %v1878
    %v3263 = vsel %vm3252, %v3185, %v1880
    %v3264 = vsel %vm3252, %v3186, %v1882
    %v3265 = vsel %vm3252, %v3187, %v1884
    %v3266 = vsel %vm3252, %v3188, %v1886
    %v3267 = vsel %vm3252, %v3189, %v1888
    %v3268 = vsel %vm3252, %v3190, %v1890
    %v3269 = vsel %vm3252, %v3191, %v1892
    %v3270 = vsel %vm3252, %v3192, %v1894
    %v3271 = vsel %vm3252, %v3193, %v1896
    %v3272 = vsel %vm3252, %v3194, %v1898
    %v3273 = vsel %vm3252, %v3195, %v1900
    %v3274 = vsel %vm3252, %v3196, %v1902
    %v3275 = vsel %vm3252, %v3197, %v1904
    %v3276 = vsel %vm3252, %v3198, %v1906
    %v3277 = vsel %vm3252, %v3199, %v1908
    %v3278 = vsel %vm3252, %v3200, %v1910
    %v3279 = vsel %vm3252, %v3201, %v1912
    %v3280 = vsel %vm3252, %v3202, %v1914
    %v3281 = vsel %vm3252, %v3203, %v1916
    %v3282 = vsel %vm3252, %v3204, %v1918
    %v3283 = vsel %vm3252, %v3205, %v1920
    %v3284 = vsel %vm3252, %v3206, %v1922
    %v3285 = vsel %vm3252, %v3207, %v1924
    %v3286 = vsel %vm3252, %v3208, %v1926
    %v3287 = vsel %vm3252, %v3209, %v1928
    %v3288 = vsel %vm3252, %v3210, %v1930
    %v3289 = vsel %vm3252, %v3211, %v1932
    %v3290 = vsel %vm3252, %v3212, %v1934
    %v3291 = vsel %vm3252, %v3213, %v1936
    %v3292 = vsel %vm3252, %v3214, %v1938
    %v3293 = vsel %vm3252, %v3215, %v1940
    %v3294 = vsel %vm3252, %v3216, %v1942
    %v3295 = vsel %vm3252, %v3217, %v1944
    %v3296 = vsel %vm3252, %v3218, %v1946
    %v3297 = vsel %vm3252, %v3219, %v1948
    %v3298 = vsel %vm3252, %v3220, %v1950
    %v3299 = vsel %vm3252, %v3221, %v1952
    %v3300 = vsel %vm3252, %v3222, %v1954
    %v3301 = vsel %vm3252, %v3223, %v1956
    %v3302 = vsel %vm3252, %v3224, %v1958
    %v3303 = vsel %vm3252, %v3225, %v1960
    %v3304 = vsel %vm3252, %v3226, %v1962
    %v3305 = vsel %vm3252, %v3227, %v1964
    %v3306 = vsel %vm3252, %v3228, %v1966
    %v3307 = vsel %vm3252, %v3229, %v1968
    %v3308 = vsel %vm3252, %v3230, %v1970
    %v3309 = vsel %vm3252, %v3231, %v1972
    %v3310 = vsel %vm3252, %v3232, %v1974
    %v3311 = vsel %vm3252, %v3233, %v1976
    %v3312 = vsel %vm3252, %v3234, %v1978
    %v3313 = vsel %vm3252, %v3235, %v1980
    %v3314 = vsel %vm3252, %v3236, %v1982
    %v3315 = vsel %vm3252, %v3237, %v1984
    %v3316 = vsel %vm3252, %v3238, %v1986
    %v3317 = vsel %vm3252, %v3239, %v1988
    %v3318 = vsel %vm3252, %v3240, %v1990
    %v3319 = vsel %vm3252, %v3241, %v1992
    %v3320 = vsel %vm3252, %v3242, %v1994
    %v3321 = vsel %vm3252, %v3243, %v1996
    %v3322 = vsel %vm3252, %v3244, %v1998
    %v3323 = vsel %vm3252, %v3245, %v2000
    %v3324 = vsel %vm3252, %v3246, %v2002
    %v3325 = vsel %vm3252, %v3247, %v2004
    %v3326 = vsel %vm3252, %v3248, %v2006
    %v3327 = vsel %vm3252, %v3249, %v2008
    %v3328 = vsel %vm3252, %v3250, %v2010
    %v3329 = vsel %vm3252, %v3251, %v2012
    %vm3330 = vcmask 195584
    %v3331 = vsel %vm3330, %v3253, %v2094
    %v3332 = vsel %vm3330, %v3254, %v2096
    %v3333 = vsel %vm3330, %v3255, %v2098
    %v3334 = vsel %vm3330, %v3256, %v2100
    %v3335 = vsel %vm3330, %v3257, %v2102
    %v3336 = vsel %vm3330, %v3258, %v2104
    %v3337 = vsel %vm3330, %v3259, %v2106
    %v3338 = vsel %vm3330, %v3260, %v2108
    %v3339 = vsel %vm3330, %v3261, %v2110
    %v3340 = vsel %vm3330, %v3262, %v2112
    %v3341 = vsel %vm3330, %v3263, %v2114
    %v3342 = vsel %vm3330, %v3264, %v2116
    %v3343 = vsel %vm3330, %v3265, %v2118
    %v3344 = vsel %vm3330, %v3266, %v2120
    %v3345 = vsel %vm3330, %v3267, %v2122
    %v3346 = vsel %vm3330, %v3268, %v2124
    %v3347 = vsel %vm3330, %v3269, %v2126
    %v3348 = vsel %vm3330, %v3270, %v2128
    %v3349 = vsel %vm3330, %v3271, %v2130
    %v3350 = vsel %vm3330, %v3272, %v2132
    %v3351 = vsel %vm3330, %v3273, %v2134
    %v3352 = vsel %vm3330, %v3274, %v2136
    %v3353 = vsel %vm3330, %v3275, %v2138
    %v3354 = vsel %vm3330, %v3276, %v2140
    %v3355 = vsel %vm3330, %v3277, %v2142
    %v3356 = vsel %vm3330, %v3278, %v2144
    %v3357 = vsel %vm3330, %v3279, %v2146
    %v3358 = vsel %vm3330, %v3280, %v2148
    %v3359 = vsel %vm3330, %v3281, %v2150
    %v3360 = vsel %vm3330, %v3282, %v2152
    %v3361 = vsel %vm3330, %v3283, %v2154
    %v3362 = vsel %vm3330, %v3284, %v2156
    %v3363 = vsel %vm3330, %v3285, %v2158
    %v3364 = vsel %vm3330, %v3286, %v2160
    %v3365 = vsel %vm3330, %v3287, %v2162
    %v3366 = vsel %vm3330, %v3288, %v2164
    %v3367 = vsel %vm3330, %v3289, %v2166
    %v3368 = vsel %vm3330, %v3290, %v2168
    %v3369 = vsel %vm3330, %v3291, %v2170
    %v3370 = vsel %vm3330, %v3292, %v2172
    %v3371 = vsel %vm3330, %v3293, %v2174
    %v3372 = vsel %vm3330, %v3294, %v2176
    %v3373 = vsel %vm3330, %v3295, %v2178
    %v3374 = vsel %vm3330, %v3296, %v2180
    %v3375 = vsel %vm3330, %v3297, %v2182
    %v3376 = vsel %vm3330, %v3298, %v2184
    %v3377 = vsel %vm3330, %v3299, %v2186
    %v3378 = vsel %vm3330, %v3300, %v2188
    %v3379 = vsel %vm3330, %v3301, %v2190
    %v3380 = vsel %vm3330, %v3302, %v2192
    %v3381 = vsel %vm3330, %v3303, %v2194
    %v3382 = vsel %vm3330, %v3304, %v2196
    %v3383 = vsel %vm3330, %v3305, %v2198
    %v3384 = vsel %vm3330, %v3306, %v2200
    %v3385 = vsel %vm3330, %v3307, %v2202
    %v3386 = vsel %vm3330, %v3308, %v2204
    %v3387 = vsel %vm3330, %v3309, %v2206
    %v3388 = vsel %vm3330, %v3310, %v2208
    %v3389 = vsel %vm3330, %v3311, %v2210
    %v3390 = vsel %vm3330, %v3312, %v2212
    %v3391 = vsel %vm3330, %v3313, %v2214
    %v3392 = vsel %vm3330, %v3314, %v2216
    %v3393 = vsel %vm3330, %v3315, %v2218
    %v3394 = vsel %vm3330, %v3316, %v2220
    %v3395 = vsel %vm3330, %v3317, %v2222
    %v3396 = vsel %vm3330, %v3318, %v2224
    %v3397 = vsel %vm3330, %v3319, %v2226
    %v3398 = vsel %vm3330, %v3320, %v2228
    %v3399 = vsel %vm3330, %v3321, %v2230
    %v3400 = vsel %vm3330, %v3322, %v2232
    %v3401 = vsel %vm3330, %v3323, %v2234
    %v3402 = vsel %vm3330, %v3324, %v2236
    %v3403 = vsel %vm3330, %v3325, %v2238
    %v3404 = vsel %vm3330, %v3326, %v2240
    %v3405 = vsel %vm3330, %v3327, %v2242
    %v3406 = vsel %vm3330, %v3328, %v2244
    %v3407 = vsel %vm3330, %v3329, %v2246
    %vm3408 = vcmask 228352
    %v3409 = vsel %vm3408, %v3331, %v2402
    %v3410 = vsel %vm3408, %v3332, %v2404
    %v3411 = vsel %vm3408, %v3333, %v2406
    %v3412 = vsel %vm3408, %v3334, %v2408
    %v3413 = vsel %vm3408, %v3335, %v2410
    %v3414 = vsel %vm3408, %v3336, %v2412
    %v3415 = vsel %vm3408, %v3337, %v2414
    %v3416 = vsel %vm3408, %v3338, %v2416
    %v3417 = vsel %vm3408, %v3339, %v2418
    %v3418 = vsel %vm3408, %v3340, %v2420
    %v3419 = vsel %vm3408, %v3341, %v2422
    %v3420 = vsel %vm3408, %v3342, %v2424
    %v3421 = vsel %vm3408, %v3343, %v2426
    %v3422 = vsel %vm3408, %v3344, %v2428
    %v3423 = vsel %vm3408, %v3345, %v2430
    %v3424 = vsel %vm3408, %v3346, %v2432
    %v3425 = vsel %vm3408, %v3347, %v2434
    %v3426 = vsel %vm3408, %v3348, %v2436
    %v3427 = vsel %vm3408, %v3349, %v2438
    %v3428 = vsel %vm3408, %v3350, %v2440
    %v3429 = vsel %vm3408, %v3351, %v2442
    %v3430 = vsel %vm3408, %v3352, %v2444
    %v3431 = vsel %vm3408, %v3353, %v2446
    %v3432 = vsel %vm3408, %v3354, %v2448
    %v3433 = vsel %vm3408, %v3355, %v2450
    %v3434 = vsel %vm3408, %v3356, %v2452
    %v3435 = vsel %vm3408, %v3357, %v2454
    %v3436 = vsel %vm3408, %v3358, %v2456
    %v3437 = vsel %vm3408, %v3359, %v2458
    %v3438 = vsel %vm3408, %v3360, %v2460
    %v3439 = vsel %vm3408, %v3361, %v2462
    %v3440 = vsel %vm3408, %v3362, %v2464
    %v3441 = vsel %vm3408, %v3363, %v2466
    %v3442 = vsel %vm3408, %v3364, %v2468
    %v3443 = vsel %vm3408, %v3365, %v2470
    %v3444 = vsel %vm3408, %v3366, %v2472
    %v3445 = vsel %vm3408, %v3367, %v2474
    %v3446 = vsel %vm3408, %v3368, %v2476
    %v3447 = vsel %vm3408, %v3369, %v2478
    %v3448 = vsel %vm3408, %v3370, %v2480
    %v3449 = vsel %vm3408, %v3371, %v2482
    %v3450 = vsel %vm3408, %v3372, %v2484
    %v3451 = vsel %vm3408, %v3373, %v2486
    %v3452 = vsel %vm3408, %v3374, %v2488
    %v3453 = vsel %vm3408, %v3375, %v2490
    %v3454 = vsel %vm3408, %v3376, %v2492
    %v3455 = vsel %vm3408, %v3377, %v2494
    %v3456 = vsel %vm3408, %v3378, %v2496
    %v3457 = vsel %vm3408, %v3379, %v2498
    %v3458 = vsel %vm3408, %v3380, %v2500
    %v3459 = vsel %vm3408, %v3381, %v2502
    %v3460 = vsel %vm3408, %v3382, %v2504
    %v3461 = vsel %vm3408, %v3383, %v2506
    %v3462 = vsel %vm3408, %v3384, %v2508
    %v3463 = vsel %vm3408, %v3385, %v2510
    %v3464 = vsel %vm3408, %v3386, %v2512
    %v3465 = vsel %vm3408, %v3387, %v2514
    %v3466 = vsel %vm3408, %v3388, %v2516
    %v3467 = vsel %vm3408, %v3389, %v2518
    %v3468 = vsel %vm3408, %v3390, %v2520
    %v3469 = vsel %vm3408, %v3391, %v2522
    %v3470 = vsel %vm3408, %v3392, %v2524
    %v3471 = vsel %vm3408, %v3393, %v2526
    %v3472 = vsel %vm3408, %v3394, %v2528
    %v3473 = vsel %vm3408, %v3395, %v2530
    %v3474 = vsel %vm3408, %v3396, %v2532
    %v3475 = vsel %vm3408, %v3397, %v2534
    %v3476 = vsel %vm3408, %v3398, %v2536
    %v3477 = vsel %vm3408, %v3399, %v2538
    %v3478 = vsel %vm3408, %v3400, %v2540
    %v3479 = vsel %vm3408, %v3401, %v2542
    %v3480 = vsel %vm3408, %v3402, %v2544
    %v3481 = vsel %vm3408, %v3403, %v2546
    %v3482 = vsel %vm3408, %v3404, %v2548
    %v3483 = vsel %vm3408, %v3405, %v2550
    %v3484 = vsel %vm3408, %v3406, %v2552
    %v3485 = vsel %vm3408, %v3407, %v2554
    %v3486 = vsel %vm40, %v3409, %v2710
    %v3487 = vsel %vm40, %v3410, %v2712
    %v3488 = vsel %vm40, %v3411, %v2714
    %v3489 = vsel %vm40, %v3412, %v2716
    %v3490 = vsel %vm40, %v3413, %v2718
    %v3491 = vsel %vm40, %v3414, %v2720
    %v3492 = vsel %vm40, %v3415, %v2722
    %v3493 = vsel %vm40, %v3416, %v2724
    %v3494 = vsel %vm40, %v3417, %v2726
    %v3495 = vsel %vm40, %v3418, %v2728
    %v3496 = vsel %vm40, %v3419, %v2730
    %v3497 = vsel %vm40, %v3420, %v2732
    %v3498 = vsel %vm40, %v3421, %v2734
    %v3499 = vsel %vm40, %v3422, %v2736
    %v3500 = vsel %vm40, %v3423, %v2738
    %v3501 = vsel %vm40, %v3424, %v2740
    %v3502 = vsel %vm40, %v3425, %v2742
    %v3503 = vsel %vm40, %v3426, %v2744
    %v3504 = vsel %vm40, %v3427, %v2746
    %v3505 = vsel %vm40, %v3428, %v2748
    %v3506 = vsel %vm40, %v3429, %v2750
    %v3507 = vsel %vm40, %v3430, %v2752
    %v3508 = vsel %vm40, %v3431, %v2754
    %v3509 = vsel %vm40, %v3432, %v2756
    %v3510 = vsel %vm40, %v3433, %v2758
    %v3511 = vsel %vm40, %v3434, %v2760
    %v3512 = vsel %vm40, %v3435, %v2762
    %v3513 = vsel %vm40, %v3436, %v2764
    %v3514 = vsel %vm40, %v3437, %v2766
    %v3515 = vsel %vm40, %v3438, %v2768
    %v3516 = vsel %vm40, %v3439, %v2770
    %v3517 = vsel %vm40, %v3440, %v2772
    %v3518 = vsel %vm40, %v3441, %v2774
    %v3519 = vsel %vm40, %v3442, %v2776
    %v3520 = vsel %vm40, %v3443, %v2778
    %v3521 = vsel %vm40, %v3444, %v2780
    %v3522 = vsel %vm40, %v3445, %v2782
    %v3523 = vsel %vm40, %v3446, %v2784
    %v3524 = vsel %vm40, %v3447, %v2786
    %v3525 = vsel %vm40, %v3448, %v2788
    %v3526 = vsel %vm40, %v3449, %v2790
    %v3527 = vsel %vm40, %v3450, %v2792
    %v3528 = vsel %vm40, %v3451, %v2794
    %v3529 = vsel %vm40, %v3452, %v2796
    %v3530 = vsel %vm40, %v3453, %v2798
    %v3531 = vsel %vm40, %v3454, %v2800
    %v3532 = vsel %vm40, %v3455, %v2802
    %v3533 = vsel %vm40, %v3456, %v2804
    %v3534 = vsel %vm40, %v3457, %v2806
    %v3535 = vsel %vm40, %v3458, %v2808
    %v3536 = vsel %vm40, %v3459, %v2810
    %v3537 = vsel %vm40, %v3460, %v2812
    %v3538 = vsel %vm40, %v3461, %v2814
    %v3539 = vsel %vm40, %v3462, %v2816
    %v3540 = vsel %vm40, %v3463, %v2818
    %v3541 = vsel %vm40, %v3464, %v2820
    %v3542 = vsel %vm40, %v3465, %v2822
    %v3543 = vsel %vm40, %v3466, %v2824
    %v3544 = vsel %vm40, %v3467, %v2826
    %v3545 = vsel %vm40, %v3468, %v2828
    %v3546 = vsel %vm40, %v3469, %v2830
    %v3547 = vsel %vm40, %v3470, %v2832
    %v3548 = vsel %vm40, %v3471, %v2834
    %v3549 = vsel %vm40, %v3472, %v2836
    %v3550 = vsel %vm40, %v3473, %v2838
    %v3551 = vsel %vm40, %v3474, %v2840
    %v3552 = vsel %vm40, %v3475, %v2842
    %v3553 = vsel %vm40, %v3476, %v2844
    %v3554 = vsel %vm40, %v3477, %v2846
    %v3555 = vsel %vm40, %v3478, %v2848
    %v3556 = vsel %vm40, %v3479, %v2850
    %v3557 = vsel %vm40, %v3480, %v2852
    %v3558 = vsel %vm40, %v3481, %v2854
    %v3559 = vsel %vm40, %v3482, %v2856
    %v3560 = vsel %vm40, %v3483, %v2858
    %v3561 = vsel %vm40, %v3484, %v2860
    %v3562 = vsel %vm40, %v3485, %v2862
    %v3563 = vpack.c.bf16 %v3487, %v3486
    %v3564 = vpack.c.bf16 %v3489, %v3488
    %v3565 = vpack.c.bf16 %v3491, %v3490
    %v3566 = vpack.c.bf16 %v3493, %v3492
    %v3567 = vpack.c.bf16 %v3495, %v3494
    %v3568 = vpack.c.bf16 %v3497, %v3496
    %v3569 = vpack.c.bf16 %v3499, %v3498
    %v3570 = vpack.c.bf16 %v3501, %v3500
    %v3571 = vpack.c.bf16 %v3503, %v3502
    %v3572 = vpack.c.bf16 %v3505, %v3504
    %v3573 = vpack.c.bf16 %v3507, %v3506
    %v3574 = vpack.c.bf16 %v3509, %v3508
    %v3575 = vpack.c.bf16 %v3511, %v3510
    %v3576 = vpack.c.bf16 %v3513, %v3512
    %v3577 = vpack.c.bf16 %v3515, %v3514
    %v3578 = vpack.c.bf16 %v3517, %v3516
    %v3579 = vpack.c.bf16 %v3519, %v3518
    %v3580 = vpack.c.bf16 %v3521, %v3520
    %v3581 = vpack.c.bf16 %v3523, %v3522
    %v3582 = vpack.c.bf16 %v3525, %v3524
    %v3583 = vpack.c.bf16 %v3527, %v3526
    %v3584 = vpack.c.bf16 %v3529, %v3528
    %v3585 = vpack.c.bf16 %v3531, %v3530
    %v3586 = vpack.c.bf16 %v3533, %v3532
    %v3587 = vpack.c.bf16 %v3535, %v3534
    %v3588 = vpack.c.bf16 %v3537, %v3536
    %v3589 = vpack.c.bf16 %v3539, %v3538
    %v3590 = vpack.c.bf16 %v3541, %v3540
    %v3591 = vpack.c.bf16 %v3543, %v3542
    %v3592 = vpack.c.bf16 %v3545, %v3544
    %v3593 = vpack.c.bf16 %v3547, %v3546
    %v3594 = vpack.c.bf16 %v3549, %v3548
    %v3595 = vpack.c.bf16 %v3551, %v3550
    %v3596 = vpack.c.bf16 %v3553, %v3552
    %v3597 = vpack.c.bf16 %v3555, %v3554
    %v3598 = vpack.c.bf16 %v3557, %v3556
    %v3599 = vpack.c.bf16 %v3559, %v3558
    %v3600 = vpack.c.bf16 %v3561, %v3560
    %v3601 = vpack.c.bf16 %v3562, %v3562
    %v3602 = vld [vmem:[%s1] sm:$0xf]
    %v3603 = vld [vmem:[%s1 + $0x4] sm:$0xf]
    %v3604 = vld [vmem:[%s1 + $0x8] sm:$0xf]
    %v3605 = vld [vmem:[%s1 + $0xc] sm:$0xf]
    %v3606 = vld [vmem:[%s1 + $0x10] sm:$0x3]
    %v3612 = vunpack.c.l.b16 %v3602
    %v3613 = vunpack.c.l.b16 %v3603
    %v3614 = vunpack.c.l.b16 %v3604
    %v3615 = vunpack.c.l.b16 %v3605
    %v3616 = vunpack.c.l.b16 %v3606
    %v3617 = vpack.c.b16 %v3613, %v3612
    %v3618 = vpack.c.b16 %v3615, %v3614
    %v3619 = vpack.c.b16 %v3616, %v3616
    %vm3622 = vcmask 293888
    %v3624 = vsel %vm3622, %v3563, 0
    %v3627 = vsel %vm3622, %v3564, 0
    %v3630 = vsel %vm3622, %v3565, 0
    %v3633 = vsel %vm3622, %v3566, 0
    %v3636 = vsel %vm3622, %v3567, 0
    %v3639 = vsel %vm3622, %v3568, 0
    %v3642 = vsel %vm3622, %v3569, 0
    %v3645 = vsel %vm3622, %v3570, 0
    %v3648 = vsel %vm3622, %v3571, 0
    %v3651 = vsel %vm3622, %v3572, 0
    %v3654 = vsel %vm3622, %v3573, 0
    %v3657 = vsel %vm3622, %v3574, 0
    %v3660 = vsel %vm3622, %v3575, 0
    %v3663 = vsel %vm3622, %v3576, 0
    %v3666 = vsel %vm3622, %v3577, 0
    %v3669 = vsel %vm3622, %v3578, 0
    %v3672 = vsel %vm3622, %v3579, 0
    %v3675 = vsel %vm3622, %v3580, 0
    %v3678 = vsel %vm3622, %v3581, 0
    %v3681 = vsel %vm3622, %v3582, 0
    %v3684 = vsel %vm3622, %v3583, 0
    %v3687 = vsel %vm3622, %v3584, 0
    %v3690 = vsel %vm3622, %v3585, 0
    %v3693 = vsel %vm3622, %v3586, 0
    %v3696 = vsel %vm3622, %v3587, 0
    %v3699 = vsel %vm3622, %v3588, 0
    %v3702 = vsel %vm3622, %v3589, 0
    %v3705 = vsel %vm3622, %v3590, 0
    %v3708 = vsel %vm3622, %v3591, 0
    %v3711 = vsel %vm3622, %v3592, 0
    %v3714 = vsel %vm3622, %v3593, 0
    %v3717 = vsel %vm3622, %v3594, 0
    %v3720 = vsel %vm3622, %v3595, 0
    %v3723 = vsel %vm3622, %v3596, 0
    %v3726 = vsel %vm3622, %v3597, 0
    %v3729 = vsel %vm3622, %v3598, 0
    %v3732 = vsel %vm3622, %v3599, 0
    %v3735 = vsel %vm3622, %v3600, 0
    %v3738 = vsel %vm3622, %v3601, 0
    %vm3740 = vcmask 1041408
    %v3742 = vsel %vm3740, %v3619, 0
    %3744 = vmatprep.subr.bf16.mxu0 0
    %3745 = vmatpush1.bf16.msra.mxu0 %v3617
    %3746 = vmatprep.subr.bf16.mxu0 0
    %3747 = vmatpush1.bf16.msra.mxu0 %v3618
    %3748 = vmatprep.subr.bf16.mxu0 0
    %3749 = vmatpush1.bf16.msra.mxu0 %v3742
    %3750 = vmatprep.subr.bf16.mxu0 0
    %3751 = vmatpush1.bf16.msra.mxu0 0
    %3752 = vmatprep.subr.bf16.mxu0 0
    %3753 = vmatpush1.bf16.msra.mxu0 0
    %3754 = vmatprep.subr.bf16.mxu0 0
    %3755 = vmatpush1.bf16.msra.mxu0 0
    %3756 = vmatprep.subr.bf16.mxu0 0
    %3757 = vmatpush1.bf16.msra.mxu0 0
    %3758 = vmatprep.subr.bf16.mxu0 0
    %3759 = vmatpush1.bf16.msra.mxu0 0
    %3760 = vmatprep.subr.bf16.mxu0 0
    %3761 = vmatpush1.bf16.msra.mxu0 0
    %3762 = vmatprep.subr.bf16.mxu0 0
    %3763 = vmatpush1.bf16.msra.mxu0 0
    %3764 = vmatprep.subr.bf16.mxu0 0
    %3765 = vmatpush1.bf16.msra.mxu0 0
    %3766 = vmatprep.subr.bf16.mxu0 0
    %3767 = vmatpush1.bf16.msra.mxu0 0
    %3768 = vmatprep.subr.bf16.mxu0 0
    %3769 = vmatpush1.bf16.msra.mxu0 0
    %3770 = vmatprep.subr.bf16.mxu0 0
    %3771 = vmatpush1.bf16.msra.mxu0 0
    %3772 = vmatprep.subr.bf16.mxu0 0
    %3773 = vmatpush1.bf16.msra.mxu0 0
    %3774 = vmatprep.subr.bf16.mxu0 0
    %3775 = vmatpush1.bf16.msra.mxu0 0
    %3776 = vmatprep.mubr.bf16.mxu0 0
    %3777 = vmatmul.mubr.bf16.gmra.mrb[0].mxu0 %v3624
    %v3778 = vpop.f32.mrb[0].mxu0
    %v3779 = vadd.f32 0.0, %v3778
    %v3780 = vpop.f32.mrb[0].mxu0
    %v3781 = vpop.f32.mrb[0].mxu0
    %v3782 = vadd.f32 0.0, %v3781
    %v3783 = vpop.f32.mrb[0].mxu0
    %3784 = vmatprep.mubr.bf16.mxu0 0
    %3785 = vmatmul.mubr.bf16.gmra.mrb[0].mxu0 %v3627
    %v3786 = vpop.f32.mrb[0].mxu0
    %v3787 = vadd.f32 0.0, %v3786
    %v3788 = vpop.f32.mrb[0].mxu0
    %v3789 = vpop.f32.mrb[0].mxu0
    %v3790 = vadd.f32 0.0, %v3789
    %v3791 = vpop.f32.mrb[0].mxu0
    %3792 = vmatprep.mubr.bf16.mxu0 0
    %3793 = vmatmul.mubr.bf16.gmra.mrb[0].mxu0 %v3630
    %v3794 = vpop.f32.mrb[0].mxu0
    %v3795 = vadd.f32 0.0, %v3794
    %v3796 = vpop.f32.mrb[0].mxu0
    %v3797 = vpop.f32.mrb[0].mxu0
    %v3798 = vadd.f32 0.0, %v3797
    %v3799 = vpop.f32.mrb[0].mxu0
    %3800 = vmatprep.mubr.bf16.mxu0 0
    %3801 = vmatmul.mubr.bf16.gmra.mrb[0].mxu0 %v3633
    %v3802 = vpop.f32.mrb[0].mxu0
    %v3803 = vadd.f32 0.0, %v3802
    %v3804 = vpop.f32.mrb[0].mxu0
    %v3805 = vpop.f32.mrb[0].mxu0
    %v3806 = vadd.f32 0.0, %v3805
    %v3807 = vpop.f32.mrb[0].mxu0
    %3808 = vmatprep.mubr.bf16.mxu0 0
    %3809 = vmatmul.mubr.bf16.gmra.mrb[0].mxu0 %v3636
    %v3810 = vpop.f32.mrb[0].mxu0
    %v3811 = vadd.f32 0.0, %v3810
    %v3812 = vpop.f32.mrb[0].mxu0
    %v3813 = vpop.f32.mrb[0].mxu0
    %v3814 = vadd.f32 0.0, %v3813
    %v3815 = vpop.f32.mrb[0].mxu0
    %3816 = vmatprep.mubr.bf16.mxu0 0
    %3817 = vmatmul.mubr.bf16.gmra.mrb[0].mxu0 %v3639
    %v3818 = vpop.f32.mrb[0].mxu0
    %v3819 = vadd.f32 0.0, %v3818
    %v3820 = vpop.f32.mrb[0].mxu0
    %v3821 = vpop.f32.mrb[0].mxu0
    %v3822 = vadd.f32 0.0, %v3821
    %v3823 = vpop.f32.mrb[0].mxu0
    %3824 = vmatprep.mubr.bf16.mxu0 0
    %3825 = vmatmul.mubr.bf16.gmra.mrb[0].mxu0 %v3642
    %v3826 = vpop.f32.mrb[0].mxu0
    %v3827 = vadd.f32 0.0, %v3826
    %v3828 = vpop.f32.mrb[0].mxu0
    %v3829 = vpop.f32.mrb[0].mxu0
    %v3830 = vadd.f32 0.0, %v3829
    %v3831 = vpop.f32.mrb[0].mxu0
    %3832 = vmatprep.mubr.bf16.mxu0 0
    %3833 = vmatmul.mubr.bf16.gmra.mrb[0].mxu0 %v3645
    %v3834 = vpop.f32.mrb[0].mxu0
    %v3835 = vadd.f32 0.0, %v3834
    %v3836 = vpop.f32.mrb[0].mxu0
    %v3837 = vpop.f32.mrb[0].mxu0
    %v3838 = vadd.f32 0.0, %v3837
    %v3839 = vpop.f32.mrb[0].mxu0
    %3840 = vmatprep.mubr.bf16.mxu0 0
    %3841 = vmatmul.mubr.bf16.gmra.mrb[0].mxu0 %v3648
    %v3842 = vpop.f32.mrb[0].mxu0
    %v3843 = vadd.f32 0.0, %v3842
    %v3844 = vpop.f32.mrb[0].mxu0
    %v3845 = vpop.f32.mrb[0].mxu0
    %v3846 = vadd.f32 0.0, %v3845
    %v3847 = vpop.f32.mrb[0].mxu0
    %3848 = vmatprep.mubr.bf16.mxu0 0
    %3849 = vmatmul.mubr.bf16.gmra.mrb[0].mxu0 %v3651
    %v3850 = vpop.f32.mrb[0].mxu0
    %v3851 = vadd.f32 0.0, %v3850
    %v3852 = vpop.f32.mrb[0].mxu0
    %v3853 = vpop.f32.mrb[0].mxu0
    %v3854 = vadd.f32 0.0, %v3853
    %v3855 = vpop.f32.mrb[0].mxu0
    %3856 = vmatprep.mubr.bf16.mxu0 0
    %3857 = vmatmul.mubr.bf16.gmra.mrb[0].mxu0 %v3654
    %v3858 = vpop.f32.mrb[0].mxu0
    %v3859 = vadd.f32 0.0, %v3858
    %v3860 = vpop.f32.mrb[0].mxu0
    %v3861 = vpop.f32.mrb[0].mxu0
    %v3862 = vadd.f32 0.0, %v3861
    %v3863 = vpop.f32.mrb[0].mxu0
    %3864 = vmatprep.mubr.bf16.mxu0 0
    %3865 = vmatmul.mubr.bf16.gmra.mrb[0].mxu0 %v3657
    %v3866 = vpop.f32.mrb[0].mxu0
    %v3867 = vadd.f32 0.0, %v3866
    %v3868 = vpop.f32.mrb[0].mxu0
    %v3869 = vpop.f32.mrb[0].mxu0
    %v3870 = vadd.f32 0.0, %v3869
    %v3871 = vpop.f32.mrb[0].mxu0
    %3872 = vmatprep.mubr.bf16.mxu0 0
    %3873 = vmatmul.mubr.bf16.gmra.mrb[0].mxu0 %v3660
    %v3874 = vpop.f32.mrb[0].mxu0
    %v3875 = vadd.f32 0.0, %v3874
    %v3876 = vpop.f32.mrb[0].mxu0
    %v3877 = vpop.f32.mrb[0].mxu0
    %v3878 = vadd.f32 0.0, %v3877
    %v3879 = vpop.f32.mrb[0].mxu0
    %3880 = vmatprep.mubr.bf16.mxu0 0
    %3881 = vmatmul.mubr.bf16.gmra.mrb[0].mxu0 %v3663
    %v3882 = vpop.f32.mrb[0].mxu0
    %v3883 = vadd.f32 0.0, %v3882
    %v3884 = vpop.f32.mrb[0].mxu0
    %v3885 = vpop.f32.mrb[0].mxu0
    %v3886 = vadd.f32 0.0, %v3885
    %v3887 = vpop.f32.mrb[0].mxu0
    %3888 = vmatprep.mubr.bf16.mxu0 0
    %3889 = vmatmul.mubr.bf16.gmra.mrb[0].mxu0 %v3666
    %v3890 = vpop.f32.mrb[0].mxu0
    %v3891 = vadd.f32 0.0, %v3890
    %v3892 = vpop.f32.mrb[0].mxu0
    %v3893 = vpop.f32.mrb[0].mxu0
    %v3894 = vadd.f32 0.0, %v3893
    %v3895 = vpop.f32.mrb[0].mxu0
    %3896 = vmatprep.mubr.bf16.mxu0 0
    %3897 = vmatmul.mubr.bf16.gmra.mrb[0].mxu0 %v3669
    %v3898 = vpop.f32.mrb[0].mxu0
    %v3899 = vadd.f32 0.0, %v3898
    %v3900 = vpop.f32.mrb[0].mxu0
    %v3901 = vpop.f32.mrb[0].mxu0
    %v3902 = vadd.f32 0.0, %v3901
    %v3903 = vpop.f32.mrb[0].mxu0
    %3904 = vmatprep.mubr.bf16.mxu0 0
    %3905 = vmatmul.mubr.bf16.gmra.mrb[0].mxu0 %v3672
    %v3906 = vpop.f32.mrb[0].mxu0
    %v3907 = vadd.f32 0.0, %v3906
    %v3908 = vpop.f32.mrb[0].mxu0
    %v3909 = vpop.f32.mrb[0].mxu0
    %v3910 = vadd.f32 0.0, %v3909
    %v3911 = vpop.f32.mrb[0].mxu0
    %3912 = vmatprep.mubr.bf16.mxu0 0
    %3913 = vmatmul.mubr.bf16.gmra.mrb[0].mxu0 %v3675
    %v3914 = vpop.f32.mrb[0].mxu0
    %v3915 = vadd.f32 0.0, %v3914
    %v3916 = vpop.f32.mrb[0].mxu0
    %v3917 = vpop.f32.mrb[0].mxu0
    %v3918 = vadd.f32 0.0, %v3917
    %v3919 = vpop.f32.mrb[0].mxu0
    %3920 = vmatprep.mubr.bf16.mxu0 0
    %3921 = vmatmul.mubr.bf16.gmra.mrb[0].mxu0 %v3678
    %v3922 = vpop.f32.mrb[0].mxu0
    %v3923 = vadd.f32 0.0, %v3922
    %v3924 = vpop.f32.mrb[0].mxu0
    %v3925 = vpop.f32.mrb[0].mxu0
    %v3926 = vadd.f32 0.0, %v3925
    %v3927 = vpop.f32.mrb[0].mxu0
    %3928 = vmatprep.mubr.bf16.mxu0 0
    %3929 = vmatmul.mubr.bf16.gmra.mrb[0].mxu0 %v3681
    %v3930 = vpop.f32.mrb[0].mxu0
    %v3931 = vadd.f32 0.0, %v3930
    %v3932 = vpop.f32.mrb[0].mxu0
    %v3933 = vpop.f32.mrb[0].mxu0
    %v3934 = vadd.f32 0.0, %v3933
    %v3935 = vpop.f32.mrb[0].mxu0
    %3936 = vmatprep.mubr.bf16.mxu0 0
    %3937 = vmatmul.mubr.bf16.gmra.mrb[0].mxu0 %v3684
    %v3938 = vpop.f32.mrb[0].mxu0
    %v3939 = vadd.f32 0.0, %v3938
    %v3940 = vpop.f32.mrb[0].mxu0
    %v3941 = vpop.f32.mrb[0].mxu0
    %v3942 = vadd.f32 0.0, %v3941
    %v3943 = vpop.f32.mrb[0].mxu0
    %3944 = vmatprep.mubr.bf16.mxu0 0
    %3945 = vmatmul.mubr.bf16.gmra.mrb[0].mxu0 %v3687
    %v3946 = vpop.f32.mrb[0].mxu0
    %v3947 = vadd.f32 0.0, %v3946
    %v3948 = vpop.f32.mrb[0].mxu0
    %v3949 = vpop.f32.mrb[0].mxu0
    %v3950 = vadd.f32 0.0, %v3949
    %v3951 = vpop.f32.mrb[0].mxu0
    %3952 = vmatprep.mubr.bf16.mxu0 0
    %3953 = vmatmul.mubr.bf16.gmra.mrb[0].mxu0 %v3690
    %v3954 = vpop.f32.mrb[0].mxu0
    %v3955 = vadd.f32 0.0, %v3954
    %v3956 = vpop.f32.mrb[0].mxu0
    %v3957 = vpop.f32.mrb[0].mxu0
    %v3958 = vadd.f32 0.0, %v3957
    %v3959 = vpop.f32.mrb[0].mxu0
    %3960 = vmatprep.mubr.bf16.mxu0 0
    %3961 = vmatmul.mubr.bf16.gmra.mrb[0].mxu0 %v3693
    %v3962 = vpop.f32.mrb[0].mxu0
    %v3963 = vadd.f32 0.0, %v3962
    %v3964 = vpop.f32.mrb[0].mxu0
    %v3965 = vpop.f32.mrb[0].mxu0
    %v3966 = vadd.f32 0.0, %v3965
    %v3967 = vpop.f32.mrb[0].mxu0
    %3968 = vmatprep.mubr.bf16.mxu0 0
    %3969 = vmatmul.mubr.bf16.gmra.mrb[0].mxu0 %v3696
    %v3970 = vpop.f32.mrb[0].mxu0
    %v3971 = vadd.f32 0.0, %v3970
    %v3972 = vpop.f32.mrb[0].mxu0
    %v3973 = vpop.f32.mrb[0].mxu0
    %v3974 = vadd.f32 0.0, %v3973
    %v3975 = vpop.f32.mrb[0].mxu0
    %3976 = vmatprep.mubr.bf16.mxu0 0
    %3977 = vmatmul.mubr.bf16.gmra.mrb[0].mxu0 %v3699
    %v3978 = vpop.f32.mrb[0].mxu0
    %v3979 = vadd.f32 0.0, %v3978
    %v3980 = vpop.f32.mrb[0].mxu0
    %v3981 = vpop.f32.mrb[0].mxu0
    %v3982 = vadd.f32 0.0, %v3981
    %v3983 = vpop.f32.mrb[0].mxu0
    %3984 = vmatprep.mubr.bf16.mxu0 0
    %3985 = vmatmul.mubr.bf16.gmra.mrb[0].mxu0 %v3702
    %v3986 = vpop.f32.mrb[0].mxu0
    %v3987 = vadd.f32 0.0, %v3986
    %v3988 = vpop.f32.mrb[0].mxu0
    %v3989 = vpop.f32.mrb[0].mxu0
    %v3990 = vadd.f32 0.0, %v3989
    %v3991 = vpop.f32.mrb[0].mxu0
    %3992 = vmatprep.mubr.bf16.mxu0 0
    %3993 = vmatmul.mubr.bf16.gmra.mrb[0].mxu0 %v3705
    %v3994 = vpop.f32.mrb[0].mxu0
    %v3995 = vadd.f32 0.0, %v3994
    %v3996 = vpop.f32.mrb[0].mxu0
    %v3997 = vpop.f32.mrb[0].mxu0
    %v3998 = vadd.f32 0.0, %v3997
    %v3999 = vpop.f32.mrb[0].mxu0
    %4000 = vmatprep.mubr.bf16.mxu0 0
    %4001 = vmatmul.mubr.bf16.gmra.mrb[0].mxu0 %v3708
    %v4002 = vpop.f32.mrb[0].mxu0
    %v4003 = vadd.f32 0.0, %v4002
    %v4004 = vpop.f32.mrb[0].mxu0
    %v4005 = vpop.f32.mrb[0].mxu0
    %v4006 = vadd.f32 0.0, %v4005
    %v4007 = vpop.f32.mrb[0].mxu0
    %4008 = vmatprep.mubr.bf16.mxu0 0
    %4009 = vmatmul.mubr.bf16.gmra.mrb[0].mxu0 %v3711
    %v4010 = vpop.f32.mrb[0].mxu0
    %v4011 = vadd.f32 0.0, %v4010
    %v4012 = vpop.f32.mrb[0].mxu0
    %v4013 = vpop.f32.mrb[0].mxu0
    %v4014 = vadd.f32 0.0, %v4013
    %v4015 = vpop.f32.mrb[0].mxu0
    %4016 = vmatprep.mubr.bf16.mxu0 0
    %4017 = vmatmul.mubr.bf16.gmra.mrb[0].mxu0 %v3714
    %v4018 = vpop.f32.mrb[0].mxu0
    %v4019 = vadd.f32 0.0, %v4018
    %v4020 = vpop.f32.mrb[0].mxu0
    %v4021 = vpop.f32.mrb[0].mxu0
    %v4022 = vadd.f32 0.0, %v4021
    %v4023 = vpop.f32.mrb[0].mxu0
    %4024 = vmatprep.mubr.bf16.mxu0 0
    %4025 = vmatmul.mubr.bf16.gmra.mrb[0].mxu0 %v3717
    %v4026 = vpop.f32.mrb[0].mxu0
    %v4027 = vadd.f32 0.0, %v4026
    %v4028 = vpop.f32.mrb[0].mxu0
    %v4029 = vpop.f32.mrb[0].mxu0
    %v4030 = vadd.f32 0.0, %v4029
    %v4031 = vpop.f32.mrb[0].mxu0
    %4032 = vmatprep.mubr.bf16.mxu0 0
    %4033 = vmatmul.mubr.bf16.gmra.mrb[0].mxu0 %v3720
    %v4034 = vpop.f32.mrb[0].mxu0
    %v4035 = vadd.f32 0.0, %v4034
    %v4036 = vpop.f32.mrb[0].mxu0
    %v4037 = vpop.f32.mrb[0].mxu0
    %v4038 = vadd.f32 0.0, %v4037
    %v4039 = vpop.f32.mrb[0].mxu0
    %4040 = vmatprep.mubr.bf16.mxu0 0
    %4041 = vmatmul.mubr.bf16.gmra.mrb[0].mxu0 %v3723
    %v4042 = vpop.f32.mrb[0].mxu0
    %v4043 = vadd.f32 0.0, %v4042
    %v4044 = vpop.f32.mrb[0].mxu0
    %v4045 = vpop.f32.mrb[0].mxu0
    %v4046 = vadd.f32 0.0, %v4045
    %v4047 = vpop.f32.mrb[0].mxu0
    %4048 = vmatprep.mubr.bf16.mxu0 0
    %4049 = vmatmul.mubr.bf16.gmra.mrb[0].mxu0 %v3726
    %v4050 = vpop.f32.mrb[0].mxu0
    %v4051 = vadd.f32 0.0, %v4050
    %v4052 = vpop.f32.mrb[0].mxu0
    %v4053 = vpop.f32.mrb[0].mxu0
    %v4054 = vadd.f32 0.0, %v4053
    %v4055 = vpop.f32.mrb[0].mxu0
    %4056 = vmatprep.mubr.bf16.mxu0 0
    %4057 = vmatmul.mubr.bf16.gmra.mrb[0].mxu0 %v3729
    %v4058 = vpop.f32.mrb[0].mxu0
    %v4059 = vadd.f32 0.0, %v4058
    %v4060 = vpop.f32.mrb[0].mxu0
    %v4061 = vpop.f32.mrb[0].mxu0
    %v4062 = vadd.f32 0.0, %v4061
    %v4063 = vpop.f32.mrb[0].mxu0
    %4064 = vmatprep.mubr.bf16.mxu0 0
    %4065 = vmatmul.mubr.bf16.gmra.mrb[0].mxu0 %v3732
    %v4066 = vpop.f32.mrb[0].mxu0
    %v4067 = vadd.f32 0.0, %v4066
    %v4068 = vpop.f32.mrb[0].mxu0
    %v4069 = vpop.f32.mrb[0].mxu0
    %v4070 = vadd.f32 0.0, %v4069
    %v4071 = vpop.f32.mrb[0].mxu0
    %4072 = vmatprep.mubr.bf16.mxu0 0
    %4073 = vmatmul.mubr.bf16.gmra.mrb[0].mxu0 %v3735
    %v4074 = vpop.f32.mrb[0].mxu0
    %v4075 = vadd.f32 0.0, %v4074
    %v4076 = vpop.f32.mrb[0].mxu0
    %v4077 = vpop.f32.mrb[0].mxu0
    %v4078 = vadd.f32 0.0, %v4077
    %v4079 = vpop.f32.mrb[0].mxu0
    %4080 = vmatprep.mubr.bf16.mxu0 0
    %4081 = vmatmul.mubr.bf16.gmra.mrb[0].mxu0 %v3738
    %v4082 = vpop.f32.mrb[0].mxu0
    %v4083 = vadd.f32 0.0, %v4082
    %v4084 = vpop.f32.mrb[0].mxu0
    %v4085 = vpop.f32.mrb[0].mxu0
    %v4086 = vpop.f32.mrb[0].mxu0
    %4087 = vdwg.mxu0
    %v4088 = vld [vmem:[%s5] sm:$0xff]
    %v4089 = vld [vmem:[%s5 + $0x8] sm:$0xff]
    %v4090 = vld [vmem:[%s5 + $0x10] sm:$0xff]
    %v4091 = vld [vmem:[%s5 + $0x18] sm:$0xff]
    %v4092 = vld [vmem:[%s5 + $0x20] sm:$0xff]
    %v4093 = vld [vmem:[%s5 + $0x28] sm:$0xff]
    %v4094 = vld [vmem:[%s5 + $0x30] sm:$0xff]
    %v4095 = vld [vmem:[%s5 + $0x38] sm:$0xff]
    %v4096 = vld [vmem:[%s5 + $0x40] sm:$0xff]
    %v4097 = vld [vmem:[%s5 + $0x48] sm:$0xff]
    %v4098 = vld [vmem:[%s5 + $0x50] sm:$0xff]
    %v4099 = vld [vmem:[%s5 + $0x58] sm:$0xff]
    %v4100 = vld [vmem:[%s5 + $0x60] sm:$0xff]
    %v4101 = vld [vmem:[%s5 + $0x68] sm:$0xff]
    %v4102 = vld [vmem:[%s5 + $0x70] sm:$0xff]
    %v4103 = vld [vmem:[%s5 + $0x78] sm:$0xff]
    %v4104 = vld [vmem:[%s5 + $0x80] sm:$0xff]
    %v4105 = vld [vmem:[%s5 + $0x88] sm:$0xff]
    %v4106 = vld [vmem:[%s5 + $0x90] sm:$0xff]
    %v4107 = vld [vmem:[%s5 + $0x98] sm:$0xff]
    %v4108 = vld [vmem:[%s5 + $0xa0] sm:$0xff]
    %v4109 = vld [vmem:[%s5 + $0xa8] sm:$0xff]
    %v4110 = vld [vmem:[%s5 + $0xb0] sm:$0xff]
    %v4111 = vld [vmem:[%s5 + $0xb8] sm:$0xff]
    %v4112 = vld [vmem:[%s5 + $0xc0] sm:$0xff]
    %v4113 = vld [vmem:[%s5 + $0xc8] sm:$0xff]
    %v4114 = vld [vmem:[%s5 + $0xd0] sm:$0xff]
    %v4115 = vld [vmem:[%s5 + $0xd8] sm:$0xff]
    %v4116 = vld [vmem:[%s5 + $0xe0] sm:$0xff]
    %v4117 = vld [vmem:[%s5 + $0xe8] sm:$0xff]
    %v4118 = vld [vmem:[%s5 + $0xf0] sm:$0xff]
    %v4119 = vld [vmem:[%s5 + $0xf8] sm:$0xff]
    %v4120 = vld [vmem:[%s5 + $0x100] sm:$0xff]
    %v4121 = vld [vmem:[%s5 + $0x108] sm:$0xff]
    %v4122 = vld [vmem:[%s5 + $0x110] sm:$0xff]
    %v4123 = vld [vmem:[%s5 + $0x118] sm:$0xff]
    %v4124 = vld [vmem:[%s5 + $0x120] sm:$0xff]
    %v4125 = vld [vmem:[%s5 + $0x128] sm:$0xff]
    %v4126 = vld [vmem:[%s5 + $0x130] sm:$0xff]
    %v4127 = vld [vmem:[%s5 + $0x138] sm:$0xff]
    %v4128 = vld [vmem:[%s5 + $0x140] sm:$0xff]
    %v4129 = vld [vmem:[%s5 + $0x148] sm:$0xff]
    %v4130 = vld [vmem:[%s5 + $0x150] sm:$0xff]
    %v4131 = vld [vmem:[%s5 + $0x158] sm:$0xff]
    %v4132 = vld [vmem:[%s5 + $0x160] sm:$0xff]
    %v4133 = vld [vmem:[%s5 + $0x168] sm:$0xff]
    %v4134 = vld [vmem:[%s5 + $0x170] sm:$0xff]
    %v4135 = vld [vmem:[%s5 + $0x178] sm:$0xff]
    %v4136 = vld [vmem:[%s5 + $0x180] sm:$0xff]
    %v4137 = vld [vmem:[%s5 + $0x188] sm:$0xff]
    %v4138 = vld [vmem:[%s5 + $0x190] sm:$0xff]
    %v4139 = vld [vmem:[%s5 + $0x198] sm:$0xff]
    %v4140 = vld [vmem:[%s5 + $0x1a0] sm:$0xff]
    %v4141 = vld [vmem:[%s5 + $0x1a8] sm:$0xff]
    %v4142 = vld [vmem:[%s5 + $0x1b0] sm:$0xff]
    %v4143 = vld [vmem:[%s5 + $0x1b8] sm:$0xff]
    %v4144 = vld [vmem:[%s5 + $0x1c0] sm:$0xff]
    %v4145 = vld [vmem:[%s5 + $0x1c8] sm:$0xff]
    %v4146 = vld [vmem:[%s5 + $0x1d0] sm:$0xff]
    %v4147 = vld [vmem:[%s5 + $0x1d8] sm:$0xff]
    %v4148 = vld [vmem:[%s5 + $0x1e0] sm:$0xff]
    %v4149 = vld [vmem:[%s5 + $0x1e8] sm:$0xff]
    %v4150 = vld [vmem:[%s5 + $0x1f0] sm:$0xff]
    %v4151 = vld [vmem:[%s5 + $0x1f8] sm:$0xff]
    %v4152 = vld [vmem:[%s5 + $0x200] sm:$0xff]
    %v4153 = vld [vmem:[%s5 + $0x208] sm:$0xff]
    %v4154 = vld [vmem:[%s5 + $0x210] sm:$0xff]
    %v4155 = vld [vmem:[%s5 + $0x218] sm:$0xff]
    %v4156 = vld [vmem:[%s5 + $0x220] sm:$0xff]
    %v4157 = vld [vmem:[%s5 + $0x228] sm:$0xff]
    %v4158 = vld [vmem:[%s5 + $0x230] sm:$0xff]
    %v4159 = vld [vmem:[%s5 + $0x238] sm:$0xff]
    %v4160 = vld [vmem:[%s5 + $0x240] sm:$0xff]
    %v4161 = vld [vmem:[%s5 + $0x248] sm:$0xff]
    %v4162 = vld [vmem:[%s5 + $0x250] sm:$0xff]
    %v4163 = vld [vmem:[%s5 + $0x258] sm:$0xff]
    %v4164 = vld [vmem:[%s5 + $0x260] sm:$0x3]
    %4166 = vset.pattern.permute.xlu0 0
    %4167 = vperm.xlu0 %4166, %v4088
    %v4168 = vpop.permute.xlu0 %4167
    %4171 = vset.pattern.permute.xlu0 0
    %4172 = vperm.xlu0 %4171, %v4089
    %v4173 = vpop.permute.xlu0 %4172
    %4176 = vset.pattern.permute.xlu0 0
    %4177 = vperm.xlu0 %4176, %v4090
    %v4178 = vpop.permute.xlu0 %4177
    %4181 = vset.pattern.permute.xlu0 0
    %4182 = vperm.xlu0 %4181, %v4091
    %v4183 = vpop.permute.xlu0 %4182
    %4186 = vset.pattern.permute.xlu0 0
    %4187 = vperm.xlu0 %4186, %v4092
    %v4188 = vpop.permute.xlu0 %4187
    %4191 = vset.pattern.permute.xlu0 0
    %4192 = vperm.xlu0 %4191, %v4093
    %v4193 = vpop.permute.xlu0 %4192
    %4196 = vset.pattern.permute.xlu0 0
    %4197 = vperm.xlu0 %4196, %v4094
    %v4198 = vpop.permute.xlu0 %4197
    %4201 = vset.pattern.permute.xlu0 0
    %4202 = vperm.xlu0 %4201, %v4095
    %v4203 = vpop.permute.xlu0 %4202
    %4206 = vset.pattern.permute.xlu0 0
    %4207 = vperm.xlu0 %4206, %v4096
    %v4208 = vpop.permute.xlu0 %4207
    %4211 = vset.pattern.permute.xlu0 0
    %4212 = vperm.xlu0 %4211, %v4097
    %v4213 = vpop.permute.xlu0 %4212
    %4216 = vset.pattern.permute.xlu0 0
    %4217 = vperm.xlu0 %4216, %v4098
    %v4218 = vpop.permute.xlu0 %4217
    %4221 = vset.pattern.permute.xlu0 0
    %4222 = vperm.xlu0 %4221, %v4099
    %v4223 = vpop.permute.xlu0 %4222
    %4226 = vset.pattern.permute.xlu0 0
    %4227 = vperm.xlu0 %4226, %v4100
    %v4228 = vpop.permute.xlu0 %4227
    %4231 = vset.pattern.permute.xlu0 0
    %4232 = vperm.xlu0 %4231, %v4101
    %v4233 = vpop.permute.xlu0 %4232
    %4236 = vset.pattern.permute.xlu0 0
    %4237 = vperm.xlu0 %4236, %v4102
    %v4238 = vpop.permute.xlu0 %4237
    %4241 = vset.pattern.permute.xlu0 0
    %4242 = vperm.xlu0 %4241, %v4103
    %v4243 = vpop.permute.xlu0 %4242
    %4246 = vset.pattern.permute.xlu0 0
    %4247 = vperm.xlu0 %4246, %v4104
    %v4248 = vpop.permute.xlu0 %4247
    %4251 = vset.pattern.permute.xlu0 0
    %4252 = vperm.xlu0 %4251, %v4105
    %v4253 = vpop.permute.xlu0 %4252
    %4256 = vset.pattern.permute.xlu0 0
    %4257 = vperm.xlu0 %4256, %v4106
    %v4258 = vpop.permute.xlu0 %4257
    %4261 = vset.pattern.permute.xlu0 0
    %4262 = vperm.xlu0 %4261, %v4107
    %v4263 = vpop.permute.xlu0 %4262
    %4266 = vset.pattern.permute.xlu0 0
    %4267 = vperm.xlu0 %4266, %v4108
    %v4268 = vpop.permute.xlu0 %4267
    %4271 = vset.pattern.permute.xlu0 0
    %4272 = vperm.xlu0 %4271, %v4109
    %v4273 = vpop.permute.xlu0 %4272
    %4276 = vset.pattern.permute.xlu0 0
    %4277 = vperm.xlu0 %4276, %v4110
    %v4278 = vpop.permute.xlu0 %4277
    %4281 = vset.pattern.permute.xlu0 0
    %4282 = vperm.xlu0 %4281, %v4111
    %v4283 = vpop.permute.xlu0 %4282
    %4286 = vset.pattern.permute.xlu0 0
    %4287 = vperm.xlu0 %4286, %v4112
    %v4288 = vpop.permute.xlu0 %4287
    %4291 = vset.pattern.permute.xlu0 0
    %4292 = vperm.xlu0 %4291, %v4113
    %v4293 = vpop.permute.xlu0 %4292
    %4296 = vset.pattern.permute.xlu0 0
    %4297 = vperm.xlu0 %4296, %v4114
    %v4298 = vpop.permute.xlu0 %4297
    %4301 = vset.pattern.permute.xlu0 0
    %4302 = vperm.xlu0 %4301, %v4115
    %v4303 = vpop.permute.xlu0 %4302
    %4306 = vset.pattern.permute.xlu0 0
    %4307 = vperm.xlu0 %4306, %v4116
    %v4308 = vpop.permute.xlu0 %4307
    %4311 = vset.pattern.permute.xlu0 0
    %4312 = vperm.xlu0 %4311, %v4117
    %v4313 = vpop.permute.xlu0 %4312
    %4316 = vset.pattern.permute.xlu0 0
    %4317 = vperm.xlu0 %4316, %v4118
    %v4318 = vpop.permute.xlu0 %4317
    %4321 = vset.pattern.permute.xlu0 0
    %4322 = vperm.xlu0 %4321, %v4119
    %v4323 = vpop.permute.xlu0 %4322
    %4326 = vset.pattern.permute.xlu0 0
    %4327 = vperm.xlu0 %4326, %v4120
    %v4328 = vpop.permute.xlu0 %4327
    %4331 = vset.pattern.permute.xlu0 0
    %4332 = vperm.xlu0 %4331, %v4121
    %v4333 = vpop.permute.xlu0 %4332
    %4336 = vset.pattern.permute.xlu0 0
    %4337 = vperm.xlu0 %4336, %v4122
    %v4338 = vpop.permute.xlu0 %4337
    %4341 = vset.pattern.permute.xlu0 0
    %4342 = vperm.xlu0 %4341, %v4123
    %v4343 = vpop.permute.xlu0 %4342
    %4346 = vset.pattern.permute.xlu0 0
    %4347 = vperm.xlu0 %4346, %v4124
    %v4348 = vpop.permute.xlu0 %4347
    %4351 = vset.pattern.permute.xlu0 0
    %4352 = vperm.xlu0 %4351, %v4125
    %v4353 = vpop.permute.xlu0 %4352
    %4356 = vset.pattern.permute.xlu0 0
    %4357 = vperm.xlu0 %4356, %v4126
    %v4358 = vpop.permute.xlu0 %4357
    %4361 = vset.pattern.permute.xlu0 0
    %4362 = vperm.xlu0 %4361, %v4127
    %v4363 = vpop.permute.xlu0 %4362
    %4366 = vset.pattern.permute.xlu0 0
    %4367 = vperm.xlu0 %4366, %v4128
    %v4368 = vpop.permute.xlu0 %4367
    %4371 = vset.pattern.permute.xlu0 0
    %4372 = vperm.xlu0 %4371, %v4129
    %v4373 = vpop.permute.xlu0 %4372
    %4376 = vset.pattern.permute.xlu0 0
    %4377 = vperm.xlu0 %4376, %v4130
    %v4378 = vpop.permute.xlu0 %4377
    %4381 = vset.pattern.permute.xlu0 0
    %4382 = vperm.xlu0 %4381, %v4131
    %v4383 = vpop.permute.xlu0 %4382
    %4386 = vset.pattern.permute.xlu0 0
    %4387 = vperm.xlu0 %4386, %v4132
    %v4388 = vpop.permute.xlu0 %4387
    %4391 = vset.pattern.permute.xlu0 0
    %4392 = vperm.xlu0 %4391, %v4133
    %v4393 = vpop.permute.xlu0 %4392
    %4396 = vset.pattern.permute.xlu0 0
    %4397 = vperm.xlu0 %4396, %v4134
    %v4398 = vpop.permute.xlu0 %4397
    %4401 = vset.pattern.permute.xlu0 0
    %4402 = vperm.xlu0 %4401, %v4135
    %v4403 = vpop.permute.xlu0 %4402
    %4406 = vset.pattern.permute.xlu0 0
    %4407 = vperm.xlu0 %4406, %v4136
    %v4408 = vpop.permute.xlu0 %4407
    %4411 = vset.pattern.permute.xlu0 0
    %4412 = vperm.xlu0 %4411, %v4137
    %v4413 = vpop.permute.xlu0 %4412
    %4416 = vset.pattern.permute.xlu0 0
    %4417 = vperm.xlu0 %4416, %v4138
    %v4418 = vpop.permute.xlu0 %4417
    %4421 = vset.pattern.permute.xlu0 0
    %4422 = vperm.xlu0 %4421, %v4139
    %v4423 = vpop.permute.xlu0 %4422
    %4426 = vset.pattern.permute.xlu0 0
    %4427 = vperm.xlu0 %4426, %v4140
    %v4428 = vpop.permute.xlu0 %4427
    %4431 = vset.pattern.permute.xlu0 0
    %4432 = vperm.xlu0 %4431, %v4141
    %v4433 = vpop.permute.xlu0 %4432
    %4436 = vset.pattern.permute.xlu0 0
    %4437 = vperm.xlu0 %4436, %v4142
    %v4438 = vpop.permute.xlu0 %4437
    %4441 = vset.pattern.permute.xlu0 0
    %4442 = vperm.xlu0 %4441, %v4143
    %v4443 = vpop.permute.xlu0 %4442
    %4446 = vset.pattern.permute.xlu0 0
    %4447 = vperm.xlu0 %4446, %v4144
    %v4448 = vpop.permute.xlu0 %4447
    %4451 = vset.pattern.permute.xlu0 0
    %4452 = vperm.xlu0 %4451, %v4145
    %v4453 = vpop.permute.xlu0 %4452
    %4456 = vset.pattern.permute.xlu0 0
    %4457 = vperm.xlu0 %4456, %v4146
    %v4458 = vpop.permute.xlu0 %4457
    %4461 = vset.pattern.permute.xlu0 0
    %4462 = vperm.xlu0 %4461, %v4147
    %v4463 = vpop.permute.xlu0 %4462
    %4466 = vset.pattern.permute.xlu0 0
    %4467 = vperm.xlu0 %4466, %v4148
    %v4468 = vpop.permute.xlu0 %4467
    %4471 = vset.pattern.permute.xlu0 0
    %4472 = vperm.xlu0 %4471, %v4149
    %v4473 = vpop.permute.xlu0 %4472
    %4476 = vset.pattern.permute.xlu0 0
    %4477 = vperm.xlu0 %4476, %v4150
    %v4478 = vpop.permute.xlu0 %4477
    %4481 = vset.pattern.permute.xlu0 0
    %4482 = vperm.xlu0 %4481, %v4151
    %v4483 = vpop.permute.xlu0 %4482
    %4486 = vset.pattern.permute.xlu0 0
    %4487 = vperm.xlu0 %4486, %v4152
    %v4488 = vpop.permute.xlu0 %4487
    %4491 = vset.pattern.permute.xlu0 0
    %4492 = vperm.xlu0 %4491, %v4153
    %v4493 = vpop.permute.xlu0 %4492
    %4496 = vset.pattern.permute.xlu0 0
    %4497 = vperm.xlu0 %4496, %v4154
    %v4498 = vpop.permute.xlu0 %4497
    %4501 = vset.pattern.permute.xlu0 0
    %4502 = vperm.xlu0 %4501, %v4155
    %v4503 = vpop.permute.xlu0 %4502
    %4506 = vset.pattern.permute.xlu0 0
    %4507 = vperm.xlu0 %4506, %v4156
    %v4508 = vpop.permute.xlu0 %4507
    %4511 = vset.pattern.permute.xlu0 0
    %4512 = vperm.xlu0 %4511, %v4157
    %v4513 = vpop.permute.xlu0 %4512
    %4516 = vset.pattern.permute.xlu0 0
    %4517 = vperm.xlu0 %4516, %v4158
    %v4518 = vpop.permute.xlu0 %4517
    %4521 = vset.pattern.permute.xlu0 0
    %4522 = vperm.xlu0 %4521, %v4159
    %v4523 = vpop.permute.xlu0 %4522
    %4526 = vset.pattern.permute.xlu0 0
    %4527 = vperm.xlu0 %4526, %v4160
    %v4528 = vpop.permute.xlu0 %4527
    %4531 = vset.pattern.permute.xlu0 0
    %4532 = vperm.xlu0 %4531, %v4161
    %v4533 = vpop.permute.xlu0 %4532
    %4536 = vset.pattern.permute.xlu0 0
    %4537 = vperm.xlu0 %4536, %v4162
    %v4538 = vpop.permute.xlu0 %4537
    %4541 = vset.pattern.permute.xlu0 0
    %4542 = vperm.xlu0 %4541, %v4163
    %v4543 = vpop.permute.xlu0 %4542
    %4546 = vset.pattern.permute.xlu0 0
    %4547 = vperm.xlu0 %4546, %v4164
    %v4548 = vpop.permute.xlu0 %4547
    %v4550 = vmul.f32 %v3779, %v4168
    %v4551 = vmul.f32 %v3782, %v4173
    %v4552 = vmul.f32 %v3787, %v4178
    %v4553 = vmul.f32 %v3790, %v4183
    %v4554 = vmul.f32 %v3795, %v4188
    %v4555 = vmul.f32 %v3798, %v4193
    %v4556 = vmul.f32 %v3803, %v4198
    %v4557 = vmul.f32 %v3806, %v4203
    %v4558 = vmul.f32 %v3811, %v4208
    %v4559 = vmul.f32 %v3814, %v4213
    %v4560 = vmul.f32 %v3819, %v4218
    %v4561 = vmul.f32 %v3822, %v4223
    %v4562 = vmul.f32 %v3827, %v4228
    %v4563 = vmul.f32 %v3830, %v4233
    %v4564 = vmul.f32 %v3835, %v4238
    %v4565 = vmul.f32 %v3838, %v4243
    %v4566 = vmul.f32 %v3843, %v4248
    %v4567 = vmul.f32 %v3846, %v4253
    %v4568 = vmul.f32 %v3851, %v4258
    %v4569 = vmul.f32 %v3854, %v4263
    %v4570 = vmul.f32 %v3859, %v4268
    %v4571 = vmul.f32 %v3862, %v4273
    %v4572 = vmul.f32 %v3867, %v4278
    %v4573 = vmul.f32 %v3870, %v4283
    %v4574 = vmul.f32 %v3875, %v4288
    %v4575 = vmul.f32 %v3878, %v4293
    %v4576 = vmul.f32 %v3883, %v4298
    %v4577 = vmul.f32 %v3886, %v4303
    %v4578 = vmul.f32 %v3891, %v4308
    %v4579 = vmul.f32 %v3894, %v4313
    %v4580 = vmul.f32 %v3899, %v4318
    %v4581 = vmul.f32 %v3902, %v4323
    %v4582 = vmul.f32 %v3907, %v4328
    %v4583 = vmul.f32 %v3910, %v4333
    %v4584 = vmul.f32 %v3915, %v4338
    %v4585 = vmul.f32 %v3918, %v4343
    %v4586 = vmul.f32 %v3923, %v4348
    %v4587 = vmul.f32 %v3926, %v4353
    %v4588 = vmul.f32 %v3931, %v4358
    %v4589 = vmul.f32 %v3934, %v4363
    %v4590 = vmul.f32 %v3939, %v4368
    %v4591 = vmul.f32 %v3942, %v4373
    %v4592 = vmul.f32 %v3947, %v4378
    %v4593 = vmul.f32 %v3950, %v4383
    %v4594 = vmul.f32 %v3955, %v4388
    %v4595 = vmul.f32 %v3958, %v4393
    %v4596 = vmul.f32 %v3963, %v4398
    %v4597 = vmul.f32 %v3966, %v4403
    %v4598 = vmul.f32 %v3971, %v4408
    %v4599 = vmul.f32 %v3974, %v4413
    %v4600 = vmul.f32 %v3979, %v4418
    %v4601 = vmul.f32 %v3982, %v4423
    %v4602 = vmul.f32 %v3987, %v4428
    %v4603 = vmul.f32 %v3990, %v4433
    %v4604 = vmul.f32 %v3995, %v4438
    %v4605 = vmul.f32 %v3998, %v4443
    %v4606 = vmul.f32 %v4003, %v4448
    %v4607 = vmul.f32 %v4006, %v4453
    %v4608 = vmul.f32 %v4011, %v4458
    %v4609 = vmul.f32 %v4014, %v4463
    %v4610 = vmul.f32 %v4019, %v4468
    %v4611 = vmul.f32 %v4022, %v4473
    %v4612 = vmul.f32 %v4027, %v4478
    %v4613 = vmul.f32 %v4030, %v4483
    %v4614 = vmul.f32 %v4035, %v4488
    %v4615 = vmul.f32 %v4038, %v4493
    %v4616 = vmul.f32 %v4043, %v4498
    %v4617 = vmul.f32 %v4046, %v4503
    %v4618 = vmul.f32 %v4051, %v4508
    %v4619 = vmul.f32 %v4054, %v4513
    %v4620 = vmul.f32 %v4059, %v4518
    %v4621 = vmul.f32 %v4062, %v4523
    %v4622 = vmul.f32 %v4067, %v4528
    %v4623 = vmul.f32 %v4070, %v4533
    %v4624 = vmul.f32 %v4075, %v4538
    %v4625 = vmul.f32 %v4078, %v4543
    %v4626 = vmul.f32 %v4083, %v4548
    %v4627 = vsel %vm40, %v4550, 0.0
    %v4628 = vsel %vm40, %v4551, 0.0
    %v4629 = vadd.f32 %v4627, %v4628
    %v4630 = vsel %vm40, %v4552, 0.0
    %v4631 = vadd.f32 %v4629, %v4630
    %v4632 = vsel %vm40, %v4553, 0.0
    %v4633 = vadd.f32 %v4631, %v4632
    %v4634 = vsel %vm40, %v4554, 0.0
    %v4635 = vadd.f32 %v4633, %v4634
    %v4636 = vsel %vm40, %v4555, 0.0
    %v4637 = vadd.f32 %v4635, %v4636
    %v4638 = vsel %vm40, %v4556, 0.0
    %v4639 = vadd.f32 %v4637, %v4638
    %v4640 = vsel %vm40, %v4557, 0.0
    %v4641 = vadd.f32 %v4639, %v4640
    %v4642 = vsel %vm40, %v4558, 0.0
    %v4643 = vadd.f32 %v4641, %v4642
    %v4644 = vsel %vm40, %v4559, 0.0
    %v4645 = vadd.f32 %v4643, %v4644
    %v4646 = vsel %vm40, %v4560, 0.0
    %v4647 = vadd.f32 %v4645, %v4646
    %v4648 = vsel %vm40, %v4561, 0.0
    %v4649 = vadd.f32 %v4647, %v4648
    %v4650 = vsel %vm40, %v4562, 0.0
    %v4651 = vadd.f32 %v4649, %v4650
    %v4652 = vsel %vm40, %v4563, 0.0
    %v4653 = vadd.f32 %v4651, %v4652
    %v4654 = vsel %vm40, %v4564, 0.0
    %v4655 = vadd.f32 %v4653, %v4654
    %v4656 = vsel %vm40, %v4565, 0.0
    %v4657 = vadd.f32 %v4655, %v4656
    %v4658 = vsel %vm40, %v4566, 0.0
    %v4659 = vadd.f32 %v4657, %v4658
    %v4660 = vsel %vm40, %v4567, 0.0
    %v4661 = vadd.f32 %v4659, %v4660
    %v4662 = vsel %vm40, %v4568, 0.0
    %v4663 = vadd.f32 %v4661, %v4662
    %v4664 = vsel %vm40, %v4569, 0.0
    %v4665 = vadd.f32 %v4663, %v4664
    %v4666 = vsel %vm40, %v4570, 0.0
    %v4667 = vadd.f32 %v4665, %v4666
    %v4668 = vsel %vm40, %v4571, 0.0
    %v4669 = vadd.f32 %v4667, %v4668
    %v4670 = vsel %vm40, %v4572, 0.0
    %v4671 = vadd.f32 %v4669, %v4670
    %v4672 = vsel %vm40, %v4573, 0.0
    %v4673 = vadd.f32 %v4671, %v4672
    %v4674 = vsel %vm40, %v4574, 0.0
    %v4675 = vadd.f32 %v4673, %v4674
    %v4676 = vsel %vm40, %v4575, 0.0
    %v4677 = vadd.f32 %v4675, %v4676
    %v4678 = vsel %vm40, %v4576, 0.0
    %v4679 = vadd.f32 %v4677, %v4678
    %v4680 = vsel %vm40, %v4577, 0.0
    %v4681 = vadd.f32 %v4679, %v4680
    %v4682 = vsel %vm40, %v4578, 0.0
    %v4683 = vadd.f32 %v4681, %v4682
    %v4684 = vsel %vm40, %v4579, 0.0
    %v4685 = vadd.f32 %v4683, %v4684
    %v4686 = vsel %vm40, %v4580, 0.0
    %v4687 = vadd.f32 %v4685, %v4686
    %v4688 = vsel %vm40, %v4581, 0.0
    %v4689 = vadd.f32 %v4687, %v4688
    %v4690 = vsel %vm40, %v4582, 0.0
    %v4691 = vadd.f32 %v4689, %v4690
    %v4692 = vsel %vm40, %v4583, 0.0
    %v4693 = vadd.f32 %v4691, %v4692
    %v4694 = vsel %vm40, %v4584, 0.0
    %v4695 = vadd.f32 %v4693, %v4694
    %v4696 = vsel %vm40, %v4585, 0.0
    %v4697 = vadd.f32 %v4695, %v4696
    %v4698 = vsel %vm40, %v4586, 0.0
    %v4699 = vadd.f32 %v4697, %v4698
    %v4700 = vsel %vm40, %v4587, 0.0
    %v4701 = vadd.f32 %v4699, %v4700
    %v4702 = vsel %vm40, %v4588, 0.0
    %v4703 = vadd.f32 %v4701, %v4702
    %v4704 = vsel %vm40, %v4589, 0.0
    %v4705 = vadd.f32 %v4703, %v4704
    %v4706 = vsel %vm40, %v4590, 0.0
    %v4707 = vadd.f32 %v4705, %v4706
    %v4708 = vsel %vm40, %v4591, 0.0
    %v4709 = vadd.f32 %v4707, %v4708
    %v4710 = vsel %vm40, %v4592, 0.0
    %v4711 = vadd.f32 %v4709, %v4710
    %v4712 = vsel %vm40, %v4593, 0.0
    %v4713 = vadd.f32 %v4711, %v4712
    %v4714 = vsel %vm40, %v4594, 0.0
    %v4715 = vadd.f32 %v4713, %v4714
    %v4716 = vsel %vm40, %v4595, 0.0
    %v4717 = vadd.f32 %v4715, %v4716
    %v4718 = vsel %vm40, %v4596, 0.0
    %v4719 = vadd.f32 %v4717, %v4718
    %v4720 = vsel %vm40, %v4597, 0.0
    %v4721 = vadd.f32 %v4719, %v4720
    %v4722 = vsel %vm40, %v4598, 0.0
    %v4723 = vadd.f32 %v4721, %v4722
    %v4724 = vsel %vm40, %v4599, 0.0
    %v4725 = vadd.f32 %v4723, %v4724
    %v4726 = vsel %vm40, %v4600, 0.0
    %v4727 = vadd.f32 %v4725, %v4726
    %v4728 = vsel %vm40, %v4601, 0.0
    %v4729 = vadd.f32 %v4727, %v4728
    %v4730 = vsel %vm40, %v4602, 0.0
    %v4731 = vadd.f32 %v4729, %v4730
    %v4732 = vsel %vm40, %v4603, 0.0
    %v4733 = vadd.f32 %v4731, %v4732
    %v4734 = vsel %vm40, %v4604, 0.0
    %v4735 = vadd.f32 %v4733, %v4734
    %v4736 = vsel %vm40, %v4605, 0.0
    %v4737 = vadd.f32 %v4735, %v4736
    %v4738 = vsel %vm40, %v4606, 0.0
    %v4739 = vadd.f32 %v4737, %v4738
    %v4740 = vsel %vm40, %v4607, 0.0
    %v4741 = vadd.f32 %v4739, %v4740
    %v4742 = vsel %vm40, %v4608, 0.0
    %v4743 = vadd.f32 %v4741, %v4742
    %v4744 = vsel %vm40, %v4609, 0.0
    %v4745 = vadd.f32 %v4743, %v4744
    %v4746 = vsel %vm40, %v4610, 0.0
    %v4747 = vadd.f32 %v4745, %v4746
    %v4748 = vsel %vm40, %v4611, 0.0
    %v4749 = vadd.f32 %v4747, %v4748
    %v4750 = vsel %vm40, %v4612, 0.0
    %v4751 = vadd.f32 %v4749, %v4750
    %v4752 = vsel %vm40, %v4613, 0.0
    %v4753 = vadd.f32 %v4751, %v4752
    %v4754 = vsel %vm40, %v4614, 0.0
    %v4755 = vadd.f32 %v4753, %v4754
    %v4756 = vsel %vm40, %v4615, 0.0
    %v4757 = vadd.f32 %v4755, %v4756
    %v4758 = vsel %vm40, %v4616, 0.0
    %v4759 = vadd.f32 %v4757, %v4758
    %v4760 = vsel %vm40, %v4617, 0.0
    %v4761 = vadd.f32 %v4759, %v4760
    %v4762 = vsel %vm40, %v4618, 0.0
    %v4763 = vadd.f32 %v4761, %v4762
    %v4764 = vsel %vm40, %v4619, 0.0
    %v4765 = vadd.f32 %v4763, %v4764
    %v4766 = vsel %vm40, %v4620, 0.0
    %v4767 = vadd.f32 %v4765, %v4766
    %v4768 = vsel %vm40, %v4621, 0.0
    %v4769 = vadd.f32 %v4767, %v4768
    %v4770 = vsel %vm40, %v4622, 0.0
    %v4771 = vadd.f32 %v4769, %v4770
    %v4772 = vsel %vm40, %v4623, 0.0
    %v4773 = vadd.f32 %v4771, %v4772
    %v4774 = vsel %vm40, %v4624, 0.0
    %v4775 = vadd.f32 %v4773, %v4774
    %v4776 = vsel %vm40, %v4625, 0.0
    %v4777 = vadd.f32 %v4775, %v4776
    %vm4778 = vcmask 254976
    %v4779 = vsel %vm4778, %v4626, 0.0
    %v4780 = vadd.f32 %v4777, %v4779
    %v4781 = vrot.slane %v4780, 4
    %v4782 = vadd.f32 %v4780, %v4781
    %v4783 = vrot.slane %v4782, 2
    %v4784 = vadd.f32 %v4782, %v4783
    %v4785 = vrot.slane %v4784, 1
    %v4786 = vadd.f32 %v4784, %v4785
    %v4787 = vmul.f32 %v4786, 0.001953125
    %v4788 = vsub.f32 %v3779, %v4787
    %v4789 = vsub.f32 %v3782, %v4787
    %v4790 = vsub.f32 %v3787, %v4787
    %v4791 = vsub.f32 %v3790, %v4787
    %v4792 = vsub.f32 %v3795, %v4787
    %v4793 = vsub.f32 %v3798, %v4787
    %v4794 = vsub.f32 %v3803, %v4787
    %v4795 = vsub.f32 %v3806, %v4787
    %v4796 = vsub.f32 %v3811, %v4787
    %v4797 = vsub.f32 %v3814, %v4787
    %v4798 = vsub.f32 %v3819, %v4787
    %v4799 = vsub.f32 %v3822, %v4787
    %v4800 = vsub.f32 %v3827, %v4787
    %v4801 = vsub.f32 %v3830, %v4787
    %v4802 = vsub.f32 %v3835, %v4787
    %v4803 = vsub.f32 %v3838, %v4787
    %v4804 = vsub.f32 %v3843, %v4787
    %v4805 = vsub.f32 %v3846, %v4787
    %v4806 = vsub.f32 %v3851, %v4787
    %v4807 = vsub.f32 %v3854, %v4787
    %v4808 = vsub.f32 %v3859, %v4787
    %v4809 = vsub.f32 %v3862, %v4787
    %v4810 = vsub.f32 %v3867, %v4787
    %v4811 = vsub.f32 %v3870, %v4787
    %v4812 = vsub.f32 %v3875, %v4787
    %v4813 = vsub.f32 %v3878, %v4787
    %v4814 = vsub.f32 %v3883, %v4787
    %v4815 = vsub.f32 %v3886, %v4787
    %v4816 = vsub.f32 %v3891, %v4787
    %v4817 = vsub.f32 %v3894, %v4787
    %v4818 = vsub.f32 %v3899, %v4787
    %v4819 = vsub.f32 %v3902, %v4787
    %v4820 = vsub.f32 %v3907, %v4787
    %v4821 = vsub.f32 %v3910, %v4787
    %v4822 = vsub.f32 %v3915, %v4787
    %v4823 = vsub.f32 %v3918, %v4787
    %v4824 = vsub.f32 %v3923, %v4787
    %v4825 = vsub.f32 %v3926, %v4787
    %v4826 = vsub.f32 %v3931, %v4787
    %v4827 = vsub.f32 %v3934, %v4787
    %v4828 = vsub.f32 %v3939, %v4787
    %v4829 = vsub.f32 %v3942, %v4787
    %v4830 = vsub.f32 %v3947, %v4787
    %v4831 = vsub.f32 %v3950, %v4787
    %v4832 = vsub.f32 %v3955, %v4787
    %v4833 = vsub.f32 %v3958, %v4787
    %v4834 = vsub.f32 %v3963, %v4787
    %v4835 = vsub.f32 %v3966, %v4787
    %v4836 = vsub.f32 %v3971, %v4787
    %v4837 = vsub.f32 %v3974, %v4787
    %v4838 = vsub.f32 %v3979, %v4787
    %v4839 = vsub.f32 %v3982, %v4787
    %v4840 = vsub.f32 %v3987, %v4787
    %v4841 = vsub.f32 %v3990, %v4787
    %v4842 = vsub.f32 %v3995, %v4787
    %v4843 = vsub.f32 %v3998, %v4787
    %v4844 = vsub.f32 %v4003, %v4787
    %v4845 = vsub.f32 %v4006, %v4787
    %v4846 = vsub.f32 %v4011, %v4787
    %v4847 = vsub.f32 %v4014, %v4787
    %v4848 = vsub.f32 %v4019, %v4787
    %v4849 = vsub.f32 %v4022, %v4787
    %v4850 = vsub.f32 %v4027, %v4787
    %v4851 = vsub.f32 %v4030, %v4787
    %v4852 = vsub.f32 %v4035, %v4787
    %v4853 = vsub.f32 %v4038, %v4787
    %v4854 = vsub.f32 %v4043, %v4787
    %v4855 = vsub.f32 %v4046, %v4787
    %v4856 = vsub.f32 %v4051, %v4787
    %v4857 = vsub.f32 %v4054, %v4787
    %v4858 = vsub.f32 %v4059, %v4787
    %v4859 = vsub.f32 %v4062, %v4787
    %v4860 = vsub.f32 %v4067, %v4787
    %v4861 = vsub.f32 %v4070, %v4787
    %v4862 = vsub.f32 %v4075, %v4787
    %v4863 = vsub.f32 %v4078, %v4787
    %v4864 = vsub.f32 %v4083, %v4787
    %v4865 = vmul.f32 %v4788, %v4788
    %v4866 = vmul.f32 %v4789, %v4789
    %v4867 = vmul.f32 %v4790, %v4790
    %v4868 = vmul.f32 %v4791, %v4791
    %v4869 = vmul.f32 %v4792, %v4792
    %v4870 = vmul.f32 %v4793, %v4793
    %v4871 = vmul.f32 %v4794, %v4794
    %v4872 = vmul.f32 %v4795, %v4795
    %v4873 = vmul.f32 %v4796, %v4796
    %v4874 = vmul.f32 %v4797, %v4797
    %v4875 = vmul.f32 %v4798, %v4798
    %v4876 = vmul.f32 %v4799, %v4799
    %v4877 = vmul.f32 %v4800, %v4800
    %v4878 = vmul.f32 %v4801, %v4801
    %v4879 = vmul.f32 %v4802, %v4802
    %v4880 = vmul.f32 %v4803, %v4803
    %v4881 = vmul.f32 %v4804, %v4804
    %v4882 = vmul.f32 %v4805, %v4805
    %v4883 = vmul.f32 %v4806, %v4806
    %v4884 = vmul.f32 %v4807, %v4807
    %v4885 = vmul.f32 %v4808, %v4808
    %v4886 = vmul.f32 %v4809, %v4809
    %v4887 = vmul.f32 %v4810, %v4810
    %v4888 = vmul.f32 %v4811, %v4811
    %v4889 = vmul.f32 %v4812, %v4812
    %v4890 = vmul.f32 %v4813, %v4813
    %v4891 = vmul.f32 %v4814, %v4814
    %v4892 = vmul.f32 %v4815, %v4815
    %v4893 = vmul.f32 %v4816, %v4816
    %v4894 = vmul.f32 %v4817, %v4817
    %v4895 = vmul.f32 %v4818, %v4818
    %v4896 = vmul.f32 %v4819, %v4819
    %v4897 = vmul.f32 %v4820, %v4820
    %v4898 = vmul.f32 %v4821, %v4821
    %v4899 = vmul.f32 %v4822, %v4822
    %v4900 = vmul.f32 %v4823, %v4823
    %v4901 = vmul.f32 %v4824, %v4824
    %v4902 = vmul.f32 %v4825, %v4825
    %v4903 = vmul.f32 %v4826, %v4826
    %v4904 = vmul.f32 %v4827, %v4827
    %v4905 = vmul.f32 %v4828, %v4828
    %v4906 = vmul.f32 %v4829, %v4829
    %v4907 = vmul.f32 %v4830, %v4830
    %v4908 = vmul.f32 %v4831, %v4831
    %v4909 = vmul.f32 %v4832, %v4832
    %v4910 = vmul.f32 %v4833, %v4833
    %v4911 = vmul.f32 %v4834, %v4834
    %v4912 = vmul.f32 %v4835, %v4835
    %v4913 = vmul.f32 %v4836, %v4836
    %v4914 = vmul.f32 %v4837, %v4837
    %v4915 = vmul.f32 %v4838, %v4838
    %v4916 = vmul.f32 %v4839, %v4839
    %v4917 = vmul.f32 %v4840, %v4840
    %v4918 = vmul.f32 %v4841, %v4841
    %v4919 = vmul.f32 %v4842, %v4842
    %v4920 = vmul.f32 %v4843, %v4843
    %v4921 = vmul.f32 %v4844, %v4844
    %v4922 = vmul.f32 %v4845, %v4845
    %v4923 = vmul.f32 %v4846, %v4846
    %v4924 = vmul.f32 %v4847, %v4847
    %v4925 = vmul.f32 %v4848, %v4848
    %v4926 = vmul.f32 %v4849, %v4849
    %v4927 = vmul.f32 %v4850, %v4850
    %v4928 = vmul.f32 %v4851, %v4851
    %v4929 = vmul.f32 %v4852, %v4852
    %v4930 = vmul.f32 %v4853, %v4853
    %v4931 = vmul.f32 %v4854, %v4854
    %v4932 = vmul.f32 %v4855, %v4855
    %v4933 = vmul.f32 %v4856, %v4856
    %v4934 = vmul.f32 %v4857, %v4857
    %v4935 = vmul.f32 %v4858, %v4858
    %v4936 = vmul.f32 %v4859, %v4859
    %v4937 = vmul.f32 %v4860, %v4860
    %v4938 = vmul.f32 %v4861, %v4861
    %v4939 = vmul.f32 %v4862, %v4862
    %v4940 = vmul.f32 %v4863, %v4863
    %v4941 = vmul.f32 %v4864, %v4864
    %v4942 = vmul.f32 %v4865, %v4168
    %v4943 = vmul.f32 %v4866, %v4173
    %v4944 = vmul.f32 %v4867, %v4178
    %v4945 = vmul.f32 %v4868, %v4183
    %v4946 = vmul.f32 %v4869, %v4188
    %v4947 = vmul.f32 %v4870, %v4193
    %v4948 = vmul.f32 %v4871, %v4198
    %v4949 = vmul.f32 %v4872, %v4203
    %v4950 = vmul.f32 %v4873, %v4208
    %v4951 = vmul.f32 %v4874, %v4213
    %v4952 = vmul.f32 %v4875, %v4218
    %v4953 = vmul.f32 %v4876, %v4223
    %v4954 = vmul.f32 %v4877, %v4228
    %v4955 = vmul.f32 %v4878, %v4233
    %v4956 = vmul.f32 %v4879, %v4238
    %v4957 = vmul.f32 %v4880, %v4243
    %v4958 = vmul.f32 %v4881, %v4248
    %v4959 = vmul.f32 %v4882, %v4253
    %v4960 = vmul.f32 %v4883, %v4258
    %v4961 = vmul.f32 %v4884, %v4263
    %v4962 = vmul.f32 %v4885, %v4268
    %v4963 = vmul.f32 %v4886, %v4273
    %v4964 = vmul.f32 %v4887, %v4278
    %v4965 = vmul.f32 %v4888, %v4283
    %v4966 = vmul.f32 %v4889, %v4288
    %v4967 = vmul.f32 %v4890, %v4293
    %v4968 = vmul.f32 %v4891, %v4298
    %v4969 = vmul.f32 %v4892, %v4303
    %v4970 = vmul.f32 %v4893, %v4308
    %v4971 = vmul.f32 %v4894, %v4313
    %v4972 = vmul.f32 %v4895, %v4318
    %v4973 = vmul.f32 %v4896, %v4323
    %v4974 = vmul.f32 %v4897, %v4328
    %v4975 = vmul.f32 %v4898, %v4333
    %v4976 = vmul.f32 %v4899, %v4338
    %v4977 = vmul.f32 %v4900, %v4343
    %v4978 = vmul.f32 %v4901, %v4348
    %v4979 = vmul.f32 %v4902, %v4353
    %v4980 = vmul.f32 %v4903, %v4358
    %v4981 = vmul.f32 %v4904, %v4363
    %v4982 = vmul.f32 %v4905, %v4368
    %v4983 = vmul.f32 %v4906, %v4373
    %v4984 = vmul.f32 %v4907, %v4378
    %v4985 = vmul.f32 %v4908, %v4383
    %v4986 = vmul.f32 %v4909, %v4388
    %v4987 = vmul.f32 %v4910, %v4393
    %v4988 = vmul.f32 %v4911, %v4398
    %v4989 = vmul.f32 %v4912, %v4403
    %v4990 = vmul.f32 %v4913, %v4408
    %v4991 = vmul.f32 %v4914, %v4413
    %v4992 = vmul.f32 %v4915, %v4418
    %v4993 = vmul.f32 %v4916, %v4423
    %v4994 = vmul.f32 %v4917, %v4428
    %v4995 = vmul.f32 %v4918, %v4433
    %v4996 = vmul.f32 %v4919, %v4438
    %v4997 = vmul.f32 %v4920, %v4443
    %v4998 = vmul.f32 %v4921, %v4448
    %v4999 = vmul.f32 %v4922, %v4453
    %v5000 = vmul.f32 %v4923, %v4458
    %v5001 = vmul.f32 %v4924, %v4463
    %v5002 = vmul.f32 %v4925, %v4468
    %v5003 = vmul.f32 %v4926, %v4473
    %v5004 = vmul.f32 %v4927, %v4478
    %v5005 = vmul.f32 %v4928, %v4483
    %v5006 = vmul.f32 %v4929, %v4488
    %v5007 = vmul.f32 %v4930, %v4493
    %v5008 = vmul.f32 %v4931, %v4498
    %v5009 = vmul.f32 %v4932, %v4503
    %v5010 = vmul.f32 %v4933, %v4508
    %v5011 = vmul.f32 %v4934, %v4513
    %v5012 = vmul.f32 %v4935, %v4518
    %v5013 = vmul.f32 %v4936, %v4523
    %v5014 = vmul.f32 %v4937, %v4528
    %v5015 = vmul.f32 %v4938, %v4533
    %v5016 = vmul.f32 %v4939, %v4538
    %v5017 = vmul.f32 %v4940, %v4543
    %v5018 = vmul.f32 %v4941, %v4548
    %v5019 = vsel %vm40, %v4942, 0.0
    %v5020 = vsel %vm40, %v4943, 0.0
    %v5021 = vadd.f32 %v5019, %v5020
    %v5022 = vsel %vm40, %v4944, 0.0
    %v5023 = vadd.f32 %v5021, %v5022
    %v5024 = vsel %vm40, %v4945, 0.0
    %v5025 = vadd.f32 %v5023, %v5024
    %v5026 = vsel %vm40, %v4946, 0.0
    %v5027 = vadd.f32 %v5025, %v5026
    %v5028 = vsel %vm40, %v4947, 0.0
    %v5029 = vadd.f32 %v5027, %v5028
    %v5030 = vsel %vm40, %v4948, 0.0
    %v5031 = vadd.f32 %v5029, %v5030
    %v5032 = vsel %vm40, %v4949, 0.0
    %v5033 = vadd.f32 %v5031, %v5032
    %v5034 = vsel %vm40, %v4950, 0.0
    %v5035 = vadd.f32 %v5033, %v5034
    %v5036 = vsel %vm40, %v4951, 0.0
    %v5037 = vadd.f32 %v5035, %v5036
    %v5038 = vsel %vm40, %v4952, 0.0
    %v5039 = vadd.f32 %v5037, %v5038
    %v5040 = vsel %vm40, %v4953, 0.0
    %v5041 = vadd.f32 %v5039, %v5040
    %v5042 = vsel %vm40, %v4954, 0.0
    %v5043 = vadd.f32 %v5041, %v5042
    %v5044 = vsel %vm40, %v4955, 0.0
    %v5045 = vadd.f32 %v5043, %v5044
    %v5046 = vsel %vm40, %v4956, 0.0
    %v5047 = vadd.f32 %v5045, %v5046
    %v5048 = vsel %vm40, %v4957, 0.0
    %v5049 = vadd.f32 %v5047, %v5048
    %v5050 = vsel %vm40, %v4958, 0.0
    %v5051 = vadd.f32 %v5049, %v5050
    %v5052 = vsel %vm40, %v4959, 0.0
    %v5053 = vadd.f32 %v5051, %v5052
    %v5054 = vsel %vm40, %v4960, 0.0
    %v5055 = vadd.f32 %v5053, %v5054
    %v5056 = vsel %vm40, %v4961, 0.0
    %v5057 = vadd.f32 %v5055, %v5056
    %v5058 = vsel %vm40, %v4962, 0.0
    %v5059 = vadd.f32 %v5057, %v5058
    %v5060 = vsel %vm40, %v4963, 0.0
    %v5061 = vadd.f32 %v5059, %v5060
    %v5062 = vsel %vm40, %v4964, 0.0
    %v5063 = vadd.f32 %v5061, %v5062
    %v5064 = vsel %vm40, %v4965, 0.0
    %v5065 = vadd.f32 %v5063, %v5064
    %v5066 = vsel %vm40, %v4966, 0.0
    %v5067 = vadd.f32 %v5065, %v5066
    %v5068 = vsel %vm40, %v4967, 0.0
    %v5069 = vadd.f32 %v5067, %v5068
    %v5070 = vsel %vm40, %v4968, 0.0
    %v5071 = vadd.f32 %v5069, %v5070
    %v5072 = vsel %vm40, %v4969, 0.0
    %v5073 = vadd.f32 %v5071, %v5072
    %v5074 = vsel %vm40, %v4970, 0.0
    %v5075 = vadd.f32 %v5073, %v5074
    %v5076 = vsel %vm40, %v4971, 0.0
    %v5077 = vadd.f32 %v5075, %v5076
    %v5078 = vsel %vm40, %v4972, 0.0
    %v5079 = vadd.f32 %v5077, %v5078
    %v5080 = vsel %vm40, %v4973, 0.0
    %v5081 = vadd.f32 %v5079, %v5080
    %v5082 = vsel %vm40, %v4974, 0.0
    %v5083 = vadd.f32 %v5081, %v5082
    %v5084 = vsel %vm40, %v4975, 0.0
    %v5085 = vadd.f32 %v5083, %v5084
    %v5086 = vsel %vm40, %v4976, 0.0
    %v5087 = vadd.f32 %v5085, %v5086
    %v5088 = vsel %vm40, %v4977, 0.0
    %v5089 = vadd.f32 %v5087, %v5088
    %v5090 = vsel %vm40, %v4978, 0.0
    %v5091 = vadd.f32 %v5089, %v5090
    %v5092 = vsel %vm40, %v4979, 0.0
    %v5093 = vadd.f32 %v5091, %v5092
    %v5094 = vsel %vm40, %v4980, 0.0
    %v5095 = vadd.f32 %v5093, %v5094
    %v5096 = vsel %vm40, %v4981, 0.0
    %v5097 = vadd.f32 %v5095, %v5096
    %v5098 = vsel %vm40, %v4982, 0.0
    %v5099 = vadd.f32 %v5097, %v5098
    %v5100 = vsel %vm40, %v4983, 0.0
    %v5101 = vadd.f32 %v5099, %v5100
    %v5102 = vsel %vm40, %v4984, 0.0
    %v5103 = vadd.f32 %v5101, %v5102
    %v5104 = vsel %vm40, %v4985, 0.0
    %v5105 = vadd.f32 %v5103, %v5104
    %v5106 = vsel %vm40, %v4986, 0.0
    %v5107 = vadd.f32 %v5105, %v5106
    %v5108 = vsel %vm40, %v4987, 0.0
    %v5109 = vadd.f32 %v5107, %v5108
    %v5110 = vsel %vm40, %v4988, 0.0
    %v5111 = vadd.f32 %v5109, %v5110
    %v5112 = vsel %vm40, %v4989, 0.0
    %v5113 = vadd.f32 %v5111, %v5112
    %v5114 = vsel %vm40, %v4990, 0.0
    %v5115 = vadd.f32 %v5113, %v5114
    %v5116 = vsel %vm40, %v4991, 0.0
    %v5117 = vadd.f32 %v5115, %v5116
    %v5118 = vsel %vm40, %v4992, 0.0
    %v5119 = vadd.f32 %v5117, %v5118
    %v5120 = vsel %vm40, %v4993, 0.0
    %v5121 = vadd.f32 %v5119, %v5120
    %v5122 = vsel %vm40, %v4994, 0.0
    %v5123 = vadd.f32 %v5121, %v5122
    %v5124 = vsel %vm40, %v4995, 0.0
    %v5125 = vadd.f32 %v5123, %v5124
    %v5126 = vsel %vm40, %v4996, 0.0
    %v5127 = vadd.f32 %v5125, %v5126
    %v5128 = vsel %vm40, %v4997, 0.0
    %v5129 = vadd.f32 %v5127, %v5128
    %v5130 = vsel %vm40, %v4998, 0.0
    %v5131 = vadd.f32 %v5129, %v5130
    %v5132 = vsel %vm40, %v4999, 0.0
    %v5133 = vadd.f32 %v5131, %v5132
    %v5134 = vsel %vm40, %v5000, 0.0
    %v5135 = vadd.f32 %v5133, %v5134
    %v5136 = vsel %vm40, %v5001, 0.0
    %v5137 = vadd.f32 %v5135, %v5136
    %v5138 = vsel %vm40, %v5002, 0.0
    %v5139 = vadd.f32 %v5137, %v5138
    %v5140 = vsel %vm40, %v5003, 0.0
    %v5141 = vadd.f32 %v5139, %v5140
    %v5142 = vsel %vm40, %v5004, 0.0
    %v5143 = vadd.f32 %v5141, %v5142
    %v5144 = vsel %vm40, %v5005, 0.0
    %v5145 = vadd.f32 %v5143, %v5144
    %v5146 = vsel %vm40, %v5006, 0.0
    %v5147 = vadd.f32 %v5145, %v5146
    %v5148 = vsel %vm40, %v5007, 0.0
    %v5149 = vadd.f32 %v5147, %v5148
    %v5150 = vsel %vm40, %v5008, 0.0
    %v5151 = vadd.f32 %v5149, %v5150
    %v5152 = vsel %vm40, %v5009, 0.0
    %v5153 = vadd.f32 %v5151, %v5152
    %v5154 = vsel %vm40, %v5010, 0.0
    %v5155 = vadd.f32 %v5153, %v5154
    %v5156 = vsel %vm40, %v5011, 0.0
    %v5157 = vadd.f32 %v5155, %v5156
    %v5158 = vsel %vm40, %v5012, 0.0
    %v5159 = vadd.f32 %v5157, %v5158
    %v5160 = vsel %vm40, %v5013, 0.0
    %v5161 = vadd.f32 %v5159, %v5160
    %v5162 = vsel %vm40, %v5014, 0.0
    %v5163 = vadd.f32 %v5161, %v5162
    %v5164 = vsel %vm40, %v5015, 0.0
    %v5165 = vadd.f32 %v5163, %v5164
    %v5166 = vsel %vm40, %v5016, 0.0
    %v5167 = vadd.f32 %v5165, %v5166
    %v5168 = vsel %vm40, %v5017, 0.0
    %v5169 = vadd.f32 %v5167, %v5168
    %v5170 = vsel %vm4778, %v5018, 0.0
    %v5171 = vadd.f32 %v5169, %v5170
    %v5172 = vrot.slane %v5171, 4
    %v5173 = vadd.f32 %v5171, %v5172
    %v5174 = vrot.slane %v5173, 2
    %v5175 = vadd.f32 %v5173, %v5174
    %v5176 = vrot.slane %v5175, 1
    %v5177 = vadd.f32 %v5175, %v5176
    %v5178 = vmul.f32 %v5177, 0.001953125
    %v5179 = vld [vmem:[%s3] sm:$0x1]
    %v5180 = vadd.f32 %v5178, 1e-05
    %v5181 = vrsqrt.pop %v5180
    %v5182 = vmul.f32 %v5179, %v5181
    %v5183 = vld [vmem:[%s4] sm:$0x1]
    %v5184 = vmul.f32 %v4787, %v5182
    %v5185 = vsub.f32 %v5183, %v5184
    %v5187 = vlaneseq
    %v5188 = vshrl.u32 %v5187, 7
    %v5189 = vsub.s32 0, %v5188
    %v5190 = vrot.slane %v5182, %v5189
    %v5193 = vlaneseq
    %v5194 = vshrl.u32 %v5193, 7
    %v5195 = vsub.s32 0, %v5194
    %v5196 = vrot.slane %v5185, %v5195
    %vm5198 = vcmp.ge.f32.partialorder %v5190, 0.0
    %5199 = vst.msk [vmem:[#allocation5] sm:$0xff] %vm40, %v3779
    %5200 = vst.msk [vmem:[#allocation5 + $0x8] sm:$0xff] %vm40, %v3782
    %5201 = vst.msk [vmem:[#allocation5 + $0x10] sm:$0xff] %vm40, %v3787
    %5202 = vst.msk [vmem:[#allocation5 + $0x18] sm:$0xff] %vm40, %v3790
    %5203 = vst.msk [vmem:[#allocation5 + $0x20] sm:$0xff] %vm40, %v3795
    %5204 = vst.msk [vmem:[#allocation5 + $0x28] sm:$0xff] %vm40, %v3798
    %5205 = vst.msk [vmem:[#allocation5 + $0x30] sm:$0xff] %vm40, %v3803
    %5206 = vst.msk [vmem:[#allocation5 + $0x38] sm:$0xff] %vm40, %v3806
    %5207 = vst.msk [vmem:[#allocation5 + $0x40] sm:$0xff] %vm40, %v3811
    %5208 = vst.msk [vmem:[#allocation5 + $0x48] sm:$0xff] %vm40, %v3814
    %5209 = vst.msk [vmem:[#allocation5 + $0x50] sm:$0xff] %vm40, %v3819
    %5210 = vst.msk [vmem:[#allocation5 + $0x58] sm:$0xff] %vm40, %v3822
    %5211 = vst.msk [vmem:[#allocation5 + $0x60] sm:$0xff] %vm40, %v3827
    %5212 = vst.msk [vmem:[#allocation5 + $0x68] sm:$0xff] %vm40, %v3830
    %5213 = vst.msk [vmem:[#allocation5 + $0x70] sm:$0xff] %vm40, %v3835
    %5214 = vst.msk [vmem:[#allocation5 + $0x78] sm:$0xff] %vm40, %v3838
    %5215 = vst.msk [vmem:[#allocation5 + $0x80] sm:$0xff] %vm40, %v3843
    %5216 = vst.msk [vmem:[#allocation5 + $0x88] sm:$0xff] %vm40, %v3846
    %5217 = vst.msk [vmem:[#allocation5 + $0x90] sm:$0xff] %vm40, %v3851
    %5218 = vst.msk [vmem:[#allocation5 + $0x98] sm:$0xff] %vm40, %v3854
    %5219 = vst.msk [vmem:[#allocation5 + $0xa0] sm:$0xff] %vm40, %v3859
    %5220 = vst.msk [vmem:[#allocation5 + $0xa8] sm:$0xff] %vm40, %v3862
    %5221 = vst.msk [vmem:[#allocation5 + $0xb0] sm:$0xff] %vm40, %v3867
    %5222 = vst.msk [vmem:[#allocation5 + $0xb8] sm:$0xff] %vm40, %v3870
    %5223 = vst.msk [vmem:[#allocation5 + $0xc0] sm:$0xff] %vm40, %v3875
    %5224 = vst.msk [vmem:[#allocation5 + $0xc8] sm:$0xff] %vm40, %v3878
    %5225 = vst.msk [vmem:[#allocation5 + $0xd0] sm:$0xff] %vm40, %v3883
    %5226 = vst.msk [vmem:[#allocation5 + $0xd8] sm:$0xff] %vm40, %v3886
    %5227 = vst.msk [vmem:[#allocation5 + $0xe0] sm:$0xff] %vm40, %v3891
    %5228 = vst.msk [vmem:[#allocation5 + $0xe8] sm:$0xff] %vm40, %v3894
    %5229 = vst.msk [vmem:[#allocation5 + $0xf0] sm:$0xff] %vm40, %v3899
    %5230 = vst.msk [vmem:[#allocation5 + $0xf8] sm:$0xff] %vm40, %v3902
    %5231 = vst.msk [vmem:[#allocation5 + $0x100] sm:$0xff] %vm40, %v3907
    %5232 = vst.msk [vmem:[#allocation5 + $0x108] sm:$0xff] %vm40, %v3910
    %5233 = vst.msk [vmem:[#allocation5 + $0x110] sm:$0xff] %vm40, %v3915
    %5234 = vst.msk [vmem:[#allocation5 + $0x118] sm:$0xff] %vm40, %v3918
    %5235 = vst.msk [vmem:[#allocation5 + $0x120] sm:$0xff] %vm40, %v3923
    %5236 = vst.msk [vmem:[#allocation5 + $0x128] sm:$0xff] %vm40, %v3926
    %5237 = vst.msk [vmem:[#allocation5 + $0x130] sm:$0xff] %vm40, %v3931
    %5238 = vst.msk [vmem:[#allocation5 + $0x138] sm:$0xff] %vm40, %v3934
    %5239 = vst.msk [vmem:[#allocation5 + $0x140] sm:$0xff] %vm40, %v3939
    %5240 = vst.msk [vmem:[#allocation5 + $0x148] sm:$0xff] %vm40, %v3942
    %5241 = vst.msk [vmem:[#allocation5 + $0x150] sm:$0xff] %vm40, %v3947
    %5242 = vst.msk [vmem:[#allocation5 + $0x158] sm:$0xff] %vm40, %v3950
    %5243 = vst.msk [vmem:[#allocation5 + $0x160] sm:$0xff] %vm40, %v3955
    %5244 = vst.msk [vmem:[#allocation5 + $0x168] sm:$0xff] %vm40, %v3958
    %5245 = vst.msk [vmem:[#allocation5 + $0x170] sm:$0xff] %vm40, %v3963
    %5246 = vst.msk [vmem:[#allocation5 + $0x178] sm:$0xff] %vm40, %v3966
    %5247 = vst.msk [vmem:[#allocation5 + $0x180] sm:$0xff] %vm40, %v3971
    %5248 = vst.msk [vmem:[#allocation5 + $0x188] sm:$0xff] %vm40, %v3974
    %5249 = vst.msk [vmem:[#allocation5 + $0x190] sm:$0xff] %vm40, %v3979
    %5250 = vst.msk [vmem:[#allocation5 + $0x198] sm:$0xff] %vm40, %v3982
    %5251 = vst.msk [vmem:[#allocation5 + $0x1a0] sm:$0xff] %vm40, %v3987
    %5252 = vst.msk [vmem:[#allocation5 + $0x1a8] sm:$0xff] %vm40, %v3990
    %5253 = vst.msk [vmem:[#allocation5 + $0x1b0] sm:$0xff] %vm40, %v3995
    %5254 = vst.msk [vmem:[#allocation5 + $0x1b8] sm:$0xff] %vm40, %v3998
    %5255 = vst.msk [vmem:[#allocation5 + $0x1c0] sm:$0xff] %vm40, %v4003
    %5256 = vst.msk [vmem:[#allocation5 + $0x1c8] sm:$0xff] %vm40, %v4006
    %5257 = vst.msk [vmem:[#allocation5 + $0x1d0] sm:$0xff] %vm40, %v4011
    %5258 = vst.msk [vmem:[#allocation5 + $0x1d8] sm:$0xff] %vm40, %v4014
    %5259 = vst.msk [vmem:[#allocation5 + $0x1e0] sm:$0xff] %vm40, %v4019
    %5260 = vst.msk [vmem:[#allocation5 + $0x1e8] sm:$0xff] %vm40, %v4022
    %5261 = vst.msk [vmem:[#allocation5 + $0x1f0] sm:$0xff] %vm40, %v4027
    %5262 = vst.msk [vmem:[#allocation5 + $0x1f8] sm:$0xff] %vm40, %v4030
    %5263 = vst.msk [vmem:[#allocation5 + $0x200] sm:$0xff] %vm40, %v4035
    %5264 = vst.msk [vmem:[#allocation5 + $0x208] sm:$0xff] %vm40, %v4038
    %5265 = vst.msk [vmem:[#allocation5 + $0x210] sm:$0xff] %vm40, %v4043
    %5266 = vst.msk [vmem:[#allocation5 + $0x218] sm:$0xff] %vm40, %v4046
    %5267 = vst.msk [vmem:[#allocation5 + $0x220] sm:$0xff] %vm40, %v4051
    %5268 = vst.msk [vmem:[#allocation5 + $0x228] sm:$0xff] %vm40, %v4054
    %5269 = vst.msk [vmem:[#allocation5 + $0x230] sm:$0xff] %vm40, %v4059
    %5270 = vst.msk [vmem:[#allocation5 + $0x238] sm:$0xff] %vm40, %v4062
    %5271 = vst.msk [vmem:[#allocation5 + $0x240] sm:$0xff] %vm40, %v4067
    %5272 = vst.msk [vmem:[#allocation5 + $0x248] sm:$0xff] %vm40, %v4070
    %5273 = vst.msk [vmem:[#allocation5 + $0x250] sm:$0xff] %vm40, %v4075
    %5274 = vst.msk [vmem:[#allocation5 + $0x258] sm:$0xff] %vm40, %v4078
    %5275 = vst.msk [vmem:[#allocation5 + $0x260] sm:$0x3] %vm4778, %v4083
    %v5276 = vld [vmem:[#allocation5] ss:$2 sm:$0xff]
    %s5277 = scalar_lea.vmem [#allocation5], 1
    %v5278 = vld [vmem:[%s5277] ss:$2 sm:$0xff]
    %s5279 = scalar_lea.vmem [#allocation5], 18
    %v5280 = vld [vmem:[%s5279] ss:$2 sm:$0xff]
    %s5281 = scalar_lea.vmem [#allocation5], 19
    %v5282 = vld [vmem:[%s5281] ss:$2 sm:$0xff]
    %v5283 = vmax.f32 %v5276, %v5278
    %v5284 = vmax.f32 %v5280, %v5282
    %v5285 = vmax.f32 %v5283, %v5284
    %v5286 = vmin.f32 %v5276, %v5278
    %v5287 = vmin.f32 %v5280, %v5282
    %v5288 = vmin.f32 %v5286, %v5287
    %v5289 = vsel %vm5198, %v5285, %v5288
    %v5290 = vmul.f32 %v5289, %v5190
    %v5291 = vadd.f32 %v5290, %v5196
    %v5292 = vmax.f32 %v5291, 0.0
    %5293 = vst.msk [vmem:[#allocation2 + $0xb] sm:$0xff] %vm40, %v5292
    %s5294 = scalar_lea.vmem [#allocation5], 36
    %v5295 = vld [vmem:[%s5294] ss:$2 sm:$0xff]
    %s5296 = scalar_lea.vmem [#allocation5], 37
    %v5297 = vld [vmem:[%s5296] ss:$2 sm:$0xff]
    %s5298 = scalar_lea.vmem [#allocation5], 54
    %v5299 = vld [vmem:[%s5298] ss:$2 sm:$0xff]
    %s5300 = scalar_lea.vmem [#allocation5], 55
    %v5301 = vld [vmem:[%s5300] ss:$2 sm:$0xff]
    %v5302 = vmax.f32 %v5295, %v5297
    %v5303 = vmax.f32 %v5299, %v5301
    %v5304 = vmax.f32 %v5302, %v5303
    %v5305 = vmin.f32 %v5295, %v5297
    %v5306 = vmin.f32 %v5299, %v5301
    %v5307 = vmin.f32 %v5305, %v5306
    %v5308 = vsel %vm5198, %v5304, %v5307
    %v5309 = vmul.f32 %v5308, %v5190
    %v5310 = vadd.f32 %v5309, %v5196
    %v5311 = vmax.f32 %v5310, 0.0
    %5312 = vst.msk [vmem:[#allocation2 + $0x15] sm:$0xff] %vm40, %v5311
    %s5313 = scalar_lea.vmem [#allocation5], 72
    %v5314 = vld [vmem:[%s5313] ss:$2 sm:$0xff]
    %s5315 = scalar_lea.vmem [#allocation5], 73
    %v5316 = vld [vmem:[%s5315] ss:$2 sm:$0xff]
    %s5317 = scalar_lea.vmem [#allocation5], 90
    %v5318 = vld [vmem:[%s5317] ss:$2 sm:$0xff]
    %s5319 = scalar_lea.vmem [#allocation5], 91
    %v5320 = vld [vmem:[%s5319] ss:$2 sm:$0xff]
    %v5321 = vmax.f32 %v5314, %v5316
    %v5322 = vmax.f32 %v5318, %v5320
    %v5323 = vmax.f32 %v5321, %v5322
    %v5324 = vmin.f32 %v5314, %v5316
    %v5325 = vmin.f32 %v5318, %v5320
    %v5326 = vmin.f32 %v5324, %v5325
    %v5327 = vsel %vm5198, %v5323, %v5326
    %v5328 = vmul.f32 %v5327, %v5190
    %v5329 = vadd.f32 %v5328, %v5196
    %v5330 = vmax.f32 %v5329, 0.0
    %5331 = vst.msk [vmem:[#allocation2 + $0x1f] sm:$0xff] %vm40, %v5330
    %s5332 = scalar_lea.vmem [#allocation5], 108
    %v5333 = vld [vmem:[%s5332] ss:$2 sm:$0xff]
    %s5334 = scalar_lea.vmem [#allocation5], 109
    %v5335 = vld [vmem:[%s5334] ss:$2 sm:$0xff]
    %s5336 = scalar_lea.vmem [#allocation5], 126
    %v5337 = vld [vmem:[%s5336] ss:$2 sm:$0xff]
    %s5338 = scalar_lea.vmem [#allocation5], 127
    %v5339 = vld [vmem:[%s5338] ss:$2 sm:$0xff]
    %v5340 = vmax.f32 %v5333, %v5335
    %v5341 = vmax.f32 %v5337, %v5339
    %v5342 = vmax.f32 %v5340, %v5341
    %v5343 = vmin.f32 %v5333, %v5335
    %v5344 = vmin.f32 %v5337, %v5339
    %v5345 = vmin.f32 %v5343, %v5344
    %v5346 = vsel %vm5198, %v5342, %v5345
    %v5347 = vmul.f32 %v5346, %v5190
    %v5348 = vadd.f32 %v5347, %v5196
    %v5349 = vmax.f32 %v5348, 0.0
    %5350 = vst.msk [vmem:[#allocation2 + $0x29] sm:$0xff] %vm40, %v5349
    %s5351 = scalar_lea.vmem [#allocation5], 144
    %v5352 = vld [vmem:[%s5351] ss:$2 sm:$0xff]
    %s5353 = scalar_lea.vmem [#allocation5], 145
    %v5354 = vld [vmem:[%s5353] ss:$2 sm:$0xff]
    %s5355 = scalar_lea.vmem [#allocation5], 162
    %v5356 = vld [vmem:[%s5355] ss:$2 sm:$0xff]
    %s5357 = scalar_lea.vmem [#allocation5], 163
    %v5358 = vld [vmem:[%s5357] ss:$2 sm:$0xff]
    %v5359 = vmax.f32 %v5352, %v5354
    %v5360 = vmax.f32 %v5356, %v5358
    %v5361 = vmax.f32 %v5359, %v5360
    %v5362 = vmin.f32 %v5352, %v5354
    %v5363 = vmin.f32 %v5356, %v5358
    %v5364 = vmin.f32 %v5362, %v5363
    %v5365 = vsel %vm5198, %v5361, %v5364
    %v5366 = vmul.f32 %v5365, %v5190
    %v5367 = vadd.f32 %v5366, %v5196
    %v5368 = vmax.f32 %v5367, 0.0
    %5369 = vst.msk [vmem:[#allocation2 + $0x33] sm:$0xff] %vm40, %v5368
    %s5370 = scalar_lea.vmem [#allocation5], 180
    %v5371 = vld [vmem:[%s5370] ss:$2 sm:$0xff]
    %s5372 = scalar_lea.vmem [#allocation5], 181
    %v5373 = vld [vmem:[%s5372] ss:$2 sm:$0xff]
    %s5374 = scalar_lea.vmem [#allocation5], 198
    %v5375 = vld [vmem:[%s5374] ss:$2 sm:$0xff]
    %s5376 = scalar_lea.vmem [#allocation5], 199
    %v5377 = vld [vmem:[%s5376] ss:$2 sm:$0xff]
    %v5378 = vmax.f32 %v5371, %v5373
    %v5379 = vmax.f32 %v5375, %v5377
    %v5380 = vmax.f32 %v5378, %v5379
    %v5381 = vmin.f32 %v5371, %v5373
    %v5382 = vmin.f32 %v5375, %v5377
    %v5383 = vmin.f32 %v5381, %v5382
    %v5384 = vsel %vm5198, %v5380, %v5383
    %v5385 = vmul.f32 %v5384, %v5190
    %v5386 = vadd.f32 %v5385, %v5196
    %v5387 = vmax.f32 %v5386, 0.0
    %5388 = vst.msk [vmem:[#allocation2 + $0x3d] sm:$0xff] %vm40, %v5387
    %s5389 = scalar_lea.vmem [#allocation5], 216
    %v5390 = vld [vmem:[%s5389] ss:$2 sm:$0xff]
    %s5391 = scalar_lea.vmem [#allocation5], 217
    %v5392 = vld [vmem:[%s5391] ss:$2 sm:$0xff]
    %s5393 = scalar_lea.vmem [#allocation5], 234
    %v5394 = vld [vmem:[%s5393] ss:$2 sm:$0xff]
    %s5395 = scalar_lea.vmem [#allocation5], 235
    %v5396 = vld [vmem:[%s5395] ss:$2 sm:$0xff]
    %v5397 = vmax.f32 %v5390, %v5392
    %v5398 = vmax.f32 %v5394, %v5396
    %v5399 = vmax.f32 %v5397, %v5398
    %v5400 = vmin.f32 %v5390, %v5392
    %v5401 = vmin.f32 %v5394, %v5396
    %v5402 = vmin.f32 %v5400, %v5401
    %v5403 = vsel %vm5198, %v5399, %v5402
    %v5404 = vmul.f32 %v5403, %v5190
    %v5405 = vadd.f32 %v5404, %v5196
    %v5406 = vmax.f32 %v5405, 0.0
    %5407 = vst.msk [vmem:[#allocation2 + $0x47] sm:$0xff] %vm40, %v5406
    %s5408 = scalar_lea.vmem [#allocation5], 252
    %v5409 = vld [vmem:[%s5408] ss:$2 sm:$0xff]
    %s5410 = scalar_lea.vmem [#allocation5], 253
    %v5411 = vld [vmem:[%s5410] ss:$2 sm:$0xff]
    %s5412 = scalar_lea.vmem [#allocation5], 270
    %v5413 = vld [vmem:[%s5412] ss:$2 sm:$0xff]
    %s5414 = scalar_lea.vmem [#allocation5], 271
    %v5415 = vld [vmem:[%s5414] ss:$2 sm:$0xff]
    %v5416 = vmax.f32 %v5409, %v5411
    %v5417 = vmax.f32 %v5413, %v5415
    %v5418 = vmax.f32 %v5416, %v5417
    %v5419 = vmin.f32 %v5409, %v5411
    %v5420 = vmin.f32 %v5413, %v5415
    %v5421 = vmin.f32 %v5419, %v5420
    %v5422 = vsel %vm5198, %v5418, %v5421
    %v5423 = vmul.f32 %v5422, %v5190
    %v5424 = vadd.f32 %v5423, %v5196
    %v5425 = vmax.f32 %v5424, 0.0
    %5426 = vst.msk [vmem:[#allocation2 + $0x51] sm:$0xff] %vm40, %v5425
    %s5427 = scalar_lea.vmem [#allocation5], 324
    %v5428 = vld [vmem:[%s5427] ss:$2 sm:$0xff]
    %s5429 = scalar_lea.vmem [#allocation5], 325
    %v5430 = vld [vmem:[%s5429] ss:$2 sm:$0xff]
    %s5431 = scalar_lea.vmem [#allocation5], 342
    %v5432 = vld [vmem:[%s5431] ss:$2 sm:$0xff]
    %s5433 = scalar_lea.vmem [#allocation5], 343
    %v5434 = vld [vmem:[%s5433] ss:$2 sm:$0xff]
    %v5435 = vmax.f32 %v5428, %v5430
    %v5436 = vmax.f32 %v5432, %v5434
    %v5437 = vmax.f32 %v5435, %v5436
    %v5438 = vmin.f32 %v5428, %v5430
    %v5439 = vmin.f32 %v5432, %v5434
    %v5440 = vmin.f32 %v5438, %v5439
    %v5441 = vsel %vm5198, %v5437, %v5440
    %v5442 = vmul.f32 %v5441, %v5190
    %v5443 = vadd.f32 %v5442, %v5196
    %v5444 = vmax.f32 %v5443, 0.0
    %5445 = vst.msk [vmem:[#allocation2 + $0x6f] sm:$0xff] %vm40, %v5444
    %s5446 = scalar_lea.vmem [#allocation5], 360
    %v5447 = vld [vmem:[%s5446] ss:$2 sm:$0xff]
    %s5448 = scalar_lea.vmem [#allocation5], 361
    %v5449 = vld [vmem:[%s5448] ss:$2 sm:$0xff]
    %s5450 = scalar_lea.vmem [#allocation5], 378
    %v5451 = vld [vmem:[%s5450] ss:$2 sm:$0xff]
    %s5452 = scalar_lea.vmem [#allocation5], 379
    %v5453 = vld [vmem:[%s5452] ss:$2 sm:$0xff]
    %v5454 = vmax.f32 %v5447, %v5449
    %v5455 = vmax.f32 %v5451, %v5453
    %v5456 = vmax.f32 %v5454, %v5455
    %v5457 = vmin.f32 %v5447, %v5449
    %v5458 = vmin.f32 %v5451, %v5453
    %v5459 = vmin.f32 %v5457, %v5458
    %v5460 = vsel %vm5198, %v5456, %v5459
    %v5461 = vmul.f32 %v5460, %v5190
    %v5462 = vadd.f32 %v5461, %v5196
    %v5463 = vmax.f32 %v5462, 0.0
    %5464 = vst.msk [vmem:[#allocation2 + $0x79] sm:$0xff] %vm40, %v5463
    %s5465 = scalar_lea.vmem [#allocation5], 396
    %v5466 = vld [vmem:[%s5465] ss:$2 sm:$0xff]
    %s5467 = scalar_lea.vmem [#allocation5], 397
    %v5468 = vld [vmem:[%s5467] ss:$2 sm:$0xff]
    %s5469 = scalar_lea.vmem [#allocation5], 414
    %v5470 = vld [vmem:[%s5469] ss:$2 sm:$0xff]
    %s5471 = scalar_lea.vmem [#allocation5], 415
    %v5472 = vld [vmem:[%s5471] ss:$2 sm:$0xff]
    %v5473 = vmax.f32 %v5466, %v5468
    %v5474 = vmax.f32 %v5470, %v5472
    %v5475 = vmax.f32 %v5473, %v5474
    %v5476 = vmin.f32 %v5466, %v5468
    %v5477 = vmin.f32 %v5470, %v5472
    %v5478 = vmin.f32 %v5476, %v5477
    %v5479 = vsel %vm5198, %v5475, %v5478
    %v5480 = vmul.f32 %v5479, %v5190
    %v5481 = vadd.f32 %v5480, %v5196
    %v5482 = vmax.f32 %v5481, 0.0
    %5483 = vst.msk [vmem:[#allocation2 + $0x83] sm:$0xff] %vm40, %v5482
    %s5484 = scalar_lea.vmem [#allocation5], 432
    %v5485 = vld [vmem:[%s5484] ss:$2 sm:$0xff]
    %s5486 = scalar_lea.vmem [#allocation5], 433
    %v5487 = vld [vmem:[%s5486] ss:$2 sm:$0xff]
    %s5488 = scalar_lea.vmem [#allocation5], 450
    %v5489 = vld [vmem:[%s5488] ss:$2 sm:$0xff]
    %s5490 = scalar_lea.vmem [#allocation5], 451
    %v5491 = vld [vmem:[%s5490] ss:$2 sm:$0xff]
    %v5492 = vmax.f32 %v5485, %v5487
    %v5493 = vmax.f32 %v5489, %v5491
    %v5494 = vmax.f32 %v5492, %v5493
    %v5495 = vmin.f32 %v5485, %v5487
    %v5496 = vmin.f32 %v5489, %v5491
    %v5497 = vmin.f32 %v5495, %v5496
    %v5498 = vsel %vm5198, %v5494, %v5497
    %v5499 = vmul.f32 %v5498, %v5190
    %v5500 = vadd.f32 %v5499, %v5196
    %v5501 = vmax.f32 %v5500, 0.0
    %5502 = vst.msk [vmem:[#allocation2 + $0x8d] sm:$0xff] %vm40, %v5501
    %s5503 = scalar_lea.vmem [#allocation5], 468
    %v5504 = vld [vmem:[%s5503] ss:$2 sm:$0xff]
    %s5505 = scalar_lea.vmem [#allocation5], 469
    %v5506 = vld [vmem:[%s5505] ss:$2 sm:$0xff]
    %s5507 = scalar_lea.vmem [#allocation5], 486
    %v5508 = vld [vmem:[%s5507] ss:$2 sm:$0xff]
    %s5509 = scalar_lea.vmem [#allocation5], 487
    %v5510 = vld [vmem:[%s5509] ss:$2 sm:$0xff]
    %v5511 = vmax.f32 %v5504, %v5506
    %v5512 = vmax.f32 %v5508, %v5510
    %v5513 = vmax.f32 %v5511, %v5512
    %v5514 = vmin.f32 %v5504, %v5506
    %v5515 = vmin.f32 %v5508, %v5510
    %v5516 = vmin.f32 %v5514, %v5515
    %v5517 = vsel %vm5198, %v5513, %v5516
    %v5518 = vmul.f32 %v5517, %v5190
    %v5519 = vadd.f32 %v5518, %v5196
    %v5520 = vmax.f32 %v5519, 0.0
    %5521 = vst.msk [vmem:[#allocation2 + $0x97] sm:$0xff] %vm40, %v5520
    %s5522 = scalar_lea.vmem [#allocation5], 504
    %v5523 = vld [vmem:[%s5522] ss:$2 sm:$0xff]
    %s5524 = scalar_lea.vmem [#allocation5], 505
    %v5525 = vld [vmem:[%s5524] ss:$2 sm:$0xff]
    %s5526 = scalar_lea.vmem [#allocation5], 522
    %v5527 = vld [vmem:[%s5526] ss:$2 sm:$0xff]
    %s5528 = scalar_lea.vmem [#allocation5], 523
    %v5529 = vld [vmem:[%s5528] ss:$2 sm:$0xff]
    %v5530 = vmax.f32 %v5523, %v5525
    %v5531 = vmax.f32 %v5527, %v5529
    %v5532 = vmax.f32 %v5530, %v5531
    %v5533 = vmin.f32 %v5523, %v5525
    %v5534 = vmin.f32 %v5527, %v5529
    %v5535 = vmin.f32 %v5533, %v5534
    %v5536 = vsel %vm5198, %v5532, %v5535
    %v5537 = vmul.f32 %v5536, %v5190
    %v5538 = vadd.f32 %v5537, %v5196
    %v5539 = vmax.f32 %v5538, 0.0
    %5540 = vst.msk [vmem:[#allocation2 + $0xa1] sm:$0xff] %vm40, %v5539
    %s5541 = scalar_lea.vmem [#allocation5], 540
    %v5542 = vld [vmem:[%s5541] ss:$2 sm:$0xff]
    %s5543 = scalar_lea.vmem [#allocation5], 541
    %v5544 = vld [vmem:[%s5543] ss:$2 sm:$0xff]
    %s5545 = scalar_lea.vmem [#allocation5], 558
    %v5546 = vld [vmem:[%s5545] ss:$2 sm:$0xff]
    %s5547 = scalar_lea.vmem [#allocation5], 559
    %v5548 = vld [vmem:[%s5547] ss:$2 sm:$0xff]
    %v5549 = vmax.f32 %v5542, %v5544
    %v5550 = vmax.f32 %v5546, %v5548
    %v5551 = vmax.f32 %v5549, %v5550
    %v5552 = vmin.f32 %v5542, %v5544
    %v5553 = vmin.f32 %v5546, %v5548
    %v5554 = vmin.f32 %v5552, %v5553
    %v5555 = vsel %vm5198, %v5551, %v5554
    %v5556 = vmul.f32 %v5555, %v5190
    %v5557 = vadd.f32 %v5556, %v5196
    %v5558 = vmax.f32 %v5557, 0.0
    %5559 = vst.msk [vmem:[#allocation2 + $0xab] sm:$0xff] %vm40, %v5558
    %s5560 = scalar_lea.vmem [#allocation5], 576
    %v5561 = vld [vmem:[%s5560] ss:$2 sm:$0xff]
    %s5562 = scalar_lea.vmem [#allocation5], 577
    %v5563 = vld [vmem:[%s5562] ss:$2 sm:$0xff]
    %s5564 = scalar_lea.vmem [#allocation5], 594
    %v5565 = vld [vmem:[%s5564] ss:$2 sm:$0xff]
    %s5566 = scalar_lea.vmem [#allocation5], 595
    %v5567 = vld [vmem:[%s5566] ss:$2 sm:$0xff]
    %v5568 = vmax.f32 %v5561, %v5563
    %v5569 = vmax.f32 %v5565, %v5567
    %v5570 = vmax.f32 %v5568, %v5569
    %v5571 = vmin.f32 %v5561, %v5563
    %v5572 = vmin.f32 %v5565, %v5567
    %v5573 = vmin.f32 %v5571, %v5572
    %v5574 = vsel %vm5198, %v5570, %v5573
    %v5575 = vmul.f32 %v5574, %v5190
    %v5576 = vadd.f32 %v5575, %v5196
    %v5577 = vmax.f32 %v5576, 0.0
    %5578 = vst.msk [vmem:[#allocation2 + $0xb5] sm:$0xff] %vm40, %v5577
    %v5579 = vld [vmem:[#allocation2] sm:$0xff]
    %v5580 = vld [vmem:[#allocation2 + $0x8] sm:$0xff]
    %v5581 = vld [vmem:[#allocation2 + $0x10] sm:$0xff]
    %v5582 = vld [vmem:[#allocation2 + $0x18] sm:$0xff]
    %v5583 = vld [vmem:[#allocation2 + $0x20] sm:$0xff]
    %v5584 = vld [vmem:[#allocation2 + $0x28] sm:$0xff]
    %v5585 = vld [vmem:[#allocation2 + $0x30] sm:$0xff]
    %v5586 = vld [vmem:[#allocation2 + $0x38] sm:$0xff]
    %v5587 = vld [vmem:[#allocation2 + $0x40] sm:$0xff]
    %v5588 = vld [vmem:[#allocation2 + $0x48] sm:$0xff]
    %v5589 = vld [vmem:[#allocation2 + $0x50] sm:$0xff]
    %v5590 = vld [vmem:[#allocation2 + $0x58] sm:$0xff]
    %v5591 = vld [vmem:[#allocation2 + $0x60] sm:$0xff]
    %v5592 = vld [vmem:[#allocation2 + $0x68] sm:$0xff]
    %v5593 = vld [vmem:[#allocation2 + $0x70] sm:$0xff]
    %v5594 = vld [vmem:[#allocation2 + $0x78] sm:$0xff]
    %v5595 = vld [vmem:[#allocation2 + $0x80] sm:$0xff]
    %v5596 = vld [vmem:[#allocation2 + $0x88] sm:$0xff]
    %v5597 = vld [vmem:[#allocation2 + $0x90] sm:$0xff]
    %v5598 = vld [vmem:[#allocation2 + $0x98] sm:$0xff]
    %v5599 = vld [vmem:[#allocation2 + $0xa0] sm:$0xff]
    %v5600 = vld [vmem:[#allocation2 + $0xa8] sm:$0xff]
    %v5601 = vld [vmem:[#allocation2 + $0xb0] sm:$0x3]
    %v5602 = vld [vmem:[#allocation2 + $0x1] sm:$0xff]
    %v5603 = vld [vmem:[#allocation2 + $0x9] sm:$0xff]
    %v5604 = vld [vmem:[#allocation2 + $0x11] sm:$0xff]
    %v5605 = vld [vmem:[#allocation2 + $0x19] sm:$0xff]
    %v5606 = vld [vmem:[#allocation2 + $0x21] sm:$0xff]
    %v5607 = vld [vmem:[#allocation2 + $0x29] sm:$0xff]
    %v5608 = vld [vmem:[#allocation2 + $0x31] sm:$0xff]
    %v5609 = vld [vmem:[#allocation2 + $0x39] sm:$0xff]
    %v5610 = vld [vmem:[#allocation2 + $0x41] sm:$0xff]
    %v5611 = vld [vmem:[#allocation2 + $0x49] sm:$0xff]
    %v5612 = vld [vmem:[#allocation2 + $0x51] sm:$0xff]
    %v5613 = vld [vmem:[#allocation2 + $0x59] sm:$0xff]
    %v5614 = vld [vmem:[#allocation2 + $0x61] sm:$0xff]
    %v5615 = vld [vmem:[#allocation2 + $0x69] sm:$0xff]
    %v5616 = vld [vmem:[#allocation2 + $0x71] sm:$0xff]
    %v5617 = vld [vmem:[#allocation2 + $0x79] sm:$0xff]
    %v5618 = vld [vmem:[#allocation2 + $0x81] sm:$0xff]
    %v5619 = vld [vmem:[#allocation2 + $0x89] sm:$0xff]
    %v5620 = vld [vmem:[#allocation2 + $0x91] sm:$0xff]
    %v5621 = vld [vmem:[#allocation2 + $0x99] sm:$0xff]
    %v5622 = vld [vmem:[#allocation2 + $0xa1] sm:$0xff]
    %v5623 = vld [vmem:[#allocation2 + $0xa9] sm:$0xff]
    %v5624 = vld [vmem:[#allocation2 + $0xb1] sm:$0x3]
    %v5625 = vld [vmem:[#allocation2 + $0x2] sm:$0xff]
    %v5626 = vld [vmem:[#allocation2 + $0xa] sm:$0xff]
    %v5627 = vld [vmem:[#allocation2 + $0x12] sm:$0xff]
    %v5628 = vld [vmem:[#allocation2 + $0x1a] sm:$0xff]
    %v5629 = vld [vmem:[#allocation2 + $0x22] sm:$0xff]
    %v5630 = vld [vmem:[#allocation2 + $0x2a] sm:$0xff]
    %v5631 = vld [vmem:[#allocation2 + $0x32] sm:$0xff]
    %v5632 = vld [vmem:[#allocation2 + $0x3a] sm:$0xff]
    %v5633 = vld [vmem:[#allocation2 + $0x42] sm:$0xff]
    %v5634 = vld [vmem:[#allocation2 + $0x4a] sm:$0xff]
    %v5635 = vld [vmem:[#allocation2 + $0x52] sm:$0xff]
    %v5636 = vld [vmem:[#allocation2 + $0x5a] sm:$0xff]
    %v5637 = vld [vmem:[#allocation2 + $0x62] sm:$0xff]
    %v5638 = vld [vmem:[#allocation2 + $0x6a] sm:$0xff]
    %v5639 = vld [vmem:[#allocation2 + $0x72] sm:$0xff]
    %v5640 = vld [vmem:[#allocation2 + $0x7a] sm:$0xff]
    %v5641 = vld [vmem:[#allocation2 + $0x82] sm:$0xff]
    %v5642 = vld [vmem:[#allocation2 + $0x8a] sm:$0xff]
    %v5643 = vld [vmem:[#allocation2 + $0x92] sm:$0xff]
    %v5644 = vld [vmem:[#allocation2 + $0x9a] sm:$0xff]
    %v5645 = vld [vmem:[#allocation2 + $0xa2] sm:$0xff]
    %v5646 = vld [vmem:[#allocation2 + $0xaa] sm:$0xff]
    %v5647 = vld [vmem:[#allocation2 + $0xb2] sm:$0x3]
    %v5648 = vld [vmem:[#allocation2 + $0xb2] sm:$0xff]
    %v5649 = vld [vmem:[#allocation2 + $0xba] sm:$0x3]
    %v5650 = vld [vmem:[#allocation2 + $0xb] sm:$0xff]
    %v5651 = vld [vmem:[#allocation2 + $0x13] sm:$0xff]
    %v5652 = vld [vmem:[#allocation2 + $0x1b] sm:$0xff]
    %v5653 = vld [vmem:[#allocation2 + $0x23] sm:$0xff]
    %v5654 = vld [vmem:[#allocation2 + $0x2b] sm:$0xff]
    %v5655 = vld [vmem:[#allocation2 + $0x33] sm:$0xff]
    %v5656 = vld [vmem:[#allocation2 + $0x3b] sm:$0xff]
    %v5657 = vld [vmem:[#allocation2 + $0x43] sm:$0xff]
    %v5658 = vld [vmem:[#allocation2 + $0x4b] sm:$0xff]
    %v5659 = vld [vmem:[#allocation2 + $0x53] sm:$0xff]
    %v5660 = vld [vmem:[#allocation2 + $0x5b] sm:$0xff]
    %v5661 = vld [vmem:[#allocation2 + $0x63] sm:$0xff]
    %v5662 = vld [vmem:[#allocation2 + $0x6b] sm:$0xff]
    %v5663 = vld [vmem:[#allocation2 + $0x73] sm:$0xff]
    %v5664 = vld [vmem:[#allocation2 + $0x7b] sm:$0xff]
    %v5665 = vld [vmem:[#allocation2 + $0x83] sm:$0xff]
    %v5666 = vld [vmem:[#allocation2 + $0x8b] sm:$0xff]
    %v5667 = vld [vmem:[#allocation2 + $0x93] sm:$0xff]
    %v5668 = vld [vmem:[#allocation2 + $0x9b] sm:$0xff]
    %v5669 = vld [vmem:[#allocation2 + $0xa3] sm:$0xff]
    %v5670 = vld [vmem:[#allocation2 + $0xab] sm:$0xff]
    %v5671 = vld [vmem:[#allocation2 + $0xb3] sm:$0xff]
    %v5672 = vld [vmem:[#allocation2 + $0xbb] sm:$0x3]
    %v5673 = vld [vmem:[#allocation2 + $0xc] sm:$0xff]
    %v5674 = vld [vmem:[#allocation2 + $0x14] sm:$0xff]
    %v5675 = vld [vmem:[#allocation2 + $0x1c] sm:$0xff]
    %v5676 = vld [vmem:[#allocation2 + $0x24] sm:$0xff]
    %v5677 = vld [vmem:[#allocation2 + $0x2c] sm:$0xff]
    %v5678 = vld [vmem:[#allocation2 + $0x34] sm:$0xff]
    %v5679 = vld [vmem:[#allocation2 + $0x3c] sm:$0xff]
    %v5680 = vld [vmem:[#allocation2 + $0x44] sm:$0xff]
    %v5681 = vld [vmem:[#allocation2 + $0x4c] sm:$0xff]
    %v5682 = vld [vmem:[#allocation2 + $0x54] sm:$0xff]
    %v5683 = vld [vmem:[#allocation2 + $0x5c] sm:$0xff]
    %v5684 = vld [vmem:[#allocation2 + $0x64] sm:$0xff]
    %v5685 = vld [vmem:[#allocation2 + $0x6c] sm:$0xff]
    %v5686 = vld [vmem:[#allocation2 + $0x74] sm:$0xff]
    %v5687 = vld [vmem:[#allocation2 + $0x7c] sm:$0xff]
    %v5688 = vld [vmem:[#allocation2 + $0x84] sm:$0xff]
    %v5689 = vld [vmem:[#allocation2 + $0x8c] sm:$0xff]
    %v5690 = vld [vmem:[#allocation2 + $0x94] sm:$0xff]
    %v5691 = vld [vmem:[#allocation2 + $0x9c] sm:$0xff]
    %v5692 = vld [vmem:[#allocation2 + $0xa4] sm:$0xff]
    %v5693 = vld [vmem:[#allocation2 + $0xac] sm:$0xff]
    %v5694 = vld [vmem:[#allocation2 + $0xb4] sm:$0xff]
    %v5695 = vld [vmem:[#allocation2 + $0xbc] sm:$0x3]
    %v5696 = vld [vmem:[#allocation2 + $0xbc] sm:$0xff]
    %v5697 = vld [vmem:[#allocation2 + $0xc4] sm:$0x3]
    %v5698 = vld [vmem:[#allocation2 + $0x15] sm:$0xff]
    %v5699 = vld [vmem:[#allocation2 + $0x1d] sm:$0xff]
    %v5700 = vld [vmem:[#allocation2 + $0x25] sm:$0xff]
    %v5701 = vld [vmem:[#allocation2 + $0x2d] sm:$0xff]
    %v5702 = vld [vmem:[#allocation2 + $0x35] sm:$0xff]
    %v5703 = vld [vmem:[#allocation2 + $0x3d] sm:$0xff]
    %v5704 = vld [vmem:[#allocation2 + $0x45] sm:$0xff]
    %v5705 = vld [vmem:[#allocation2 + $0x4d] sm:$0xff]
    %v5706 = vld [vmem:[#allocation2 + $0x55] sm:$0xff]
    %v5707 = vld [vmem:[#allocation2 + $0x5d] sm:$0xff]
    %v5708 = vld [vmem:[#allocation2 + $0x65] sm:$0xff]
    %v5709 = vld [vmem:[#allocation2 + $0x6d] sm:$0xff]
    %v5710 = vld [vmem:[#allocation2 + $0x75] sm:$0xff]
    %v5711 = vld [vmem:[#allocation2 + $0x7d] sm:$0xff]
    %v5712 = vld [vmem:[#allocation2 + $0x85] sm:$0xff]
    %v5713 = vld [vmem:[#allocation2 + $0x8d] sm:$0xff]
    %v5714 = vld [vmem:[#allocation2 + $0x95] sm:$0xff]
    %v5715 = vld [vmem:[#allocation2 + $0x9d] sm:$0xff]
    %v5716 = vld [vmem:[#allocation2 + $0xa5] sm:$0xff]
    %v5717 = vld [vmem:[#allocation2 + $0xad] sm:$0xff]
    %v5718 = vld [vmem:[#allocation2 + $0xb5] sm:$0xff]
    %v5719 = vld [vmem:[#allocation2 + $0xbd] sm:$0xff]
    %v5720 = vld [vmem:[#allocation2 + $0xc5] sm:$0x3]
    %v5721 = vld [vmem:[#allocation2 + $0x16] sm:$0xff]
    %v5722 = vld [vmem:[#allocation2 + $0x1e] sm:$0xff]
    %v5723 = vld [vmem:[#allocation2 + $0x26] sm:$0xff]
    %v5724 = vld [vmem:[#allocation2 + $0x2e] sm:$0xff]
    %v5725 = vld [vmem:[#allocation2 + $0x36] sm:$0xff]
    %v5726 = vld [vmem:[#allocation2 + $0x3e] sm:$0xff]
    %v5727 = vld [vmem:[#allocation2 + $0x46] sm:$0xff]
    %v5728 = vld [vmem:[#allocation2 + $0x4e] sm:$0xff]
    %v5729 = vld [vmem:[#allocation2 + $0x56] sm:$0xff]
    %v5730 = vld [vmem:[#allocation2 + $0x5e] sm:$0xff]
    %v5731 = vld [vmem:[#allocation2 + $0x66] sm:$0xff]
    %v5732 = vld [vmem:[#allocation2 + $0x6e] sm:$0xff]
    %v5733 = vld [vmem:[#allocation2 + $0x76] sm:$0xff]
    %v5734 = vld [vmem:[#allocation2 + $0x7e] sm:$0xff]
    %v5735 = vld [vmem:[#allocation2 + $0x86] sm:$0xff]
    %v5736 = vld [vmem:[#allocation2 + $0x8e] sm:$0xff]
    %v5737 = vld [vmem:[#allocation2 + $0x96] sm:$0xff]
    %v5738 = vld [vmem:[#allocation2 + $0x9e] sm:$0xff]
    %v5739 = vld [vmem:[#allocation2 + $0xa6] sm:$0xff]
    %v5740 = vld [vmem:[#allocation2 + $0xae] sm:$0xff]
    %v5741 = vld [vmem:[#allocation2 + $0xb6] sm:$0xff]
    %v5742 = vld [vmem:[#allocation2 + $0xbe] sm:$0xff]
    %v5743 = vld [vmem:[#allocation2 + $0xc6] sm:$0x3]
    %5767 = vrot.lane.b32.xlu0 %v5602, 32
    %v5768 = vpop.permute.xlu0 %5767
    %5769 = vrot.lane.b32.xlu0 %v5603, 32
    %v5770 = vpop.permute.xlu0 %5769
    %5771 = vrot.lane.b32.xlu0 %v5604, 32
    %v5772 = vpop.permute.xlu0 %5771
    %5773 = vrot.lane.b32.xlu0 %v5605, 32
    %v5774 = vpop.permute.xlu0 %5773
    %5775 = vrot.lane.b32.xlu0 %v5606, 32
    %v5776 = vpop.permute.xlu0 %5775
    %5777 = vrot.lane.b32.xlu0 %v5607, 32
    %v5778 = vpop.permute.xlu0 %5777
    %5779 = vrot.lane.b32.xlu0 %v5608, 32
    %v5780 = vpop.permute.xlu0 %5779
    %5781 = vrot.lane.b32.xlu0 %v5609, 32
    %v5782 = vpop.permute.xlu0 %5781
    %5783 = vrot.lane.b32.xlu0 %v5610, 32
    %v5784 = vpop.permute.xlu0 %5783
    %5785 = vrot.lane.b32.xlu0 %v5611, 32
    %v5786 = vpop.permute.xlu0 %5785
    %5787 = vrot.lane.b32.xlu0 %v5612, 32
    %v5788 = vpop.permute.xlu0 %5787
    %5789 = vrot.lane.b32.xlu0 %v5613, 32
    %v5790 = vpop.permute.xlu0 %5789
    %5791 = vrot.lane.b32.xlu0 %v5614, 32
    %v5792 = vpop.permute.xlu0 %5791
    %5793 = vrot.lane.b32.xlu0 %v5615, 32
    %v5794 = vpop.permute.xlu0 %5793
    %5795 = vrot.lane.b32.xlu0 %v5616, 32
    %v5796 = vpop.permute.xlu0 %5795
    %5797 = vrot.lane.b32.xlu0 %v5617, 32
    %v5798 = vpop.permute.xlu0 %5797
    %5799 = vrot.lane.b32.xlu0 %v5618, 32
    %v5800 = vpop.permute.xlu0 %5799
    %5801 = vrot.lane.b32.xlu0 %v5619, 32
    %v5802 = vpop.permute.xlu0 %5801
    %5803 = vrot.lane.b32.xlu0 %v5620, 32
    %v5804 = vpop.permute.xlu0 %5803
    %5805 = vrot.lane.b32.xlu0 %v5621, 32
    %v5806 = vpop.permute.xlu0 %5805
    %5807 = vrot.lane.b32.xlu0 %v5622, 32
    %v5808 = vpop.permute.xlu0 %5807
    %5809 = vrot.lane.b32.xlu0 %v5623, 32
    %v5810 = vpop.permute.xlu0 %5809
    %5811 = vrot.lane.b32.xlu0 %v5624, 32
    %v5812 = vpop.permute.xlu0 %5811
    %5859 = vrot.lane.b32.xlu0 %v5625, 64
    %v5860 = vpop.permute.xlu0 %5859
    %5861 = vrot.lane.b32.xlu0 %v5626, 64
    %v5862 = vpop.permute.xlu0 %5861
    %5863 = vrot.lane.b32.xlu0 %v5627, 64
    %v5864 = vpop.permute.xlu0 %5863
    %5865 = vrot.lane.b32.xlu0 %v5628, 64
    %v5866 = vpop.permute.xlu0 %5865
    %5867 = vrot.lane.b32.xlu0 %v5629, 64
    %v5868 = vpop.permute.xlu0 %5867
    %5869 = vrot.lane.b32.xlu0 %v5630, 64
    %v5870 = vpop.permute.xlu0 %5869
    %5871 = vrot.lane.b32.xlu0 %v5631, 64
    %v5872 = vpop.permute.xlu0 %5871
    %5873 = vrot.lane.b32.xlu0 %v5632, 64
    %v5874 = vpop.permute.xlu0 %5873
    %5875 = vrot.lane.b32.xlu0 %v5633, 64
    %v5876 = vpop.permute.xlu0 %5875
    %5877 = vrot.lane.b32.xlu0 %v5634, 64
    %v5878 = vpop.permute.xlu0 %5877
    %5879 = vrot.lane.b32.xlu0 %v5635, 64
    %v5880 = vpop.permute.xlu0 %5879
    %5881 = vrot.lane.b32.xlu0 %v5636, 64
    %v5882 = vpop.permute.xlu0 %5881
    %5883 = vrot.lane.b32.xlu0 %v5637, 64
    %v5884 = vpop.permute.xlu0 %5883
    %5885 = vrot.lane.b32.xlu0 %v5638, 64
    %v5886 = vpop.permute.xlu0 %5885
    %5887 = vrot.lane.b32.xlu0 %v5639, 64
    %v5888 = vpop.permute.xlu0 %5887
    %5889 = vrot.lane.b32.xlu0 %v5640, 64
    %v5890 = vpop.permute.xlu0 %5889
    %5891 = vrot.lane.b32.xlu0 %v5641, 64
    %v5892 = vpop.permute.xlu0 %5891
    %5893 = vrot.lane.b32.xlu0 %v5642, 64
    %v5894 = vpop.permute.xlu0 %5893
    %5895 = vrot.lane.b32.xlu0 %v5643, 64
    %v5896 = vpop.permute.xlu0 %5895
    %5897 = vrot.lane.b32.xlu0 %v5644, 64
    %v5898 = vpop.permute.xlu0 %5897
    %5899 = vrot.lane.b32.xlu0 %v5645, 64
    %v5900 = vpop.permute.xlu0 %5899
    %5901 = vrot.lane.b32.xlu0 %v5646, 64
    %v5902 = vpop.permute.xlu0 %5901
    %5903 = vrot.lane.b32.xlu0 %v5647, 64
    %v5904 = vpop.permute.xlu0 %5903
    %5930 = vrot.lane.b32.xlu0 %v5626, 96
    %v5931 = vpop.permute.xlu0 %5930
    %5932 = vrot.lane.b32.xlu0 %v5627, 96
    %v5933 = vpop.permute.xlu0 %5932
    %5934 = vrot.lane.b32.xlu0 %v5628, 96
    %v5935 = vpop.permute.xlu0 %5934
    %5936 = vrot.lane.b32.xlu0 %v5629, 96
    %v5937 = vpop.permute.xlu0 %5936
    %5938 = vrot.lane.b32.xlu0 %v5630, 96
    %v5939 = vpop.permute.xlu0 %5938
    %5940 = vrot.lane.b32.xlu0 %v5631, 96
    %v5941 = vpop.permute.xlu0 %5940
    %5942 = vrot.lane.b32.xlu0 %v5632, 96
    %v5943 = vpop.permute.xlu0 %5942
    %5944 = vrot.lane.b32.xlu0 %v5633, 96
    %v5945 = vpop.permute.xlu0 %5944
    %5946 = vrot.lane.b32.xlu0 %v5634, 96
    %v5947 = vpop.permute.xlu0 %5946
    %5948 = vrot.lane.b32.xlu0 %v5635, 96
    %v5949 = vpop.permute.xlu0 %5948
    %5950 = vrot.lane.b32.xlu0 %v5636, 96
    %v5951 = vpop.permute.xlu0 %5950
    %5952 = vrot.lane.b32.xlu0 %v5637, 96
    %v5953 = vpop.permute.xlu0 %5952
    %5954 = vrot.lane.b32.xlu0 %v5638, 96
    %v5955 = vpop.permute.xlu0 %5954
    %5956 = vrot.lane.b32.xlu0 %v5639, 96
    %v5957 = vpop.permute.xlu0 %5956
    %5958 = vrot.lane.b32.xlu0 %v5640, 96
    %v5959 = vpop.permute.xlu0 %5958
    %5960 = vrot.lane.b32.xlu0 %v5641, 96
    %v5961 = vpop.permute.xlu0 %5960
    %5962 = vrot.lane.b32.xlu0 %v5642, 96
    %v5963 = vpop.permute.xlu0 %5962
    %5964 = vrot.lane.b32.xlu0 %v5643, 96
    %v5965 = vpop.permute.xlu0 %5964
    %5966 = vrot.lane.b32.xlu0 %v5644, 96
    %v5967 = vpop.permute.xlu0 %5966
    %5968 = vrot.lane.b32.xlu0 %v5645, 96
    %v5969 = vpop.permute.xlu0 %5968
    %5970 = vrot.lane.b32.xlu0 %v5646, 96
    %v5971 = vpop.permute.xlu0 %5970
    %5972 = vrot.lane.b32.xlu0 %v5648, 96
    %v5973 = vpop.permute.xlu0 %5972
    %5974 = vrot.lane.b32.xlu0 %v5649, 96
    %v5975 = vpop.permute.xlu0 %5974
    %6022 = vrot.lane.b32.xlu0 %v5673, 32
    %v6023 = vpop.permute.xlu0 %6022
    %6024 = vrot.lane.b32.xlu0 %v5674, 32
    %v6025 = vpop.permute.xlu0 %6024
    %6026 = vrot.lane.b32.xlu0 %v5675, 32
    %v6027 = vpop.permute.xlu0 %6026
    %6028 = vrot.lane.b32.xlu0 %v5676, 32
    %v6029 = vpop.permute.xlu0 %6028
    %6030 = vrot.lane.b32.xlu0 %v5677, 32
    %v6031 = vpop.permute.xlu0 %6030
    %6032 = vrot.lane.b32.xlu0 %v5678, 32
    %v6033 = vpop.permute.xlu0 %6032
    %6034 = vrot.lane.b32.xlu0 %v5679, 32
    %v6035 = vpop.permute.xlu0 %6034
    %6036 = vrot.lane.b32.xlu0 %v5680, 32
    %v6037 = vpop.permute.xlu0 %6036
    %6038 = vrot.lane.b32.xlu0 %v5681, 32
    %v6039 = vpop.permute.xlu0 %6038
    %6040 = vrot.lane.b32.xlu0 %v5682, 32
    %v6041 = vpop.permute.xlu0 %6040
    %6042 = vrot.lane.b32.xlu0 %v5683, 32
    %v6043 = vpop.permute.xlu0 %6042
    %6044 = vrot.lane.b32.xlu0 %v5684, 32
    %v6045 = vpop.permute.xlu0 %6044
    %6046 = vrot.lane.b32.xlu0 %v5685, 32
    %v6047 = vpop.permute.xlu0 %6046
    %6048 = vrot.lane.b32.xlu0 %v5686, 32
    %v6049 = vpop.permute.xlu0 %6048
    %6050 = vrot.lane.b32.xlu0 %v5687, 32
    %v6051 = vpop.permute.xlu0 %6050
    %6052 = vrot.lane.b32.xlu0 %v5688, 32
    %v6053 = vpop.permute.xlu0 %6052
    %6054 = vrot.lane.b32.xlu0 %v5689, 32
    %v6055 = vpop.permute.xlu0 %6054
    %6056 = vrot.lane.b32.xlu0 %v5690, 32
    %v6057 = vpop.permute.xlu0 %6056
    %6058 = vrot.lane.b32.xlu0 %v5691, 32
    %v6059 = vpop.permute.xlu0 %6058
    %6060 = vrot.lane.b32.xlu0 %v5692, 32
    %v6061 = vpop.permute.xlu0 %6060
    %6062 = vrot.lane.b32.xlu0 %v5693, 32
    %v6063 = vpop.permute.xlu0 %6062
    %6064 = vrot.lane.b32.xlu0 %v5694, 32
    %v6065 = vpop.permute.xlu0 %6064
    %6066 = vrot.lane.b32.xlu0 %v5695, 32
    %v6067 = vpop.permute.xlu0 %6066
    %6093 = vrot.lane.b32.xlu0 %v5674, 64
    %v6094 = vpop.permute.xlu0 %6093
    %6095 = vrot.lane.b32.xlu0 %v5675, 64
    %v6096 = vpop.permute.xlu0 %6095
    %6097 = vrot.lane.b32.xlu0 %v5676, 64
    %v6098 = vpop.permute.xlu0 %6097
    %6099 = vrot.lane.b32.xlu0 %v5677, 64
    %v6100 = vpop.permute.xlu0 %6099
    %6101 = vrot.lane.b32.xlu0 %v5678, 64
    %v6102 = vpop.permute.xlu0 %6101
    %6103 = vrot.lane.b32.xlu0 %v5679, 64
    %v6104 = vpop.permute.xlu0 %6103
    %6105 = vrot.lane.b32.xlu0 %v5680, 64
    %v6106 = vpop.permute.xlu0 %6105
    %6107 = vrot.lane.b32.xlu0 %v5681, 64
    %v6108 = vpop.permute.xlu0 %6107
    %6109 = vrot.lane.b32.xlu0 %v5682, 64
    %v6110 = vpop.permute.xlu0 %6109
    %6111 = vrot.lane.b32.xlu0 %v5683, 64
    %v6112 = vpop.permute.xlu0 %6111
    %6113 = vrot.lane.b32.xlu0 %v5684, 64
    %v6114 = vpop.permute.xlu0 %6113
    %6115 = vrot.lane.b32.xlu0 %v5685, 64
    %v6116 = vpop.permute.xlu0 %6115
    %6117 = vrot.lane.b32.xlu0 %v5686, 64
    %v6118 = vpop.permute.xlu0 %6117
    %6119 = vrot.lane.b32.xlu0 %v5687, 64
    %v6120 = vpop.permute.xlu0 %6119
    %6121 = vrot.lane.b32.xlu0 %v5688, 64
    %v6122 = vpop.permute.xlu0 %6121
    %6123 = vrot.lane.b32.xlu0 %v5689, 64
    %v6124 = vpop.permute.xlu0 %6123
    %6125 = vrot.lane.b32.xlu0 %v5690, 64
    %v6126 = vpop.permute.xlu0 %6125
    %6127 = vrot.lane.b32.xlu0 %v5691, 64
    %v6128 = vpop.permute.xlu0 %6127
    %6129 = vrot.lane.b32.xlu0 %v5692, 64
    %v6130 = vpop.permute.xlu0 %6129
    %6131 = vrot.lane.b32.xlu0 %v5693, 64
    %v6132 = vpop.permute.xlu0 %6131
    %6133 = vrot.lane.b32.xlu0 %v5694, 64
    %v6134 = vpop.permute.xlu0 %6133
    %6135 = vrot.lane.b32.xlu0 %v5696, 64
    %v6136 = vpop.permute.xlu0 %6135
    %6137 = vrot.lane.b32.xlu0 %v5697, 64
    %v6138 = vpop.permute.xlu0 %6137
    %6185 = vrot.lane.b32.xlu0 %v5698, 96
    %v6186 = vpop.permute.xlu0 %6185
    %6187 = vrot.lane.b32.xlu0 %v5699, 96
    %v6188 = vpop.permute.xlu0 %6187
    %6189 = vrot.lane.b32.xlu0 %v5700, 96
    %v6190 = vpop.permute.xlu0 %6189
    %6191 = vrot.lane.b32.xlu0 %v5701, 96
    %v6192 = vpop.permute.xlu0 %6191
    %6193 = vrot.lane.b32.xlu0 %v5702, 96
    %v6194 = vpop.permute.xlu0 %6193
    %6195 = vrot.lane.b32.xlu0 %v5703, 96
    %v6196 = vpop.permute.xlu0 %6195
    %6197 = vrot.lane.b32.xlu0 %v5704, 96
    %v6198 = vpop.permute.xlu0 %6197
    %6199 = vrot.lane.b32.xlu0 %v5705, 96
    %v6200 = vpop.permute.xlu0 %6199
    %6201 = vrot.lane.b32.xlu0 %v5706, 96
    %v6202 = vpop.permute.xlu0 %6201
    %6203 = vrot.lane.b32.xlu0 %v5707, 96
    %v6204 = vpop.permute.xlu0 %6203
    %6205 = vrot.lane.b32.xlu0 %v5708, 96
    %v6206 = vpop.permute.xlu0 %6205
    %6207 = vrot.lane.b32.xlu0 %v5709, 96
    %v6208 = vpop.permute.xlu0 %6207
    %6209 = vrot.lane.b32.xlu0 %v5710, 96
    %v6210 = vpop.permute.xlu0 %6209
    %6211 = vrot.lane.b32.xlu0 %v5711, 96
    %v6212 = vpop.permute.xlu0 %6211
    %6213 = vrot.lane.b32.xlu0 %v5712, 96
    %v6214 = vpop.permute.xlu0 %6213
    %6215 = vrot.lane.b32.xlu0 %v5713, 96
    %v6216 = vpop.permute.xlu0 %6215
    %6217 = vrot.lane.b32.xlu0 %v5714, 96
    %v6218 = vpop.permute.xlu0 %6217
    %6219 = vrot.lane.b32.xlu0 %v5715, 96
    %v6220 = vpop.permute.xlu0 %6219
    %6221 = vrot.lane.b32.xlu0 %v5716, 96
    %v6222 = vpop.permute.xlu0 %6221
    %6223 = vrot.lane.b32.xlu0 %v5717, 96
    %v6224 = vpop.permute.xlu0 %6223
    %6225 = vrot.lane.b32.xlu0 %v5718, 96
    %v6226 = vpop.permute.xlu0 %6225
    %6227 = vrot.lane.b32.xlu0 %v5719, 96
    %v6228 = vpop.permute.xlu0 %6227
    %6229 = vrot.lane.b32.xlu0 %v5720, 96
    %v6230 = vpop.permute.xlu0 %6229
    %v6254 = vsel %vm40, %v5579, %v5768
    %v6255 = vsel %vm40, %v5580, %v5770
    %v6256 = vsel %vm40, %v5581, %v5772
    %v6257 = vsel %vm40, %v5582, %v5774
    %v6258 = vsel %vm40, %v5583, %v5776
    %v6259 = vsel %vm40, %v5584, %v5778
    %v6260 = vsel %vm40, %v5585, %v5780
    %v6261 = vsel %vm40, %v5586, %v5782
    %v6262 = vsel %vm40, %v5587, %v5784
    %v6263 = vsel %vm40, %v5588, %v5786
    %v6264 = vsel %vm40, %v5589, %v5788
    %v6265 = vsel %vm40, %v5590, %v5790
    %v6266 = vsel %vm40, %v5591, %v5792
    %v6267 = vsel %vm40, %v5592, %v5794
    %v6268 = vsel %vm40, %v5593, %v5796
    %v6269 = vsel %vm40, %v5594, %v5798
    %v6270 = vsel %vm40, %v5595, %v5800
    %v6271 = vsel %vm40, %v5596, %v5802
    %v6272 = vsel %vm40, %v5597, %v5804
    %v6273 = vsel %vm40, %v5598, %v5806
    %v6274 = vsel %vm40, %v5599, %v5808
    %v6275 = vsel %vm40, %v5600, %v5810
    %v6276 = vsel %vm40, %v5601, %v5812
    %vm6277 = vcmask 523264
    %v6278 = vsel %vm6277, %v6254, %v5860
    %v6279 = vsel %vm6277, %v6255, %v5862
    %v6280 = vsel %vm6277, %v6256, %v5864
    %v6281 = vsel %vm6277, %v6257, %v5866
    %v6282 = vsel %vm6277, %v6258, %v5868
    %v6283 = vsel %vm6277, %v6259, %v5870
    %v6284 = vsel %vm6277, %v6260, %v5872
    %v6285 = vsel %vm6277, %v6261, %v5874
    %v6286 = vsel %vm6277, %v6262, %v5876
    %v6287 = vsel %vm6277, %v6263, %v5878
    %v6288 = vsel %vm6277, %v6264, %v5880
    %v6289 = vsel %vm6277, %v6265, %v5882
    %v6290 = vsel %vm6277, %v6266, %v5884
    %v6291 = vsel %vm6277, %v6267, %v5886
    %v6292 = vsel %vm6277, %v6268, %v5888
    %v6293 = vsel %vm6277, %v6269, %v5890
    %v6294 = vsel %vm6277, %v6270, %v5892
    %v6295 = vsel %vm6277, %v6271, %v5894
    %v6296 = vsel %vm6277, %v6272, %v5896
    %v6297 = vsel %vm6277, %v6273, %v5898
    %v6298 = vsel %vm6277, %v6274, %v5900
    %v6299 = vsel %vm6277, %v6275, %v5902
    %v6300 = vsel %vm6277, %v6276, %v5904
    %vm6301 = vcmask 785408
    %v6302 = vsel %vm6301, %v6278, %v5931
    %v6303 = vsel %vm6301, %v6279, %v5933
    %v6304 = vsel %vm6301, %v6280, %v5935
    %v6305 = vsel %vm6301, %v6281, %v5937
    %v6306 = vsel %vm6301, %v6282, %v5939
    %v6307 = vsel %vm6301, %v6283, %v5941
    %v6308 = vsel %vm6301, %v6284, %v5943
    %v6309 = vsel %vm6301, %v6285, %v5945
    %v6310 = vsel %vm6301, %v6286, %v5947
    %v6311 = vsel %vm6301, %v6287, %v5949
    %v6312 = vsel %vm6301, %v6288, %v5951
    %v6313 = vsel %vm6301, %v6289, %v5953
    %v6314 = vsel %vm6301, %v6290, %v5955
    %v6315 = vsel %vm6301, %v6291, %v5957
    %v6316 = vsel %vm6301, %v6292, %v5959
    %v6317 = vsel %vm6301, %v6293, %v5961
    %v6318 = vsel %vm6301, %v6294, %v5963
    %v6319 = vsel %vm6301, %v6295, %v5965
    %v6320 = vsel %vm6301, %v6296, %v5967
    %v6321 = vsel %vm6301, %v6297, %v5969
    %v6322 = vsel %vm6301, %v6298, %v5971
    %v6323 = vsel %vm6301, %v6299, %v5973
    %v6324 = vsel %vm6301, %v6300, %v5975
    %v6325 = vsel %vm40, %v5650, %v6023
    %v6326 = vsel %vm40, %v5651, %v6025
    %v6327 = vsel %vm40, %v5652, %v6027
    %v6328 = vsel %vm40, %v5653, %v6029
    %v6329 = vsel %vm40, %v5654, %v6031
    %v6330 = vsel %vm40, %v5655, %v6033
    %v6331 = vsel %vm40, %v5656, %v6035
    %v6332 = vsel %vm40, %v5657, %v6037
    %v6333 = vsel %vm40, %v5658, %v6039
    %v6334 = vsel %vm40, %v5659, %v6041
    %v6335 = vsel %vm40, %v5660, %v6043
    %v6336 = vsel %vm40, %v5661, %v6045
    %v6337 = vsel %vm40, %v5662, %v6047
    %v6338 = vsel %vm40, %v5663, %v6049
    %v6339 = vsel %vm40, %v5664, %v6051
    %v6340 = vsel %vm40, %v5665, %v6053
    %v6341 = vsel %vm40, %v5666, %v6055
    %v6342 = vsel %vm40, %v5667, %v6057
    %v6343 = vsel %vm40, %v5668, %v6059
    %v6344 = vsel %vm40, %v5669, %v6061
    %v6345 = vsel %vm40, %v5670, %v6063
    %v6346 = vsel %vm40, %v5671, %v6065
    %v6347 = vsel %vm40, %v5672, %v6067
    %v6348 = vsel %vm6277, %v6325, %v6094
    %v6349 = vsel %vm6277, %v6326, %v6096
    %v6350 = vsel %vm6277, %v6327, %v6098
    %v6351 = vsel %vm6277, %v6328, %v6100
    %v6352 = vsel %vm6277, %v6329, %v6102
    %v6353 = vsel %vm6277, %v6330, %v6104
    %v6354 = vsel %vm6277, %v6331, %v6106
    %v6355 = vsel %vm6277, %v6332, %v6108
    %v6356 = vsel %vm6277, %v6333, %v6110
    %v6357 = vsel %vm6277, %v6334, %v6112
    %v6358 = vsel %vm6277, %v6335, %v6114
    %v6359 = vsel %vm6277, %v6336, %v6116
    %v6360 = vsel %vm6277, %v6337, %v6118
    %v6361 = vsel %vm6277, %v6338, %v6120
    %v6362 = vsel %vm6277, %v6339, %v6122
    %v6363 = vsel %vm6277, %v6340, %v6124
    %v6364 = vsel %vm6277, %v6341, %v6126
    %v6365 = vsel %vm6277, %v6342, %v6128
    %v6366 = vsel %vm6277, %v6343, %v6130
    %v6367 = vsel %vm6277, %v6344, %v6132
    %v6368 = vsel %vm6277, %v6345, %v6134
    %v6369 = vsel %vm6277, %v6346, %v6136
    %v6370 = vsel %vm6277, %v6347, %v6138
    %v6371 = vsel %vm6301, %v6348, %v6186
    %v6372 = vsel %vm6301, %v6349, %v6188
    %v6373 = vsel %vm6301, %v6350, %v6190
    %v6374 = vsel %vm6301, %v6351, %v6192
    %v6375 = vsel %vm6301, %v6352, %v6194
    %v6376 = vsel %vm6301, %v6353, %v6196
    %v6377 = vsel %vm6301, %v6354, %v6198
    %v6378 = vsel %vm6301, %v6355, %v6200
    %v6379 = vsel %vm6301, %v6356, %v6202
    %v6380 = vsel %vm6301, %v6357, %v6204
    %v6381 = vsel %vm6301, %v6358, %v6206
    %v6382 = vsel %vm6301, %v6359, %v6208
    %v6383 = vsel %vm6301, %v6360, %v6210
    %v6384 = vsel %vm6301, %v6361, %v6212
    %v6385 = vsel %vm6301, %v6362, %v6214
    %v6386 = vsel %vm6301, %v6363, %v6216
    %v6387 = vsel %vm6301, %v6364, %v6218
    %v6388 = vsel %vm6301, %v6365, %v6220
    %v6389 = vsel %vm6301, %v6366, %v6222
    %v6390 = vsel %vm6301, %v6367, %v6224
    %v6391 = vsel %vm6301, %v6368, %v6226
    %v6392 = vsel %vm6301, %v6369, %v6228
    %v6393 = vsel %vm6301, %v6370, %v6230
    %v6394 = vpack.c.bf16 %v6303, %v6302
    %v6395 = vpack.c.bf16 %v6372, %v6371
    %v6396 = vpack.c.bf16 %v5722, %v5721
    %v6397 = vpack.c.bf16 %v6305, %v6304
    %v6398 = vpack.c.bf16 %v6374, %v6373
    %v6399 = vpack.c.bf16 %v5724, %v5723
    %v6400 = vpack.c.bf16 %v6307, %v6306
    %v6401 = vpack.c.bf16 %v6376, %v6375
    %v6402 = vpack.c.bf16 %v5726, %v5725
    %v6403 = vpack.c.bf16 %v6309, %v6308
    %v6404 = vpack.c.bf16 %v6378, %v6377
    %v6405 = vpack.c.bf16 %v5728, %v5727
    %v6406 = vpack.c.bf16 %v6311, %v6310
    %v6407 = vpack.c.bf16 %v6380, %v6379
    %v6408 = vpack.c.bf16 %v5730, %v5729
    %v6409 = vpack.c.bf16 %v6313, %v6312
    %v6410 = vpack.c.bf16 %v6382, %v6381
    %v6411 = vpack.c.bf16 %v5732, %v5731
    %v6412 = vpack.c.bf16 %v6315, %v6314
    %v6413 = vpack.c.bf16 %v6384, %v6383
    %v6414 = vpack.c.bf16 %v5734, %v5733
    %v6415 = vpack.c.bf16 %v6317, %v6316
    %v6416 = vpack.c.bf16 %v6386, %v6385
    %v6417 = vpack.c.bf16 %v5736, %v5735
    %v6418 = vpack.c.bf16 %v6319, %v6318
    %v6419 = vpack.c.bf16 %v6388, %v6387
    %v6420 = vpack.c.bf16 %v5738, %v5737
    %v6421 = vpack.c.bf16 %v6321, %v6320
    %v6422 = vpack.c.bf16 %v6390, %v6389
    %v6423 = vpack.c.bf16 %v5740, %v5739
    %v6424 = vpack.c.bf16 %v6323, %v6322
    %v6425 = vpack.c.bf16 %v6392, %v6391
    %v6426 = vpack.c.bf16 %v5742, %v5741
    %v6427 = vpack.c.bf16 %v6324, %v6324
    %v6428 = vpack.c.bf16 %v6393, %v6393
    %v6429 = vpack.c.bf16 %v5743, %v5743
    %v6430 = vld [vmem:[%s2] sm:$0xf]
    %v6431 = vld [vmem:[%s2 + $0x4] sm:$0xf]
    %v6432 = vld [vmem:[%s2 + $0x8] sm:$0xf]
    %v6433 = vld [vmem:[%s2 + $0xc] sm:$0xf]
    %v6434 = vld [vmem:[%s2 + $0x10] sm:$0xf]
    %v6435 = vld [vmem:[%s2 + $0x14] sm:$0xf]
    %v6436 = vld [vmem:[%s2 + $0x18] sm:$0xf]
    %v6437 = vld [vmem:[%s2 + $0x1c] sm:$0xf]
    %v6438 = vld [vmem:[%s2 + $0x20] sm:$0xf]
    %v6439 = vld [vmem:[%s2 + $0x24] sm:$0xf]
    %v6440 = vld [vmem:[%s2 + $0x28] sm:$0xf]
    %v6441 = vld [vmem:[%s2 + $0x2c] sm:$0xf]
    %v6442 = vld [vmem:[%s2 + $0x30] sm:$0xf]
    %v6443 = vld [vmem:[%s2 + $0x34] sm:$0xf]
    %v6444 = vld [vmem:[%s2 + $0x38] sm:$0xf]
    %v6445 = vld [vmem:[%s2 + $0x3c] sm:$0xf]
    %v6446 = vld [vmem:[%s2 + $0x40] sm:$0xf]
    %v6447 = vld [vmem:[%s2 + $0x44] sm:$0xf]
    %v6448 = vld [vmem:[%s2 + $0x48] sm:$0xf]
    %v6449 = vld [vmem:[%s2 + $0x4c] sm:$0xf]
    %v6450 = vld [vmem:[%s2 + $0x50] sm:$0xf]
    %v6451 = vld [vmem:[%s2 + $0x54] sm:$0xf]
    %v6452 = vld [vmem:[%s2 + $0x58] sm:$0xf]
    %v6453 = vld [vmem:[%s2 + $0x5c] sm:$0xf]
    %v6454 = vld [vmem:[%s2 + $0x60] sm:$0xf]
    %v6455 = vld [vmem:[%s2 + $0x64] sm:$0xf]
    %v6456 = vld [vmem:[%s2 + $0x68] sm:$0xf]
    %v6457 = vld [vmem:[%s2 + $0x6c] sm:$0xf]
    %v6458 = vld [vmem:[%s2 + $0x70] sm:$0xf]
    %v6459 = vld [vmem:[%s2 + $0x74] sm:$0xf]
    %v6460 = vld [vmem:[%s2 + $0x78] sm:$0xf]
    %v6461 = vld [vmem:[%s2 + $0x7c] sm:$0xf]
    %v6462 = vld [vmem:[%s2 + $0x80] sm:$0xf]
    %v6463 = vld [vmem:[%s2 + $0x84] sm:$0xf]
    %v6464 = vld [vmem:[%s2 + $0x88] sm:$0xf]
    %v6465 = vld [vmem:[%s2 + $0x8c] sm:$0xf]
    %v6502 = vunpack.c.l.b16 %v6430
    %v6503 = vunpack.c.l.b16 %v6431
    %v6504 = vunpack.c.l.b16 %v6432
    %v6505 = vunpack.c.l.b16 %v6433
    %v6506 = vunpack.c.l.b16 %v6434
    %v6507 = vunpack.c.l.b16 %v6435
    %v6508 = vunpack.c.l.b16 %v6436
    %v6509 = vunpack.c.l.b16 %v6437
    %v6510 = vunpack.c.l.b16 %v6438
    %v6511 = vunpack.c.l.b16 %v6439
    %v6512 = vunpack.c.l.b16 %v6440
    %v6513 = vunpack.c.l.b16 %v6441
    %v6514 = vunpack.c.l.b16 %v6442
    %v6515 = vunpack.c.l.b16 %v6443
    %v6516 = vunpack.c.l.b16 %v6444
    %v6517 = vunpack.c.l.b16 %v6445
    %v6518 = vunpack.c.l.b16 %v6446
    %v6519 = vunpack.c.l.b16 %v6447
    %v6520 = vunpack.c.l.b16 %v6448
    %v6521 = vunpack.c.l.b16 %v6449
    %v6522 = vunpack.c.l.b16 %v6450
    %v6523 = vunpack.c.l.b16 %v6451
    %v6524 = vunpack.c.l.b16 %v6452
    %v6525 = vunpack.c.l.b16 %v6453
    %v6526 = vunpack.c.l.b16 %v6454
    %v6527 = vunpack.c.l.b16 %v6455
    %v6528 = vunpack.c.l.b16 %v6456
    %v6529 = vunpack.c.l.b16 %v6457
    %v6530 = vunpack.c.l.b16 %v6458
    %v6531 = vunpack.c.l.b16 %v6459
    %v6532 = vunpack.c.l.b16 %v6460
    %v6533 = vunpack.c.l.b16 %v6461
    %v6534 = vunpack.c.l.b16 %v6462
    %v6535 = vunpack.c.l.b16 %v6463
    %v6536 = vunpack.c.l.b16 %v6464
    %v6537 = vunpack.c.l.b16 %v6465
    %v6538 = vpack.c.b16 %v6503, %v6502
    %v6539 = vpack.c.b16 %v6505, %v6504
    %v6540 = vpack.c.b16 %v6507, %v6506
    %v6541 = vpack.c.b16 %v6509, %v6508
    %v6542 = vpack.c.b16 %v6511, %v6510
    %v6543 = vpack.c.b16 %v6513, %v6512
    %v6544 = vpack.c.b16 %v6515, %v6514
    %v6545 = vpack.c.b16 %v6517, %v6516
    %v6546 = vpack.c.b16 %v6519, %v6518
    %v6547 = vpack.c.b16 %v6521, %v6520
    %v6548 = vpack.c.b16 %v6523, %v6522
    %v6549 = vpack.c.b16 %v6525, %v6524
    %v6550 = vpack.c.b16 %v6527, %v6526
    %v6551 = vpack.c.b16 %v6529, %v6528
    %v6552 = vpack.c.b16 %v6531, %v6530
    %v6553 = vpack.c.b16 %v6533, %v6532
    %v6554 = vpack.c.b16 %v6535, %v6534
    %v6555 = vpack.c.b16 %v6537, %v6536
    %v6575 = vsel %vm40, %v6396, 0
    %v6578 = vsel %vm40, %v6399, 0
    %v6581 = vsel %vm40, %v6402, 0
    %v6584 = vsel %vm40, %v6405, 0
    %v6587 = vsel %vm40, %v6408, 0
    %v6590 = vsel %vm40, %v6411, 0
    %v6593 = vsel %vm40, %v6414, 0
    %v6596 = vsel %vm40, %v6417, 0
    %v6599 = vsel %vm40, %v6420, 0
    %v6602 = vsel %vm40, %v6423, 0
    %v6605 = vsel %vm40, %v6426, 0
    %v6608 = vsel %vm40, %v6429, 0
    %6610 = vmatprep.subr.bf16.mxu0 0
    %6611 = vmatpush1.bf16.msra.mxu0 %v6538
    %6612 = vmatprep.subr.bf16.mxu0 0
    %6613 = vmatpush1.bf16.msra.mxu0 %v6539
    %6614 = vmatprep.subr.bf16.mxu0 0
    %6615 = vmatpush1.bf16.msra.mxu0 %v6540
    %6616 = vmatprep.subr.bf16.mxu0 0
    %6617 = vmatpush1.bf16.msra.mxu0 %v6541
    %6618 = vmatprep.subr.bf16.mxu0 0
    %6619 = vmatpush1.bf16.msra.mxu0 %v6542
    %6620 = vmatprep.subr.bf16.mxu0 0
    %6621 = vmatpush1.bf16.msra.mxu0 %v6543
    %6622 = vmatprep.subr.bf16.mxu0 0
    %6623 = vmatpush1.bf16.msra.mxu0 %v6544
    %6624 = vmatprep.subr.bf16.mxu0 0
    %6625 = vmatpush1.bf16.msra.mxu0 %v6545
    %6626 = vmatprep.subr.bf16.mxu0 0
    %6627 = vmatpush1.bf16.msra.mxu0 %v6546
    %6628 = vmatprep.subr.bf16.mxu0 0
    %6629 = vmatpush1.bf16.msra.mxu0 %v6547
    %6630 = vmatprep.subr.bf16.mxu0 0
    %6631 = vmatpush1.bf16.msra.mxu0 %v6548
    %6632 = vmatprep.subr.bf16.mxu0 0
    %6633 = vmatpush1.bf16.msra.mxu0 %v6549
    %6634 = vmatprep.subr.bf16.mxu0 0
    %6635 = vmatpush1.bf16.msra.mxu0 %v6550
    %6636 = vmatprep.subr.bf16.mxu0 0
    %6637 = vmatpush1.bf16.msra.mxu0 %v6551
    %6638 = vmatprep.subr.bf16.mxu0 0
    %6639 = vmatpush1.bf16.msra.mxu0 %v6552
    %6640 = vmatprep.subr.bf16.mxu0 0
    %6641 = vmatpush1.bf16.msra.mxu0 %v6553
    %6642 = vmatprep.mubr.bf16.mxu0 %v6395
    %6643 = vmatmul.mubr.bf16.gmra.mrb[0].mxu0 %v6394
    %v6644 = vpop.f32.mrb[0].mxu0
    %v6645 = vadd.f32 0.0, %v6644
    %v6646 = vpop.f32.mrb[0].mxu0
    %v6647 = vpop.f32.mrb[0].mxu0
    %v6648 = vadd.f32 0.0, %v6647
    %v6649 = vpop.f32.mrb[0].mxu0
    %6650 = vmatprep.mubr.bf16.mxu0 %v6398
    %6651 = vmatmul.mubr.bf16.gmra.mrb[0].mxu0 %v6397
    %v6652 = vpop.f32.mrb[0].mxu0
    %v6653 = vadd.f32 0.0, %v6652
    %v6654 = vpop.f32.mrb[0].mxu0
    %v6655 = vpop.f32.mrb[0].mxu0
    %v6656 = vadd.f32 0.0, %v6655
    %v6657 = vpop.f32.mrb[0].mxu0
    %6658 = vmatprep.mubr.bf16.mxu0 %v6401
    %6659 = vmatmul.mubr.bf16.gmra.mrb[0].mxu0 %v6400
    %v6660 = vpop.f32.mrb[0].mxu0
    %v6661 = vadd.f32 0.0, %v6660
    %v6662 = vpop.f32.mrb[0].mxu0
    %v6663 = vpop.f32.mrb[0].mxu0
    %v6664 = vadd.f32 0.0, %v6663
    %v6665 = vpop.f32.mrb[0].mxu0
    %6666 = vmatprep.mubr.bf16.mxu0 %v6404
    %6667 = vmatmul.mubr.bf16.gmra.mrb[0].mxu0 %v6403
    %v6668 = vpop.f32.mrb[0].mxu0
    %v6669 = vadd.f32 0.0, %v6668
    %v6670 = vpop.f32.mrb[0].mxu0
    %v6671 = vpop.f32.mrb[0].mxu0
    %v6672 = vadd.f32 0.0, %v6671
    %v6673 = vpop.f32.mrb[0].mxu0
    %6674 = vmatprep.mubr.bf16.mxu0 %v6407
    %6675 = vmatmul.mubr.bf16.gmra.mrb[0].mxu0 %v6406
    %v6676 = vpop.f32.mrb[0].mxu0
    %v6677 = vadd.f32 0.0, %v6676
    %v6678 = vpop.f32.mrb[0].mxu0
    %v6679 = vpop.f32.mrb[0].mxu0
    %v6680 = vadd.f32 0.0, %v6679
    %v6681 = vpop.f32.mrb[0].mxu0
    %6682 = vmatprep.mubr.bf16.mxu0 %v6410
    %6683 = vmatmul.mubr.bf16.gmra.mrb[0].mxu0 %v6409
    %v6684 = vpop.f32.mrb[0].mxu0
    %v6685 = vadd.f32 0.0, %v6684
    %v6686 = vpop.f32.mrb[0].mxu0
    %v6687 = vpop.f32.mrb[0].mxu0
    %v6688 = vadd.f32 0.0, %v6687
    %v6689 = vpop.f32.mrb[0].mxu0
    %6690 = vmatprep.mubr.bf16.mxu0 %v6413
    %6691 = vmatmul.mubr.bf16.gmra.mrb[0].mxu0 %v6412
    %v6692 = vpop.f32.mrb[0].mxu0
    %v6693 = vadd.f32 0.0, %v6692
    %v6694 = vpop.f32.mrb[0].mxu0
    %v6695 = vpop.f32.mrb[0].mxu0
    %v6696 = vadd.f32 0.0, %v6695
    %v6697 = vpop.f32.mrb[0].mxu0
    %6698 = vmatprep.mubr.bf16.mxu0 %v6416
    %6699 = vmatmul.mubr.bf16.gmra.mrb[0].mxu0 %v6415
    %v6700 = vpop.f32.mrb[0].mxu0
    %v6701 = vadd.f32 0.0, %v6700
    %v6702 = vpop.f32.mrb[0].mxu0
    %v6703 = vpop.f32.mrb[0].mxu0
    %v6704 = vadd.f32 0.0, %v6703
    %v6705 = vpop.f32.mrb[0].mxu0
    %6706 = vmatprep.mubr.bf16.mxu0 %v6419
    %6707 = vmatmul.mubr.bf16.gmra.mrb[0].mxu0 %v6418
    %v6708 = vpop.f32.mrb[0].mxu0
    %v6709 = vadd.f32 0.0, %v6708
    %v6710 = vpop.f32.mrb[0].mxu0
    %v6711 = vpop.f32.mrb[0].mxu0
    %v6712 = vadd.f32 0.0, %v6711
    %v6713 = vpop.f32.mrb[0].mxu0
    %6714 = vmatprep.mubr.bf16.mxu0 %v6422
    %6715 = vmatmul.mubr.bf16.gmra.mrb[0].mxu0 %v6421
    %v6716 = vpop.f32.mrb[0].mxu0
    %v6717 = vadd.f32 0.0, %v6716
    %v6718 = vpop.f32.mrb[0].mxu0
    %v6719 = vpop.f32.mrb[0].mxu0
    %v6720 = vadd.f32 0.0, %v6719
    %v6721 = vpop.f32.mrb[0].mxu0
    %6722 = vmatprep.mubr.bf16.mxu0 %v6425
    %6723 = vmatmul.mubr.bf16.gmra.mrb[0].mxu0 %v6424
    %v6724 = vpop.f32.mrb[0].mxu0
    %v6725 = vadd.f32 0.0, %v6724
    %v6726 = vpop.f32.mrb[0].mxu0
    %v6727 = vpop.f32.mrb[0].mxu0
    %v6728 = vadd.f32 0.0, %v6727
    %v6729 = vpop.f32.mrb[0].mxu0
    %6730 = vmatprep.mubr.bf16.mxu0 %v6428
    %6731 = vmatmul.mubr.bf16.gmra.mrb[0].mxu0 %v6427
    %v6732 = vpop.f32.mrb[0].mxu0
    %v6733 = vadd.f32 0.0, %v6732
    %v6734 = vpop.f32.mrb[0].mxu0
    %v6735 = vpop.f32.mrb[0].mxu0
    %v6736 = vpop.f32.mrb[0].mxu0
    %6737 = vdwg.mxu0
    %6738 = vmatprep.subr.bf16.mxu0 0
    %6739 = vmatpush1.bf16.msra.mxu0 %v6554
    %6740 = vmatprep.subr.bf16.mxu0 0
    %6741 = vmatpush1.bf16.msra.mxu0 %v6555
    %6742 = vmatprep.subr.bf16.mxu0 0
    %6743 = vmatpush1.bf16.msra.mxu0 0
    %6744 = vmatprep.subr.bf16.mxu0 0
    %6745 = vmatpush1.bf16.msra.mxu0 0
    %6746 = vmatprep.subr.bf16.mxu0 0
    %6747 = vmatpush1.bf16.msra.mxu0 0
    %6748 = vmatprep.subr.bf16.mxu0 0
    %6749 = vmatpush1.bf16.msra.mxu0 0
    %6750 = vmatprep.subr.bf16.mxu0 0
    %6751 = vmatpush1.bf16.msra.mxu0 0
    %6752 = vmatprep.subr.bf16.mxu0 0
    %6753 = vmatpush1.bf16.msra.mxu0 0
    %6754 = vmatprep.subr.bf16.mxu0 0
    %6755 = vmatpush1.bf16.msra.mxu0 0
    %6756 = vmatprep.subr.bf16.mxu0 0
    %6757 = vmatpush1.bf16.msra.mxu0 0
    %6758 = vmatprep.subr.bf16.mxu0 0
    %6759 = vmatpush1.bf16.msra.mxu0 0
    %6760 = vmatprep.subr.bf16.mxu0 0
    %6761 = vmatpush1.bf16.msra.mxu0 0
    %6762 = vmatprep.subr.bf16.mxu0 0
    %6763 = vmatpush1.bf16.msra.mxu0 0
    %6764 = vmatprep.subr.bf16.mxu0 0
    %6765 = vmatpush1.bf16.msra.mxu0 0
    %6766 = vmatprep.subr.bf16.mxu0 0
    %6767 = vmatpush1.bf16.msra.mxu0 0
    %6768 = vmatprep.subr.bf16.mxu0 0
    %6769 = vmatpush1.bf16.msra.mxu0 0
    %6770 = vmatprep.mubr.bf16.mxu0 0
    %6771 = vmatmul.mubr.bf16.gmra.mrb[0].mxu0 %v6575
    %v6772 = vpop.f32.mrb[0].mxu0
    %v6773 = vadd.f32 %v6645, %v6772
    %v6774 = vpop.f32.mrb[0].mxu0
    %v6775 = vpop.f32.mrb[0].mxu0
    %v6776 = vadd.f32 %v6648, %v6775
    %v6777 = vpop.f32.mrb[0].mxu0
    %6778 = vmatprep.mubr.bf16.mxu0 0
    %6779 = vmatmul.mubr.bf16.gmra.mrb[0].mxu0 %v6578
    %v6780 = vpop.f32.mrb[0].mxu0
    %v6781 = vadd.f32 %v6653, %v6780
    %v6782 = vpop.f32.mrb[0].mxu0
    %v6783 = vpop.f32.mrb[0].mxu0
    %v6784 = vadd.f32 %v6656, %v6783
    %v6785 = vpop.f32.mrb[0].mxu0
    %6786 = vmatprep.mubr.bf16.mxu0 0
    %6787 = vmatmul.mubr.bf16.gmra.mrb[0].mxu0 %v6581
    %v6788 = vpop.f32.mrb[0].mxu0
    %v6789 = vadd.f32 %v6661, %v6788
    %v6790 = vpop.f32.mrb[0].mxu0
    %v6791 = vpop.f32.mrb[0].mxu0
    %v6792 = vadd.f32 %v6664, %v6791
    %v6793 = vpop.f32.mrb[0].mxu0
    %6794 = vmatprep.mubr.bf16.mxu0 0
    %6795 = vmatmul.mubr.bf16.gmra.mrb[0].mxu0 %v6584
    %v6796 = vpop.f32.mrb[0].mxu0
    %v6797 = vadd.f32 %v6669, %v6796
    %v6798 = vpop.f32.mrb[0].mxu0
    %v6799 = vpop.f32.mrb[0].mxu0
    %v6800 = vadd.f32 %v6672, %v6799
    %v6801 = vpop.f32.mrb[0].mxu0
    %6802 = vmatprep.mubr.bf16.mxu0 0
    %6803 = vmatmul.mubr.bf16.gmra.mrb[0].mxu0 %v6587
    %v6804 = vpop.f32.mrb[0].mxu0
    %v6805 = vadd.f32 %v6677, %v6804
    %v6806 = vpop.f32.mrb[0].mxu0
    %v6807 = vpop.f32.mrb[0].mxu0
    %v6808 = vadd.f32 %v6680, %v6807
    %v6809 = vpop.f32.mrb[0].mxu0
    %6810 = vmatprep.mubr.bf16.mxu0 0
    %6811 = vmatmul.mubr.bf16.gmra.mrb[0].mxu0 %v6590
    %v6812 = vpop.f32.mrb[0].mxu0
    %v6813 = vadd.f32 %v6685, %v6812
    %v6814 = vpop.f32.mrb[0].mxu0
    %v6815 = vpop.f32.mrb[0].mxu0
    %v6816 = vadd.f32 %v6688, %v6815
    %v6817 = vpop.f32.mrb[0].mxu0
    %6818 = vmatprep.mubr.bf16.mxu0 0
    %6819 = vmatmul.mubr.bf16.gmra.mrb[0].mxu0 %v6593
    %v6820 = vpop.f32.mrb[0].mxu0
    %v6821 = vadd.f32 %v6693, %v6820
    %v6822 = vpop.f32.mrb[0].mxu0
    %v6823 = vpop.f32.mrb[0].mxu0
    %v6824 = vadd.f32 %v6696, %v6823
    %v6825 = vpop.f32.mrb[0].mxu0
    %6826 = vmatprep.mubr.bf16.mxu0 0
    %6827 = vmatmul.mubr.bf16.gmra.mrb[0].mxu0 %v6596
    %v6828 = vpop.f32.mrb[0].mxu0
    %v6829 = vadd.f32 %v6701, %v6828
    %v6830 = vpop.f32.mrb[0].mxu0
    %v6831 = vpop.f32.mrb[0].mxu0
    %v6832 = vadd.f32 %v6704, %v6831
    %v6833 = vpop.f32.mrb[0].mxu0
    %6834 = vmatprep.mubr.bf16.mxu0 0
    %6835 = vmatmul.mubr.bf16.gmra.mrb[0].mxu0 %v6599
    %v6836 = vpop.f32.mrb[0].mxu0
    %v6837 = vadd.f32 %v6709, %v6836
    %v6838 = vpop.f32.mrb[0].mxu0
    %v6839 = vpop.f32.mrb[0].mxu0
    %v6840 = vadd.f32 %v6712, %v6839
    %v6841 = vpop.f32.mrb[0].mxu0
    %6842 = vmatprep.mubr.bf16.mxu0 0
    %6843 = vmatmul.mubr.bf16.gmra.mrb[0].mxu0 %v6602
    %v6844 = vpop.f32.mrb[0].mxu0
    %v6845 = vadd.f32 %v6717, %v6844
    %v6846 = vpop.f32.mrb[0].mxu0
    %v6847 = vpop.f32.mrb[0].mxu0
    %v6848 = vadd.f32 %v6720, %v6847
    %v6849 = vpop.f32.mrb[0].mxu0
    %6850 = vmatprep.mubr.bf16.mxu0 0
    %6851 = vmatmul.mubr.bf16.gmra.mrb[0].mxu0 %v6605
    %v6852 = vpop.f32.mrb[0].mxu0
    %v6853 = vadd.f32 %v6725, %v6852
    %v6854 = vpop.f32.mrb[0].mxu0
    %v6855 = vpop.f32.mrb[0].mxu0
    %v6856 = vadd.f32 %v6728, %v6855
    %v6857 = vpop.f32.mrb[0].mxu0
    %6858 = vmatprep.mubr.bf16.mxu0 0
    %6859 = vmatmul.mubr.bf16.gmra.mrb[0].mxu0 %v6608
    %v6860 = vpop.f32.mrb[0].mxu0
    %v6861 = vadd.f32 %v6733, %v6860
    %v6862 = vpop.f32.mrb[0].mxu0
    %v6863 = vpop.f32.mrb[0].mxu0
    %v6864 = vpop.f32.mrb[0].mxu0
    %6865 = vdwg.mxu0
    %v6866 = vld [vmem:[%s6] sm:$0xff]
    %v6867 = vld [vmem:[%s6 + $0x8] sm:$0xff]
    %v6868 = vld [vmem:[%s6 + $0x10] sm:$0xff]
    %v6869 = vld [vmem:[%s6 + $0x18] sm:$0xff]
    %v6870 = vld [vmem:[%s6 + $0x20] sm:$0xff]
    %v6871 = vld [vmem:[%s6 + $0x28] sm:$0xff]
    %v6872 = vld [vmem:[%s6 + $0x30] sm:$0xff]
    %v6873 = vld [vmem:[%s6 + $0x38] sm:$0xff]
    %v6874 = vld [vmem:[%s6 + $0x40] sm:$0xff]
    %v6875 = vld [vmem:[%s6 + $0x48] sm:$0xff]
    %v6876 = vld [vmem:[%s6 + $0x50] sm:$0xff]
    %v6877 = vld [vmem:[%s6 + $0x58] sm:$0xff]
    %v6878 = vld [vmem:[%s6 + $0x60] sm:$0xff]
    %v6879 = vld [vmem:[%s6 + $0x68] sm:$0xff]
    %v6880 = vld [vmem:[%s6 + $0x70] sm:$0xff]
    %v6881 = vld [vmem:[%s6 + $0x78] sm:$0xff]
    %v6882 = vld [vmem:[%s6 + $0x80] sm:$0xff]
    %v6883 = vld [vmem:[%s6 + $0x88] sm:$0xff]
    %v6884 = vld [vmem:[%s6 + $0x90] sm:$0xff]
    %v6885 = vld [vmem:[%s6 + $0x98] sm:$0xff]
    %v6886 = vld [vmem:[%s6 + $0xa0] sm:$0xff]
    %v6887 = vld [vmem:[%s6 + $0xa8] sm:$0xff]
    %v6888 = vld [vmem:[%s6 + $0xb0] sm:$0x3]
    %6890 = vset.pattern.permute.xlu0 0
    %6891 = vperm.xlu0 %6890, %v6866
    %v6892 = vpop.permute.xlu0 %6891
    %6895 = vset.pattern.permute.xlu0 0
    %6896 = vperm.xlu0 %6895, %v6867
    %v6897 = vpop.permute.xlu0 %6896
    %6900 = vset.pattern.permute.xlu0 0
    %6901 = vperm.xlu0 %6900, %v6868
    %v6902 = vpop.permute.xlu0 %6901
    %6905 = vset.pattern.permute.xlu0 0
    %6906 = vperm.xlu0 %6905, %v6869
    %v6907 = vpop.permute.xlu0 %6906
    %6910 = vset.pattern.permute.xlu0 0
    %6911 = vperm.xlu0 %6910, %v6870
    %v6912 = vpop.permute.xlu0 %6911
    %6915 = vset.pattern.permute.xlu0 0
    %6916 = vperm.xlu0 %6915, %v6871
    %v6917 = vpop.permute.xlu0 %6916
    %6920 = vset.pattern.permute.xlu0 0
    %6921 = vperm.xlu0 %6920, %v6872
    %v6922 = vpop.permute.xlu0 %6921
    %6925 = vset.pattern.permute.xlu0 0
    %6926 = vperm.xlu0 %6925, %v6873
    %v6927 = vpop.permute.xlu0 %6926
    %6930 = vset.pattern.permute.xlu0 0
    %6931 = vperm.xlu0 %6930, %v6874
    %v6932 = vpop.permute.xlu0 %6931
    %6935 = vset.pattern.permute.xlu0 0
    %6936 = vperm.xlu0 %6935, %v6875
    %v6937 = vpop.permute.xlu0 %6936
    %6940 = vset.pattern.permute.xlu0 0
    %6941 = vperm.xlu0 %6940, %v6876
    %v6942 = vpop.permute.xlu0 %6941
    %6945 = vset.pattern.permute.xlu0 0
    %6946 = vperm.xlu0 %6945, %v6877
    %v6947 = vpop.permute.xlu0 %6946
    %6950 = vset.pattern.permute.xlu0 0
    %6951 = vperm.xlu0 %6950, %v6878
    %v6952 = vpop.permute.xlu0 %6951
    %6955 = vset.pattern.permute.xlu0 0
    %6956 = vperm.xlu0 %6955, %v6879
    %v6957 = vpop.permute.xlu0 %6956
    %6960 = vset.pattern.permute.xlu0 0
    %6961 = vperm.xlu0 %6960, %v6880
    %v6962 = vpop.permute.xlu0 %6961
    %6965 = vset.pattern.permute.xlu0 0
    %6966 = vperm.xlu0 %6965, %v6881
    %v6967 = vpop.permute.xlu0 %6966
    %6970 = vset.pattern.permute.xlu0 0
    %6971 = vperm.xlu0 %6970, %v6882
    %v6972 = vpop.permute.xlu0 %6971
    %6975 = vset.pattern.permute.xlu0 0
    %6976 = vperm.xlu0 %6975, %v6883
    %v6977 = vpop.permute.xlu0 %6976
    %6980 = vset.pattern.permute.xlu0 0
    %6981 = vperm.xlu0 %6980, %v6884
    %v6982 = vpop.permute.xlu0 %6981
    %6985 = vset.pattern.permute.xlu0 0
    %6986 = vperm.xlu0 %6985, %v6885
    %v6987 = vpop.permute.xlu0 %6986
    %6990 = vset.pattern.permute.xlu0 0
    %6991 = vperm.xlu0 %6990, %v6886
    %v6992 = vpop.permute.xlu0 %6991
    %6995 = vset.pattern.permute.xlu0 0
    %6996 = vperm.xlu0 %6995, %v6887
    %v6997 = vpop.permute.xlu0 %6996
    %7000 = vset.pattern.permute.xlu0 0
    %7001 = vperm.xlu0 %7000, %v6888
    %v7002 = vpop.permute.xlu0 %7001
    %v7004 = vmul.f32 %v6773, %v6892
    %v7005 = vmul.f32 %v6776, %v6897
    %v7006 = vmul.f32 %v6781, %v6902
    %v7007 = vmul.f32 %v6784, %v6907
    %v7008 = vmul.f32 %v6789, %v6912
    %v7009 = vmul.f32 %v6792, %v6917
    %v7010 = vmul.f32 %v6797, %v6922
    %v7011 = vmul.f32 %v6800, %v6927
    %v7012 = vmul.f32 %v6805, %v6932
    %v7013 = vmul.f32 %v6808, %v6937
    %v7014 = vmul.f32 %v6813, %v6942
    %v7015 = vmul.f32 %v6816, %v6947
    %v7016 = vmul.f32 %v6821, %v6952
    %v7017 = vmul.f32 %v6824, %v6957
    %v7018 = vmul.f32 %v6829, %v6962
    %v7019 = vmul.f32 %v6832, %v6967
    %v7020 = vmul.f32 %v6837, %v6972
    %v7021 = vmul.f32 %v6840, %v6977
    %v7022 = vmul.f32 %v6845, %v6982
    %v7023 = vmul.f32 %v6848, %v6987
    %v7024 = vmul.f32 %v6853, %v6992
    %v7025 = vmul.f32 %v6856, %v6997
    %v7026 = vmul.f32 %v6861, %v7002
    %v7027 = vsel %vm40, %v7004, 0.0
    %v7028 = vsel %vm40, %v7005, 0.0
    %v7029 = vadd.f32 %v7027, %v7028
    %v7030 = vsel %vm40, %v7006, 0.0
    %v7031 = vadd.f32 %v7029, %v7030
    %v7032 = vsel %vm40, %v7007, 0.0
    %v7033 = vadd.f32 %v7031, %v7032
    %v7034 = vsel %vm40, %v7008, 0.0
    %v7035 = vadd.f32 %v7033, %v7034
    %v7036 = vsel %vm40, %v7009, 0.0
    %v7037 = vadd.f32 %v7035, %v7036
    %v7038 = vsel %vm40, %v7010, 0.0
    %v7039 = vadd.f32 %v7037, %v7038
    %v7040 = vsel %vm40, %v7011, 0.0
    %v7041 = vadd.f32 %v7039, %v7040
    %v7042 = vsel %vm40, %v7012, 0.0
    %v7043 = vadd.f32 %v7041, %v7042
    %v7044 = vsel %vm40, %v7013, 0.0
    %v7045 = vadd.f32 %v7043, %v7044
    %v7046 = vsel %vm40, %v7014, 0.0
    %v7047 = vadd.f32 %v7045, %v7046
    %v7048 = vsel %vm40, %v7015, 0.0
    %v7049 = vadd.f32 %v7047, %v7048
    %v7050 = vsel %vm40, %v7016, 0.0
    %v7051 = vadd.f32 %v7049, %v7050
    %v7052 = vsel %vm40, %v7017, 0.0
    %v7053 = vadd.f32 %v7051, %v7052
    %v7054 = vsel %vm40, %v7018, 0.0
    %v7055 = vadd.f32 %v7053, %v7054
    %v7056 = vsel %vm40, %v7019, 0.0
    %v7057 = vadd.f32 %v7055, %v7056
    %v7058 = vsel %vm40, %v7020, 0.0
    %v7059 = vadd.f32 %v7057, %v7058
    %v7060 = vsel %vm40, %v7021, 0.0
    %v7061 = vadd.f32 %v7059, %v7060
    %v7062 = vsel %vm40, %v7022, 0.0
    %v7063 = vadd.f32 %v7061, %v7062
    %v7064 = vsel %vm40, %v7023, 0.0
    %v7065 = vadd.f32 %v7063, %v7064
    %v7066 = vsel %vm40, %v7024, 0.0
    %v7067 = vadd.f32 %v7065, %v7066
    %v7068 = vsel %vm40, %v7025, 0.0
    %v7069 = vadd.f32 %v7067, %v7068
    %v7070 = vsel %vm4778, %v7026, 0.0
    %v7071 = vadd.f32 %v7069, %v7070
    %v7072 = vrot.slane %v7071, 4
    %v7073 = vadd.f32 %v7071, %v7072
    %v7074 = vrot.slane %v7073, 2
    %v7075 = vadd.f32 %v7073, %v7074
    %v7076 = vrot.slane %v7075, 1
    %v7077 = vadd.f32 %v7075, %v7076
    %v7078 = vmul.f32 %v7077, 0.0078125
    %v7079 = vsub.f32 %v6773, %v7078
    %v7080 = vsub.f32 %v6776, %v7078
    %v7081 = vsub.f32 %v6781, %v7078
    %v7082 = vsub.f32 %v6784, %v7078
    %v7083 = vsub.f32 %v6789, %v7078
    %v7084 = vsub.f32 %v6792, %v7078
    %v7085 = vsub.f32 %v6797, %v7078
    %v7086 = vsub.f32 %v6800, %v7078
    %v7087 = vsub.f32 %v6805, %v7078
    %v7088 = vsub.f32 %v6808, %v7078
    %v7089 = vsub.f32 %v6813, %v7078
    %v7090 = vsub.f32 %v6816, %v7078
    %v7091 = vsub.f32 %v6821, %v7078
    %v7092 = vsub.f32 %v6824, %v7078
    %v7093 = vsub.f32 %v6829, %v7078
    %v7094 = vsub.f32 %v6832, %v7078
    %v7095 = vsub.f32 %v6837, %v7078
    %v7096 = vsub.f32 %v6840, %v7078
    %v7097 = vsub.f32 %v6845, %v7078
    %v7098 = vsub.f32 %v6848, %v7078
    %v7099 = vsub.f32 %v6853, %v7078
    %v7100 = vsub.f32 %v6856, %v7078
    %v7101 = vsub.f32 %v6861, %v7078
    %v7102 = vmul.f32 %v7079, %v7079
    %v7103 = vmul.f32 %v7080, %v7080
    %v7104 = vmul.f32 %v7081, %v7081
    %v7105 = vmul.f32 %v7082, %v7082
    %v7106 = vmul.f32 %v7083, %v7083
    %v7107 = vmul.f32 %v7084, %v7084
    %v7108 = vmul.f32 %v7085, %v7085
    %v7109 = vmul.f32 %v7086, %v7086
    %v7110 = vmul.f32 %v7087, %v7087
    %v7111 = vmul.f32 %v7088, %v7088
    %v7112 = vmul.f32 %v7089, %v7089
    %v7113 = vmul.f32 %v7090, %v7090
    %v7114 = vmul.f32 %v7091, %v7091
    %v7115 = vmul.f32 %v7092, %v7092
    %v7116 = vmul.f32 %v7093, %v7093
    %v7117 = vmul.f32 %v7094, %v7094
    %v7118 = vmul.f32 %v7095, %v7095
    %v7119 = vmul.f32 %v7096, %v7096
    %v7120 = vmul.f32 %v7097, %v7097
    %v7121 = vmul.f32 %v7098, %v7098
    %v7122 = vmul.f32 %v7099, %v7099
    %v7123 = vmul.f32 %v7100, %v7100
    %v7124 = vmul.f32 %v7101, %v7101
    %v7125 = vmul.f32 %v7102, %v6892
    %v7126 = vmul.f32 %v7103, %v6897
    %v7127 = vmul.f32 %v7104, %v6902
    %v7128 = vmul.f32 %v7105, %v6907
    %v7129 = vmul.f32 %v7106, %v6912
    %v7130 = vmul.f32 %v7107, %v6917
    %v7131 = vmul.f32 %v7108, %v6922
    %v7132 = vmul.f32 %v7109, %v6927
    %v7133 = vmul.f32 %v7110, %v6932
    %v7134 = vmul.f32 %v7111, %v6937
    %v7135 = vmul.f32 %v7112, %v6942
    %v7136 = vmul.f32 %v7113, %v6947
    %v7137 = vmul.f32 %v7114, %v6952
    %v7138 = vmul.f32 %v7115, %v6957
    %v7139 = vmul.f32 %v7116, %v6962
    %v7140 = vmul.f32 %v7117, %v6967
    %v7141 = vmul.f32 %v7118, %v6972
    %v7142 = vmul.f32 %v7119, %v6977
    %v7143 = vmul.f32 %v7120, %v6982
    %v7144 = vmul.f32 %v7121, %v6987
    %v7145 = vmul.f32 %v7122, %v6992
    %v7146 = vmul.f32 %v7123, %v6997
    %v7147 = vmul.f32 %v7124, %v7002
    %v7148 = vsel %vm40, %v7125, 0.0
    %v7149 = vsel %vm40, %v7126, 0.0
    %v7150 = vadd.f32 %v7148, %v7149
    %v7151 = vsel %vm40, %v7127, 0.0
    %v7152 = vadd.f32 %v7150, %v7151
    %v7153 = vsel %vm40, %v7128, 0.0
    %v7154 = vadd.f32 %v7152, %v7153
    %v7155 = vsel %vm40, %v7129, 0.0
    %v7156 = vadd.f32 %v7154, %v7155
    %v7157 = vsel %vm40, %v7130, 0.0
    %v7158 = vadd.f32 %v7156, %v7157
    %v7159 = vsel %vm40, %v7131, 0.0
    %v7160 = vadd.f32 %v7158, %v7159
    %v7161 = vsel %vm40, %v7132, 0.0
    %v7162 = vadd.f32 %v7160, %v7161
    %v7163 = vsel %vm40, %v7133, 0.0
    %v7164 = vadd.f32 %v7162, %v7163
    %v7165 = vsel %vm40, %v7134, 0.0
    %v7166 = vadd.f32 %v7164, %v7165
    %v7167 = vsel %vm40, %v7135, 0.0
    %v7168 = vadd.f32 %v7166, %v7167
    %v7169 = vsel %vm40, %v7136, 0.0
    %v7170 = vadd.f32 %v7168, %v7169
    %v7171 = vsel %vm40, %v7137, 0.0
    %v7172 = vadd.f32 %v7170, %v7171
    %v7173 = vsel %vm40, %v7138, 0.0
    %v7174 = vadd.f32 %v7172, %v7173
    %v7175 = vsel %vm40, %v7139, 0.0
    %v7176 = vadd.f32 %v7174, %v7175
    %v7177 = vsel %vm40, %v7140, 0.0
    %v7178 = vadd.f32 %v7176, %v7177
    %v7179 = vsel %vm40, %v7141, 0.0
    %v7180 = vadd.f32 %v7178, %v7179
    %v7181 = vsel %vm40, %v7142, 0.0
    %v7182 = vadd.f32 %v7180, %v7181
    %v7183 = vsel %vm40, %v7143, 0.0
    %v7184 = vadd.f32 %v7182, %v7183
    %v7185 = vsel %vm40, %v7144, 0.0
    %v7186 = vadd.f32 %v7184, %v7185
    %v7187 = vsel %vm40, %v7145, 0.0
    %v7188 = vadd.f32 %v7186, %v7187
    %v7189 = vsel %vm40, %v7146, 0.0
    %v7190 = vadd.f32 %v7188, %v7189
    %v7191 = vsel %vm4778, %v7147, 0.0
    %v7192 = vadd.f32 %v7190, %v7191
    %v7193 = vrot.slane %v7192, 4
    %v7194 = vadd.f32 %v7192, %v7193
    %v7195 = vrot.slane %v7194, 2
    %v7196 = vadd.f32 %v7194, %v7195
    %v7197 = vrot.slane %v7196, 1
    %v7198 = vadd.f32 %v7196, %v7197
    %v7199 = vmul.f32 %v7198, 0.0078125
    %s7200 = scalar_lea.vmem %s3, 1
    %v7201 = vld [vmem:[%s7200] sm:$0x1]
    %v7202 = vadd.f32 %v7199, 1e-05
    %v7203 = vrsqrt.pop %v7202
    %v7204 = vmul.f32 %v7201, %v7203
    %s7205 = scalar_lea.vmem %s4, 1
    %v7206 = vld [vmem:[%s7205] sm:$0x1]
    %v7207 = vmul.f32 %v7078, %v7204
    %v7208 = vsub.f32 %v7206, %v7207
    %v7210 = vlaneseq
    %v7211 = vshrl.u32 %v7210, 7
    %v7212 = vsub.s32 0, %v7211
    %v7213 = vrot.slane %v7204, %v7212
    %v7216 = vlaneseq
    %v7217 = vshrl.u32 %v7216, 7
    %v7218 = vsub.s32 0, %v7217
    %v7219 = vrot.slane %v7208, %v7218
    %vm7221 = vcmp.ge.f32.partialorder %v7213, 0.0
    %7222 = vst.msk [vmem:[#allocation5] sm:$0xff] %vm40, %v6773
    %7223 = vst.msk [vmem:[#allocation5 + $0x8] sm:$0xff] %vm40, %v6776
    %7224 = vst.msk [vmem:[#allocation5 + $0x10] sm:$0xff] %vm40, %v6781
    %7225 = vst.msk [vmem:[#allocation5 + $0x18] sm:$0xff] %vm40, %v6784
    %7226 = vst.msk [vmem:[#allocation5 + $0x20] sm:$0xff] %vm40, %v6789
    %7227 = vst.msk [vmem:[#allocation5 + $0x28] sm:$0xff] %vm40, %v6792
    %7228 = vst.msk [vmem:[#allocation5 + $0x30] sm:$0xff] %vm40, %v6797
    %7229 = vst.msk [vmem:[#allocation5 + $0x38] sm:$0xff] %vm40, %v6800
    %7230 = vst.msk [vmem:[#allocation5 + $0x40] sm:$0xff] %vm40, %v6805
    %7231 = vst.msk [vmem:[#allocation5 + $0x48] sm:$0xff] %vm40, %v6808
    %7232 = vst.msk [vmem:[#allocation5 + $0x50] sm:$0xff] %vm40, %v6813
    %7233 = vst.msk [vmem:[#allocation5 + $0x58] sm:$0xff] %vm40, %v6816
    %7234 = vst.msk [vmem:[#allocation5 + $0x60] sm:$0xff] %vm40, %v6821
    %7235 = vst.msk [vmem:[#allocation5 + $0x68] sm:$0xff] %vm40, %v6824
    %7236 = vst.msk [vmem:[#allocation5 + $0x70] sm:$0xff] %vm40, %v6829
    %7237 = vst.msk [vmem:[#allocation5 + $0x78] sm:$0xff] %vm40, %v6832
    %7238 = vst.msk [vmem:[#allocation5 + $0x80] sm:$0xff] %vm40, %v6837
    %7239 = vst.msk [vmem:[#allocation5 + $0x88] sm:$0xff] %vm40, %v6840
    %7240 = vst.msk [vmem:[#allocation5 + $0x90] sm:$0xff] %vm40, %v6845
    %7241 = vst.msk [vmem:[#allocation5 + $0x98] sm:$0xff] %vm40, %v6848
    %7242 = vst.msk [vmem:[#allocation5 + $0xa0] sm:$0xff] %vm40, %v6853
    %7243 = vst.msk [vmem:[#allocation5 + $0xa8] sm:$0xff] %vm40, %v6856
    %7244 = vst.msk [vmem:[#allocation5 + $0xb0] sm:$0x3] %vm4778, %v6861
    %v7245 = vld [vmem:[#allocation5] ss:$2 sm:$0xf]
    %v7246 = vld [vmem:[%s5277] ss:$2 sm:$0xf]
    %s7247 = scalar_lea.vmem [#allocation5], 10
    %v7248 = vld [vmem:[%s7247] ss:$2 sm:$0xf]
    %s7249 = scalar_lea.vmem [#allocation5], 11
    %v7250 = vld [vmem:[%s7249] ss:$2 sm:$0xf]
    %v7251 = vmax.f32 %v7245, %v7246
    %v7252 = vmax.f32 %v7248, %v7250
    %v7253 = vmax.f32 %v7251, %v7252
    %v7254 = vmin.f32 %v7245, %v7246
    %v7255 = vmin.f32 %v7248, %v7250
    %v7256 = vmin.f32 %v7254, %v7255
    %v7257 = vsel %vm7221, %v7253, %v7256
    %v7258 = vmul.f32 %v7257, %v7213
    %v7259 = vadd.f32 %v7258, %v7219
    %v7260 = vmax.f32 %v7259, 0.0
    %vm7261 = vcmask 257024
    %7262 = vst.msk [vmem:[#allocation3 + $0x7] sm:$0xf] %vm7261, %v7260
    %s7263 = scalar_lea.vmem [#allocation5], 20
    %v7264 = vld [vmem:[%s7263] ss:$2 sm:$0xf]
    %s7265 = scalar_lea.vmem [#allocation5], 21
    %v7266 = vld [vmem:[%s7265] ss:$2 sm:$0xf]
    %s7267 = scalar_lea.vmem [#allocation5], 30
    %v7268 = vld [vmem:[%s7267] ss:$2 sm:$0xf]
    %s7269 = scalar_lea.vmem [#allocation5], 31
    %v7270 = vld [vmem:[%s7269] ss:$2 sm:$0xf]
    %v7271 = vmax.f32 %v7264, %v7266
    %v7272 = vmax.f32 %v7268, %v7270
    %v7273 = vmax.f32 %v7271, %v7272
    %v7274 = vmin.f32 %v7264, %v7266
    %v7275 = vmin.f32 %v7268, %v7270
    %v7276 = vmin.f32 %v7274, %v7275
    %v7277 = vsel %vm7221, %v7273, %v7276
    %v7278 = vmul.f32 %v7277, %v7213
    %v7279 = vadd.f32 %v7278, %v7219
    %v7280 = vmax.f32 %v7279, 0.0
    %7281 = vst.msk [vmem:[#allocation3 + $0xd] sm:$0xf] %vm7261, %v7280
    %s7282 = scalar_lea.vmem [#allocation5], 40
    %v7283 = vld [vmem:[%s7282] ss:$2 sm:$0xf]
    %s7284 = scalar_lea.vmem [#allocation5], 41
    %v7285 = vld [vmem:[%s7284] ss:$2 sm:$0xf]
    %s7286 = scalar_lea.vmem [#allocation5], 50
    %v7287 = vld [vmem:[%s7286] ss:$2 sm:$0xf]
    %s7288 = scalar_lea.vmem [#allocation5], 51
    %v7289 = vld [vmem:[%s7288] ss:$2 sm:$0xf]
    %v7290 = vmax.f32 %v7283, %v7285
    %v7291 = vmax.f32 %v7287, %v7289
    %v7292 = vmax.f32 %v7290, %v7291
    %v7293 = vmin.f32 %v7283, %v7285
    %v7294 = vmin.f32 %v7287, %v7289
    %v7295 = vmin.f32 %v7293, %v7294
    %v7296 = vsel %vm7221, %v7292, %v7295
    %v7297 = vmul.f32 %v7296, %v7213
    %v7298 = vadd.f32 %v7297, %v7219
    %v7299 = vmax.f32 %v7298, 0.0
    %7300 = vst.msk [vmem:[#allocation3 + $0x13] sm:$0xf] %vm7261, %v7299
    %s7301 = scalar_lea.vmem [#allocation5], 60
    %v7302 = vld [vmem:[%s7301] ss:$2 sm:$0xf]
    %s7303 = scalar_lea.vmem [#allocation5], 61
    %v7304 = vld [vmem:[%s7303] ss:$2 sm:$0xf]
    %s7305 = scalar_lea.vmem [#allocation5], 70
    %v7306 = vld [vmem:[%s7305] ss:$2 sm:$0xf]
    %s7307 = scalar_lea.vmem [#allocation5], 71
    %v7308 = vld [vmem:[%s7307] ss:$2 sm:$0xf]
    %v7309 = vmax.f32 %v7302, %v7304
    %v7310 = vmax.f32 %v7306, %v7308
    %v7311 = vmax.f32 %v7309, %v7310
    %v7312 = vmin.f32 %v7302, %v7304
    %v7313 = vmin.f32 %v7306, %v7308
    %v7314 = vmin.f32 %v7312, %v7313
    %v7315 = vsel %vm7221, %v7311, %v7314
    %v7316 = vmul.f32 %v7315, %v7213
    %v7317 = vadd.f32 %v7316, %v7219
    %v7318 = vmax.f32 %v7317, 0.0
    %7319 = vst.msk [vmem:[#allocation3 + $0x19] sm:$0xf] %vm7261, %v7318
    %s7320 = scalar_lea.vmem [#allocation5], 100
    %v7321 = vld [vmem:[%s7320] ss:$2 sm:$0xf]
    %s7322 = scalar_lea.vmem [#allocation5], 101
    %v7323 = vld [vmem:[%s7322] ss:$2 sm:$0xf]
    %s7324 = scalar_lea.vmem [#allocation5], 110
    %v7325 = vld [vmem:[%s7324] ss:$2 sm:$0xf]
    %s7326 = scalar_lea.vmem [#allocation5], 111
    %v7327 = vld [vmem:[%s7326] ss:$2 sm:$0xf]
    %v7328 = vmax.f32 %v7321, %v7323
    %v7329 = vmax.f32 %v7325, %v7327
    %v7330 = vmax.f32 %v7328, %v7329
    %v7331 = vmin.f32 %v7321, %v7323
    %v7332 = vmin.f32 %v7325, %v7327
    %v7333 = vmin.f32 %v7331, %v7332
    %v7334 = vsel %vm7221, %v7330, %v7333
    %v7335 = vmul.f32 %v7334, %v7213
    %v7336 = vadd.f32 %v7335, %v7219
    %v7337 = vmax.f32 %v7336, 0.0
    %7338 = vst.msk [vmem:[#allocation3 + $0x2b] sm:$0xf] %vm7261, %v7337
    %s7339 = scalar_lea.vmem [#allocation5], 120
    %v7340 = vld [vmem:[%s7339] ss:$2 sm:$0xf]
    %s7341 = scalar_lea.vmem [#allocation5], 121
    %v7342 = vld [vmem:[%s7341] ss:$2 sm:$0xf]
    %s7343 = scalar_lea.vmem [#allocation5], 130
    %v7344 = vld [vmem:[%s7343] ss:$2 sm:$0xf]
    %s7345 = scalar_lea.vmem [#allocation5], 131
    %v7346 = vld [vmem:[%s7345] ss:$2 sm:$0xf]
    %v7347 = vmax.f32 %v7340, %v7342
    %v7348 = vmax.f32 %v7344, %v7346
    %v7349 = vmax.f32 %v7347, %v7348
    %v7350 = vmin.f32 %v7340, %v7342
    %v7351 = vmin.f32 %v7344, %v7346
    %v7352 = vmin.f32 %v7350, %v7351
    %v7353 = vsel %vm7221, %v7349, %v7352
    %v7354 = vmul.f32 %v7353, %v7213
    %v7355 = vadd.f32 %v7354, %v7219
    %v7356 = vmax.f32 %v7355, 0.0
    %7357 = vst.msk [vmem:[#allocation3 + $0x31] sm:$0xf] %vm7261, %v7356
    %s7358 = scalar_lea.vmem [#allocation5], 140
    %v7359 = vld [vmem:[%s7358] ss:$2 sm:$0xf]
    %s7360 = scalar_lea.vmem [#allocation5], 141
    %v7361 = vld [vmem:[%s7360] ss:$2 sm:$0xf]
    %s7362 = scalar_lea.vmem [#allocation5], 150
    %v7363 = vld [vmem:[%s7362] ss:$2 sm:$0xf]
    %s7364 = scalar_lea.vmem [#allocation5], 151
    %v7365 = vld [vmem:[%s7364] ss:$2 sm:$0xf]
    %v7366 = vmax.f32 %v7359, %v7361
    %v7367 = vmax.f32 %v7363, %v7365
    %v7368 = vmax.f32 %v7366, %v7367
    %v7369 = vmin.f32 %v7359, %v7361
    %v7370 = vmin.f32 %v7363, %v7365
    %v7371 = vmin.f32 %v7369, %v7370
    %v7372 = vsel %vm7221, %v7368, %v7371
    %v7373 = vmul.f32 %v7372, %v7213
    %v7374 = vadd.f32 %v7373, %v7219
    %v7375 = vmax.f32 %v7374, 0.0
    %7376 = vst.msk [vmem:[#allocation3 + $0x37] sm:$0xf] %vm7261, %v7375
    %s7377 = scalar_lea.vmem [#allocation5], 160
    %v7378 = vld [vmem:[%s7377] ss:$2 sm:$0xf]
    %s7379 = scalar_lea.vmem [#allocation5], 161
    %v7380 = vld [vmem:[%s7379] ss:$2 sm:$0xf]
    %s7381 = scalar_lea.vmem [#allocation5], 170
    %v7382 = vld [vmem:[%s7381] ss:$2 sm:$0xf]
    %s7383 = scalar_lea.vmem [#allocation5], 171
    %v7384 = vld [vmem:[%s7383] ss:$2 sm:$0xf]
    %v7385 = vmax.f32 %v7378, %v7380
    %v7386 = vmax.f32 %v7382, %v7384
    %v7387 = vmax.f32 %v7385, %v7386
    %v7388 = vmin.f32 %v7378, %v7380
    %v7389 = vmin.f32 %v7382, %v7384
    %v7390 = vmin.f32 %v7388, %v7389
    %v7391 = vsel %vm7221, %v7387, %v7390
    %v7392 = vmul.f32 %v7391, %v7213
    %v7393 = vadd.f32 %v7392, %v7219
    %v7394 = vmax.f32 %v7393, 0.0
    %7395 = vst.msk [vmem:[#allocation3 + $0x3d] sm:$0xf] %vm7261, %v7394
    %v7396 = vld [vmem:[#allocation3] sm:$0xff]
    %v7397 = vld [vmem:[#allocation3 + $0x8] sm:$0xff]
    %v7398 = vld [vmem:[#allocation3 + $0x10] sm:$0xff]
    %v7399 = vld [vmem:[#allocation3 + $0x18] sm:$0xff]
    %v7400 = vld [vmem:[#allocation3 + $0x20] sm:$0xff]
    %v7401 = vld [vmem:[#allocation3 + $0x28] sm:$0xff]
    %v7402 = vld [vmem:[#allocation3 + $0x30] sm:$0xff]
    %v7403 = vld [vmem:[#allocation3 + $0x38] sm:$0x3]
    %v7404 = vld [vmem:[#allocation3 + $0x1] sm:$0xff]
    %v7405 = vld [vmem:[#allocation3 + $0x9] sm:$0xff]
    %v7406 = vld [vmem:[#allocation3 + $0x11] sm:$0xff]
    %v7407 = vld [vmem:[#allocation3 + $0x19] sm:$0xff]
    %v7408 = vld [vmem:[#allocation3 + $0x21] sm:$0xff]
    %v7409 = vld [vmem:[#allocation3 + $0x29] sm:$0xff]
    %v7410 = vld [vmem:[#allocation3 + $0x31] sm:$0xff]
    %v7411 = vld [vmem:[#allocation3 + $0x39] sm:$0x3]
    %v7412 = vld [vmem:[#allocation3 + $0x2] sm:$0xff]
    %v7413 = vld [vmem:[#allocation3 + $0xa] sm:$0xff]
    %v7414 = vld [vmem:[#allocation3 + $0x12] sm:$0xff]
    %v7415 = vld [vmem:[#allocation3 + $0x1a] sm:$0xff]
    %v7416 = vld [vmem:[#allocation3 + $0x22] sm:$0xff]
    %v7417 = vld [vmem:[#allocation3 + $0x2a] sm:$0xff]
    %v7418 = vld [vmem:[#allocation3 + $0x32] sm:$0xff]
    %v7419 = vld [vmem:[#allocation3 + $0x3a] sm:$0x3]
    %v7420 = vld [vmem:[#allocation3 + $0x6] sm:$0xff]
    %v7421 = vld [vmem:[#allocation3 + $0xe] sm:$0xff]
    %v7422 = vld [vmem:[#allocation3 + $0x16] sm:$0xff]
    %v7423 = vld [vmem:[#allocation3 + $0x1e] sm:$0xff]
    %v7424 = vld [vmem:[#allocation3 + $0x26] sm:$0xff]
    %v7425 = vld [vmem:[#allocation3 + $0x2e] sm:$0xff]
    %v7426 = vld [vmem:[#allocation3 + $0x36] sm:$0xff]
    %v7427 = vld [vmem:[#allocation3 + $0x3e] sm:$0x3]
    %v7428 = vld [vmem:[#allocation3 + $0x7] sm:$0xff]
    %v7429 = vld [vmem:[#allocation3 + $0xf] sm:$0xff]
    %v7430 = vld [vmem:[#allocation3 + $0x17] sm:$0xff]
    %v7431 = vld [vmem:[#allocation3 + $0x1f] sm:$0xff]
    %v7432 = vld [vmem:[#allocation3 + $0x27] sm:$0xff]
    %v7433 = vld [vmem:[#allocation3 + $0x2f] sm:$0xff]
    %v7434 = vld [vmem:[#allocation3 + $0x37] sm:$0xff]
    %v7435 = vld [vmem:[#allocation3 + $0x3f] sm:$0x3]
    %v7436 = vld [vmem:[#allocation3 + $0x38] sm:$0xff]
    %v7437 = vld [vmem:[#allocation3 + $0x40] sm:$0x3]
    %v7438 = vld [vmem:[#allocation3 + $0xc] sm:$0xff]
    %v7439 = vld [vmem:[#allocation3 + $0x14] sm:$0xff]
    %v7440 = vld [vmem:[#allocation3 + $0x1c] sm:$0xff]
    %v7441 = vld [vmem:[#allocation3 + $0x24] sm:$0xff]
    %v7442 = vld [vmem:[#allocation3 + $0x2c] sm:$0xff]
    %v7443 = vld [vmem:[#allocation3 + $0x34] sm:$0xff]
    %v7444 = vld [vmem:[#allocation3 + $0x3c] sm:$0xff]
    %v7445 = vld [vmem:[#allocation3 + $0x44] sm:$0x3]
    %v7446 = vld [vmem:[#allocation3 + $0xd] sm:$0xff]
    %v7447 = vld [vmem:[#allocation3 + $0x15] sm:$0xff]
    %v7448 = vld [vmem:[#allocation3 + $0x1d] sm:$0xff]
    %v7449 = vld [vmem:[#allocation3 + $0x25] sm:$0xff]
    %v7450 = vld [vmem:[#allocation3 + $0x2d] sm:$0xff]
    %v7451 = vld [vmem:[#allocation3 + $0x35] sm:$0xff]
    %v7452 = vld [vmem:[#allocation3 + $0x3d] sm:$0xff]
    %v7453 = vld [vmem:[#allocation3 + $0x45] sm:$0x3]
    %v7454 = vld [vmem:[#allocation3 + $0x3e] sm:$0xff]
    %v7455 = vld [vmem:[#allocation3 + $0x46] sm:$0x3]
    %7464 = vrot.lane.b32.xlu0 %v7404, 32
    %v7465 = vpop.permute.xlu0 %7464
    %7466 = vrot.lane.b32.xlu0 %v7405, 32
    %v7467 = vpop.permute.xlu0 %7466
    %7468 = vrot.lane.b32.xlu0 %v7406, 32
    %v7469 = vpop.permute.xlu0 %7468
    %7470 = vrot.lane.b32.xlu0 %v7407, 32
    %v7471 = vpop.permute.xlu0 %7470
    %7472 = vrot.lane.b32.xlu0 %v7408, 32
    %v7473 = vpop.permute.xlu0 %7472
    %7474 = vrot.lane.b32.xlu0 %v7409, 32
    %v7475 = vpop.permute.xlu0 %7474
    %7476 = vrot.lane.b32.xlu0 %v7410, 32
    %v7477 = vpop.permute.xlu0 %7476
    %7478 = vrot.lane.b32.xlu0 %v7411, 32
    %v7479 = vpop.permute.xlu0 %7478
    %7496 = vrot.lane.b32.xlu0 %v7412, 64
    %v7497 = vpop.permute.xlu0 %7496
    %7498 = vrot.lane.b32.xlu0 %v7413, 64
    %v7499 = vpop.permute.xlu0 %7498
    %7500 = vrot.lane.b32.xlu0 %v7414, 64
    %v7501 = vpop.permute.xlu0 %7500
    %7502 = vrot.lane.b32.xlu0 %v7415, 64
    %v7503 = vpop.permute.xlu0 %7502
    %7504 = vrot.lane.b32.xlu0 %v7416, 64
    %v7505 = vpop.permute.xlu0 %7504
    %7506 = vrot.lane.b32.xlu0 %v7417, 64
    %v7507 = vpop.permute.xlu0 %7506
    %7508 = vrot.lane.b32.xlu0 %v7418, 64
    %v7509 = vpop.permute.xlu0 %7508
    %7510 = vrot.lane.b32.xlu0 %v7419, 64
    %v7511 = vpop.permute.xlu0 %7510
    %7528 = vrot.lane.b32.xlu0 %v7420, 96
    %v7529 = vpop.permute.xlu0 %7528
    %7530 = vrot.lane.b32.xlu0 %v7421, 96
    %v7531 = vpop.permute.xlu0 %7530
    %7532 = vrot.lane.b32.xlu0 %v7422, 96
    %v7533 = vpop.permute.xlu0 %7532
    %7534 = vrot.lane.b32.xlu0 %v7423, 96
    %v7535 = vpop.permute.xlu0 %7534
    %7536 = vrot.lane.b32.xlu0 %v7424, 96
    %v7537 = vpop.permute.xlu0 %7536
    %7538 = vrot.lane.b32.xlu0 %v7425, 96
    %v7539 = vpop.permute.xlu0 %7538
    %7540 = vrot.lane.b32.xlu0 %v7426, 96
    %v7541 = vpop.permute.xlu0 %7540
    %7542 = vrot.lane.b32.xlu0 %v7427, 96
    %v7543 = vpop.permute.xlu0 %7542
    %7560 = vrot.lane.b32.xlu0 %v7397, 32
    %v7561 = vpop.permute.xlu0 %7560
    %7562 = vrot.lane.b32.xlu0 %v7398, 32
    %v7563 = vpop.permute.xlu0 %7562
    %7564 = vrot.lane.b32.xlu0 %v7399, 32
    %v7565 = vpop.permute.xlu0 %7564
    %7566 = vrot.lane.b32.xlu0 %v7400, 32
    %v7567 = vpop.permute.xlu0 %7566
    %7568 = vrot.lane.b32.xlu0 %v7401, 32
    %v7569 = vpop.permute.xlu0 %7568
    %7570 = vrot.lane.b32.xlu0 %v7402, 32
    %v7571 = vpop.permute.xlu0 %7570
    %7572 = vrot.lane.b32.xlu0 %v7436, 32
    %v7573 = vpop.permute.xlu0 %7572
    %7574 = vrot.lane.b32.xlu0 %v7437, 32
    %v7575 = vpop.permute.xlu0 %7574
    %7592 = vrot.lane.b32.xlu0 %v7438, 64
    %v7593 = vpop.permute.xlu0 %7592
    %7594 = vrot.lane.b32.xlu0 %v7439, 64
    %v7595 = vpop.permute.xlu0 %7594
    %7596 = vrot.lane.b32.xlu0 %v7440, 64
    %v7597 = vpop.permute.xlu0 %7596
    %7598 = vrot.lane.b32.xlu0 %v7441, 64
    %v7599 = vpop.permute.xlu0 %7598
    %7600 = vrot.lane.b32.xlu0 %v7442, 64
    %v7601 = vpop.permute.xlu0 %7600
    %7602 = vrot.lane.b32.xlu0 %v7443, 64
    %v7603 = vpop.permute.xlu0 %7602
    %7604 = vrot.lane.b32.xlu0 %v7444, 64
    %v7605 = vpop.permute.xlu0 %7604
    %7606 = vrot.lane.b32.xlu0 %v7445, 64
    %v7607 = vpop.permute.xlu0 %7606
    %7624 = vrot.lane.b32.xlu0 %v7446, 96
    %v7625 = vpop.permute.xlu0 %7624
    %7626 = vrot.lane.b32.xlu0 %v7447, 96
    %v7627 = vpop.permute.xlu0 %7626
    %7628 = vrot.lane.b32.xlu0 %v7448, 96
    %v7629 = vpop.permute.xlu0 %7628
    %7630 = vrot.lane.b32.xlu0 %v7449, 96
    %v7631 = vpop.permute.xlu0 %7630
    %7632 = vrot.lane.b32.xlu0 %v7450, 96
    %v7633 = vpop.permute.xlu0 %7632
    %7634 = vrot.lane.b32.xlu0 %v7451, 96
    %v7635 = vpop.permute.xlu0 %7634
    %7636 = vrot.lane.b32.xlu0 %v7452, 96
    %v7637 = vpop.permute.xlu0 %7636
    %7638 = vrot.lane.b32.xlu0 %v7453, 96
    %v7639 = vpop.permute.xlu0 %7638
    %v7648 = vsel %vm40, %v7396, %v7465
    %v7649 = vsel %vm40, %v7397, %v7467
    %v7650 = vsel %vm40, %v7398, %v7469
    %v7651 = vsel %vm40, %v7399, %v7471
    %v7652 = vsel %vm40, %v7400, %v7473
    %v7653 = vsel %vm40, %v7401, %v7475
    %v7654 = vsel %vm40, %v7402, %v7477
    %v7655 = vsel %vm40, %v7403, %v7479
    %v7656 = vsel %vm6277, %v7648, %v7497
    %v7657 = vsel %vm6277, %v7649, %v7499
    %v7658 = vsel %vm6277, %v7650, %v7501
    %v7659 = vsel %vm6277, %v7651, %v7503
    %v7660 = vsel %vm6277, %v7652, %v7505
    %v7661 = vsel %vm6277, %v7653, %v7507
    %v7662 = vsel %vm6277, %v7654, %v7509
    %v7663 = vsel %vm6277, %v7655, %v7511
    %v7664 = vsel %vm6301, %v7656, %v7529
    %v7665 = vsel %vm6301, %v7657, %v7531
    %v7666 = vsel %vm6301, %v7658, %v7533
    %v7667 = vsel %vm6301, %v7659, %v7535
    %v7668 = vsel %vm6301, %v7660, %v7537
    %v7669 = vsel %vm6301, %v7661, %v7539
    %v7670 = vsel %vm6301, %v7662, %v7541
    %v7671 = vsel %vm6301, %v7663, %v7543
    %v7672 = vsel %vm40, %v7428, %v7561
    %v7673 = vsel %vm40, %v7429, %v7563
    %v7674 = vsel %vm40, %v7430, %v7565
    %v7675 = vsel %vm40, %v7431, %v7567
    %v7676 = vsel %vm40, %v7432, %v7569
    %v7677 = vsel %vm40, %v7433, %v7571
    %v7678 = vsel %vm40, %v7434, %v7573
    %v7679 = vsel %vm40, %v7435, %v7575
    %v7680 = vsel %vm6277, %v7672, %v7593
    %v7681 = vsel %vm6277, %v7673, %v7595
    %v7682 = vsel %vm6277, %v7674, %v7597
    %v7683 = vsel %vm6277, %v7675, %v7599
    %v7684 = vsel %vm6277, %v7676, %v7601
    %v7685 = vsel %vm6277, %v7677, %v7603
    %v7686 = vsel %vm6277, %v7678, %v7605
    %v7687 = vsel %vm6277, %v7679, %v7607
    %v7688 = vsel %vm6301, %v7680, %v7625
    %v7689 = vsel %vm6301, %v7681, %v7627
    %v7690 = vsel %vm6301, %v7682, %v7629
    %v7691 = vsel %vm6301, %v7683, %v7631
    %v7692 = vsel %vm6301, %v7684, %v7633
    %v7693 = vsel %vm6301, %v7685, %v7635
    %v7694 = vsel %vm6301, %v7686, %v7637
    %v7695 = vsel %vm6301, %v7687, %v7639
    %v7696 = vpack.c.bf16 %v7665, %v7664
    %v7697 = vpack.c.bf16 %v7689, %v7688
    %v7698 = vpack.c.bf16 %v7422, %v7421
    %v7699 = vpack.c.bf16 %v7667, %v7666
    %v7700 = vpack.c.bf16 %v7691, %v7690
    %v7701 = vpack.c.bf16 %v7424, %v7423
    %v7702 = vpack.c.bf16 %v7669, %v7668
    %v7703 = vpack.c.bf16 %v7693, %v7692
    %v7704 = vpack.c.bf16 %v7426, %v7425
    %v7705 = vpack.c.bf16 %v7671, %v7670
    %v7706 = vpack.c.bf16 %v7695, %v7694
    %v7707 = vpack.c.bf16 %v7455, %v7454
    %s7708 = scalar_lea.vmem %s2, 144
    %v7709 = vld [vmem:[%s7708] sm:$0xf]
    %v7710 = vld [vmem:[%s7708 + $0x4] sm:$0xf]
    %v7711 = vld [vmem:[%s7708 + $0x8] sm:$0xf]
    %v7712 = vld [vmem:[%s7708 + $0xc] sm:$0xf]
    %v7713 = vld [vmem:[%s7708 + $0x10] sm:$0xf]
    %v7714 = vld [vmem:[%s7708 + $0x14] sm:$0xf]
    %v7715 = vld [vmem:[%s7708 + $0x18] sm:$0xf]
    %v7716 = vld [vmem:[%s7708 + $0x1c] sm:$0xf]
    %v7717 = vld [vmem:[%s7708 + $0x20] sm:$0xf]
    %v7718 = vld [vmem:[%s7708 + $0x24] sm:$0xf]
    %v7719 = vld [vmem:[%s7708 + $0x28] sm:$0xf]
    %v7720 = vld [vmem:[%s7708 + $0x2c] sm:$0xf]
    %v7721 = vld [vmem:[%s7708 + $0x30] sm:$0xf]
    %v7722 = vld [vmem:[%s7708 + $0x34] sm:$0xf]
    %v7723 = vld [vmem:[%s7708 + $0x38] sm:$0xf]
    %v7724 = vld [vmem:[%s7708 + $0x3c] sm:$0xf]
    %v7725 = vld [vmem:[%s7708 + $0x40] sm:$0xf]
    %v7726 = vld [vmem:[%s7708 + $0x44] sm:$0xf]
    %v7727 = vld [vmem:[%s7708 + $0x48] sm:$0xf]
    %v7728 = vld [vmem:[%s7708 + $0x4c] sm:$0xf]
    %v7729 = vld [vmem:[%s7708 + $0x50] sm:$0xf]
    %v7730 = vld [vmem:[%s7708 + $0x54] sm:$0xf]
    %v7731 = vld [vmem:[%s7708 + $0x58] sm:$0xf]
    %v7732 = vld [vmem:[%s7708 + $0x5c] sm:$0xf]
    %v7733 = vld [vmem:[%s7708 + $0x60] sm:$0xf]
    %v7734 = vld [vmem:[%s7708 + $0x64] sm:$0xf]
    %v7735 = vld [vmem:[%s7708 + $0x68] sm:$0xf]
    %v7736 = vld [vmem:[%s7708 + $0x6c] sm:$0xf]
    %v7737 = vld [vmem:[%s7708 + $0x70] sm:$0xf]
    %v7738 = vld [vmem:[%s7708 + $0x74] sm:$0xf]
    %v7739 = vld [vmem:[%s7708 + $0x78] sm:$0xf]
    %v7740 = vld [vmem:[%s7708 + $0x7c] sm:$0xf]
    %v7741 = vld [vmem:[%s7708 + $0x80] sm:$0xf]
    %v7742 = vld [vmem:[%s7708 + $0x84] sm:$0xf]
    %v7743 = vld [vmem:[%s7708 + $0x88] sm:$0xf]
    %v7744 = vld [vmem:[%s7708 + $0x8c] sm:$0xf]
    %v7781 = vunpack.c.l.b16 %v7709
    %v7782 = vunpack.c.l.b16 %v7710
    %v7783 = vunpack.c.l.b16 %v7711
    %v7784 = vunpack.c.l.b16 %v7712
    %v7785 = vunpack.c.l.b16 %v7713
    %v7786 = vunpack.c.l.b16 %v7714
    %v7787 = vunpack.c.l.b16 %v7715
    %v7788 = vunpack.c.l.b16 %v7716
    %v7789 = vunpack.c.l.b16 %v7717
    %v7790 = vunpack.c.l.b16 %v7718
    %v7791 = vunpack.c.l.b16 %v7719
    %v7792 = vunpack.c.l.b16 %v7720
    %v7793 = vunpack.c.l.b16 %v7721
    %v7794 = vunpack.c.l.b16 %v7722
    %v7795 = vunpack.c.l.b16 %v7723
    %v7796 = vunpack.c.l.b16 %v7724
    %v7797 = vunpack.c.l.b16 %v7725
    %v7798 = vunpack.c.l.b16 %v7726
    %v7799 = vunpack.c.l.b16 %v7727
    %v7800 = vunpack.c.l.b16 %v7728
    %v7801 = vunpack.c.l.b16 %v7729
    %v7802 = vunpack.c.l.b16 %v7730
    %v7803 = vunpack.c.l.b16 %v7731
    %v7804 = vunpack.c.l.b16 %v7732
    %v7805 = vunpack.c.l.b16 %v7733
    %v7806 = vunpack.c.l.b16 %v7734
    %v7807 = vunpack.c.l.b16 %v7735
    %v7808 = vunpack.c.l.b16 %v7736
    %v7809 = vunpack.c.l.b16 %v7737
    %v7810 = vunpack.c.l.b16 %v7738
    %v7811 = vunpack.c.l.b16 %v7739
    %v7812 = vunpack.c.l.b16 %v7740
    %v7813 = vunpack.c.l.b16 %v7741
    %v7814 = vunpack.c.l.b16 %v7742
    %v7815 = vunpack.c.l.b16 %v7743
    %v7816 = vunpack.c.l.b16 %v7744
    %v7817 = vpack.c.b16 %v7782, %v7781
    %v7818 = vpack.c.b16 %v7784, %v7783
    %v7819 = vpack.c.b16 %v7786, %v7785
    %v7820 = vpack.c.b16 %v7788, %v7787
    %v7821 = vpack.c.b16 %v7790, %v7789
    %v7822 = vpack.c.b16 %v7792, %v7791
    %v7823 = vpack.c.b16 %v7794, %v7793
    %v7824 = vpack.c.b16 %v7796, %v7795
    %v7825 = vpack.c.b16 %v7798, %v7797
    %v7826 = vpack.c.b16 %v7800, %v7799
    %v7827 = vpack.c.b16 %v7802, %v7801
    %v7828 = vpack.c.b16 %v7804, %v7803
    %v7829 = vpack.c.b16 %v7806, %v7805
    %v7830 = vpack.c.b16 %v7808, %v7807
    %v7831 = vpack.c.b16 %v7810, %v7809
    %v7832 = vpack.c.b16 %v7812, %v7811
    %v7833 = vpack.c.b16 %v7814, %v7813
    %v7834 = vpack.c.b16 %v7816, %v7815
    %v7854 = vsel %vm40, %v7698, 0
    %v7857 = vsel %vm40, %v7701, 0
    %v7860 = vsel %vm40, %v7704, 0
    %v7863 = vsel %vm40, %v7707, 0
    %7865 = vmatprep.subr.bf16.mxu0 0
    %7866 = vmatpush1.bf16.msra.mxu0 %v7817
    %7867 = vmatprep.subr.bf16.mxu0 0
    %7868 = vmatpush1.bf16.msra.mxu0 %v7818
    %7869 = vmatprep.subr.bf16.mxu0 0
    %7870 = vmatpush1.bf16.msra.mxu0 %v7819
    %7871 = vmatprep.subr.bf16.mxu0 0
    %7872 = vmatpush1.bf16.msra.mxu0 %v7820
    %7873 = vmatprep.subr.bf16.mxu0 0
    %7874 = vmatpush1.bf16.msra.mxu0 %v7821
    %7875 = vmatprep.subr.bf16.mxu0 0
    %7876 = vmatpush1.bf16.msra.mxu0 %v7822
    %7877 = vmatprep.subr.bf16.mxu0 0
    %7878 = vmatpush1.bf16.msra.mxu0 %v7823
    %7879 = vmatprep.subr.bf16.mxu0 0
    %7880 = vmatpush1.bf16.msra.mxu0 %v7824
    %7881 = vmatprep.subr.bf16.mxu0 0
    %7882 = vmatpush1.bf16.msra.mxu0 %v7825
    %7883 = vmatprep.subr.bf16.mxu0 0
    %7884 = vmatpush1.bf16.msra.mxu0 %v7826
    %7885 = vmatprep.subr.bf16.mxu0 0
    %7886 = vmatpush1.bf16.msra.mxu0 %v7827
    %7887 = vmatprep.subr.bf16.mxu0 0
    %7888 = vmatpush1.bf16.msra.mxu0 %v7828
    %7889 = vmatprep.subr.bf16.mxu0 0
    %7890 = vmatpush1.bf16.msra.mxu0 %v7829
    %7891 = vmatprep.subr.bf16.mxu0 0
    %7892 = vmatpush1.bf16.msra.mxu0 %v7830
    %7893 = vmatprep.subr.bf16.mxu0 0
    %7894 = vmatpush1.bf16.msra.mxu0 %v7831
    %7895 = vmatprep.subr.bf16.mxu0 0
    %7896 = vmatpush1.bf16.msra.mxu0 %v7832
    %7897 = vmatprep.mubr.bf16.mxu0 %v7697
    %7898 = vmatmul.mubr.bf16.gmra.mrb[0].mxu0 %v7696
    %v7899 = vpop.f32.mrb[0].mxu0
    %v7900 = vadd.f32 0.0, %v7899
    %v7901 = vpop.f32.mrb[0].mxu0
    %v7902 = vpop.f32.mrb[0].mxu0
    %v7903 = vadd.f32 0.0, %v7902
    %v7904 = vpop.f32.mrb[0].mxu0
    %7905 = vmatprep.mubr.bf16.mxu0 %v7700
    %7906 = vmatmul.mubr.bf16.gmra.mrb[0].mxu0 %v7699
    %v7907 = vpop.f32.mrb[0].mxu0
    %v7908 = vadd.f32 0.0, %v7907
    %v7909 = vpop.f32.mrb[0].mxu0
    %v7910 = vpop.f32.mrb[0].mxu0
    %v7911 = vadd.f32 0.0, %v7910
    %v7912 = vpop.f32.mrb[0].mxu0
    %7913 = vmatprep.mubr.bf16.mxu0 %v7703
    %7914 = vmatmul.mubr.bf16.gmra.mrb[0].mxu0 %v7702
    %v7915 = vpop.f32.mrb[0].mxu0
    %v7916 = vadd.f32 0.0, %v7915
    %v7917 = vpop.f32.mrb[0].mxu0
    %v7918 = vpop.f32.mrb[0].mxu0
    %v7919 = vadd.f32 0.0, %v7918
    %v7920 = vpop.f32.mrb[0].mxu0
    %7921 = vmatprep.mubr.bf16.mxu0 %v7706
    %7922 = vmatmul.mubr.bf16.gmra.mrb[0].mxu0 %v7705
    %v7923 = vpop.f32.mrb[0].mxu0
    %v7924 = vadd.f32 0.0, %v7923
    %v7925 = vpop.f32.mrb[0].mxu0
    %v7926 = vpop.f32.mrb[0].mxu0
    %v7927 = vadd.f32 0.0, %v7926
    %v7928 = vpop.f32.mrb[0].mxu0
    %7929 = vdwg.mxu0
    %7930 = vmatprep.subr.bf16.mxu0 0
    %7931 = vmatpush1.bf16.msra.mxu0 %v7833
    %7932 = vmatprep.subr.bf16.mxu0 0
    %7933 = vmatpush1.bf16.msra.mxu0 %v7834
    %7934 = vmatprep.subr.bf16.mxu0 0
    %7935 = vmatpush1.bf16.msra.mxu0 0
    %7936 = vmatprep.subr.bf16.mxu0 0
    %7937 = vmatpush1.bf16.msra.mxu0 0
    %7938 = vmatprep.subr.bf16.mxu0 0
    %7939 = vmatpush1.bf16.msra.mxu0 0
    %7940 = vmatprep.subr.bf16.mxu0 0
    %7941 = vmatpush1.bf16.msra.mxu0 0
    %7942 = vmatprep.subr.bf16.mxu0 0
    %7943 = vmatpush1.bf16.msra.mxu0 0
    %7944 = vmatprep.subr.bf16.mxu0 0
    %7945 = vmatpush1.bf16.msra.mxu0 0
    %7946 = vmatprep.subr.bf16.mxu0 0
    %7947 = vmatpush1.bf16.msra.mxu0 0
    %7948 = vmatprep.subr.bf16.mxu0 0
    %7949 = vmatpush1.bf16.msra.mxu0 0
    %7950 = vmatprep.subr.bf16.mxu0 0
    %7951 = vmatpush1.bf16.msra.mxu0 0
    %7952 = vmatprep.subr.bf16.mxu0 0
    %7953 = vmatpush1.bf16.msra.mxu0 0
    %7954 = vmatprep.subr.bf16.mxu0 0
    %7955 = vmatpush1.bf16.msra.mxu0 0
    %7956 = vmatprep.subr.bf16.mxu0 0
    %7957 = vmatpush1.bf16.msra.mxu0 0
    %7958 = vmatprep.subr.bf16.mxu0 0
    %7959 = vmatpush1.bf16.msra.mxu0 0
    %7960 = vmatprep.subr.bf16.mxu0 0
    %7961 = vmatpush1.bf16.msra.mxu0 0
    %7962 = vmatprep.mubr.bf16.mxu0 0
    %7963 = vmatmul.mubr.bf16.gmra.mrb[0].mxu0 %v7854
    %v7964 = vpop.f32.mrb[0].mxu0
    %v7965 = vadd.f32 %v7900, %v7964
    %v7966 = vpop.f32.mrb[0].mxu0
    %v7967 = vpop.f32.mrb[0].mxu0
    %v7968 = vadd.f32 %v7903, %v7967
    %v7969 = vpop.f32.mrb[0].mxu0
    %7970 = vmatprep.mubr.bf16.mxu0 0
    %7971 = vmatmul.mubr.bf16.gmra.mrb[0].mxu0 %v7857
    %v7972 = vpop.f32.mrb[0].mxu0
    %v7973 = vadd.f32 %v7908, %v7972
    %v7974 = vpop.f32.mrb[0].mxu0
    %v7975 = vpop.f32.mrb[0].mxu0
    %v7976 = vadd.f32 %v7911, %v7975
    %v7977 = vpop.f32.mrb[0].mxu0
    %7978 = vmatprep.mubr.bf16.mxu0 0
    %7979 = vmatmul.mubr.bf16.gmra.mrb[0].mxu0 %v7860
    %v7980 = vpop.f32.mrb[0].mxu0
    %v7981 = vadd.f32 %v7916, %v7980
    %v7982 = vpop.f32.mrb[0].mxu0
    %v7983 = vpop.f32.mrb[0].mxu0
    %v7984 = vadd.f32 %v7919, %v7983
    %v7985 = vpop.f32.mrb[0].mxu0
    %7986 = vmatprep.mubr.bf16.mxu0 0
    %7987 = vmatmul.mubr.bf16.gmra.mrb[0].mxu0 %v7863
    %v7988 = vpop.f32.mrb[0].mxu0
    %v7989 = vadd.f32 %v7924, %v7988
    %v7990 = vpop.f32.mrb[0].mxu0
    %v7991 = vpop.f32.mrb[0].mxu0
    %v7992 = vadd.f32 %v7927, %v7991
    %v7993 = vpop.f32.mrb[0].mxu0
    %7994 = vdwg.mxu0
    %v7995 = vld [vmem:[%s7] sm:$0xff]
    %v7996 = vld [vmem:[%s7 + $0x8] sm:$0xff]
    %v7997 = vld [vmem:[%s7 + $0x10] sm:$0xff]
    %v7998 = vld [vmem:[%s7 + $0x18] sm:$0xff]
    %v7999 = vld [vmem:[%s7 + $0x20] sm:$0xff]
    %v8000 = vld [vmem:[%s7 + $0x28] sm:$0xff]
    %v8001 = vld [vmem:[%s7 + $0x30] sm:$0xff]
    %v8002 = vld [vmem:[%s7 + $0x38] sm:$0x3]
    %8004 = vset.pattern.permute.xlu0 0
    %8005 = vperm.xlu0 %8004, %v7995
    %v8006 = vpop.permute.xlu0 %8005
    %8009 = vset.pattern.permute.xlu0 0
    %8010 = vperm.xlu0 %8009, %v7996
    %v8011 = vpop.permute.xlu0 %8010
    %8014 = vset.pattern.permute.xlu0 0
    %8015 = vperm.xlu0 %8014, %v7997
    %v8016 = vpop.permute.xlu0 %8015
    %8019 = vset.pattern.permute.xlu0 0
    %8020 = vperm.xlu0 %8019, %v7998
    %v8021 = vpop.permute.xlu0 %8020
    %8024 = vset.pattern.permute.xlu0 0
    %8025 = vperm.xlu0 %8024, %v7999
    %v8026 = vpop.permute.xlu0 %8025
    %8029 = vset.pattern.permute.xlu0 0
    %8030 = vperm.xlu0 %8029, %v8000
    %v8031 = vpop.permute.xlu0 %8030
    %8034 = vset.pattern.permute.xlu0 0
    %8035 = vperm.xlu0 %8034, %v8001
    %v8036 = vpop.permute.xlu0 %8035
    %8039 = vset.pattern.permute.xlu0 0
    %8040 = vperm.xlu0 %8039, %v8002
    %v8041 = vpop.permute.xlu0 %8040
    %v8043 = vmul.f32 %v7965, %v8006
    %v8044 = vmul.f32 %v7968, %v8011
    %v8045 = vmul.f32 %v7973, %v8016
    %v8046 = vmul.f32 %v7976, %v8021
    %v8047 = vmul.f32 %v7981, %v8026
    %v8048 = vmul.f32 %v7984, %v8031
    %v8049 = vmul.f32 %v7989, %v8036
    %v8050 = vmul.f32 %v7992, %v8041
    %v8051 = vsel %vm40, %v8043, 0.0
    %v8052 = vsel %vm40, %v8044, 0.0
    %v8053 = vadd.f32 %v8051, %v8052
    %v8054 = vsel %vm40, %v8045, 0.0
    %v8055 = vadd.f32 %v8053, %v8054
    %v8056 = vsel %vm40, %v8046, 0.0
    %v8057 = vadd.f32 %v8055, %v8056
    %v8058 = vsel %vm40, %v8047, 0.0
    %v8059 = vadd.f32 %v8057, %v8058
    %v8060 = vsel %vm40, %v8048, 0.0
    %v8061 = vadd.f32 %v8059, %v8060
    %v8062 = vsel %vm40, %v8049, 0.0
    %v8063 = vadd.f32 %v8061, %v8062
    %v8064 = vsel %vm4778, %v8050, 0.0
    %v8065 = vadd.f32 %v8063, %v8064
    %v8066 = vrot.slane %v8065, 4
    %v8067 = vadd.f32 %v8065, %v8066
    %v8068 = vrot.slane %v8067, 2
    %v8069 = vadd.f32 %v8067, %v8068
    %v8070 = vrot.slane %v8069, 1
    %v8071 = vadd.f32 %v8069, %v8070
    %v8072 = vmul.f32 %v8071, 0.03125
    %v8073 = vsub.f32 %v7965, %v8072
    %v8074 = vsub.f32 %v7968, %v8072
    %v8075 = vsub.f32 %v7973, %v8072
    %v8076 = vsub.f32 %v7976, %v8072
    %v8077 = vsub.f32 %v7981, %v8072
    %v8078 = vsub.f32 %v7984, %v8072
    %v8079 = vsub.f32 %v7989, %v8072
    %v8080 = vsub.f32 %v7992, %v8072
    %v8081 = vmul.f32 %v8073, %v8073
    %v8082 = vmul.f32 %v8074, %v8074
    %v8083 = vmul.f32 %v8075, %v8075
    %v8084 = vmul.f32 %v8076, %v8076
    %v8085 = vmul.f32 %v8077, %v8077
    %v8086 = vmul.f32 %v8078, %v8078
    %v8087 = vmul.f32 %v8079, %v8079
    %v8088 = vmul.f32 %v8080, %v8080
    %v8089 = vmul.f32 %v8081, %v8006
    %v8090 = vmul.f32 %v8082, %v8011
    %v8091 = vmul.f32 %v8083, %v8016
    %v8092 = vmul.f32 %v8084, %v8021
    %v8093 = vmul.f32 %v8085, %v8026
    %v8094 = vmul.f32 %v8086, %v8031
    %v8095 = vmul.f32 %v8087, %v8036
    %v8096 = vmul.f32 %v8088, %v8041
    %v8097 = vsel %vm40, %v8089, 0.0
    %v8098 = vsel %vm40, %v8090, 0.0
    %v8099 = vadd.f32 %v8097, %v8098
    %v8100 = vsel %vm40, %v8091, 0.0
    %v8101 = vadd.f32 %v8099, %v8100
    %v8102 = vsel %vm40, %v8092, 0.0
    %v8103 = vadd.f32 %v8101, %v8102
    %v8104 = vsel %vm40, %v8093, 0.0
    %v8105 = vadd.f32 %v8103, %v8104
    %v8106 = vsel %vm40, %v8094, 0.0
    %v8107 = vadd.f32 %v8105, %v8106
    %v8108 = vsel %vm40, %v8095, 0.0
    %v8109 = vadd.f32 %v8107, %v8108
    %v8110 = vsel %vm4778, %v8096, 0.0
    %v8111 = vadd.f32 %v8109, %v8110
    %v8112 = vrot.slane %v8111, 4
    %v8113 = vadd.f32 %v8111, %v8112
    %v8114 = vrot.slane %v8113, 2
    %v8115 = vadd.f32 %v8113, %v8114
    %v8116 = vrot.slane %v8115, 1
    %v8117 = vadd.f32 %v8115, %v8116
    %v8118 = vmul.f32 %v8117, 0.03125
    %s8119 = scalar_lea.vmem %s3, 2
    %v8120 = vld [vmem:[%s8119] sm:$0x1]
    %v8121 = vadd.f32 %v8118, 1e-05
    %v8122 = vrsqrt.pop %v8121
    %v8123 = vmul.f32 %v8120, %v8122
    %s8124 = scalar_lea.vmem %s4, 2
    %v8125 = vld [vmem:[%s8124] sm:$0x1]
    %v8126 = vmul.f32 %v8072, %v8123
    %v8127 = vsub.f32 %v8125, %v8126
    %v8129 = vlaneseq
    %v8130 = vshrl.u32 %v8129, 7
    %v8131 = vsub.s32 0, %v8130
    %v8132 = vrot.slane %v8123, %v8131
    %v8135 = vlaneseq
    %v8136 = vshrl.u32 %v8135, 7
    %v8137 = vsub.s32 0, %v8136
    %v8138 = vrot.slane %v8127, %v8137
    %vm8140 = vcmp.ge.f32.partialorder %v8132, 0.0
    %8141 = vst.msk [vmem:[#allocation5] sm:$0xff] %vm40, %v7965
    %8142 = vst.msk [vmem:[#allocation5 + $0x8] sm:$0xff] %vm40, %v7968
    %8143 = vst.msk [vmem:[#allocation5 + $0x10] sm:$0xff] %vm40, %v7973
    %8144 = vst.msk [vmem:[#allocation5 + $0x18] sm:$0xff] %vm40, %v7976
    %8145 = vst.msk [vmem:[#allocation5 + $0x20] sm:$0xff] %vm40, %v7981
    %8146 = vst.msk [vmem:[#allocation5 + $0x28] sm:$0xff] %vm40, %v7984
    %8147 = vst.msk [vmem:[#allocation5 + $0x30] sm:$0xff] %vm40, %v7989
    %8148 = vst.msk [vmem:[#allocation5 + $0x38] sm:$0x3] %vm4778, %v7992
    %v8149 = vld [vmem:[#allocation5] ss:$2 sm:$0x3]
    %v8150 = vld [vmem:[%s5277] ss:$2 sm:$0x3]
    %s8151 = scalar_lea.vmem [#allocation5], 6
    %v8152 = vld [vmem:[%s8151] ss:$2 sm:$0x3]
    %s8153 = scalar_lea.vmem [#allocation5], 7
    %v8154 = vld [vmem:[%s8153] ss:$2 sm:$0x3]
    %v8155 = vmax.f32 %v8149, %v8150
    %v8156 = vmax.f32 %v8152, %v8154
    %v8157 = vmax.f32 %v8155, %v8156
    %v8158 = vmin.f32 %v8149, %v8150
    %v8159 = vmin.f32 %v8152, %v8154
    %v8160 = vmin.f32 %v8158, %v8159
    %v8161 = vsel %vm8140, %v8157, %v8160
    %v8162 = vmul.f32 %v8161, %v8132
    %v8163 = vadd.f32 %v8162, %v8138
    %v8164 = vmax.f32 %v8163, 0.0
    %8165 = vst.msk [vmem:[#allocation4 + $0x5] sm:$0x3] %vm4778, %v8164
    %s8166 = scalar_lea.vmem [#allocation5], 12
    %v8167 = vld [vmem:[%s8166] ss:$2 sm:$0x3]
    %s8168 = scalar_lea.vmem [#allocation5], 13
    %v8169 = vld [vmem:[%s8168] ss:$2 sm:$0x3]
    %v8170 = vld [vmem:[%s5279] ss:$2 sm:$0x3]
    %v8171 = vld [vmem:[%s5281] ss:$2 sm:$0x3]
    %v8172 = vmax.f32 %v8167, %v8169
    %v8173 = vmax.f32 %v8170, %v8171
    %v8174 = vmax.f32 %v8172, %v8173
    %v8175 = vmin.f32 %v8167, %v8169
    %v8176 = vmin.f32 %v8170, %v8171
    %v8177 = vmin.f32 %v8175, %v8176
    %v8178 = vsel %vm8140, %v8174, %v8177
    %v8179 = vmul.f32 %v8178, %v8132
    %v8180 = vadd.f32 %v8179, %v8138
    %v8181 = vmax.f32 %v8180, 0.0
    %8182 = vst.msk [vmem:[#allocation4 + $0x9] sm:$0x3] %vm4778, %v8181
    %v8183 = vld [vmem:[%s5294] ss:$2 sm:$0x3]
    %v8184 = vld [vmem:[%s5296] ss:$2 sm:$0x3]
    %s8185 = scalar_lea.vmem [#allocation5], 42
    %v8186 = vld [vmem:[%s8185] ss:$2 sm:$0x3]
    %s8187 = scalar_lea.vmem [#allocation5], 43
    %v8188 = vld [vmem:[%s8187] ss:$2 sm:$0x3]
    %v8189 = vmax.f32 %v8183, %v8184
    %v8190 = vmax.f32 %v8186, %v8188
    %v8191 = vmax.f32 %v8189, %v8190
    %v8192 = vmin.f32 %v8183, %v8184
    %v8193 = vmin.f32 %v8186, %v8188
    %v8194 = vmin.f32 %v8192, %v8193
    %v8195 = vsel %vm8140, %v8191, %v8194
    %v8196 = vmul.f32 %v8195, %v8132
    %v8197 = vadd.f32 %v8196, %v8138
    %v8198 = vmax.f32 %v8197, 0.0
    %8199 = vst.msk [vmem:[#allocation4 + $0x15] sm:$0x3] %vm4778, %v8198
    %s8200 = scalar_lea.vmem [#allocation5], 48
    %v8201 = vld [vmem:[%s8200] ss:$2 sm:$0x3]
    %s8202 = scalar_lea.vmem [#allocation5], 49
    %v8203 = vld [vmem:[%s8202] ss:$2 sm:$0x3]
    %v8204 = vld [vmem:[%s5298] ss:$2 sm:$0x3]
    %v8205 = vld [vmem:[%s5300] ss:$2 sm:$0x3]
    %v8206 = vmax.f32 %v8201, %v8203
    %v8207 = vmax.f32 %v8204, %v8205
    %v8208 = vmax.f32 %v8206, %v8207
    %v8209 = vmin.f32 %v8201, %v8203
    %v8210 = vmin.f32 %v8204, %v8205
    %v8211 = vmin.f32 %v8209, %v8210
    %v8212 = vsel %vm8140, %v8208, %v8211
    %v8213 = vmul.f32 %v8212, %v8132
    %v8214 = vadd.f32 %v8213, %v8138
    %v8215 = vmax.f32 %v8214, 0.0
    %8216 = vst.msk [vmem:[#allocation4 + $0x19] sm:$0x3] %vm4778, %v8215
    %v8217 = vld [vmem:[#allocation4] sm:$0xff]
    %v8218 = vld [vmem:[#allocation4 + $0x8] sm:$0xff]
    %v8219 = vld [vmem:[#allocation4 + $0x10] sm:$0x3f]
    %v8220 = vld [vmem:[#allocation4 + $0x1] sm:$0xff]
    %v8221 = vld [vmem:[#allocation4 + $0x9] sm:$0xff]
    %v8222 = vld [vmem:[#allocation4 + $0x11] sm:$0x3f]
    %v8223 = vld [vmem:[#allocation4 + $0x2] sm:$0xff]
    %v8224 = vld [vmem:[#allocation4 + $0xa] sm:$0xff]
    %v8225 = vld [vmem:[#allocation4 + $0x12] sm:$0x3f]
    %v8226 = vld [vmem:[#allocation4 + $0x4] sm:$0xff]
    %v8227 = vld [vmem:[#allocation4 + $0xc] sm:$0xff]
    %v8228 = vld [vmem:[#allocation4 + $0x14] sm:$0x3f]
    %v8229 = vld [vmem:[#allocation4 + $0x5] sm:$0xff]
    %v8230 = vld [vmem:[#allocation4 + $0xd] sm:$0xff]
    %v8231 = vld [vmem:[#allocation4 + $0x15] sm:$0x3f]
    %v8232 = vld [vmem:[#allocation4 + $0x6] sm:$0xff]
    %v8233 = vld [vmem:[#allocation4 + $0xe] sm:$0xff]
    %v8234 = vld [vmem:[#allocation4 + $0x16] sm:$0x3f]
    %v8235 = vld [vmem:[#allocation4 + $0x10] sm:$0xff]
    %v8236 = vld [vmem:[#allocation4 + $0x18] sm:$0x3f]
    %v8237 = vld [vmem:[#allocation4 + $0x11] sm:$0xff]
    %v8238 = vld [vmem:[#allocation4 + $0x19] sm:$0x3f]
    %v8239 = vld [vmem:[#allocation4 + $0x12] sm:$0xff]
    %v8240 = vld [vmem:[#allocation4 + $0x1a] sm:$0x3f]
    %8244 = vrot.lane.b32.xlu0 %v8220, 32
    %v8245 = vpop.permute.xlu0 %8244
    %8246 = vrot.lane.b32.xlu0 %v8221, 32
    %v8247 = vpop.permute.xlu0 %8246
    %8248 = vrot.lane.b32.xlu0 %v8222, 32
    %v8249 = vpop.permute.xlu0 %8248
    %8256 = vrot.lane.b32.xlu0 %v8223, 64
    %v8257 = vpop.permute.xlu0 %8256
    %8258 = vrot.lane.b32.xlu0 %v8224, 64
    %v8259 = vpop.permute.xlu0 %8258
    %8260 = vrot.lane.b32.xlu0 %v8225, 64
    %v8261 = vpop.permute.xlu0 %8260
    %8268 = vrot.lane.b32.xlu0 %v8226, 96
    %v8269 = vpop.permute.xlu0 %8268
    %8270 = vrot.lane.b32.xlu0 %v8227, 96
    %v8271 = vpop.permute.xlu0 %8270
    %8272 = vrot.lane.b32.xlu0 %v8228, 96
    %v8273 = vpop.permute.xlu0 %8272
    %8280 = vrot.lane.b32.xlu0 %v8232, 32
    %v8281 = vpop.permute.xlu0 %8280
    %8282 = vrot.lane.b32.xlu0 %v8233, 32
    %v8283 = vpop.permute.xlu0 %8282
    %8284 = vrot.lane.b32.xlu0 %v8234, 32
    %v8285 = vpop.permute.xlu0 %8284
    %8292 = vrot.lane.b32.xlu0 %v8218, 64
    %v8293 = vpop.permute.xlu0 %8292
    %8294 = vrot.lane.b32.xlu0 %v8235, 64
    %v8295 = vpop.permute.xlu0 %8294
    %8296 = vrot.lane.b32.xlu0 %v8236, 64
    %v8297 = vpop.permute.xlu0 %8296
    %8303 = vrot.lane.b32.xlu0 %v8221, 96
    %v8304 = vpop.permute.xlu0 %8303
    %8305 = vrot.lane.b32.xlu0 %v8237, 96
    %v8306 = vpop.permute.xlu0 %8305
    %8307 = vrot.lane.b32.xlu0 %v8238, 96
    %v8308 = vpop.permute.xlu0 %8307
    %v8312 = vsel %vm40, %v8217, %v8245
    %v8313 = vsel %vm40, %v8218, %v8247
    %v8314 = vsel %vm40, %v8219, %v8249
    %v8315 = vsel %vm6277, %v8312, %v8257
    %v8316 = vsel %vm6277, %v8313, %v8259
    %v8317 = vsel %vm6277, %v8314, %v8261
    %v8318 = vsel %vm6301, %v8315, %v8269
    %v8319 = vsel %vm6301, %v8316, %v8271
    %v8320 = vsel %vm6301, %v8317, %v8273
    %v8321 = vsel %vm40, %v8229, %v8281
    %v8322 = vsel %vm40, %v8230, %v8283
    %v8323 = vsel %vm40, %v8231, %v8285
    %v8324 = vsel %vm6277, %v8321, %v8293
    %v8325 = vsel %vm6277, %v8322, %v8295
    %v8326 = vsel %vm6277, %v8323, %v8297
    %v8327 = vsel %vm6301, %v8324, %v8304
    %v8328 = vsel %vm6301, %v8325, %v8306
    %v8329 = vsel %vm6301, %v8326, %v8308
    %v8330 = vpack.c.bf16 %v8319, %v8318
    %v8331 = vpack.c.bf16 %v8328, %v8327
    %v8332 = vpack.c.bf16 %v8239, %v8224
    %v8333 = vpack.c.bf16 %v8320, %v8320
    %v8334 = vpack.c.bf16 %v8329, %v8329
    %v8335 = vpack.c.bf16 %v8240, %v8240
    %s8336 = scalar_lea.vmem %s2, 288
    %v8337 = vld [vmem:[%s8336] sm:$0xf]
    %v8338 = vld [vmem:[%s8336 + $0x4] sm:$0xf]
    %v8339 = vld [vmem:[%s8336 + $0x8] sm:$0xf]
    %v8340 = vld [vmem:[%s8336 + $0xc] sm:$0xf]
    %v8341 = vld [vmem:[%s8336 + $0x10] sm:$0xf]
    %v8342 = vld [vmem:[%s8336 + $0x14] sm:$0xf]
    %v8343 = vld [vmem:[%s8336 + $0x18] sm:$0xf]
    %v8344 = vld [vmem:[%s8336 + $0x1c] sm:$0xf]
    %v8345 = vld [vmem:[%s8336 + $0x20] sm:$0xf]
    %v8346 = vld [vmem:[%s8336 + $0x24] sm:$0xf]
    %v8347 = vld [vmem:[%s8336 + $0x28] sm:$0xf]
    %v8348 = vld [vmem:[%s8336 + $0x2c] sm:$0xf]
    %v8349 = vld [vmem:[%s8336 + $0x30] sm:$0xf]
    %v8350 = vld [vmem:[%s8336 + $0x34] sm:$0xf]
    %v8351 = vld [vmem:[%s8336 + $0x38] sm:$0xf]
    %v8352 = vld [vmem:[%s8336 + $0x3c] sm:$0xf]
    %v8353 = vld [vmem:[%s8336 + $0x40] sm:$0xf]
    %v8354 = vld [vmem:[%s8336 + $0x44] sm:$0xf]
    %v8355 = vld [vmem:[%s8336 + $0x48] sm:$0xf]
    %v8356 = vld [vmem:[%s8336 + $0x4c] sm:$0xf]
    %v8357 = vld [vmem:[%s8336 + $0x50] sm:$0xf]
    %v8358 = vld [vmem:[%s8336 + $0x54] sm:$0xf]
    %v8359 = vld [vmem:[%s8336 + $0x58] sm:$0xf]
    %v8360 = vld [vmem:[%s8336 + $0x5c] sm:$0xf]
    %v8361 = vld [vmem:[%s8336 + $0x60] sm:$0xf]
    %v8362 = vld [vmem:[%s8336 + $0x64] sm:$0xf]
    %v8363 = vld [vmem:[%s8336 + $0x68] sm:$0xf]
    %v8364 = vld [vmem:[%s8336 + $0x6c] sm:$0xf]
    %v8365 = vld [vmem:[%s8336 + $0x70] sm:$0xf]
    %v8366 = vld [vmem:[%s8336 + $0x74] sm:$0xf]
    %v8367 = vld [vmem:[%s8336 + $0x78] sm:$0xf]
    %v8368 = vld [vmem:[%s8336 + $0x7c] sm:$0xf]
    %v8369 = vld [vmem:[%s8336 + $0x80] sm:$0xf]
    %v8370 = vld [vmem:[%s8336 + $0x84] sm:$0xf]
    %v8371 = vld [vmem:[%s8336 + $0x88] sm:$0xf]
    %v8372 = vld [vmem:[%s8336 + $0x8c] sm:$0xf]
    %v8409 = vunpack.c.l.b16 %v8337
    %v8410 = vunpack.c.l.b16 %v8338
    %v8411 = vunpack.c.l.b16 %v8339
    %v8412 = vunpack.c.l.b16 %v8340
    %v8413 = vunpack.c.l.b16 %v8341
    %v8414 = vunpack.c.l.b16 %v8342
    %v8415 = vunpack.c.l.b16 %v8343
    %v8416 = vunpack.c.l.b16 %v8344
    %v8417 = vunpack.c.l.b16 %v8345
    %v8418 = vunpack.c.l.b16 %v8346
    %v8419 = vunpack.c.l.b16 %v8347
    %v8420 = vunpack.c.l.b16 %v8348
    %v8421 = vunpack.c.l.b16 %v8349
    %v8422 = vunpack.c.l.b16 %v8350
    %v8423 = vunpack.c.l.b16 %v8351
    %v8424 = vunpack.c.l.b16 %v8352
    %v8425 = vunpack.c.l.b16 %v8353
    %v8426 = vunpack.c.l.b16 %v8354
    %v8427 = vunpack.c.l.b16 %v8355
    %v8428 = vunpack.c.l.b16 %v8356
    %v8429 = vunpack.c.l.b16 %v8357
    %v8430 = vunpack.c.l.b16 %v8358
    %v8431 = vunpack.c.l.b16 %v8359
    %v8432 = vunpack.c.l.b16 %v8360
    %v8433 = vunpack.c.l.b16 %v8361
    %v8434 = vunpack.c.l.b16 %v8362
    %v8435 = vunpack.c.l.b16 %v8363
    %v8436 = vunpack.c.l.b16 %v8364
    %v8437 = vunpack.c.l.b16 %v8365
    %v8438 = vunpack.c.l.b16 %v8366
    %v8439 = vunpack.c.l.b16 %v8367
    %v8440 = vunpack.c.l.b16 %v8368
    %v8441 = vunpack.c.l.b16 %v8369
    %v8442 = vunpack.c.l.b16 %v8370
    %v8443 = vunpack.c.l.b16 %v8371
    %v8444 = vunpack.c.l.b16 %v8372
    %v8445 = vpack.c.b16 %v8410, %v8409
    %v8446 = vpack.c.b16 %v8412, %v8411
    %v8447 = vpack.c.b16 %v8414, %v8413
    %v8448 = vpack.c.b16 %v8416, %v8415
    %v8449 = vpack.c.b16 %v8418, %v8417
    %v8450 = vpack.c.b16 %v8420, %v8419
    %v8451 = vpack.c.b16 %v8422, %v8421
    %v8452 = vpack.c.b16 %v8424, %v8423
    %v8453 = vpack.c.b16 %v8426, %v8425
    %v8454 = vpack.c.b16 %v8428, %v8427
    %v8455 = vpack.c.b16 %v8430, %v8429
    %v8456 = vpack.c.b16 %v8432, %v8431
    %v8457 = vpack.c.b16 %v8434, %v8433
    %v8458 = vpack.c.b16 %v8436, %v8435
    %v8459 = vpack.c.b16 %v8438, %v8437
    %v8460 = vpack.c.b16 %v8440, %v8439
    %v8461 = vpack.c.b16 %v8442, %v8441
    %v8462 = vpack.c.b16 %v8444, %v8443
    %v8482 = vsel %vm40, %v8332, 0
    %v8485 = vsel %vm40, %v8335, 0
    %8487 = vmatprep.subr.bf16.mxu0 0
    %8488 = vmatpush1.bf16.msra.mxu0 %v8445
    %8489 = vmatprep.subr.bf16.mxu0 0
    %8490 = vmatpush1.bf16.msra.mxu0 %v8446
    %8491 = vmatprep.subr.bf16.mxu0 0
    %8492 = vmatpush1.bf16.msra.mxu0 %v8447
    %8493 = vmatprep.subr.bf16.mxu0 0
    %8494 = vmatpush1.bf16.msra.mxu0 %v8448
    %8495 = vmatprep.subr.bf16.mxu0 0
    %8496 = vmatpush1.bf16.msra.mxu0 %v8449
    %8497 = vmatprep.subr.bf16.mxu0 0
    %8498 = vmatpush1.bf16.msra.mxu0 %v8450
    %8499 = vmatprep.subr.bf16.mxu0 0
    %8500 = vmatpush1.bf16.msra.mxu0 %v8451
    %8501 = vmatprep.subr.bf16.mxu0 0
    %8502 = vmatpush1.bf16.msra.mxu0 %v8452
    %8503 = vmatprep.subr.bf16.mxu0 0
    %8504 = vmatpush1.bf16.msra.mxu0 %v8453
    %8505 = vmatprep.subr.bf16.mxu0 0
    %8506 = vmatpush1.bf16.msra.mxu0 %v8454
    %8507 = vmatprep.subr.bf16.mxu0 0
    %8508 = vmatpush1.bf16.msra.mxu0 %v8455
    %8509 = vmatprep.subr.bf16.mxu0 0
    %8510 = vmatpush1.bf16.msra.mxu0 %v8456
    %8511 = vmatprep.subr.bf16.mxu0 0
    %8512 = vmatpush1.bf16.msra.mxu0 %v8457
    %8513 = vmatprep.subr.bf16.mxu0 0
    %8514 = vmatpush1.bf16.msra.mxu0 %v8458
    %8515 = vmatprep.subr.bf16.mxu0 0
    %8516 = vmatpush1.bf16.msra.mxu0 %v8459
    %8517 = vmatprep.subr.bf16.mxu0 0
    %8518 = vmatpush1.bf16.msra.mxu0 %v8460
    %8519 = vmatprep.mubr.bf16.mxu0 %v8331
    %8520 = vmatmul.mubr.bf16.gmra.mrb[0].mxu0 %v8330
    %v8521 = vpop.f32.mrb[0].mxu0
    %v8522 = vadd.f32 0.0, %v8521
    %v8523 = vpop.f32.mrb[0].mxu0
    %v8524 = vpop.f32.mrb[0].mxu0
    %v8525 = vadd.f32 0.0, %v8524
    %v8526 = vpop.f32.mrb[0].mxu0
    %8527 = vmatprep.mubr.bf16.mxu0 %v8334
    %8528 = vmatmul.mubr.bf16.gmra.mrb[0].mxu0 %v8333
    %v8529 = vpop.f32.mrb[0].mxu0
    %v8530 = vadd.f32 0.0, %v8529
    %v8531 = vpop.f32.mrb[0].mxu0
    %v8532 = vpop.f32.mrb[0].mxu0
    %v8533 = vpop.f32.mrb[0].mxu0
    %8534 = vdwg.mxu0
    %8535 = vmatprep.subr.bf16.mxu0 0
    %8536 = vmatpush1.bf16.msra.mxu0 %v8461
    %8537 = vmatprep.subr.bf16.mxu0 0
    %8538 = vmatpush1.bf16.msra.mxu0 %v8462
    %8539 = vmatprep.subr.bf16.mxu0 0
    %8540 = vmatpush1.bf16.msra.mxu0 0
    %8541 = vmatprep.subr.bf16.mxu0 0
    %8542 = vmatpush1.bf16.msra.mxu0 0
    %8543 = vmatprep.subr.bf16.mxu0 0
    %8544 = vmatpush1.bf16.msra.mxu0 0
    %8545 = vmatprep.subr.bf16.mxu0 0
    %8546 = vmatpush1.bf16.msra.mxu0 0
    %8547 = vmatprep.subr.bf16.mxu0 0
    %8548 = vmatpush1.bf16.msra.mxu0 0
    %8549 = vmatprep.subr.bf16.mxu0 0
    %8550 = vmatpush1.bf16.msra.mxu0 0
    %8551 = vmatprep.subr.bf16.mxu0 0
    %8552 = vmatpush1.bf16.msra.mxu0 0
    %8553 = vmatprep.subr.bf16.mxu0 0
    %8554 = vmatpush1.bf16.msra.mxu0 0
    %8555 = vmatprep.subr.bf16.mxu0 0
    %8556 = vmatpush1.bf16.msra.mxu0 0
    %8557 = vmatprep.subr.bf16.mxu0 0
    %8558 = vmatpush1.bf16.msra.mxu0 0
    %8559 = vmatprep.subr.bf16.mxu0 0
    %8560 = vmatpush1.bf16.msra.mxu0 0
    %8561 = vmatprep.subr.bf16.mxu0 0
    %8562 = vmatpush1.bf16.msra.mxu0 0
    %8563 = vmatprep.subr.bf16.mxu0 0
    %8564 = vmatpush1.bf16.msra.mxu0 0
    %8565 = vmatprep.subr.bf16.mxu0 0
    %8566 = vmatpush1.bf16.msra.mxu0 0
    %8567 = vmatprep.mubr.bf16.mxu0 0
    %8568 = vmatmul.mubr.bf16.gmra.mrb[0].mxu0 %v8482
    %v8569 = vpop.f32.mrb[0].mxu0
    %v8570 = vadd.f32 %v8522, %v8569
    %v8571 = vpop.f32.mrb[0].mxu0
    %v8572 = vpop.f32.mrb[0].mxu0
    %v8573 = vadd.f32 %v8525, %v8572
    %v8574 = vpop.f32.mrb[0].mxu0
    %8575 = vmatprep.mubr.bf16.mxu0 0
    %8576 = vmatmul.mubr.bf16.gmra.mrb[0].mxu0 %v8485
    %v8577 = vpop.f32.mrb[0].mxu0
    %v8578 = vadd.f32 %v8530, %v8577
    %v8579 = vpop.f32.mrb[0].mxu0
    %v8580 = vpop.f32.mrb[0].mxu0
    %v8581 = vpop.f32.mrb[0].mxu0
    %8582 = vdwg.mxu0
    %v8583 = vld [vmem:[%s8] sm:$0xff]
    %v8584 = vld [vmem:[%s8 + $0x8] sm:$0xff]
    %v8585 = vld [vmem:[%s8 + $0x10] sm:$0x3f]
    %8587 = vset.pattern.permute.xlu0 0
    %8588 = vperm.xlu0 %8587, %v8583
    %v8589 = vpop.permute.xlu0 %8588
    %8592 = vset.pattern.permute.xlu0 0
    %8593 = vperm.xlu0 %8592, %v8584
    %v8594 = vpop.permute.xlu0 %8593
    %8597 = vset.pattern.permute.xlu0 0
    %8598 = vperm.xlu0 %8597, %v8585
    %v8599 = vpop.permute.xlu0 %8598
    %v8601 = vmul.f32 %v8570, %v8589
    %v8602 = vmul.f32 %v8573, %v8594
    %v8603 = vmul.f32 %v8578, %v8599
    %v8604 = vsel %vm40, %v8601, 0.0
    %v8605 = vsel %vm40, %v8602, 0.0
    %v8606 = vadd.f32 %v8604, %v8605
    %vm8607 = vcmask 259072
    %v8608 = vsel %vm8607, %v8603, 0.0
    %v8609 = vadd.f32 %v8606, %v8608
    %v8610 = vrot.slane %v8609, 4
    %v8611 = vadd.f32 %v8609, %v8610
    %v8612 = vrot.slane %v8611, 2
    %v8613 = vadd.f32 %v8611, %v8612
    %v8614 = vrot.slane %v8613, 1
    %v8615 = vadd.f32 %v8613, %v8614
    %v8616 = vmul.f32 %v8615, 0.125
    %v8617 = vsub.f32 %v8570, %v8616
    %v8618 = vsub.f32 %v8573, %v8616
    %v8619 = vsub.f32 %v8578, %v8616
    %v8620 = vmul.f32 %v8617, %v8617
    %v8621 = vmul.f32 %v8618, %v8618
    %v8622 = vmul.f32 %v8619, %v8619
    %v8623 = vmul.f32 %v8620, %v8589
    %v8624 = vmul.f32 %v8621, %v8594
    %v8625 = vmul.f32 %v8622, %v8599
    %v8626 = vsel %vm40, %v8623, 0.0
    %v8627 = vsel %vm40, %v8624, 0.0
    %v8628 = vadd.f32 %v8626, %v8627
    %v8629 = vsel %vm8607, %v8625, 0.0
    %v8630 = vadd.f32 %v8628, %v8629
    %v8631 = vrot.slane %v8630, 4
    %v8632 = vadd.f32 %v8630, %v8631
    %v8633 = vrot.slane %v8632, 2
    %v8634 = vadd.f32 %v8632, %v8633
    %v8635 = vrot.slane %v8634, 1
    %v8636 = vadd.f32 %v8634, %v8635
    %v8637 = vmul.f32 %v8636, 0.125
    %s8638 = scalar_lea.vmem %s3, 3
    %v8639 = vld [vmem:[%s8638] sm:$0x1]
    %v8640 = vadd.f32 %v8637, 1e-05
    %v8641 = vrsqrt.pop %v8640
    %v8642 = vmul.f32 %v8639, %v8641
    %s8643 = scalar_lea.vmem %s4, 3
    %v8644 = vld [vmem:[%s8643] sm:$0x1]
    %v8645 = vmul.f32 %v8616, %v8642
    %v8646 = vsub.f32 %v8644, %v8645
    %vm8647 = vcmp.ge.f32.partialorder %v8642, 0.0
    %8648 = vst.msk [vmem:[#allocation5] sm:$0xff] %vm40, %v8570
    %8649 = vst.msk [vmem:[#allocation5 + $0x8] sm:$0xff] %vm40, %v8573
    %8650 = vst.msk [vmem:[#allocation5 + $0x10] sm:$0x3f] %vm8607, %v8578
    %v8651 = vld [vmem:[#allocation5] ss:$2 sm:$0x1]
    %v8652 = vld [vmem:[%s5277] ss:$2 sm:$0x1]
    %s8653 = scalar_lea.vmem [#allocation5], 4
    %v8654 = vld [vmem:[%s8653] ss:$2 sm:$0x1]
    %s8655 = scalar_lea.vmem [#allocation5], 5
    %v8656 = vld [vmem:[%s8655] ss:$2 sm:$0x1]
    %v8657 = vmax.f32 %v8651, %v8652
    %v8658 = vmax.f32 %v8654, %v8656
    %v8659 = vmax.f32 %v8657, %v8658
    %v8660 = vmin.f32 %v8651, %v8652
    %v8661 = vmin.f32 %v8654, %v8656
    %v8662 = vmin.f32 %v8660, %v8661
    %v8663 = vsel %vm8647, %v8659, %v8662
    %v8664 = vmul.f32 %v8663, %v8642
    %v8665 = vadd.f32 %v8664, %v8646
    %v8666 = vmax.f32 %v8665, 0.0
    %v8667 = vadd.f32 %v8666, 0.0
    %v8668 = vadd.f32 %v8667, 0.0
    %s8669 = scalar_lea.vmem [#allocation5], 16
    %v8670 = vld [vmem:[%s8669] ss:$2 sm:$0x1]
    %s8671 = scalar_lea.vmem [#allocation5], 17
    %v8672 = vld [vmem:[%s8671] ss:$2 sm:$0x1]
    %v8673 = vld [vmem:[%s7263] ss:$2 sm:$0x1]
    %v8674 = vld [vmem:[%s7265] ss:$2 sm:$0x1]
    %v8675 = vmax.f32 %v8670, %v8672
    %v8676 = vmax.f32 %v8673, %v8674
    %v8677 = vmax.f32 %v8675, %v8676
    %v8678 = vmin.f32 %v8670, %v8672
    %v8679 = vmin.f32 %v8673, %v8674
    %v8680 = vmin.f32 %v8678, %v8679
    %v8681 = vsel %vm8647, %v8677, %v8680
    %v8682 = vmul.f32 %v8681, %v8642
    %v8683 = vadd.f32 %v8682, %v8646
    %v8684 = vmax.f32 %v8683, 0.0
    %v8685 = vadd.f32 %v8684, 0.0
    %v8686 = vadd.f32 %v8685, 0.0
    %v8688 = vlaneseq
    %v8689 = vshrl.u32 %v8688, 7
    %v8690 = vsub.s32 0, %v8689
    %v8691 = vrot.slane %v8686, %v8690
    %vm8693 = vcmask 1040384
    %v8694 = vsel %vm8693, %v8668, %v8691
    %v8695 = vld [vmem:[%s9] sm:$0xff]
    %v8696 = vld [vmem:[%s9 + $0x8] sm:$0xff]
    %v8697 = vld [vmem:[%s9 + $0x10] sm:$0xff]
    %v8698 = vld [vmem:[%s9 + $0x18] sm:$0xff]
    %v8699 = vld [vmem:[%s10] sm:$0x1]
    %v8701 = vlaneseq
    %v8702 = vshrl.u32 %v8701, 7
    %v8703 = vsub.s32 0, %v8702
    %v8704 = vrot.slane %v8699, %v8703
    %v8707 = vsel %vm40, %v8694, 0
    %8709 = vmatprep.subr.mxu0 0.0
    %8710 = vmatpush1.msra.mxu0 %v8695
    %8711 = vmatprep.subr.mxu0 0.0
    %8712 = vmatpush1.msra.mxu0 %v8696
    %8713 = vmatprep.subr.mxu0 0.0
    %8714 = vmatpush1.msra.mxu0 %v8697
    %8715 = vmatprep.subr.mxu0 0.0
    %8716 = vmatpush1.msra.mxu0 %v8698
    %8717 = vmatprep.subr.mxu0 0.0
    %8718 = vmatpush1.msra.mxu0 0.0
    %8719 = vmatprep.subr.mxu0 0.0
    %8720 = vmatpush1.msra.mxu0 0.0
    %8721 = vmatprep.subr.mxu0 0.0
    %8722 = vmatpush1.msra.mxu0 0.0
    %8723 = vmatprep.subr.mxu0 0.0
    %8724 = vmatpush1.msra.mxu0 0.0
    %8725 = vmatprep.subr.mxu0 0.0
    %8726 = vmatpush1.msra.mxu0 0.0
    %8727 = vmatprep.subr.mxu0 0.0
    %8728 = vmatpush1.msra.mxu0 0.0
    %8729 = vmatprep.subr.mxu0 0.0
    %8730 = vmatpush1.msra.mxu0 0.0
    %8731 = vmatprep.subr.mxu0 0.0
    %8732 = vmatpush1.msra.mxu0 0.0
    %8733 = vmatprep.subr.mxu0 0.0
    %8734 = vmatpush1.msra.mxu0 0.0
    %8735 = vmatprep.subr.mxu0 0.0
    %8736 = vmatpush1.msra.mxu0 0.0
    %8737 = vmatprep.subr.mxu0 0.0
    %8738 = vmatpush1.msra.mxu0 0.0
    %8739 = vmatprep.subr.mxu0 0.0
    %8740 = vmatpush1.msra.mxu0 0.0
    %8741 = vmatprep.subr.mxu0 0.0
    %8742 = vmatpush1.msra.mxu0 0.0
    %8743 = vmatprep.subr.mxu0 0.0
    %8744 = vmatpush1.msra.mxu0 0.0
    %8745 = vmatprep.subr.mxu0 0.0
    %8746 = vmatpush1.msra.mxu0 0.0
    %8747 = vmatprep.subr.mxu0 0.0
    %8748 = vmatpush1.msra.mxu0 0.0
    %8749 = vmatprep.subr.mxu0 0.0
    %8750 = vmatpush1.msra.mxu0 0.0
    %8751 = vmatprep.subr.mxu0 0.0
    %8752 = vmatpush1.msra.mxu0 0.0
    %8753 = vmatprep.subr.mxu0 0.0
    %8754 = vmatpush1.msra.mxu0 0.0
    %8755 = vmatprep.subr.mxu0 0.0
    %8756 = vmatpush1.msra.mxu0 0.0
    %8757 = vmatprep.subr.mxu0 0.0
    %8758 = vmatpush1.msra.mxu0 0.0
    %8759 = vmatprep.subr.mxu0 0.0
    %8760 = vmatpush1.msra.mxu0 0.0
    %8761 = vmatprep.subr.mxu0 0.0
    %8762 = vmatpush1.msra.mxu0 0.0
    %8763 = vmatprep.subr.mxu0 0.0
    %8764 = vmatpush1.msra.mxu0 0.0
    %8765 = vmatprep.subr.mxu0 0.0
    %8766 = vmatpush1.msra.mxu0 0.0
    %8767 = vmatprep.subr.mxu0 0.0
    %8768 = vmatpush1.msra.mxu0 0.0
    %8769 = vmatprep.subr.mxu0 0.0
    %8770 = vmatpush1.msra.mxu0 0.0
    %8771 = vmatprep.subr.mxu0 0.0
    %8772 = vmatpush1.msra.mxu0 0.0
    %8773 = vmatprep.mubr.f32.mxu0 0.0
    %8774 = vmatmul.mubr.f32.gmra.mrb[0].mxu0 %v8707
    %v8775 = vpop.f32.mrb[0].mxu0
    %v8776 = vadd.f32 %v8704, %v8775
    %v8777 = vpop.f32.mrb[0].mxu0
    %8778 = vdwg.mxu0
    %vm8779 = vcmask 58368
    %8780 = vst.msk [vmem:[#allocation6] sm:$0x3] %vm8779, %v8776
    // Predicated region
    $region46: #{cnn_forward.1} parent=1 // pred_check
      _
    $region47: #{cnn_forward.1} parent=1 // pred_check_branch
      %8782 = sbr.rel (0) target = $region49
    $region48: #{cnn_forward.1} parent=1 // pred_region
      %s8784 = ssub.s32 32, 32
      %8785 = vsyncadd [#allocation7], %s8784
      %s8787 = sshll.u32 [#allocation6], 4
      %s8788 = int_to_ptr.vmem [resolvable:$true] %s8787
      %8790 = dma.vmem_to_hbm [thread:$0]  %s8788, 32, %s11, [#allocation7]
    $region49: #{cnn_forward.1} parent=1 // pred_fallthru
      _
    // Predicated region
    $region50: #{cnn_forward.1} parent=1 // pred_check
      _
    $region51: #{cnn_forward.1} parent=1 // pred_check_branch
      %8792 = sbr.rel (0) target = $region53
    $region52: #{cnn_forward.1} parent=1 // pred_region
      %8793 = dma.done [#allocation7], 32
    $region53: #{cnn_forward.1} parent=1 // pred_fallthru
      _
    %8794 = vsyncpa [#allocation7], 1

</llo_original>
